<compile_context>
chip_gen: v7x
topology: tpu7x:2x2x1
jax: 0.10.0
libtpu: 0.0.40
codegen_flags: <defaults>
</compile_context>

<pallas_src>
import functools

import jax
import jax.numpy as jnp
from jax.experimental import pallas as pl
from jax.experimental.pallas import tpu as pltpu

EPS = 1e-5          # nn.GroupNorm default eps
GROUPS = 32         # normalization(channels) == GroupNorm32(32, channels)


# ---------------------------------------------------------------------------
# kernel helpers (traced inside the Pallas kernel)
# ---------------------------------------------------------------------------
def _groupnorm_silu(flat, A, gamma, beta):
    """GroupNorm(32, C) + SiLU on one image.

    flat  : (H*W, C) float32
    A     : (C, C) group-averaging matrix: 1/group_size for channels in the
            same group else 0 (division by H*W happens here, so A does not
            depend on the spatial shape)
    gamma, beta : (1, C) affine parameters
    """
    inv_n = 1.0 / flat.shape[0]
    s = jnp.sum(flat, axis=0, keepdims=True)                    # (1, C)
    sq = jnp.sum(flat * flat, axis=0, keepdims=True)            # (1, C)
    mean = jnp.dot(s, A, preferred_element_type=jnp.float32) * inv_n
    meansq = jnp.dot(sq, A, preferred_element_type=jnp.float32) * inv_n
    var = meansq - mean * mean
    y = (flat - mean) * jax.lax.rsqrt(var + EPS) * gamma + beta
    return y * jax.nn.sigmoid(y)                                # SiLU (EUP)


def _conv3x3(act, w_ref, bias, mask_ref, patch_ref, W):
    """3x3 'same' convolution of one flat image as a single big-K MXU matmul.

    act       : (H*W, Cin) float32 activations
    w_ref     : (9*Cin, Cout) bfloat16 weights, rows ordered (kh, kw, cin)
    bias      : (1, Cout) float32
    mask_ref  : (H*W, 9) float32 per-tap border validity (precomputed in XLA)
    patch_ref : (H*W, 9*Cin) float32 VMEM scratch (im2col patch matrix)
    """
    M, Cin = act.shape
    for kh in range(3):
        for kw in range(3):
            t = kh * 3 + kw
            off = (kh - 1) * W + (kw - 1)               # flat source offset
            if off == 0:                                # centre tap: as-is
                tap = act
            else:
                rolled = pltpu.roll(act, shift=(-off) % M, axis=0)  # XLU rotate
                tap = rolled * mask_ref[:, t:t + 1]     # zero out-of-image px
            patch_ref[:, t * Cin:(t + 1) * Cin] = tap
    patches = patch_ref[...].astype(jnp.bfloat16)       # bf16 operands
    return jnp.dot(patches, w_ref[...],
                   preferred_element_type=jnp.float32) + bias   # f32 accum


# ---------------------------------------------------------------------------
# the Pallas kernel: one image (batch element) per grid step
# ---------------------------------------------------------------------------
def resblock_kernel(x_ref, mask_ref,
                    g1_ref, b1_ref, A1_ref, w1_ref, c1b_ref,
                    g2_ref, b2_ref, A2_ref, w2_ref, c2b_ref,
                    ws_ref, bs_ref,
                    out_ref,
                    p1_ref, p2_ref,
                    *, W):
    xf = x_ref[...].astype(jnp.float32)                          # (H*W, Cin)

    # in_layers: GroupNorm -> SiLU -> Conv2d(C, Cout, 3, padding='same')
    a1 = _groupnorm_silu(xf, A1_ref[...], g1_ref[...], b1_ref[...])
    h1 = _conv3x3(a1, w1_ref, c1b_ref[...], mask_ref, p1_ref, W)  # (H*W, Cout)

    # out_layers: GroupNorm -> SiLU -> Dropout(p) -> Conv2d(Cout, Cout, 3, 'same')
    # TODO(synk): Dropout is identity (eval mode); training-mode masking would
    # need pltpu.prng_seed / pltpu.prng_random_bits.
    a2 = _groupnorm_silu(h1, A2_ref[...], g2_ref[...], b2_ref[...])
    h2 = _conv3x3(a2, w2_ref, c2b_ref[...], mask_ref, p2_ref, W)  # (H*W, Cpad)

    # skip_connection: Conv2d(C, Cout, 1)  (out_channels != channels branch)
    skip = jnp.dot(xf.astype(jnp.bfloat16), ws_ref[...],
                   preferred_element_type=jnp.float32) + bs_ref[...]

    out_ref[...] = (skip + h2).astype(out_ref.dtype)             # lane-dense


# ---------------------------------------------------------------------------
# wrapper: layout plumbing + parameter packing done by XLA
# ---------------------------------------------------------------------------
def resblock_forward(x_nchw, params, *, groups=GROUPS):
    g1, b1, w1, c1b, g2, b2, w2, c2b, ws, bs = params
    B, C, H, W = x_nchw.shape
    Cout = w1.shape[-1]
    M = H * W
    Cpad = ((Cout + 127) // 128) * 128       # lane-dense output width
    po = Cpad - Cout

    x = jnp.transpose(x_nchw, (0, 2, 3, 1)).reshape(B, M, C)     # NCHW->(B,HW,C)

    def group_mean_matrix(c):
        cg = c // groups
        gid = jnp.arange(c) // cg
        return (gid[:, None] == gid[None, :]).astype(jnp.float32) / cg

    A1 = group_mean_matrix(C)                                    # (C, C)
    A2 = group_mean_matrix(Cout)                                 # (Cout, Cout)
    # conv weights packed for im2col (rows ordered kh, kw, cin); out-channels
    # of the *final* producers (conv2, skip) are zero-padded to Cpad so the
    # output store is lane-dense.  Intermediates keep their true width.
    w1k = w1.reshape(9 * C, Cout).astype(jnp.bfloat16)
    w2k = jnp.pad(w2, ((0, 0), (0, 0), (0, 0), (0, po))
                  ).reshape(9 * Cout, Cpad).astype(jnp.bfloat16)
    wsk = jnp.pad(ws, ((0, 0), (0, po))).astype(jnp.bfloat16)    # (C, Cpad)
    g1k, b1k = g1.reshape(1, C), b1.reshape(1, C)
    g2k, b2k = g2.reshape(1, Cout), b2.reshape(1, Cout)
    c1k = c1b.reshape(1, Cout)
    c2k = jnp.pad(c2b, (0, po)).reshape(1, Cpad)
    bsk = jnp.pad(bs, (0, po)).reshape(1, Cpad)

    # per-pixel validity of each of the 9 conv taps ('same' zero padding),
    # computed once in XLA and reused by both convs inside the kernel.
    yy, xx = jnp.meshgrid(jnp.arange(H), jnp.arange(W), indexing="ij")
    yy, xx = yy.reshape(-1), xx.reshape(-1)
    cols = []
    for kh in range(3):
        for kw in range(3):
            dy, dx = kh - 1, kw - 1
            cols.append((yy + dy >= 0) & (yy + dy < H) &
                        (xx + dx >= 0) & (xx + dx < W))
    tapmask = jnp.stack(cols, axis=1).astype(jnp.float32)        # (M, 9)

    kparams = (g1k, b1k, A1, w1k, c1k, g2k, b2k, A2, w2k, c2k, wsk, bsk)

    def full_spec(a):
        return pl.BlockSpec(a.shape, lambda b, nd=a.ndim: (0,) * nd)

    out = pl.pallas_call(
        functools.partial(resblock_kernel, W=W),
        out_shape=jax.ShapeDtypeStruct((B, M, Cpad), x_nchw.dtype),
        grid=(B,),                                    # one image per program
        in_specs=[pl.BlockSpec((None, M, C), lambda b: (b, 0, 0)),
                  full_spec(tapmask)]
                 + [full_spec(p) for p in kparams],
        out_specs=pl.BlockSpec((None, M, Cpad), lambda b: (b, 0, 0)),
        scratch_shapes=[pltpu.VMEM((M, 9 * C), jnp.float32),     # im2col conv1
                        pltpu.VMEM((M, 9 * Cout), jnp.float32)], # im2col conv2
        compiler_params=pltpu.CompilerParams(
            dimension_semantics=("parallel",)),
    )(x, tapmask, *kparams)

    out = out[:, :, :Cout].reshape(B, H, W, Cout)                # drop padding
    return jnp.transpose(out, (0, 3, 1, 2))                      # NHWC -> NCHW


# ---------------------------------------------------------------------------
# deterministic parameter construction (module-style shapes, HWIO convs)
# ---------------------------------------------------------------------------
def init_params(key, C, Cout):
    ks = jax.random.split(key, 8)
    g1 = 1.0 + 0.1 * jax.random.normal(ks[0], (C,), jnp.float32)       # GN1 w
    b1 = 0.1 * jax.random.normal(ks[1], (C,), jnp.float32)             # GN1 b
    w1 = 0.1 * jax.random.normal(ks[2], (3, 3, C, Cout), jnp.float32)  # conv1
    c1b = 0.1 * jax.random.normal(ks[3], (Cout,), jnp.float32)
    g2 = 1.0 + 0.1 * jax.random.normal(ks[4], (Cout,), jnp.float32)    # GN2 w
    b2 = 0.1 * jax.random.normal(ks[5], (Cout,), jnp.float32)          # GN2 b
    # NOTE: the original wraps conv2 in zero_module(); small random weights
    # are used so the second conv's hot path is actually exercised.
    w2 = 0.05 * jax.random.normal(ks[6], (3, 3, Cout, Cout), jnp.float32)
    c2b = jnp.zeros((Cout,), jnp.float32)
    ws = 0.1 * jax.random.normal(ks[7], (C, Cout), jnp.float32)        # 1x1 skip
    bs = jnp.zeros((Cout,), jnp.float32)
    return (g1, b1, w1, c1b, g2, b2, w2, c2b, ws, bs)


# ---------------------------------------------------------------------------
# pure-JAX reference (eval mode).  Matmul operands are rounded to bf16 with
# f32 accumulation, mirroring the kernel's MXU precision, so the comparison
# is tight.
# ---------------------------------------------------------------------------
def ref_forward(x_nchw, params, groups=GROUPS, matmul_dtype=jnp.bfloat16):
    g1, b1, w1, c1b, g2, b2, w2, c2b, ws, bs = params
    x = jnp.transpose(x_nchw, (0, 2, 3, 1))

    def gn(h, gamma, beta):
        B, H, W, C = h.shape
        hg = h.reshape(B, H, W, groups, C // groups)
        m = hg.mean(axis=(1, 2, 4), keepdims=True)
        v = hg.var(axis=(1, 2, 4), keepdims=True)
        hn = ((hg - m) / jnp.sqrt(v + EPS)).reshape(B, H, W, C)
        return hn * gamma.reshape(1, 1, 1, C) + beta.reshape(1, 1, 1, C)

    silu = lambda t: t * jax.nn.sigmoid(t)

    def conv(h, w, b):
        y = jax.lax.conv_general_dilated(
            h.astype(matmul_dtype), w.astype(matmul_dtype), (1, 1), 'SAME',
            dimension_numbers=('NHWC', 'HWIO', 'NHWC'),
            preferred_element_type=jnp.float32)
        return y + b.reshape(1, 1, 1, -1)

    h = conv(silu(gn(x, g1, b1)), w1, c1b)
    h = conv(silu(gn(h, g2, b2)), w2, c2b)
    skip = jnp.einsum('bhwc,cd->bhwd',
                      x.astype(matmul_dtype), ws.astype(matmul_dtype),
                      preferred_element_type=jnp.float32) + bs.reshape(1, 1, 1, -1)
    return jnp.transpose(skip + h, (0, 3, 1, 2))


if __name__ == "__main__":
    # GroupNorm(32, C) requires C % 32 == 0, so the smallest sensible demo is
    # channels = 32; out_channels = 64 exercises the 1x1-conv skip branch.
    B, C, H, W = 2, 32, 16, 16
    Cout = 64
    key = jax.random.PRNGKey(0)
    kx, kp = jax.random.split(key)
    x = jax.random.normal(kx, (B, C, H, W), jnp.float32)
    params = init_params(kp, C, Cout)

    out = jax.block_until_ready(resblock_forward(x, params))
    ref = jax.block_until_ready(ref_forward(x, params))

    assert out.shape == (B, Cout, H, W), out.shape
    max_err = float(jnp.max(jnp.abs(out - ref)))
    if max_err < 1e-2:
        print("KERNEL_OK")
    else:
        print("MISMATCH max_abs_err =", max_err)
</pallas_src>

<mosaic_0001>
module attributes {stable_mosaic.version = 11 : i64} {
  func.func @resblock_kernel(%arg0: i32, %arg1: memref<1x256x32xf32, #tpu.memory_space<vmem>>, %arg2: memref<256x9xf32, #tpu.memory_space<vmem>>, %arg3: memref<1x32xf32, #tpu.memory_space<vmem>>, %arg4: memref<1x32xf32, #tpu.memory_space<vmem>>, %arg5: memref<32x32xf32, #tpu.memory_space<vmem>>, %arg6: memref<288x64xbf16, #tpu.memory_space<vmem>>, %arg7: memref<1x64xf32, #tpu.memory_space<vmem>>, %arg8: memref<1x64xf32, #tpu.memory_space<vmem>>, %arg9: memref<1x64xf32, #tpu.memory_space<vmem>>, %arg10: memref<64x64xf32, #tpu.memory_space<vmem>>, %arg11: memref<576x128xbf16, #tpu.memory_space<vmem>>, %arg12: memref<1x128xf32, #tpu.memory_space<vmem>>, %arg13: memref<32x128xbf16, #tpu.memory_space<vmem>>, %arg14: memref<1x128xf32, #tpu.memory_space<vmem>>, %arg15: memref<1x256x128xf32, #tpu.memory_space<vmem>>, %arg16: memref<256x288xf32, #tpu.memory_space<vmem>>, %arg17: memref<256x576xf32, #tpu.memory_space<vmem>>) attributes {dimension_semantics = [#tpu.dimension_semantics<parallel>], iteration_bounds = array<i64: 2>, scalar_prefetch = 0 : i64, scratch_operands = 2 : i64, tpu.core_type = #tpu.core_type<tc>, window_params = [{transform_indices = @transform_0, window_bounds = array<i64: 1, 256, 32>}, {pipeline_mode = #tpu.pipeline_mode<synchronous>, transform_indices = @transform_1, window_bounds = array<i64: 256, 9>}, {pipeline_mode = #tpu.pipeline_mode<synchronous>, transform_indices = @transform_2, window_bounds = array<i64: 1, 32>}, {pipeline_mode = #tpu.pipeline_mode<synchronous>, transform_indices = @transform_3, window_bounds = array<i64: 1, 32>}, {pipeline_mode = #tpu.pipeline_mode<synchronous>, transform_indices = @transform_4, window_bounds = array<i64: 32, 32>}, {pipeline_mode = #tpu.pipeline_mode<synchronous>, transform_indices = @transform_5, window_bounds = array<i64: 288, 64>}, {pipeline_mode = #tpu.pipeline_mode<synchronous>, transform_indices = @transform_6, window_bounds = array<i64: 1, 64>}, {pipeline_mode = #tpu.pipeline_mode<synchronous>, transform_indices = @transform_7, window_bounds = array<i64: 1, 64>}, {pipeline_mode = #tpu.pipeline_mode<synchronous>, transform_indices = @transform_8, window_bounds = array<i64: 1, 64>}, {pipeline_mode = #tpu.pipeline_mode<synchronous>, transform_indices = @transform_9, window_bounds = array<i64: 64, 64>}, {pipeline_mode = #tpu.pipeline_mode<synchronous>, transform_indices = @transform_10, window_bounds = array<i64: 576, 128>}, {pipeline_mode = #tpu.pipeline_mode<synchronous>, transform_indices = @transform_11, window_bounds = array<i64: 1, 128>}, {pipeline_mode = #tpu.pipeline_mode<synchronous>, transform_indices = @transform_12, window_bounds = array<i64: 32, 128>}, {pipeline_mode = #tpu.pipeline_mode<synchronous>, transform_indices = @transform_13, window_bounds = array<i64: 1, 128>}, {transform_indices = @transform_14, window_bounds = array<i64: 1, 256, 128>}]} {
    %c0 = arith.constant 0 : index
    %c0_0 = arith.constant 0 : index
    %c0_1 = arith.constant 0 : index
    %0 = vector.load %arg1[%c0, %c0_0, %c0_1] : memref<1x256x32xf32, #tpu.memory_space<vmem>>, vector<1x256x32xf32>
    %1 = vector.shape_cast %0 : vector<1x256x32xf32> to vector<256x32xf32>
    %c0_2 = arith.constant 0 : index
    %c0_3 = arith.constant 0 : index
    %2 = vector.load %arg5[%c0_2, %c0_3] : memref<32x32xf32, #tpu.memory_space<vmem>>, vector<32x32xf32>
    %c0_4 = arith.constant 0 : index
    %c0_5 = arith.constant 0 : index
    %3 = vector.load %arg3[%c0_4, %c0_5] : memref<1x32xf32, #tpu.memory_space<vmem>>, vector<1x32xf32>
    %c0_6 = arith.constant 0 : index
    %c0_7 = arith.constant 0 : index
    %4 = vector.load %arg4[%c0_6, %c0_7] : memref<1x32xf32, #tpu.memory_space<vmem>>, vector<1x32xf32>
    %cst = arith.constant dense<0.000000e+00> : vector<32xf32>
    %5 = vector.multi_reduction <add>, %1, %cst [0] : vector<256x32xf32> to vector<32xf32>
    %6 = vector.shape_cast %5 : vector<32xf32> to vector<1x32xf32>
    %7 = arith.mulf %1, %1 : vector<256x32xf32>
    %cst_8 = arith.constant dense<0.000000e+00> : vector<32xf32>
    %8 = vector.multi_reduction <add>, %7, %cst_8 [0] : vector<256x32xf32> to vector<32xf32>
    %9 = vector.shape_cast %8 : vector<32xf32> to vector<1x32xf32>
    %cst_9 = arith.constant dense<0.000000e+00> : vector<1x32xf32>
    %10 = tpu.matmul %6, %2, %cst_9 {dimension_numbers = #tpu.dot_dimension_numbers<[1], [0], [0], [1], [0, 0, 1, 1], [], []>} : vector<1x32xf32>, vector<32x32xf32>, vector<1x32xf32> -> vector<1x32xf32>
    %cst_10 = arith.constant 3.906250e-03 : f32
    %11 = vector.broadcast %cst_10 : f32 to vector<1x32xf32>
    %12 = arith.mulf %10, %11 : vector<1x32xf32>
    %cst_11 = arith.constant dense<0.000000e+00> : vector<1x32xf32>
    %13 = tpu.matmul %9, %2, %cst_11 {dimension_numbers = #tpu.dot_dimension_numbers<[1], [0], [0], [1], [0, 0, 1, 1], [], []>} : vector<1x32xf32>, vector<32x32xf32>, vector<1x32xf32> -> vector<1x32xf32>
    %cst_12 = arith.constant 3.906250e-03 : f32
    %14 = vector.broadcast %cst_12 : f32 to vector<1x32xf32>
    %15 = arith.mulf %13, %14 : vector<1x32xf32>
    %16 = arith.mulf %12, %12 : vector<1x32xf32>
    %17 = arith.subf %15, %16 : vector<1x32xf32>
    %18 = vector.broadcast %12 : vector<1x32xf32> to vector<256x32xf32>
    %19 = arith.subf %1, %18 : vector<256x32xf32>
    %cst_13 = arith.constant 9.99999974E-6 : f32
    %20 = vector.broadcast %cst_13 : f32 to vector<1x32xf32>
    %21 = arith.addf %17, %20 : vector<1x32xf32>
    %22 = math.rsqrt %21 : vector<1x32xf32>
    %23 = vector.broadcast %22 : vector<1x32xf32> to vector<256x32xf32>
    %24 = arith.mulf %19, %23 : vector<256x32xf32>
    %25 = vector.broadcast %3 : vector<1x32xf32> to vector<256x32xf32>
    %26 = arith.mulf %24, %25 : vector<256x32xf32>
    %27 = vector.broadcast %4 : vector<1x32xf32> to vector<256x32xf32>
    %28 = arith.addf %26, %27 : vector<256x32xf32>
    %29 = arith.negf %28 : vector<256x32xf32>
    %30 = math.exp %29 : vector<256x32xf32>
    %cst_14 = arith.constant 1.000000e+00 : f32
    %31 = vector.broadcast %cst_14 : f32 to vector<256x32xf32>
    %32 = arith.addf %31, %30 : vector<256x32xf32>
    %33 = arith.divf %31, %32 : vector<256x32xf32>
    %34 = arith.mulf %28, %33 : vector<256x32xf32>
    %c0_15 = arith.constant 0 : index
    %c0_16 = arith.constant 0 : index
    %35 = vector.load %arg7[%c0_15, %c0_16] : memref<1x64xf32, #tpu.memory_space<vmem>>, vector<1x64xf32>
    %c17_i32 = arith.constant 17 : i32
    %36 = tpu.dynamic_rotate %34 by %c17_i32 dim 0 : vector<256x32xf32>, i32 -> vector<256x32xf32>
    %c0_17 = arith.constant 0 : index
    %c0_18 = arith.constant 0 : index
    %37 = vector.load %arg2[%c0_17, %c0_18] : memref<256x9xf32, #tpu.memory_space<vmem>>, vector<256x1xf32>
    %38 = vector.broadcast %37 : vector<256x1xf32> to vector<256x32xf32>
    %39 = arith.mulf %36, %38 : vector<256x32xf32>
    %c0_19 = arith.constant 0 : index
    %c0_20 = arith.constant 0 : index
    %40 = vector.load %arg16[%c0_19, %c0_20] : memref<256x288xf32, #tpu.memory_space<vmem>>, vector<256x32xf32>
    tpu.vector_store %arg16[%c0_19, %c0_20], %39 {strides = array<i32>} : memref<256x288xf32, #tpu.memory_space<vmem>>, vector<256x32xf32>,
    %c16_i32 = arith.constant 16 : i32
    %41 = tpu.dynamic_rotate %34 by %c16_i32 dim 0 : vector<256x32xf32>, i32 -> vector<256x32xf32>
    %c0_21 = arith.constant 0 : index
    %c1 = arith.constant 1 : index
    %42 = vector.load %arg2[%c0_21, %c1] : memref<256x9xf32, #tpu.memory_space<vmem>>, vector<256x1xf32>
    %43 = vector.broadcast %42 : vector<256x1xf32> to vector<256x32xf32>
    %44 = arith.mulf %41, %43 : vector<256x32xf32>
    %c0_22 = arith.constant 0 : index
    %c32 = arith.constant 32 : index
    %45 = vector.load %arg16[%c0_22, %c32] : memref<256x288xf32, #tpu.memory_space<vmem>>, vector<256x32xf32>
    tpu.vector_store %arg16[%c0_22, %c32], %44 {strides = array<i32>} : memref<256x288xf32, #tpu.memory_space<vmem>>, vector<256x32xf32>,
    %c15_i32 = arith.constant 15 : i32
    %46 = tpu.dynamic_rotate %34 by %c15_i32 dim 0 : vector<256x32xf32>, i32 -> vector<256x32xf32>
    %c0_23 = arith.constant 0 : index
    %c2 = arith.constant 2 : index
    %47 = vector.load %arg2[%c0_23, %c2] : memref<256x9xf32, #tpu.memory_space<vmem>>, vector<256x1xf32>
    %48 = vector.broadcast %47 : vector<256x1xf32> to vector<256x32xf32>
    %49 = arith.mulf %46, %48 : vector<256x32xf32>
    %c0_24 = arith.constant 0 : index
    %c64 = arith.constant 64 : index
    %50 = vector.load %arg16[%c0_24, %c64] : memref<256x288xf32, #tpu.memory_space<vmem>>, vector<256x32xf32>
    tpu.vector_store %arg16[%c0_24, %c64], %49 {strides = array<i32>} : memref<256x288xf32, #tpu.memory_space<vmem>>, vector<256x32xf32>,
    %c1_i32 = arith.constant 1 : i32
    %51 = tpu.dynamic_rotate %34 by %c1_i32 dim 0 : vector<256x32xf32>, i32 -> vector<256x32xf32>
    %c0_25 = arith.constant 0 : index
    %c3 = arith.constant 3 : index
    %52 = vector.load %arg2[%c0_25, %c3] : memref<256x9xf32, #tpu.memory_space<vmem>>, vector<256x1xf32>
    %53 = vector.broadcast %52 : vector<256x1xf32> to vector<256x32xf32>
    %54 = arith.mulf %51, %53 : vector<256x32xf32>
    %c0_26 = arith.constant 0 : index
    %c96 = arith.constant 96 : index
    %55 = vector.load %arg16[%c0_26, %c96] : memref<256x288xf32, #tpu.memory_space<vmem>>, vector<256x32xf32>
    tpu.vector_store %arg16[%c0_26, %c96], %54 {strides = array<i32>} : memref<256x288xf32, #tpu.memory_space<vmem>>, vector<256x32xf32>,
    %c0_27 = arith.constant 0 : index
    %c128 = arith.constant 128 : index
    %56 = vector.load %arg16[%c0_27, %c128] : memref<256x288xf32, #tpu.memory_space<vmem>>, vector<256x32xf32>
    tpu.vector_store %arg16[%c0_27, %c128], %34 {strides = array<i32>} : memref<256x288xf32, #tpu.memory_space<vmem>>, vector<256x32xf32>,
    %c255_i32 = arith.constant 255 : i32
    %57 = tpu.dynamic_rotate %34 by %c255_i32 dim 0 : vector<256x32xf32>, i32 -> vector<256x32xf32>
    %c0_28 = arith.constant 0 : index
    %c5 = arith.constant 5 : index
    %58 = vector.load %arg2[%c0_28, %c5] : memref<256x9xf32, #tpu.memory_space<vmem>>, vector<256x1xf32>
    %59 = vector.broadcast %58 : vector<256x1xf32> to vector<256x32xf32>
    %60 = arith.mulf %57, %59 : vector<256x32xf32>
    %c0_29 = arith.constant 0 : index
    %c160 = arith.constant 160 : index
    %61 = vector.load %arg16[%c0_29, %c160] : memref<256x288xf32, #tpu.memory_space<vmem>>, vector<256x32xf32>
    tpu.vector_store %arg16[%c0_29, %c160], %60 {strides = array<i32>} : memref<256x288xf32, #tpu.memory_space<vmem>>, vector<256x32xf32>,
    %c241_i32 = arith.constant 241 : i32
    %62 = tpu.dynamic_rotate %34 by %c241_i32 dim 0 : vector<256x32xf32>, i32 -> vector<256x32xf32>
    %c0_30 = arith.constant 0 : index
    %c6 = arith.constant 6 : index
    %63 = vector.load %arg2[%c0_30, %c6] : memref<256x9xf32, #tpu.memory_space<vmem>>, vector<256x1xf32>
    %64 = vector.broadcast %63 : vector<256x1xf32> to vector<256x32xf32>
    %65 = arith.mulf %62, %64 : vector<256x32xf32>
    %c0_31 = arith.constant 0 : index
    %c192 = arith.constant 192 : index
    %66 = vector.load %arg16[%c0_31, %c192] : memref<256x288xf32, #tpu.memory_space<vmem>>, vector<256x32xf32>
    tpu.vector_store %arg16[%c0_31, %c192], %65 {strides = array<i32>} : memref<256x288xf32, #tpu.memory_space<vmem>>, vector<256x32xf32>,
    %c240_i32 = arith.constant 240 : i32
    %67 = tpu.dynamic_rotate %34 by %c240_i32 dim 0 : vector<256x32xf32>, i32 -> vector<256x32xf32>
    %c0_32 = arith.constant 0 : index
    %c7 = arith.constant 7 : index
    %68 = vector.load %arg2[%c0_32, %c7] : memref<256x9xf32, #tpu.memory_space<vmem>>, vector<256x1xf32>
    %69 = vector.broadcast %68 : vector<256x1xf32> to vector<256x32xf32>
    %70 = arith.mulf %67, %69 : vector<256x32xf32>
    %c0_33 = arith.constant 0 : index
    %c224 = arith.constant 224 : index
    %71 = vector.load %arg16[%c0_33, %c224] : memref<256x288xf32, #tpu.memory_space<vmem>>, vector<256x32xf32>
    tpu.vector_store %arg16[%c0_33, %c224], %70 {strides = array<i32>} : memref<256x288xf32, #tpu.memory_space<vmem>>, vector<256x32xf32>,
    %c239_i32 = arith.constant 239 : i32
    %72 = tpu.dynamic_rotate %34 by %c239_i32 dim 0 : vector<256x32xf32>, i32 -> vector<256x32xf32>
    %c0_34 = arith.constant 0 : index
    %c8 = arith.constant 8 : index
    %73 = vector.load %arg2[%c0_34, %c8] : memref<256x9xf32, #tpu.memory_space<vmem>>, vector<256x1xf32>
    %74 = vector.broadcast %73 : vector<256x1xf32> to vector<256x32xf32>
    %75 = arith.mulf %72, %74 : vector<256x32xf32>
    %c0_35 = arith.constant 0 : index
    %c256 = arith.constant 256 : index
    %76 = vector.load %arg16[%c0_35, %c256] : memref<256x288xf32, #tpu.memory_space<vmem>>, vector<256x32xf32>
    tpu.vector_store %arg16[%c0_35, %c256], %75 {strides = array<i32>} : memref<256x288xf32, #tpu.memory_space<vmem>>, vector<256x32xf32>,
    %c0_36 = arith.constant 0 : index
    %c0_37 = arith.constant 0 : index
    %77 = vector.load %arg16[%c0_36, %c0_37] : memref<256x288xf32, #tpu.memory_space<vmem>>, vector<256x288xf32>
    %78 = arith.truncf %77 : vector<256x288xf32> to vector<256x288xbf16>
    %c0_38 = arith.constant 0 : index
    %c0_39 = arith.constant 0 : index
    %79 = vector.load %arg6[%c0_38, %c0_39] : memref<288x64xbf16, #tpu.memory_space<vmem>>, vector<288x64xbf16>
    %cst_40 = arith.constant dense<0.000000e+00> : vector<256x64xf32>
    %80 = tpu.matmul %78, %79, %cst_40 {dimension_numbers = #tpu.dot_dimension_numbers<[1], [0], [0], [1], [0, 0, 1, 1], [], []>} : vector<256x288xbf16>, vector<288x64xbf16>, vector<256x64xf32> -> vector<256x64xf32>
    %81 = vector.broadcast %35 : vector<1x64xf32> to vector<256x64xf32>
    %82 = arith.addf %80, %81 : vector<256x64xf32>
    %c0_41 = arith.constant 0 : index
    %c0_42 = arith.constant 0 : index
    %83 = vector.load %arg10[%c0_41, %c0_42] : memref<64x64xf32, #tpu.memory_space<vmem>>, vector<64x64xf32>
    %c0_43 = arith.constant 0 : index
    %c0_44 = arith.constant 0 : index
    %84 = vector.load %arg8[%c0_43, %c0_44] : memref<1x64xf32, #tpu.memory_space<vmem>>, vector<1x64xf32>
    %c0_45 = arith.constant 0 : index
    %c0_46 = arith.constant 0 : index
    %85 = vector.load %arg9[%c0_45, %c0_46] : memref<1x64xf32, #tpu.memory_space<vmem>>, vector<1x64xf32>
    %cst_47 = arith.constant dense<0.000000e+00> : vector<64xf32>
    %86 = vector.multi_reduction <add>, %82, %cst_47 [0] : vector<256x64xf32> to vector<64xf32>
    %87 = vector.shape_cast %86 : vector<64xf32> to vector<1x64xf32>
    %88 = arith.mulf %82, %82 : vector<256x64xf32>
    %cst_48 = arith.constant dense<0.000000e+00> : vector<64xf32>
    %89 = vector.multi_reduction <add>, %88, %cst_48 [0] : vector<256x64xf32> to vector<64xf32>
    %90 = vector.shape_cast %89 : vector<64xf32> to vector<1x64xf32>
    %cst_49 = arith.constant dense<0.000000e+00> : vector<1x64xf32>
    %91 = tpu.matmul %87, %83, %cst_49 {dimension_numbers = #tpu.dot_dimension_numbers<[1], [0], [0], [1], [0, 0, 1, 1], [], []>} : vector<1x64xf32>, vector<64x64xf32>, vector<1x64xf32> -> vector<1x64xf32>
    %cst_50 = arith.constant 3.906250e-03 : f32
    %92 = vector.broadcast %cst_50 : f32 to vector<1x64xf32>
    %93 = arith.mulf %91, %92 : vector<1x64xf32>
    %cst_51 = arith.constant dense<0.000000e+00> : vector<1x64xf32>
    %94 = tpu.matmul %90, %83, %cst_51 {dimension_numbers = #tpu.dot_dimension_numbers<[1], [0], [0], [1], [0, 0, 1, 1], [], []>} : vector<1x64xf32>, vector<64x64xf32>, vector<1x64xf32> -> vector<1x64xf32>
    %cst_52 = arith.constant 3.906250e-03 : f32
    %95 = vector.broadcast %cst_52 : f32 to vector<1x64xf32>
    %96 = arith.mulf %94, %95 : vector<1x64xf32>
    %97 = arith.mulf %93, %93 : vector<1x64xf32>
    %98 = arith.subf %96, %97 : vector<1x64xf32>
    %99 = vector.broadcast %93 : vector<1x64xf32> to vector<256x64xf32>
    %100 = arith.subf %82, %99 : vector<256x64xf32>
    %cst_53 = arith.constant 9.99999974E-6 : f32
    %101 = vector.broadcast %cst_53 : f32 to vector<1x64xf32>
    %102 = arith.addf %98, %101 : vector<1x64xf32>
    %103 = math.rsqrt %102 : vector<1x64xf32>
    %104 = vector.broadcast %103 : vector<1x64xf32> to vector<256x64xf32>
    %105 = arith.mulf %100, %104 : vector<256x64xf32>
    %106 = vector.broadcast %84 : vector<1x64xf32> to vector<256x64xf32>
    %107 = arith.mulf %105, %106 : vector<256x64xf32>
    %108 = vector.broadcast %85 : vector<1x64xf32> to vector<256x64xf32>
    %109 = arith.addf %107, %108 : vector<256x64xf32>
    %110 = arith.negf %109 : vector<256x64xf32>
    %111 = math.exp %110 : vector<256x64xf32>
    %cst_54 = arith.constant 1.000000e+00 : f32
    %112 = vector.broadcast %cst_54 : f32 to vector<256x64xf32>
    %113 = arith.addf %112, %111 : vector<256x64xf32>
    %114 = arith.divf %112, %113 : vector<256x64xf32>
    %115 = arith.mulf %109, %114 : vector<256x64xf32>
    %c0_55 = arith.constant 0 : index
    %c0_56 = arith.constant 0 : index
    %116 = vector.load %arg12[%c0_55, %c0_56] : memref<1x128xf32, #tpu.memory_space<vmem>>, vector<1x128xf32>
    %c17_i32_57 = arith.constant 17 : i32
    %117 = tpu.dynamic_rotate %115 by %c17_i32_57 dim 0 : vector<256x64xf32>, i32 -> vector<256x64xf32>
    %c0_58 = arith.constant 0 : index
    %c0_59 = arith.constant 0 : index
    %118 = vector.load %arg2[%c0_58, %c0_59] : memref<256x9xf32, #tpu.memory_space<vmem>>, vector<256x1xf32>
    %119 = vector.broadcast %118 : vector<256x1xf32> to vector<256x64xf32>
    %120 = arith.mulf %117, %119 : vector<256x64xf32>
    %c0_60 = arith.constant 0 : index
    %c0_61 = arith.constant 0 : index
    %121 = vector.load %arg17[%c0_60, %c0_61] : memref<256x576xf32, #tpu.memory_space<vmem>>, vector<256x64xf32>
    tpu.vector_store %arg17[%c0_60, %c0_61], %120 {strides = array<i32>} : memref<256x576xf32, #tpu.memory_space<vmem>>, vector<256x64xf32>,
    %c16_i32_62 = arith.constant 16 : i32
    %122 = tpu.dynamic_rotate %115 by %c16_i32_62 dim 0 : vector<256x64xf32>, i32 -> vector<256x64xf32>
    %c0_63 = arith.constant 0 : index
    %c1_64 = arith.constant 1 : index
    %123 = vector.load %arg2[%c0_63, %c1_64] : memref<256x9xf32, #tpu.memory_space<vmem>>, vector<256x1xf32>
    %124 = vector.broadcast %123 : vector<256x1xf32> to vector<256x64xf32>
    %125 = arith.mulf %122, %124 : vector<256x64xf32>
    %c0_65 = arith.constant 0 : index
    %c64_66 = arith.constant 64 : index
    %126 = vector.load %arg17[%c0_65, %c64_66] : memref<256x576xf32, #tpu.memory_space<vmem>>, vector<256x64xf32>
    tpu.vector_store %arg17[%c0_65, %c64_66], %125 {strides = array<i32>} : memref<256x576xf32, #tpu.memory_space<vmem>>, vector<256x64xf32>,
    %c15_i32_67 = arith.constant 15 : i32
    %127 = tpu.dynamic_rotate %115 by %c15_i32_67 dim 0 : vector<256x64xf32>, i32 -> vector<256x64xf32>
    %c0_68 = arith.constant 0 : index
    %c2_69 = arith.constant 2 : index
    %128 = vector.load %arg2[%c0_68, %c2_69] : memref<256x9xf32, #tpu.memory_space<vmem>>, vector<256x1xf32>
    %129 = vector.broadcast %128 : vector<256x1xf32> to vector<256x64xf32>
    %130 = arith.mulf %127, %129 : vector<256x64xf32>
    %c0_70 = arith.constant 0 : index
    %c128_71 = arith.constant 128 : index
    %131 = vector.load %arg17[%c0_70, %c128_71] : memref<256x576xf32, #tpu.memory_space<vmem>>, vector<256x64xf32>
    tpu.vector_store %arg17[%c0_70, %c128_71], %130 {strides = array<i32>} : memref<256x576xf32, #tpu.memory_space<vmem>>, vector<256x64xf32>,
    %c1_i32_72 = arith.constant 1 : i32
    %132 = tpu.dynamic_rotate %115 by %c1_i32_72 dim 0 : vector<256x64xf32>, i32 -> vector<256x64xf32>
    %c0_73 = arith.constant 0 : index
    %c3_74 = arith.constant 3 : index
    %133 = vector.load %arg2[%c0_73, %c3_74] : memref<256x9xf32, #tpu.memory_space<vmem>>, vector<256x1xf32>
    %134 = vector.broadcast %133 : vector<256x1xf32> to vector<256x64xf32>
    %135 = arith.mulf %132, %134 : vector<256x64xf32>
    %c0_75 = arith.constant 0 : index
    %c192_76 = arith.constant 192 : index
    %136 = vector.load %arg17[%c0_75, %c192_76] : memref<256x576xf32, #tpu.memory_space<vmem>>, vector<256x64xf32>
    tpu.vector_store %arg17[%c0_75, %c192_76], %135 {strides = array<i32>} : memref<256x576xf32, #tpu.memory_space<vmem>>, vector<256x64xf32>,
    %c0_77 = arith.constant 0 : index
    %c256_78 = arith.constant 256 : index
    %137 = vector.load %arg17[%c0_77, %c256_78] : memref<256x576xf32, #tpu.memory_space<vmem>>, vector<256x64xf32>
    tpu.vector_store %arg17[%c0_77, %c256_78], %115 {strides = array<i32>} : memref<256x576xf32, #tpu.memory_space<vmem>>, vector<256x64xf32>,
    %c255_i32_79 = arith.constant 255 : i32
    %138 = tpu.dynamic_rotate %115 by %c255_i32_79 dim 0 : vector<256x64xf32>, i32 -> vector<256x64xf32>
    %c0_80 = arith.constant 0 : index
    %c5_81 = arith.constant 5 : index
    %139 = vector.load %arg2[%c0_80, %c5_81] : memref<256x9xf32, #tpu.memory_space<vmem>>, vector<256x1xf32>
    %140 = vector.broadcast %139 : vector<256x1xf32> to vector<256x64xf32>
    %141 = arith.mulf %138, %140 : vector<256x64xf32>
    %c0_82 = arith.constant 0 : index
    %c320 = arith.constant 320 : index
    %142 = vector.load %arg17[%c0_82, %c320] : memref<256x576xf32, #tpu.memory_space<vmem>>, vector<256x64xf32>
    tpu.vector_store %arg17[%c0_82, %c320], %141 {strides = array<i32>} : memref<256x576xf32, #tpu.memory_space<vmem>>, vector<256x64xf32>,
    %c241_i32_83 = arith.constant 241 : i32
    %143 = tpu.dynamic_rotate %115 by %c241_i32_83 dim 0 : vector<256x64xf32>, i32 -> vector<256x64xf32>
    %c0_84 = arith.constant 0 : index
    %c6_85 = arith.constant 6 : index
    %144 = vector.load %arg2[%c0_84, %c6_85] : memref<256x9xf32, #tpu.memory_space<vmem>>, vector<256x1xf32>
    %145 = vector.broadcast %144 : vector<256x1xf32> to vector<256x64xf32>
    %146 = arith.mulf %143, %145 : vector<256x64xf32>
    %c0_86 = arith.constant 0 : index
    %c384 = arith.constant 384 : index
    %147 = vector.load %arg17[%c0_86, %c384] : memref<256x576xf32, #tpu.memory_space<vmem>>, vector<256x64xf32>
    tpu.vector_store %arg17[%c0_86, %c384], %146 {strides = array<i32>} : memref<256x576xf32, #tpu.memory_space<vmem>>, vector<256x64xf32>,
    %c240_i32_87 = arith.constant 240 : i32
    %148 = tpu.dynamic_rotate %115 by %c240_i32_87 dim 0 : vector<256x64xf32>, i32 -> vector<256x64xf32>
    %c0_88 = arith.constant 0 : index
    %c7_89 = arith.constant 7 : index
    %149 = vector.load %arg2[%c0_88, %c7_89] : memref<256x9xf32, #tpu.memory_space<vmem>>, vector<256x1xf32>
    %150 = vector.broadcast %149 : vector<256x1xf32> to vector<256x64xf32>
    %151 = arith.mulf %148, %150 : vector<256x64xf32>
    %c0_90 = arith.constant 0 : index
    %c448 = arith.constant 448 : index
    %152 = vector.load %arg17[%c0_90, %c448] : memref<256x576xf32, #tpu.memory_space<vmem>>, vector<256x64xf32>
    tpu.vector_store %arg17[%c0_90, %c448], %151 {strides = array<i32>} : memref<256x576xf32, #tpu.memory_space<vmem>>, vector<256x64xf32>,
    %c239_i32_91 = arith.constant 239 : i32
    %153 = tpu.dynamic_rotate %115 by %c239_i32_91 dim 0 : vector<256x64xf32>, i32 -> vector<256x64xf32>
    %c0_92 = arith.constant 0 : index
    %c8_93 = arith.constant 8 : index
    %154 = vector.load %arg2[%c0_92, %c8_93] : memref<256x9xf32, #tpu.memory_space<vmem>>, vector<256x1xf32>
    %155 = vector.broadcast %154 : vector<256x1xf32> to vector<256x64xf32>
    %156 = arith.mulf %153, %155 : vector<256x64xf32>
    %c0_94 = arith.constant 0 : index
    %c512 = arith.constant 512 : index
    %157 = vector.load %arg17[%c0_94, %c512] : memref<256x576xf32, #tpu.memory_space<vmem>>, vector<256x64xf32>
    tpu.vector_store %arg17[%c0_94, %c512], %156 {strides = array<i32>} : memref<256x576xf32, #tpu.memory_space<vmem>>, vector<256x64xf32>,
    %c0_95 = arith.constant 0 : index
    %c0_96 = arith.constant 0 : index
    %158 = vector.load %arg17[%c0_95, %c0_96] : memref<256x576xf32, #tpu.memory_space<vmem>>, vector<256x576xf32>
    %159 = arith.truncf %158 : vector<256x576xf32> to vector<256x576xbf16>
    %c0_97 = arith.constant 0 : index
    %c0_98 = arith.constant 0 : index
    %160 = vector.load %arg11[%c0_97, %c0_98] : memref<576x128xbf16, #tpu.memory_space<vmem>>, vector<576x128xbf16>
    %cst_99 = arith.constant dense<0.000000e+00> : vector<256x128xf32>
    %161 = tpu.matmul %159, %160, %cst_99 {dimension_numbers = #tpu.dot_dimension_numbers<[1], [0], [0], [1], [0, 0, 1, 1], [], []>} : vector<256x576xbf16>, vector<576x128xbf16>, vector<256x128xf32> -> vector<256x128xf32>
    %162 = vector.broadcast %116 : vector<1x128xf32> to vector<256x128xf32>
    %163 = arith.addf %161, %162 : vector<256x128xf32>
    %164 = arith.truncf %1 : vector<256x32xf32> to vector<256x32xbf16>
    %c0_100 = arith.constant 0 : index
    %c0_101 = arith.constant 0 : index
    %165 = vector.load %arg13[%c0_100, %c0_101] : memref<32x128xbf16, #tpu.memory_space<vmem>>, vector<32x128xbf16>
    %cst_102 = arith.constant dense<0.000000e+00> : vector<256x128xf32>
    %166 = tpu.matmul %164, %165, %cst_102 {dimension_numbers = #tpu.dot_dimension_numbers<[1], [0], [0], [1], [0, 0, 1, 1], [], []>} : vector<256x32xbf16>, vector<32x128xbf16>, vector<256x128xf32> -> vector<256x128xf32>
    %c0_103 = arith.constant 0 : index
    %c0_104 = arith.constant 0 : index
    %167 = vector.load %arg14[%c0_103, %c0_104] : memref<1x128xf32, #tpu.memory_space<vmem>>, vector<1x128xf32>
    %168 = vector.broadcast %167 : vector<1x128xf32> to vector<256x128xf32>
    %169 = arith.addf %166, %168 : vector<256x128xf32>
    %170 = arith.addf %169, %163 : vector<256x128xf32>
    %c0_105 = arith.constant 0 : index
    %c0_106 = arith.constant 0 : index
    %c0_107 = arith.constant 0 : index
    %171 = vector.load %arg15[%c0_105, %c0_106, %c0_107] : memref<1x256x128xf32, #tpu.memory_space<vmem>>, vector<1x256x128xf32>
    %172 = vector.shape_cast %171 : vector<1x256x128xf32> to vector<256x128xf32>
    %173 = vector.shape_cast %170 : vector<256x128xf32> to vector<1x256x128xf32>
    tpu.vector_store %arg15[%c0_105, %c0_106, %c0_107], %173 {strides = array<i32>} : memref<1x256x128xf32, #tpu.memory_space<vmem>>, vector<1x256x128xf32>,
    return
  }
  func.func @transform_0(%arg0: i32) -> (i32, i32, i32) {
    %c0_i32 = arith.constant 0 : i32
    %c0_i32_0 = arith.constant 0 : i32
    %c0_i32_1 = arith.constant 0 : i32
    return %arg0, %c0_i32, %c0_i32_0 : i32, i32, i32
  }
  func.func @transform_1(%arg0: i32) -> (i32, i32) {
    %c0_i32 = arith.constant 0 : i32
    %c0_i32_0 = arith.constant 0 : i32
    %c0_i32_1 = arith.constant 0 : i32
    return %c0_i32, %c0_i32_0 : i32, i32
  }
  func.func @transform_2(%arg0: i32) -> (i32, i32) {
    %c0_i32 = arith.constant 0 : i32
    %c0_i32_0 = arith.constant 0 : i32
    %c0_i32_1 = arith.constant 0 : i32
    return %c0_i32, %c0_i32_0 : i32, i32
  }
  func.func @transform_3(%arg0: i32) -> (i32, i32) {
    %c0_i32 = arith.constant 0 : i32
    %c0_i32_0 = arith.constant 0 : i32
    %c0_i32_1 = arith.constant 0 : i32
    return %c0_i32, %c0_i32_0 : i32, i32
  }
  func.func @transform_4(%arg0: i32) -> (i32, i32) {
    %c0_i32 = arith.constant 0 : i32
    %c0_i32_0 = arith.constant 0 : i32
    %c0_i32_1 = arith.constant 0 : i32
    return %c0_i32, %c0_i32_0 : i32, i32
  }
  func.func @transform_5(%arg0: i32) -> (i32, i32) {
    %c0_i32 = arith.constant 0 : i32
    %c0_i32_0 = arith.constant 0 : i32
    %c0_i32_1 = arith.constant 0 : i32
    return %c0_i32, %c0_i32_0 : i32, i32
  }
  func.func @transform_6(%arg0: i32) -> (i32, i32) {
    %c0_i32 = arith.constant 0 : i32
    %c0_i32_0 = arith.constant 0 : i32
    %c0_i32_1 = arith.constant 0 : i32
    return %c0_i32, %c0_i32_0 : i32, i32
  }
  func.func @transform_7(%arg0: i32) -> (i32, i32) {
    %c0_i32 = arith.constant 0 : i32
    %c0_i32_0 = arith.constant 0 : i32
    %c0_i32_1 = arith.constant 0 : i32
    return %c0_i32, %c0_i32_0 : i32, i32
  }
  func.func @transform_8(%arg0: i32) -> (i32, i32) {
    %c0_i32 = arith.constant 0 : i32
    %c0_i32_0 = arith.constant 0 : i32
    %c0_i32_1 = arith.constant 0 : i32
    return %c0_i32, %c0_i32_0 : i32, i32
  }
  func.func @transform_9(%arg0: i32) -> (i32, i32) {
    %c0_i32 = arith.constant 0 : i32
    %c0_i32_0 = arith.constant 0 : i32
    %c0_i32_1 = arith.constant 0 : i32
    return %c0_i32, %c0_i32_0 : i32, i32
  }
  func.func @transform_10(%arg0: i32) -> (i32, i32) {
    %c0_i32 = arith.constant 0 : i32
    %c0_i32_0 = arith.constant 0 : i32
    %c0_i32_1 = arith.constant 0 : i32
    return %c0_i32, %c0_i32_0 : i32, i32
  }
  func.func @transform_11(%arg0: i32) -> (i32, i32) {
    %c0_i32 = arith.constant 0 : i32
    %c0_i32_0 = arith.constant 0 : i32
    %c0_i32_1 = arith.constant 0 : i32
    return %c0_i32, %c0_i32_0 : i32, i32
  }
  func.func @transform_12(%arg0: i32) -> (i32, i32) {
    %c0_i32 = arith.constant 0 : i32
    %c0_i32_0 = arith.constant 0 : i32
    %c0_i32_1 = arith.constant 0 : i32
    return %c0_i32, %c0_i32_0 : i32, i32
  }
  func.func @transform_13(%arg0: i32) -> (i32, i32) {
    %c0_i32 = arith.constant 0 : i32
    %c0_i32_0 = arith.constant 0 : i32
    %c0_i32_1 = arith.constant 0 : i32
    return %c0_i32, %c0_i32_0 : i32, i32
  }
  func.func @transform_14(%arg0: i32) -> (i32, i32, i32) {
    %c0_i32 = arith.constant 0 : i32
    %c0_i32_0 = arith.constant 0 : i32
    %c0_i32_1 = arith.constant 0 : i32
    return %arg0, %c0_i32, %c0_i32_0 : i32, i32, i32
  }
}

</mosaic_0001>

<llo_original>
// kernel: tpu_custom_call.1
$region0: #{tpu_custom_call.1}
  #allocation0 [shape = 'u32[]', space=smem, size = 0x4, offset = 0x4, fixed_abs, tag = 'smem constant byte address 0x4 - core index']
  #allocation1 [shape = 'u32[144,128]{1,0:T(1,128)}', space=vmem, size = 0x12000, scoped, tag = 'internal scratch']
  #allocation2 [shape = 'f32[256,288]{1,0:T(8,128)}', space=vmem, size = 0x60000, scoped, tag = 'scratch operand']
  #allocation3 [shape = 'f32[256,576]{1,0:T(8,128)}', space=vmem, size = 0xa0000, scoped, tag = 'scratch operand']
  %s0 = inlined_call_operand.vmem [shape: f32[2,256,32], index: 0, kind: input, shape index: {}]
  %s1 = inlined_call_operand.vmem [shape: f32[256,9], index: 1, kind: input, shape index: {}]
  %s2 = inlined_call_operand.vmem [shape: f32[1,32], index: 2, kind: input, shape index: {}]
  %s3 = inlined_call_operand.vmem [shape: f32[1,32], index: 3, kind: input, shape index: {}]
  %s4 = inlined_call_operand.vmem [shape: f32[32,32], index: 4, kind: input, shape index: {}]
  %s5 = inlined_call_operand.vmem [shape: bf16[288,64], index: 5, kind: input, shape index: {}]
  %s6 = inlined_call_operand.vmem [shape: f32[1,64], index: 6, kind: input, shape index: {}]
  %s7 = inlined_call_operand.vmem [shape: f32[1,64], index: 7, kind: input, shape index: {}]
  %s8 = inlined_call_operand.vmem [shape: f32[1,64], index: 8, kind: input, shape index: {}]
  %s9 = inlined_call_operand.vmem [shape: f32[64,64], index: 9, kind: input, shape index: {}]
  %s10 = inlined_call_operand.vmem [shape: bf16[576,128], index: 10, kind: input, shape index: {}]
  %s11 = inlined_call_operand.vmem [shape: f32[1,128], index: 11, kind: input, shape index: {}]
  %s12 = inlined_call_operand.vmem [shape: bf16[32,128], index: 12, kind: input, shape index: {}]
  %s13 = inlined_call_operand.vmem [shape: f32[1,128], index: 13, kind: input, shape index: {}]
  %s14 = inlined_call_operand.hbm [shape: f32[2,256,128], index: 14, kind: output, shape index: {}]
  %s15 = sld [smem:[#allocation0]]
  $region89: #{tpu_custom_call.1} parent=0
    _
  %s17 = ssub.s32 1, %s15
  %s18 = scalar_select 0, %s17, %s15
  $region1: #{tpu_custom_call.1} parent=0
    #allocation4 [shape = 'u8[262144]{0}', space=vmem, size = 0x40000, scoped, tag = 'output window, operand 0']
    #allocation5 [shape = 's32[2]{0}', space=sflag, size = 0x8, scoped, tag = 'scoped memory for tpu_custom_call.1']
    %19 = vsyncpa [#allocation5], 0
    %s20 = scalar_lea.sflag [#allocation5], 1
    %21 = vsyncpa %s20, 0
    loop: start=0, step=1, limit=4
    $region2: #{tpu_custom_call.1} parent=1 // loop_pre_header
      _
    $region3: #{tpu_custom_call.1} parent=1 // loop_header
      %s23 = sphi 0, %s27
      %p24 = scmp.ge.s32.totalorder %s23, 4
      %s33 = sphi 0, %s35
      %s36 = sphi 0, %s33
      %s37 = sphi 0, %s36
      %s53 = sphi 0, %s37
      %s57 = sphi 0, %s57
      %s59 = sphi 0, %s57
      %s60 = sphi 0, %s59
      %s74 = sphi 0, %s60
      %s78 = sphi 0, %s78
      %s80 = sphi 0, %s78
      %s81 = sphi 0, %s80
      %s95 = sphi 0, %s81
      %s99 = sphi 0, %s99
      %s101 = sphi 0, %s99
      %s102 = sphi 0, %s101
      %s116 = sphi 0, %s102
      %s120 = sphi 0, %s120
      %s122 = sphi 0, %s120
      %s123 = sphi 0, %s122
      %s137 = sphi 0, %s123
      %s141 = sphi 0, %s141
      %s143 = sphi 0, %s141
      %s144 = sphi 0, %s143
      %s158 = sphi 0, %s144
      %s162 = sphi 0, %s162
      %s164 = sphi 0, %s162
      %s165 = sphi 0, %s164
      %s179 = sphi 0, %s165
      %s183 = sphi 0, %s183
      %s185 = sphi 0, %s183
      %s186 = sphi 0, %s185
      %s200 = sphi 0, %s186
      %s204 = sphi 0, %s204
      %s206 = sphi 0, %s204
      %s207 = sphi 0, %s206
      %s221 = sphi 0, %s207
      %s225 = sphi 0, %s225
      %s227 = sphi 0, %s225
      %s228 = sphi 0, %s227
      %s242 = sphi 0, %s228
      %s246 = sphi 0, %s246
      %s248 = sphi 0, %s246
      %s249 = sphi 0, %s248
      %s263 = sphi 0, %s249
      %s267 = sphi 0, %s267
      %s269 = sphi 0, %s267
      %s270 = sphi 0, %s269
      %s284 = sphi 0, %s270
      %s288 = sphi 0, %s288
      %s290 = sphi 0, %s288
      %s291 = sphi 0, %s290
      %s305 = sphi 0, %s291
      %s309 = sphi 0, %s309
      %s311 = sphi 0, %s309
      %s312 = sphi 0, %s311
      %s326 = sphi 0, %s312
      %s332 = sphi 0, %s334
      %s335 = sphi 0, %s332
      %s336 = sphi 0, %s335
      %s352 = sphi 0, %s336
    $region4: #{tpu_custom_call.1} parent=1 // loop_header_branch
      %26 = sbr.rel (%p24) target = $region8
    $region5: #{tpu_custom_call.1} parent=1 // loop_body
      %s28 = ssub.s32 %s23, 1
      %s29 = ssub.s32 %s23, 2
      %s30 = sadd.s32 %s23, 1
      %s31 = ssub.s32 %s23, %s30
      %p32 = scmp.eq.s32.totalorder %s31, 0
      %s34 = sadd.s32 %s33, 1
      %s35 = scalar_select %p32, %s33, %s34
      %p38 = pneg %p32
      %p39 = scmp.eq.s32.totalorder %s23, 1
      %p40 = por %p38, %p39
      %p41 = scmp.ne.s32.totalorder %s33, %s36
      %p42 = scmp.eq.s32.totalorder %s23, 0
      %p43 = por %p41, %p42
      %p44 = scmp.ne.s32.totalorder %s33, %s36
      %p45 = scmp.eq.s32.totalorder %s28, 1
      %p46 = por %p44, %p45
      %p47 = scmp.ne.s32.totalorder %s36, %s37
      %p48 = scmp.eq.s32.totalorder %s28, 0
      %p49 = por %p47, %p48
      %p50 = scmp.ne.s32.totalorder %s36, %s37
      %p51 = scmp.eq.s32.totalorder %s29, 1
      %p52 = por %p50, %p51
      %p54 = scmp.ne.s32.totalorder %s37, %s53
      %p55 = scmp.eq.s32.totalorder %s29, 0
      %p56 = por %p54, %p55
      %s58 = sadd.s32 %s57, 1
      %p61 = scmp.eq.s32.totalorder %s23, 1
      %p62 = scmp.ne.s32.totalorder %s57, %s59
      %p63 = scmp.eq.s32.totalorder %s23, 0
      %p64 = por %p62, %p63
      %p65 = scmp.ne.s32.totalorder %s57, %s59
      %p66 = scmp.eq.s32.totalorder %s28, 1
      %p67 = por %p65, %p66
      %p68 = scmp.ne.s32.totalorder %s59, %s60
      %p69 = scmp.eq.s32.totalorder %s28, 0
      %p70 = por %p68, %p69
      %p71 = scmp.ne.s32.totalorder %s59, %s60
      %p72 = scmp.eq.s32.totalorder %s29, 1
      %p73 = por %p71, %p72
      %p75 = scmp.ne.s32.totalorder %s60, %s74
      %p76 = scmp.eq.s32.totalorder %s29, 0
      %p77 = por %p75, %p76
      %s79 = sadd.s32 %s78, 1
      %p82 = scmp.eq.s32.totalorder %s23, 1
      %p83 = scmp.ne.s32.totalorder %s78, %s80
      %p84 = scmp.eq.s32.totalorder %s23, 0
      %p85 = por %p83, %p84
      %p86 = scmp.ne.s32.totalorder %s78, %s80
      %p87 = scmp.eq.s32.totalorder %s28, 1
      %p88 = por %p86, %p87
      %p89 = scmp.ne.s32.totalorder %s80, %s81
      %p90 = scmp.eq.s32.totalorder %s28, 0
      %p91 = por %p89, %p90
      %p92 = scmp.ne.s32.totalorder %s80, %s81
      %p93 = scmp.eq.s32.totalorder %s29, 1
      %p94 = por %p92, %p93
      %p96 = scmp.ne.s32.totalorder %s81, %s95
      %p97 = scmp.eq.s32.totalorder %s29, 0
      %p98 = por %p96, %p97
      %s100 = sadd.s32 %s99, 1
      %p103 = scmp.eq.s32.totalorder %s23, 1
      %p104 = scmp.ne.s32.totalorder %s99, %s101
      %p105 = scmp.eq.s32.totalorder %s23, 0
      %p106 = por %p104, %p105
      %p107 = scmp.ne.s32.totalorder %s99, %s101
      %p108 = scmp.eq.s32.totalorder %s28, 1
      %p109 = por %p107, %p108
      %p110 = scmp.ne.s32.totalorder %s101, %s102
      %p111 = scmp.eq.s32.totalorder %s28, 0
      %p112 = por %p110, %p111
      %p113 = scmp.ne.s32.totalorder %s101, %s102
      %p114 = scmp.eq.s32.totalorder %s29, 1
      %p115 = por %p113, %p114
      %p117 = scmp.ne.s32.totalorder %s102, %s116
      %p118 = scmp.eq.s32.totalorder %s29, 0
      %p119 = por %p117, %p118
      %s121 = sadd.s32 %s120, 1
      %p124 = scmp.eq.s32.totalorder %s23, 1
      %p125 = scmp.ne.s32.totalorder %s120, %s122
      %p126 = scmp.eq.s32.totalorder %s23, 0
      %p127 = por %p125, %p126
      %p128 = scmp.ne.s32.totalorder %s120, %s122
      %p129 = scmp.eq.s32.totalorder %s28, 1
      %p130 = por %p128, %p129
      %p131 = scmp.ne.s32.totalorder %s122, %s123
      %p132 = scmp.eq.s32.totalorder %s28, 0
      %p133 = por %p131, %p132
      %p134 = scmp.ne.s32.totalorder %s122, %s123
      %p135 = scmp.eq.s32.totalorder %s29, 1
      %p136 = por %p134, %p135
      %p138 = scmp.ne.s32.totalorder %s123, %s137
      %p139 = scmp.eq.s32.totalorder %s29, 0
      %p140 = por %p138, %p139
      %s142 = sadd.s32 %s141, 1
      %p145 = scmp.eq.s32.totalorder %s23, 1
      %p146 = scmp.ne.s32.totalorder %s141, %s143
      %p147 = scmp.eq.s32.totalorder %s23, 0
      %p148 = por %p146, %p147
      %p149 = scmp.ne.s32.totalorder %s141, %s143
      %p150 = scmp.eq.s32.totalorder %s28, 1
      %p151 = por %p149, %p150
      %p152 = scmp.ne.s32.totalorder %s143, %s144
      %p153 = scmp.eq.s32.totalorder %s28, 0
      %p154 = por %p152, %p153
      %p155 = scmp.ne.s32.totalorder %s143, %s144
      %p156 = scmp.eq.s32.totalorder %s29, 1
      %p157 = por %p155, %p156
      %p159 = scmp.ne.s32.totalorder %s144, %s158
      %p160 = scmp.eq.s32.totalorder %s29, 0
      %p161 = por %p159, %p160
      %s163 = sadd.s32 %s162, 1
      %p166 = scmp.eq.s32.totalorder %s23, 1
      %p167 = scmp.ne.s32.totalorder %s162, %s164
      %p168 = scmp.eq.s32.totalorder %s23, 0
      %p169 = por %p167, %p168
      %p170 = scmp.ne.s32.totalorder %s162, %s164
      %p171 = scmp.eq.s32.totalorder %s28, 1
      %p172 = por %p170, %p171
      %p173 = scmp.ne.s32.totalorder %s164, %s165
      %p174 = scmp.eq.s32.totalorder %s28, 0
      %p175 = por %p173, %p174
      %p176 = scmp.ne.s32.totalorder %s164, %s165
      %p177 = scmp.eq.s32.totalorder %s29, 1
      %p178 = por %p176, %p177
      %p180 = scmp.ne.s32.totalorder %s165, %s179
      %p181 = scmp.eq.s32.totalorder %s29, 0
      %p182 = por %p180, %p181
      %s184 = sadd.s32 %s183, 1
      %p187 = scmp.eq.s32.totalorder %s23, 1
      %p188 = scmp.ne.s32.totalorder %s183, %s185
      %p189 = scmp.eq.s32.totalorder %s23, 0
      %p190 = por %p188, %p189
      %p191 = scmp.ne.s32.totalorder %s183, %s185
      %p192 = scmp.eq.s32.totalorder %s28, 1
      %p193 = por %p191, %p192
      %p194 = scmp.ne.s32.totalorder %s185, %s186
      %p195 = scmp.eq.s32.totalorder %s28, 0
      %p196 = por %p194, %p195
      %p197 = scmp.ne.s32.totalorder %s185, %s186
      %p198 = scmp.eq.s32.totalorder %s29, 1
      %p199 = por %p197, %p198
      %p201 = scmp.ne.s32.totalorder %s186, %s200
      %p202 = scmp.eq.s32.totalorder %s29, 0
      %p203 = por %p201, %p202
      %s205 = sadd.s32 %s204, 1
      %p208 = scmp.eq.s32.totalorder %s23, 1
      %p209 = scmp.ne.s32.totalorder %s204, %s206
      %p210 = scmp.eq.s32.totalorder %s23, 0
      %p211 = por %p209, %p210
      %p212 = scmp.ne.s32.totalorder %s204, %s206
      %p213 = scmp.eq.s32.totalorder %s28, 1
      %p214 = por %p212, %p213
      %p215 = scmp.ne.s32.totalorder %s206, %s207
      %p216 = scmp.eq.s32.totalorder %s28, 0
      %p217 = por %p215, %p216
      %p218 = scmp.ne.s32.totalorder %s206, %s207
      %p219 = scmp.eq.s32.totalorder %s29, 1
      %p220 = por %p218, %p219
      %p222 = scmp.ne.s32.totalorder %s207, %s221
      %p223 = scmp.eq.s32.totalorder %s29, 0
      %p224 = por %p222, %p223
      %s226 = sadd.s32 %s225, 1
      %p229 = scmp.eq.s32.totalorder %s23, 1
      %p230 = scmp.ne.s32.totalorder %s225, %s227
      %p231 = scmp.eq.s32.totalorder %s23, 0
      %p232 = por %p230, %p231
      %p233 = scmp.ne.s32.totalorder %s225, %s227
      %p234 = scmp.eq.s32.totalorder %s28, 1
      %p235 = por %p233, %p234
      %p236 = scmp.ne.s32.totalorder %s227, %s228
      %p237 = scmp.eq.s32.totalorder %s28, 0
      %p238 = por %p236, %p237
      %p239 = scmp.ne.s32.totalorder %s227, %s228
      %p240 = scmp.eq.s32.totalorder %s29, 1
      %p241 = por %p239, %p240
      %p243 = scmp.ne.s32.totalorder %s228, %s242
      %p244 = scmp.eq.s32.totalorder %s29, 0
      %p245 = por %p243, %p244
      %s247 = sadd.s32 %s246, 1
      %p250 = scmp.eq.s32.totalorder %s23, 1
      %p251 = scmp.ne.s32.totalorder %s246, %s248
      %p252 = scmp.eq.s32.totalorder %s23, 0
      %p253 = por %p251, %p252
      %p254 = scmp.ne.s32.totalorder %s246, %s248
      %p255 = scmp.eq.s32.totalorder %s28, 1
      %p256 = por %p254, %p255
      %p257 = scmp.ne.s32.totalorder %s248, %s249
      %p258 = scmp.eq.s32.totalorder %s28, 0
      %p259 = por %p257, %p258
      %p260 = scmp.ne.s32.totalorder %s248, %s249
      %p261 = scmp.eq.s32.totalorder %s29, 1
      %p262 = por %p260, %p261
      %p264 = scmp.ne.s32.totalorder %s249, %s263
      %p265 = scmp.eq.s32.totalorder %s29, 0
      %p266 = por %p264, %p265
      %s268 = sadd.s32 %s267, 1
      %p271 = scmp.eq.s32.totalorder %s23, 1
      %p272 = scmp.ne.s32.totalorder %s267, %s269
      %p273 = scmp.eq.s32.totalorder %s23, 0
      %p274 = por %p272, %p273
      %p275 = scmp.ne.s32.totalorder %s267, %s269
      %p276 = scmp.eq.s32.totalorder %s28, 1
      %p277 = por %p275, %p276
      %p278 = scmp.ne.s32.totalorder %s269, %s270
      %p279 = scmp.eq.s32.totalorder %s28, 0
      %p280 = por %p278, %p279
      %p281 = scmp.ne.s32.totalorder %s269, %s270
      %p282 = scmp.eq.s32.totalorder %s29, 1
      %p283 = por %p281, %p282
      %p285 = scmp.ne.s32.totalorder %s270, %s284
      %p286 = scmp.eq.s32.totalorder %s29, 0
      %p287 = por %p285, %p286
      %s289 = sadd.s32 %s288, 1
      %p292 = scmp.eq.s32.totalorder %s23, 1
      %p293 = scmp.ne.s32.totalorder %s288, %s290
      %p294 = scmp.eq.s32.totalorder %s23, 0
      %p295 = por %p293, %p294
      %p296 = scmp.ne.s32.totalorder %s288, %s290
      %p297 = scmp.eq.s32.totalorder %s28, 1
      %p298 = por %p296, %p297
      %p299 = scmp.ne.s32.totalorder %s290, %s291
      %p300 = scmp.eq.s32.totalorder %s28, 0
      %p301 = por %p299, %p300
      %p302 = scmp.ne.s32.totalorder %s290, %s291
      %p303 = scmp.eq.s32.totalorder %s29, 1
      %p304 = por %p302, %p303
      %p306 = scmp.ne.s32.totalorder %s291, %s305
      %p307 = scmp.eq.s32.totalorder %s29, 0
      %p308 = por %p306, %p307
      %s310 = sadd.s32 %s309, 1
      %p313 = scmp.eq.s32.totalorder %s23, 1
      %p314 = scmp.ne.s32.totalorder %s309, %s311
      %p315 = scmp.eq.s32.totalorder %s23, 0
      %p316 = por %p314, %p315
      %p317 = scmp.ne.s32.totalorder %s309, %s311
      %p318 = scmp.eq.s32.totalorder %s28, 1
      %p319 = por %p317, %p318
      %p320 = scmp.ne.s32.totalorder %s311, %s312
      %p321 = scmp.eq.s32.totalorder %s28, 0
      %p322 = por %p320, %p321
      %p323 = scmp.ne.s32.totalorder %s311, %s312
      %p324 = scmp.eq.s32.totalorder %s29, 1
      %p325 = por %p323, %p324
      %p327 = scmp.ne.s32.totalorder %s312, %s326
      %p328 = scmp.eq.s32.totalorder %s29, 0
      %p329 = por %p327, %p328
      %s330 = ssub.s32 %s23, %s30
      %p331 = scmp.eq.s32.totalorder %s330, 0
      %s333 = sadd.s32 %s332, 1
      %s334 = scalar_select %p331, %s332, %s333
      %p337 = pneg %p331
      %p338 = scmp.eq.s32.totalorder %s23, 1
      %p339 = por %p337, %p338
      %p340 = scmp.ne.s32.totalorder %s332, %s335
      %p341 = scmp.eq.s32.totalorder %s23, 0
      %p342 = por %p340, %p341
      %p343 = scmp.ne.s32.totalorder %s332, %s335
      %p344 = scmp.eq.s32.totalorder %s28, 1
      %p345 = por %p343, %p344
      %p346 = scmp.ne.s32.totalorder %s335, %s336
      %p347 = scmp.eq.s32.totalorder %s28, 0
      %p348 = por %p346, %p347
      %p349 = scmp.ne.s32.totalorder %s335, %s336
      %p350 = scmp.eq.s32.totalorder %s29, 1
      %p351 = por %p349, %p350
      %p353 = scmp.ne.s32.totalorder %s336, %s352
      %p354 = scmp.eq.s32.totalorder %s29, 0
      %p355 = por %p353, %p354
      %p356 = scmp.le.s32.totalorder 1, %s23
      %p357 = scmp.lt.s32.totalorder %s23, 3
      %p358 = pnand %p356, %p357
      %p359 = pneg %p358
      // Predicated region
      $region9: #{tpu_custom_call.1} parent=5 // pred_check
        _
      $region10: #{tpu_custom_call.1} parent=5 // pred_check_branch
        %361 = sbr.rel (%p358) target = $region12
      $region11: #{tpu_custom_call.1} parent=5 // pred_region
        %s362 = ssub.s32 %s23, 1
        // Predicated region
        $region13: #{tpu_custom_call.1} parent=11 // pred_check
          %p363 = pneg %p70
        $region14: #{tpu_custom_call.1} parent=11 // pred_check_branch
          %365 = sbr.rel (%p363) target = $region16
        $region15: #{tpu_custom_call.1} parent=11 // pred_region
          _
        $region16: #{tpu_custom_call.1} parent=11 // pred_fallthru
          _
        // Predicated region
        $region17: #{tpu_custom_call.1} parent=11 // pred_check
          %p366 = pneg %p91
        $region18: #{tpu_custom_call.1} parent=11 // pred_check_branch
          %368 = sbr.rel (%p366) target = $region20
        $region19: #{tpu_custom_call.1} parent=11 // pred_region
          _
        $region20: #{tpu_custom_call.1} parent=11 // pred_fallthru
          _
        // Predicated region
        $region21: #{tpu_custom_call.1} parent=11 // pred_check
          %p369 = pneg %p112
        $region22: #{tpu_custom_call.1} parent=11 // pred_check_branch
          %371 = sbr.rel (%p369) target = $region24
        $region23: #{tpu_custom_call.1} parent=11 // pred_region
          _
        $region24: #{tpu_custom_call.1} parent=11 // pred_fallthru
          _
        // Predicated region
        $region25: #{tpu_custom_call.1} parent=11 // pred_check
          %p372 = pneg %p133
        $region26: #{tpu_custom_call.1} parent=11 // pred_check_branch
          %374 = sbr.rel (%p372) target = $region28
        $region27: #{tpu_custom_call.1} parent=11 // pred_region
          _
        $region28: #{tpu_custom_call.1} parent=11 // pred_fallthru
          _
        // Predicated region
        $region29: #{tpu_custom_call.1} parent=11 // pred_check
          %p375 = pneg %p154
        $region30: #{tpu_custom_call.1} parent=11 // pred_check_branch
          %377 = sbr.rel (%p375) target = $region32
        $region31: #{tpu_custom_call.1} parent=11 // pred_region
          _
        $region32: #{tpu_custom_call.1} parent=11 // pred_fallthru
          _
        // Predicated region
        $region33: #{tpu_custom_call.1} parent=11 // pred_check
          %p378 = pneg %p175
        $region34: #{tpu_custom_call.1} parent=11 // pred_check_branch
          %380 = sbr.rel (%p378) target = $region36
        $region35: #{tpu_custom_call.1} parent=11 // pred_region
          _
        $region36: #{tpu_custom_call.1} parent=11 // pred_fallthru
          _
        // Predicated region
        $region37: #{tpu_custom_call.1} parent=11 // pred_check
          %p381 = pneg %p196
        $region38: #{tpu_custom_call.1} parent=11 // pred_check_branch
          %383 = sbr.rel (%p381) target = $region40
        $region39: #{tpu_custom_call.1} parent=11 // pred_region
          _
        $region40: #{tpu_custom_call.1} parent=11 // pred_fallthru
          _
        // Predicated region
        $region41: #{tpu_custom_call.1} parent=11 // pred_check
          %p384 = pneg %p217
        $region42: #{tpu_custom_call.1} parent=11 // pred_check_branch
          %386 = sbr.rel (%p384) target = $region44
        $region43: #{tpu_custom_call.1} parent=11 // pred_region
          _
        $region44: #{tpu_custom_call.1} parent=11 // pred_fallthru
          _
        // Predicated region
        $region45: #{tpu_custom_call.1} parent=11 // pred_check
          %p387 = pneg %p238
        $region46: #{tpu_custom_call.1} parent=11 // pred_check_branch
          %389 = sbr.rel (%p387) target = $region48
        $region47: #{tpu_custom_call.1} parent=11 // pred_region
          _
        $region48: #{tpu_custom_call.1} parent=11 // pred_fallthru
          _
        // Predicated region
        $region49: #{tpu_custom_call.1} parent=11 // pred_check
          %p390 = pneg %p259
        $region50: #{tpu_custom_call.1} parent=11 // pred_check_branch
          %392 = sbr.rel (%p390) target = $region52
        $region51: #{tpu_custom_call.1} parent=11 // pred_region
          _
        $region52: #{tpu_custom_call.1} parent=11 // pred_fallthru
          _
        // Predicated region
        $region53: #{tpu_custom_call.1} parent=11 // pred_check
          %p393 = pneg %p280
        $region54: #{tpu_custom_call.1} parent=11 // pred_check_branch
          %395 = sbr.rel (%p393) target = $region56
        $region55: #{tpu_custom_call.1} parent=11 // pred_region
          _
        $region56: #{tpu_custom_call.1} parent=11 // pred_fallthru
          _
        // Predicated region
        $region57: #{tpu_custom_call.1} parent=11 // pred_check
          %p396 = pneg %p301
        $region58: #{tpu_custom_call.1} parent=11 // pred_check_branch
          %398 = sbr.rel (%p396) target = $region60
        $region59: #{tpu_custom_call.1} parent=11 // pred_region
          _
        $region60: #{tpu_custom_call.1} parent=11 // pred_fallthru
          _
        // Predicated region
        $region61: #{tpu_custom_call.1} parent=11 // pred_check
          %p399 = pneg %p322
        $region62: #{tpu_custom_call.1} parent=11 // pred_check_branch
          %401 = sbr.rel (%p399) target = $region64
        $region63: #{tpu_custom_call.1} parent=11 // pred_region
          _
        $region64: #{tpu_custom_call.1} parent=11 // pred_fallthru
          _
      $region12: #{tpu_custom_call.1} parent=5 // pred_fallthru
        _
      %p402 = scmp.lt.s32.totalorder %s23, 2
      // Predicated region
      $region65: #{tpu_custom_call.1} parent=5 // pred_check
        %p403 = pneg %p402
      $region66: #{tpu_custom_call.1} parent=5 // pred_check_branch
        %405 = sbr.rel (%p403) target = $region68
      $region67: #{tpu_custom_call.1} parent=5 // pred_region
        // Predicated region
        $region69: #{tpu_custom_call.1} parent=67 // pred_check
          %p406 = pneg %p43
        $region70: #{tpu_custom_call.1} parent=67 // pred_check_branch
          %408 = sbr.rel (%p406) target = $region72
        $region71: #{tpu_custom_call.1} parent=67 // pred_region
          %p409 = scmp.lt.s32.totalorder %s23, 1
          %s410 = scalar_select %p409, %s23, 1
          %s411 = smul.addr %s410, 32
          %s412 = smul.addr %s411, 8
          %s413 = scalar_lea.vmem %s0, %s412
        $region72: #{tpu_custom_call.1} parent=67 // pred_fallthru
          _
      $region68: #{tpu_custom_call.1} parent=5 // pred_fallthru
        _
      %p414 = scmp.le.s32.totalorder 1, %s23
      %p415 = scmp.lt.s32.totalorder %s23, 3
      %p416 = pnand %p414, %p415
      %p417 = pneg %p416
      // Predicated region
      $region73: #{tpu_custom_call.1} parent=5 // pred_check
        _
      $region74: #{tpu_custom_call.1} parent=5 // pred_check_branch
        %419 = sbr.rel (%p416) target = $region76
      $region75: #{tpu_custom_call.1} parent=5 // pred_region
        %s420 = ssub.s32 %s23, 1
        %p421 = scmp.lt.s32.totalorder %s28, 1
        %s422 = scalar_select %p421, %s28, 1
        %s423 = smul.addr %s422, 32
        %s424 = smul.addr %s423, 8
        %s425 = scalar_lea.vmem %s0, %s424
        %p426 = pneg %p49
        %p427 = pneg %p46
        %p428 = pneg %p70
        %p429 = pneg %p67
        %p430 = pneg %p91
        %p431 = pneg %p88
        %p432 = pneg %p112
        %p433 = pneg %p109
        %p434 = pneg %p133
        %p435 = pneg %p130
        %p436 = pneg %p154
        %p437 = pneg %p151
        %p438 = pneg %p175
        %p439 = pneg %p172
        %p440 = pneg %p196
        %p441 = pneg %p193
        %p442 = pneg %p217
        %p443 = pneg %p214
        %p444 = pneg %p238
        %p445 = pneg %p235
        %p446 = pneg %p259
        %p447 = pneg %p256
        %p448 = pneg %p280
        %p449 = pneg %p277
        %p450 = pneg %p301
        %p451 = pneg %p298
        %p452 = pneg %p322
        %p453 = pneg %p319
        %p454 = pneg %p348
        %p455 = pneg %p345
        %s456 = sand.u32 %s335, 1
        %s457 = scalar_lea.sflag [#allocation5], %s456
        %s458 = sand.u32 %s335, 1
        %s459 = smul.addr %s458, 256
        %s460 = scalar_lea.vmem [#allocation4], %s459
        %p461 = scmp.lt.s32.totalorder %s28, 1
        %s462 = scalar_select %p461, %s28, 1
        %s463 = smul.addr %s462, 32
        %s464 = smul.addr %s463, 8
        %s465 = scalar_lea.vmem %s0, %s464
        %v467 = vld [vmem:[%s465] sm:$0xff]
        %v468 = vld [vmem:[%s465 + $0x8] sm:$0xff]
        %v469 = vld [vmem:[%s465 + $0x10] sm:$0xff]
        %v470 = vld [vmem:[%s465 + $0x18] sm:$0xff]
        %v471 = vld [vmem:[%s465 + $0x20] sm:$0xff]
        %v472 = vld [vmem:[%s465 + $0x28] sm:$0xff]
        %v473 = vld [vmem:[%s465 + $0x30] sm:$0xff]
        %v474 = vld [vmem:[%s465 + $0x38] sm:$0xff]
        %v475 = vld [vmem:[%s465 + $0x40] sm:$0xff]
        %v476 = vld [vmem:[%s465 + $0x48] sm:$0xff]
        %v477 = vld [vmem:[%s465 + $0x50] sm:$0xff]
        %v478 = vld [vmem:[%s465 + $0x58] sm:$0xff]
        %v479 = vld [vmem:[%s465 + $0x60] sm:$0xff]
        %v480 = vld [vmem:[%s465 + $0x68] sm:$0xff]
        %v481 = vld [vmem:[%s465 + $0x70] sm:$0xff]
        %v482 = vld [vmem:[%s465 + $0x78] sm:$0xff]
        %v483 = vld [vmem:[%s465 + $0x80] sm:$0xff]
        %v484 = vld [vmem:[%s465 + $0x88] sm:$0xff]
        %v485 = vld [vmem:[%s465 + $0x90] sm:$0xff]
        %v486 = vld [vmem:[%s465 + $0x98] sm:$0xff]
        %v487 = vld [vmem:[%s465 + $0xa0] sm:$0xff]
        %v488 = vld [vmem:[%s465 + $0xa8] sm:$0xff]
        %v489 = vld [vmem:[%s465 + $0xb0] sm:$0xff]
        %v490 = vld [vmem:[%s465 + $0xb8] sm:$0xff]
        %v491 = vld [vmem:[%s465 + $0xc0] sm:$0xff]
        %v492 = vld [vmem:[%s465 + $0xc8] sm:$0xff]
        %v493 = vld [vmem:[%s465 + $0xd0] sm:$0xff]
        %v494 = vld [vmem:[%s465 + $0xd8] sm:$0xff]
        %v495 = vld [vmem:[%s465 + $0xe0] sm:$0xff]
        %v496 = vld [vmem:[%s465 + $0xe8] sm:$0xff]
        %v497 = vld [vmem:[%s465 + $0xf0] sm:$0xff]
        %v498 = vld [vmem:[%s465 + $0xf8] sm:$0xff]
        %v499 = vld [vmem:[%s4] sm:$0xff]
        %v500 = vld [vmem:[%s4 + $0x8] sm:$0xff]
        %v501 = vld [vmem:[%s4 + $0x10] sm:$0xff]
        %v502 = vld [vmem:[%s4 + $0x18] sm:$0xff]
        %v503 = vld [vmem:[%s2] sm:$0x1]
        %v504 = vld [vmem:[%s3] sm:$0x1]
        %vm505 = vcmask 261120
        %v506 = vsel %vm505, %v467, 0.0
        %v507 = vsel %vm505, %v468, 0.0
        %v508 = vadd.f32 %v506, %v507
        %v509 = vsel %vm505, %v469, 0.0
        %v510 = vadd.f32 %v508, %v509
        %v511 = vsel %vm505, %v470, 0.0
        %v512 = vadd.f32 %v510, %v511
        %v513 = vsel %vm505, %v471, 0.0
        %v514 = vadd.f32 %v512, %v513
        %v515 = vsel %vm505, %v472, 0.0
        %v516 = vadd.f32 %v514, %v515
        %v517 = vsel %vm505, %v473, 0.0
        %v518 = vadd.f32 %v516, %v517
        %v519 = vsel %vm505, %v474, 0.0
        %v520 = vadd.f32 %v518, %v519
        %v521 = vsel %vm505, %v475, 0.0
        %v522 = vadd.f32 %v520, %v521
        %v523 = vsel %vm505, %v476, 0.0
        %v524 = vadd.f32 %v522, %v523
        %v525 = vsel %vm505, %v477, 0.0
        %v526 = vadd.f32 %v524, %v525
        %v527 = vsel %vm505, %v478, 0.0
        %v528 = vadd.f32 %v526, %v527
        %v529 = vsel %vm505, %v479, 0.0
        %v530 = vadd.f32 %v528, %v529
        %v531 = vsel %vm505, %v480, 0.0
        %v532 = vadd.f32 %v530, %v531
        %v533 = vsel %vm505, %v481, 0.0
        %v534 = vadd.f32 %v532, %v533
        %v535 = vsel %vm505, %v482, 0.0
        %v536 = vadd.f32 %v534, %v535
        %v537 = vsel %vm505, %v483, 0.0
        %v538 = vadd.f32 %v536, %v537
        %v539 = vsel %vm505, %v484, 0.0
        %v540 = vadd.f32 %v538, %v539
        %v541 = vsel %vm505, %v485, 0.0
        %v542 = vadd.f32 %v540, %v541
        %v543 = vsel %vm505, %v486, 0.0
        %v544 = vadd.f32 %v542, %v543
        %v545 = vsel %vm505, %v487, 0.0
        %v546 = vadd.f32 %v544, %v545
        %v547 = vsel %vm505, %v488, 0.0
        %v548 = vadd.f32 %v546, %v547
        %v549 = vsel %vm505, %v489, 0.0
        %v550 = vadd.f32 %v548, %v549
        %v551 = vsel %vm505, %v490, 0.0
        %v552 = vadd.f32 %v550, %v551
        %v553 = vsel %vm505, %v491, 0.0
        %v554 = vadd.f32 %v552, %v553
        %v555 = vsel %vm505, %v492, 0.0
        %v556 = vadd.f32 %v554, %v555
        %v557 = vsel %vm505, %v493, 0.0
        %v558 = vadd.f32 %v556, %v557
        %v559 = vsel %vm505, %v494, 0.0
        %v560 = vadd.f32 %v558, %v559
        %v561 = vsel %vm505, %v495, 0.0
        %v562 = vadd.f32 %v560, %v561
        %v563 = vsel %vm505, %v496, 0.0
        %v564 = vadd.f32 %v562, %v563
        %v565 = vsel %vm505, %v497, 0.0
        %v566 = vadd.f32 %v564, %v565
        %v567 = vsel %vm505, %v498, 0.0
        %v568 = vadd.f32 %v566, %v567
        %v569 = vrot.slane %v568, 4
        %v570 = vadd.f32 %v568, %v569
        %v571 = vrot.slane %v570, 2
        %v572 = vadd.f32 %v570, %v571
        %v573 = vrot.slane %v572, 1
        %v574 = vadd.f32 %v572, %v573
        %v575 = vmul.f32 %v467, %v467
        %v576 = vmul.f32 %v468, %v468
        %v577 = vmul.f32 %v469, %v469
        %v578 = vmul.f32 %v470, %v470
        %v579 = vmul.f32 %v471, %v471
        %v580 = vmul.f32 %v472, %v472
        %v581 = vmul.f32 %v473, %v473
        %v582 = vmul.f32 %v474, %v474
        %v583 = vmul.f32 %v475, %v475
        %v584 = vmul.f32 %v476, %v476
        %v585 = vmul.f32 %v477, %v477
        %v586 = vmul.f32 %v478, %v478
        %v587 = vmul.f32 %v479, %v479
        %v588 = vmul.f32 %v480, %v480
        %v589 = vmul.f32 %v481, %v481
        %v590 = vmul.f32 %v482, %v482
        %v591 = vmul.f32 %v483, %v483
        %v592 = vmul.f32 %v484, %v484
        %v593 = vmul.f32 %v485, %v485
        %v594 = vmul.f32 %v486, %v486
        %v595 = vmul.f32 %v487, %v487
        %v596 = vmul.f32 %v488, %v488
        %v597 = vmul.f32 %v489, %v489
        %v598 = vmul.f32 %v490, %v490
        %v599 = vmul.f32 %v491, %v491
        %v600 = vmul.f32 %v492, %v492
        %v601 = vmul.f32 %v493, %v493
        %v602 = vmul.f32 %v494, %v494
        %v603 = vmul.f32 %v495, %v495
        %v604 = vmul.f32 %v496, %v496
        %v605 = vmul.f32 %v497, %v497
        %v606 = vmul.f32 %v498, %v498
        %v607 = vsel %vm505, %v575, 0.0
        %v608 = vsel %vm505, %v576, 0.0
        %v609 = vadd.f32 %v607, %v608
        %v610 = vsel %vm505, %v577, 0.0
        %v611 = vadd.f32 %v609, %v610
        %v612 = vsel %vm505, %v578, 0.0
        %v613 = vadd.f32 %v611, %v612
        %v614 = vsel %vm505, %v579, 0.0
        %v615 = vadd.f32 %v613, %v614
        %v616 = vsel %vm505, %v580, 0.0
        %v617 = vadd.f32 %v615, %v616
        %v618 = vsel %vm505, %v581, 0.0
        %v619 = vadd.f32 %v617, %v618
        %v620 = vsel %vm505, %v582, 0.0
        %v621 = vadd.f32 %v619, %v620
        %v622 = vsel %vm505, %v583, 0.0
        %v623 = vadd.f32 %v621, %v622
        %v624 = vsel %vm505, %v584, 0.0
        %v625 = vadd.f32 %v623, %v624
        %v626 = vsel %vm505, %v585, 0.0
        %v627 = vadd.f32 %v625, %v626
        %v628 = vsel %vm505, %v586, 0.0
        %v629 = vadd.f32 %v627, %v628
        %v630 = vsel %vm505, %v587, 0.0
        %v631 = vadd.f32 %v629, %v630
        %v632 = vsel %vm505, %v588, 0.0
        %v633 = vadd.f32 %v631, %v632
        %v634 = vsel %vm505, %v589, 0.0
        %v635 = vadd.f32 %v633, %v634
        %v636 = vsel %vm505, %v590, 0.0
        %v637 = vadd.f32 %v635, %v636
        %v638 = vsel %vm505, %v591, 0.0
        %v639 = vadd.f32 %v637, %v638
        %v640 = vsel %vm505, %v592, 0.0
        %v641 = vadd.f32 %v639, %v640
        %v642 = vsel %vm505, %v593, 0.0
        %v643 = vadd.f32 %v641, %v642
        %v644 = vsel %vm505, %v594, 0.0
        %v645 = vadd.f32 %v643, %v644
        %v646 = vsel %vm505, %v595, 0.0
        %v647 = vadd.f32 %v645, %v646
        %v648 = vsel %vm505, %v596, 0.0
        %v649 = vadd.f32 %v647, %v648
        %v650 = vsel %vm505, %v597, 0.0
        %v651 = vadd.f32 %v649, %v650
        %v652 = vsel %vm505, %v598, 0.0
        %v653 = vadd.f32 %v651, %v652
        %v654 = vsel %vm505, %v599, 0.0
        %v655 = vadd.f32 %v653, %v654
        %v656 = vsel %vm505, %v600, 0.0
        %v657 = vadd.f32 %v655, %v656
        %v658 = vsel %vm505, %v601, 0.0
        %v659 = vadd.f32 %v657, %v658
        %v660 = vsel %vm505, %v602, 0.0
        %v661 = vadd.f32 %v659, %v660
        %v662 = vsel %vm505, %v603, 0.0
        %v663 = vadd.f32 %v661, %v662
        %v664 = vsel %vm505, %v604, 0.0
        %v665 = vadd.f32 %v663, %v664
        %v666 = vsel %vm505, %v605, 0.0
        %v667 = vadd.f32 %v665, %v666
        %v668 = vsel %vm505, %v606, 0.0
        %v669 = vadd.f32 %v667, %v668
        %v670 = vrot.slane %v669, 4
        %v671 = vadd.f32 %v669, %v670
        %v672 = vrot.slane %v671, 2
        %v673 = vadd.f32 %v671, %v672
        %v674 = vrot.slane %v673, 1
        %v675 = vadd.f32 %v673, %v674
        %v677 = vsel %vm505, %v574, 0
        %679 = vmatprep.subr.mxu0 0.0
        %680 = vmatpush1.msra.mxu0 %v499
        %681 = vmatprep.subr.mxu0 0.0
        %682 = vmatpush1.msra.mxu0 %v500
        %683 = vmatprep.subr.mxu0 0.0
        %684 = vmatpush1.msra.mxu0 %v501
        %685 = vmatprep.subr.mxu0 0.0
        %686 = vmatpush1.msra.mxu0 %v502
        %687 = vmatprep.subr.mxu0 0.0
        %688 = vmatpush1.msra.mxu0 0.0
        %689 = vmatprep.subr.mxu0 0.0
        %690 = vmatpush1.msra.mxu0 0.0
        %691 = vmatprep.subr.mxu0 0.0
        %692 = vmatpush1.msra.mxu0 0.0
        %693 = vmatprep.subr.mxu0 0.0
        %694 = vmatpush1.msra.mxu0 0.0
        %695 = vmatprep.subr.mxu0 0.0
        %696 = vmatpush1.msra.mxu0 0.0
        %697 = vmatprep.subr.mxu0 0.0
        %698 = vmatpush1.msra.mxu0 0.0
        %699 = vmatprep.subr.mxu0 0.0
        %700 = vmatpush1.msra.mxu0 0.0
        %701 = vmatprep.subr.mxu0 0.0
        %702 = vmatpush1.msra.mxu0 0.0
        %703 = vmatprep.subr.mxu0 0.0
        %704 = vmatpush1.msra.mxu0 0.0
        %705 = vmatprep.subr.mxu0 0.0
        %706 = vmatpush1.msra.mxu0 0.0
        %707 = vmatprep.subr.mxu0 0.0
        %708 = vmatpush1.msra.mxu0 0.0
        %709 = vmatprep.subr.mxu0 0.0
        %710 = vmatpush1.msra.mxu0 0.0
        %711 = vmatprep.subr.mxu0 0.0
        %712 = vmatpush1.msra.mxu0 0.0
        %713 = vmatprep.subr.mxu0 0.0
        %714 = vmatpush1.msra.mxu0 0.0
        %715 = vmatprep.subr.mxu0 0.0
        %716 = vmatpush1.msra.mxu0 0.0
        %717 = vmatprep.subr.mxu0 0.0
        %718 = vmatpush1.msra.mxu0 0.0
        %719 = vmatprep.subr.mxu0 0.0
        %720 = vmatpush1.msra.mxu0 0.0
        %721 = vmatprep.subr.mxu0 0.0
        %722 = vmatpush1.msra.mxu0 0.0
        %723 = vmatprep.subr.mxu0 0.0
        %724 = vmatpush1.msra.mxu0 0.0
        %725 = vmatprep.subr.mxu0 0.0
        %726 = vmatpush1.msra.mxu0 0.0
        %727 = vmatprep.subr.mxu0 0.0
        %728 = vmatpush1.msra.mxu0 0.0
        %729 = vmatprep.subr.mxu0 0.0
        %730 = vmatpush1.msra.mxu0 0.0
        %731 = vmatprep.subr.mxu0 0.0
        %732 = vmatpush1.msra.mxu0 0.0
        %733 = vmatprep.subr.mxu0 0.0
        %734 = vmatpush1.msra.mxu0 0.0
        %735 = vmatprep.subr.mxu0 0.0
        %736 = vmatpush1.msra.mxu0 0.0
        %737 = vmatprep.subr.mxu0 0.0
        %738 = vmatpush1.msra.mxu0 0.0
        %739 = vmatprep.subr.mxu0 0.0
        %740 = vmatpush1.msra.mxu0 0.0
        %741 = vmatprep.subr.mxu0 0.0
        %742 = vmatpush1.msra.mxu0 0.0
        %743 = vmatprep.mubr.f32.mxu0 0.0
        %744 = vmatmul.mubr.f32.gmra.mrb[0].mxu0 %v677
        %v745 = vpop.f32.mrb[0].mxu0
        %v746 = vadd.f32 0.0, %v745
        %v747 = vpop.f32.mrb[0].mxu0
        %748 = vdwg.mxu0
        %v749 = vmul.f32 %v746, 0.00390625
        %v751 = vsel %vm505, %v675, 0
        %753 = vmatprep.subr.mxu0 0.0
        %754 = vmatpush1.msra.mxu0 %v499
        %755 = vmatprep.subr.mxu0 0.0
        %756 = vmatpush1.msra.mxu0 %v500
        %757 = vmatprep.subr.mxu0 0.0
        %758 = vmatpush1.msra.mxu0 %v501
        %759 = vmatprep.subr.mxu0 0.0
        %760 = vmatpush1.msra.mxu0 %v502
        %761 = vmatprep.subr.mxu0 0.0
        %762 = vmatpush1.msra.mxu0 0.0
        %763 = vmatprep.subr.mxu0 0.0
        %764 = vmatpush1.msra.mxu0 0.0
        %765 = vmatprep.subr.mxu0 0.0
        %766 = vmatpush1.msra.mxu0 0.0
        %767 = vmatprep.subr.mxu0 0.0
        %768 = vmatpush1.msra.mxu0 0.0
        %769 = vmatprep.subr.mxu0 0.0
        %770 = vmatpush1.msra.mxu0 0.0
        %771 = vmatprep.subr.mxu0 0.0
        %772 = vmatpush1.msra.mxu0 0.0
        %773 = vmatprep.subr.mxu0 0.0
        %774 = vmatpush1.msra.mxu0 0.0
        %775 = vmatprep.subr.mxu0 0.0
        %776 = vmatpush1.msra.mxu0 0.0
        %777 = vmatprep.subr.mxu0 0.0
        %778 = vmatpush1.msra.mxu0 0.0
        %779 = vmatprep.subr.mxu0 0.0
        %780 = vmatpush1.msra.mxu0 0.0
        %781 = vmatprep.subr.mxu0 0.0
        %782 = vmatpush1.msra.mxu0 0.0
        %783 = vmatprep.subr.mxu0 0.0
        %784 = vmatpush1.msra.mxu0 0.0
        %785 = vmatprep.subr.mxu0 0.0
        %786 = vmatpush1.msra.mxu0 0.0
        %787 = vmatprep.subr.mxu0 0.0
        %788 = vmatpush1.msra.mxu0 0.0
        %789 = vmatprep.subr.mxu0 0.0
        %790 = vmatpush1.msra.mxu0 0.0
        %791 = vmatprep.subr.mxu0 0.0
        %792 = vmatpush1.msra.mxu0 0.0
        %793 = vmatprep.subr.mxu0 0.0
        %794 = vmatpush1.msra.mxu0 0.0
        %795 = vmatprep.subr.mxu0 0.0
        %796 = vmatpush1.msra.mxu0 0.0
        %797 = vmatprep.subr.mxu0 0.0
        %798 = vmatpush1.msra.mxu0 0.0
        %799 = vmatprep.subr.mxu0 0.0
        %800 = vmatpush1.msra.mxu0 0.0
        %801 = vmatprep.subr.mxu0 0.0
        %802 = vmatpush1.msra.mxu0 0.0
        %803 = vmatprep.subr.mxu0 0.0
        %804 = vmatpush1.msra.mxu0 0.0
        %805 = vmatprep.subr.mxu0 0.0
        %806 = vmatpush1.msra.mxu0 0.0
        %807 = vmatprep.subr.mxu0 0.0
        %808 = vmatpush1.msra.mxu0 0.0
        %809 = vmatprep.subr.mxu0 0.0
        %810 = vmatpush1.msra.mxu0 0.0
        %811 = vmatprep.subr.mxu0 0.0
        %812 = vmatpush1.msra.mxu0 0.0
        %813 = vmatprep.subr.mxu0 0.0
        %814 = vmatpush1.msra.mxu0 0.0
        %815 = vmatprep.subr.mxu0 0.0
        %816 = vmatpush1.msra.mxu0 0.0
        %817 = vmatprep.mubr.f32.mxu0 0.0
        %818 = vmatmul.mubr.f32.gmra.mrb[0].mxu0 %v751
        %v819 = vpop.f32.mrb[0].mxu0
        %v820 = vadd.f32 0.0, %v819
        %v821 = vpop.f32.mrb[0].mxu0
        %822 = vdwg.mxu0
        %v823 = vmul.f32 %v820, 0.00390625
        %v824 = vmul.f32 %v749, %v749
        %v825 = vsub.f32 %v823, %v824
        %v826 = vlaneseq
        %v827 = vshrl.u32 %v826, 7
        %v828 = vsub.s32 0, %v827
        %v829 = vrot.slane %v749, %v828
        %v830 = vsub.f32 %v467, %v829
        %v831 = vsub.f32 %v468, %v829
        %v832 = vsub.f32 %v469, %v829
        %v833 = vsub.f32 %v470, %v829
        %v834 = vsub.f32 %v471, %v829
        %v835 = vsub.f32 %v472, %v829
        %v836 = vsub.f32 %v473, %v829
        %v837 = vsub.f32 %v474, %v829
        %v838 = vsub.f32 %v475, %v829
        %v839 = vsub.f32 %v476, %v829
        %v840 = vsub.f32 %v477, %v829
        %v841 = vsub.f32 %v478, %v829
        %v842 = vsub.f32 %v479, %v829
        %v843 = vsub.f32 %v480, %v829
        %v844 = vsub.f32 %v481, %v829
        %v845 = vsub.f32 %v482, %v829
        %v846 = vsub.f32 %v483, %v829
        %v847 = vsub.f32 %v484, %v829
        %v848 = vsub.f32 %v485, %v829
        %v849 = vsub.f32 %v486, %v829
        %v850 = vsub.f32 %v487, %v829
        %v851 = vsub.f32 %v488, %v829
        %v852 = vsub.f32 %v489, %v829
        %v853 = vsub.f32 %v490, %v829
        %v854 = vsub.f32 %v491, %v829
        %v855 = vsub.f32 %v492, %v829
        %v856 = vsub.f32 %v493, %v829
        %v857 = vsub.f32 %v494, %v829
        %v858 = vsub.f32 %v495, %v829
        %v859 = vsub.f32 %v496, %v829
        %v860 = vsub.f32 %v497, %v829
        %v861 = vsub.f32 %v498, %v829
        %v862 = vadd.f32 %v825, 1e-05
        %v863 = vrsqrt.pop %v862
        %v864 = vlaneseq
        %v865 = vshrl.u32 %v864, 7
        %v866 = vsub.s32 0, %v865
        %v867 = vrot.slane %v863, %v866
        %v868 = vmul.f32 %v830, %v867
        %v869 = vmul.f32 %v831, %v867
        %v870 = vmul.f32 %v832, %v867
        %v871 = vmul.f32 %v833, %v867
        %v872 = vmul.f32 %v834, %v867
        %v873 = vmul.f32 %v835, %v867
        %v874 = vmul.f32 %v836, %v867
        %v875 = vmul.f32 %v837, %v867
        %v876 = vmul.f32 %v838, %v867
        %v877 = vmul.f32 %v839, %v867
        %v878 = vmul.f32 %v840, %v867
        %v879 = vmul.f32 %v841, %v867
        %v880 = vmul.f32 %v842, %v867
        %v881 = vmul.f32 %v843, %v867
        %v882 = vmul.f32 %v844, %v867
        %v883 = vmul.f32 %v845, %v867
        %v884 = vmul.f32 %v846, %v867
        %v885 = vmul.f32 %v847, %v867
        %v886 = vmul.f32 %v848, %v867
        %v887 = vmul.f32 %v849, %v867
        %v888 = vmul.f32 %v850, %v867
        %v889 = vmul.f32 %v851, %v867
        %v890 = vmul.f32 %v852, %v867
        %v891 = vmul.f32 %v853, %v867
        %v892 = vmul.f32 %v854, %v867
        %v893 = vmul.f32 %v855, %v867
        %v894 = vmul.f32 %v856, %v867
        %v895 = vmul.f32 %v857, %v867
        %v896 = vmul.f32 %v858, %v867
        %v897 = vmul.f32 %v859, %v867
        %v898 = vmul.f32 %v860, %v867
        %v899 = vmul.f32 %v861, %v867
        %v901 = vlaneseq
        %v902 = vshrl.u32 %v901, 7
        %v903 = vsub.s32 0, %v902
        %v904 = vrot.slane %v503, %v903
        %v906 = vmul.f32 %v868, %v904
        %v907 = vmul.f32 %v869, %v904
        %v908 = vmul.f32 %v870, %v904
        %v909 = vmul.f32 %v871, %v904
        %v910 = vmul.f32 %v872, %v904
        %v911 = vmul.f32 %v873, %v904
        %v912 = vmul.f32 %v874, %v904
        %v913 = vmul.f32 %v875, %v904
        %v914 = vmul.f32 %v876, %v904
        %v915 = vmul.f32 %v877, %v904
        %v916 = vmul.f32 %v878, %v904
        %v917 = vmul.f32 %v879, %v904
        %v918 = vmul.f32 %v880, %v904
        %v919 = vmul.f32 %v881, %v904
        %v920 = vmul.f32 %v882, %v904
        %v921 = vmul.f32 %v883, %v904
        %v922 = vmul.f32 %v884, %v904
        %v923 = vmul.f32 %v885, %v904
        %v924 = vmul.f32 %v886, %v904
        %v925 = vmul.f32 %v887, %v904
        %v926 = vmul.f32 %v888, %v904
        %v927 = vmul.f32 %v889, %v904
        %v928 = vmul.f32 %v890, %v904
        %v929 = vmul.f32 %v891, %v904
        %v930 = vmul.f32 %v892, %v904
        %v931 = vmul.f32 %v893, %v904
        %v932 = vmul.f32 %v894, %v904
        %v933 = vmul.f32 %v895, %v904
        %v934 = vmul.f32 %v896, %v904
        %v935 = vmul.f32 %v897, %v904
        %v936 = vmul.f32 %v898, %v904
        %v937 = vmul.f32 %v899, %v904
        %v939 = vlaneseq
        %v940 = vshrl.u32 %v939, 7
        %v941 = vsub.s32 0, %v940
        %v942 = vrot.slane %v504, %v941
        %v944 = vadd.f32 %v906, %v942
        %v945 = vadd.f32 %v907, %v942
        %v946 = vadd.f32 %v908, %v942
        %v947 = vadd.f32 %v909, %v942
        %v948 = vadd.f32 %v910, %v942
        %v949 = vadd.f32 %v911, %v942
        %v950 = vadd.f32 %v912, %v942
        %v951 = vadd.f32 %v913, %v942
        %v952 = vadd.f32 %v914, %v942
        %v953 = vadd.f32 %v915, %v942
        %v954 = vadd.f32 %v916, %v942
        %v955 = vadd.f32 %v917, %v942
        %v956 = vadd.f32 %v918, %v942
        %v957 = vadd.f32 %v919, %v942
        %v958 = vadd.f32 %v920, %v942
        %v959 = vadd.f32 %v921, %v942
        %v960 = vadd.f32 %v922, %v942
        %v961 = vadd.f32 %v923, %v942
        %v962 = vadd.f32 %v924, %v942
        %v963 = vadd.f32 %v925, %v942
        %v964 = vadd.f32 %v926, %v942
        %v965 = vadd.f32 %v927, %v942
        %v966 = vadd.f32 %v928, %v942
        %v967 = vadd.f32 %v929, %v942
        %v968 = vadd.f32 %v930, %v942
        %v969 = vadd.f32 %v931, %v942
        %v970 = vadd.f32 %v932, %v942
        %v971 = vadd.f32 %v933, %v942
        %v972 = vadd.f32 %v934, %v942
        %v973 = vadd.f32 %v935, %v942
        %v974 = vadd.f32 %v936, %v942
        %v975 = vadd.f32 %v937, %v942
        %v976 = vxor.u32 %v944, 2147483648
        %v977 = vxor.u32 %v945, 2147483648
        %v978 = vxor.u32 %v946, 2147483648
        %v979 = vxor.u32 %v947, 2147483648
        %v980 = vxor.u32 %v948, 2147483648
        %v981 = vxor.u32 %v949, 2147483648
        %v982 = vxor.u32 %v950, 2147483648
        %v983 = vxor.u32 %v951, 2147483648
        %v984 = vxor.u32 %v952, 2147483648
        %v985 = vxor.u32 %v953, 2147483648
        %v986 = vxor.u32 %v954, 2147483648
        %v987 = vxor.u32 %v955, 2147483648
        %v988 = vxor.u32 %v956, 2147483648
        %v989 = vxor.u32 %v957, 2147483648
        %v990 = vxor.u32 %v958, 2147483648
        %v991 = vxor.u32 %v959, 2147483648
        %v992 = vxor.u32 %v960, 2147483648
        %v993 = vxor.u32 %v961, 2147483648
        %v994 = vxor.u32 %v962, 2147483648
        %v995 = vxor.u32 %v963, 2147483648
        %v996 = vxor.u32 %v964, 2147483648
        %v997 = vxor.u32 %v965, 2147483648
        %v998 = vxor.u32 %v966, 2147483648
        %v999 = vxor.u32 %v967, 2147483648
        %v1000 = vxor.u32 %v968, 2147483648
        %v1001 = vxor.u32 %v969, 2147483648
        %v1002 = vxor.u32 %v970, 2147483648
        %v1003 = vxor.u32 %v971, 2147483648
        %v1004 = vxor.u32 %v972, 2147483648
        %v1005 = vxor.u32 %v973, 2147483648
        %v1006 = vxor.u32 %v974, 2147483648
        %v1007 = vxor.u32 %v975, 2147483648
        %v1008 = vmul.f32 %v976, 1.442695
        %v1009 = vpow.pop %v1008
        %v1010 = vmul.f32 %v977, 1.442695
        %v1011 = vpow.pop %v1010
        %v1012 = vmul.f32 %v978, 1.442695
        %v1013 = vpow.pop %v1012
        %v1014 = vmul.f32 %v979, 1.442695
        %v1015 = vpow.pop %v1014
        %v1016 = vmul.f32 %v980, 1.442695
        %v1017 = vpow.pop %v1016
        %v1018 = vmul.f32 %v981, 1.442695
        %v1019 = vpow.pop %v1018
        %v1020 = vmul.f32 %v982, 1.442695
        %v1021 = vpow.pop %v1020
        %v1022 = vmul.f32 %v983, 1.442695
        %v1023 = vpow.pop %v1022
        %v1024 = vmul.f32 %v984, 1.442695
        %v1025 = vpow.pop %v1024
        %v1026 = vmul.f32 %v985, 1.442695
        %v1027 = vpow.pop %v1026
        %v1028 = vmul.f32 %v986, 1.442695
        %v1029 = vpow.pop %v1028
        %v1030 = vmul.f32 %v987, 1.442695
        %v1031 = vpow.pop %v1030
        %v1032 = vmul.f32 %v988, 1.442695
        %v1033 = vpow.pop %v1032
        %v1034 = vmul.f32 %v989, 1.442695
        %v1035 = vpow.pop %v1034
        %v1036 = vmul.f32 %v990, 1.442695
        %v1037 = vpow.pop %v1036
        %v1038 = vmul.f32 %v991, 1.442695
        %v1039 = vpow.pop %v1038
        %v1040 = vmul.f32 %v992, 1.442695
        %v1041 = vpow.pop %v1040
        %v1042 = vmul.f32 %v993, 1.442695
        %v1043 = vpow.pop %v1042
        %v1044 = vmul.f32 %v994, 1.442695
        %v1045 = vpow.pop %v1044
        %v1046 = vmul.f32 %v995, 1.442695
        %v1047 = vpow.pop %v1046
        %v1048 = vmul.f32 %v996, 1.442695
        %v1049 = vpow.pop %v1048
        %v1050 = vmul.f32 %v997, 1.442695
        %v1051 = vpow.pop %v1050
        %v1052 = vmul.f32 %v998, 1.442695
        %v1053 = vpow.pop %v1052
        %v1054 = vmul.f32 %v999, 1.442695
        %v1055 = vpow.pop %v1054
        %v1056 = vmul.f32 %v1000, 1.442695
        %v1057 = vpow.pop %v1056
        %v1058 = vmul.f32 %v1001, 1.442695
        %v1059 = vpow.pop %v1058
        %v1060 = vmul.f32 %v1002, 1.442695
        %v1061 = vpow.pop %v1060
        %v1062 = vmul.f32 %v1003, 1.442695
        %v1063 = vpow.pop %v1062
        %v1064 = vmul.f32 %v1004, 1.442695
        %v1065 = vpow.pop %v1064
        %v1066 = vmul.f32 %v1005, 1.442695
        %v1067 = vpow.pop %v1066
        %v1068 = vmul.f32 %v1006, 1.442695
        %v1069 = vpow.pop %v1068
        %v1070 = vmul.f32 %v1007, 1.442695
        %v1071 = vpow.pop %v1070
        %v1072 = vadd.f32 %v1009, 1.0
        %v1073 = vadd.f32 %v1011, 1.0
        %v1074 = vadd.f32 %v1013, 1.0
        %v1075 = vadd.f32 %v1015, 1.0
        %v1076 = vadd.f32 %v1017, 1.0
        %v1077 = vadd.f32 %v1019, 1.0
        %v1078 = vadd.f32 %v1021, 1.0
        %v1079 = vadd.f32 %v1023, 1.0
        %v1080 = vadd.f32 %v1025, 1.0
        %v1081 = vadd.f32 %v1027, 1.0
        %v1082 = vadd.f32 %v1029, 1.0
        %v1083 = vadd.f32 %v1031, 1.0
        %v1084 = vadd.f32 %v1033, 1.0
        %v1085 = vadd.f32 %v1035, 1.0
        %v1086 = vadd.f32 %v1037, 1.0
        %v1087 = vadd.f32 %v1039, 1.0
        %v1088 = vadd.f32 %v1041, 1.0
        %v1089 = vadd.f32 %v1043, 1.0
        %v1090 = vadd.f32 %v1045, 1.0
        %v1091 = vadd.f32 %v1047, 1.0
        %v1092 = vadd.f32 %v1049, 1.0
        %v1093 = vadd.f32 %v1051, 1.0
        %v1094 = vadd.f32 %v1053, 1.0
        %v1095 = vadd.f32 %v1055, 1.0
        %v1096 = vadd.f32 %v1057, 1.0
        %v1097 = vadd.f32 %v1059, 1.0
        %v1098 = vadd.f32 %v1061, 1.0
        %v1099 = vadd.f32 %v1063, 1.0
        %v1100 = vadd.f32 %v1065, 1.0
        %v1101 = vadd.f32 %v1067, 1.0
        %v1102 = vadd.f32 %v1069, 1.0
        %v1103 = vadd.f32 %v1071, 1.0
        %v1104 = vrcp.pop %v1072
        %v1105 = vmul.f32 1.0, %v1104
        %v1106 = vrcp.pop %v1073
        %v1107 = vmul.f32 1.0, %v1106
        %v1108 = vrcp.pop %v1074
        %v1109 = vmul.f32 1.0, %v1108
        %v1110 = vrcp.pop %v1075
        %v1111 = vmul.f32 1.0, %v1110
        %v1112 = vrcp.pop %v1076
        %v1113 = vmul.f32 1.0, %v1112
        %v1114 = vrcp.pop %v1077
        %v1115 = vmul.f32 1.0, %v1114
        %v1116 = vrcp.pop %v1078
        %v1117 = vmul.f32 1.0, %v1116
        %v1118 = vrcp.pop %v1079
        %v1119 = vmul.f32 1.0, %v1118
        %v1120 = vrcp.pop %v1080
        %v1121 = vmul.f32 1.0, %v1120
        %v1122 = vrcp.pop %v1081
        %v1123 = vmul.f32 1.0, %v1122
        %v1124 = vrcp.pop %v1082
        %v1125 = vmul.f32 1.0, %v1124
        %v1126 = vrcp.pop %v1083
        %v1127 = vmul.f32 1.0, %v1126
        %v1128 = vrcp.pop %v1084
        %v1129 = vmul.f32 1.0, %v1128
        %v1130 = vrcp.pop %v1085
        %v1131 = vmul.f32 1.0, %v1130
        %v1132 = vrcp.pop %v1086
        %v1133 = vmul.f32 1.0, %v1132
        %v1134 = vrcp.pop %v1087
        %v1135 = vmul.f32 1.0, %v1134
        %v1136 = vrcp.pop %v1088
        %v1137 = vmul.f32 1.0, %v1136
        %v1138 = vrcp.pop %v1089
        %v1139 = vmul.f32 1.0, %v1138
        %v1140 = vrcp.pop %v1090
        %v1141 = vmul.f32 1.0, %v1140
        %v1142 = vrcp.pop %v1091
        %v1143 = vmul.f32 1.0, %v1142
        %v1144 = vrcp.pop %v1092
        %v1145 = vmul.f32 1.0, %v1144
        %v1146 = vrcp.pop %v1093
        %v1147 = vmul.f32 1.0, %v1146
        %v1148 = vrcp.pop %v1094
        %v1149 = vmul.f32 1.0, %v1148
        %v1150 = vrcp.pop %v1095
        %v1151 = vmul.f32 1.0, %v1150
        %v1152 = vrcp.pop %v1096
        %v1153 = vmul.f32 1.0, %v1152
        %v1154 = vrcp.pop %v1097
        %v1155 = vmul.f32 1.0, %v1154
        %v1156 = vrcp.pop %v1098
        %v1157 = vmul.f32 1.0, %v1156
        %v1158 = vrcp.pop %v1099
        %v1159 = vmul.f32 1.0, %v1158
        %v1160 = vrcp.pop %v1100
        %v1161 = vmul.f32 1.0, %v1160
        %v1162 = vrcp.pop %v1101
        %v1163 = vmul.f32 1.0, %v1162
        %v1164 = vrcp.pop %v1102
        %v1165 = vmul.f32 1.0, %v1164
        %v1166 = vrcp.pop %v1103
        %v1167 = vmul.f32 1.0, %v1166
        %v1168 = vmul.f32 %v944, %v1105
        %v1169 = vmul.f32 %v945, %v1107
        %v1170 = vmul.f32 %v946, %v1109
        %v1171 = vmul.f32 %v947, %v1111
        %v1172 = vmul.f32 %v948, %v1113
        %v1173 = vmul.f32 %v949, %v1115
        %v1174 = vmul.f32 %v950, %v1117
        %v1175 = vmul.f32 %v951, %v1119
        %v1176 = vmul.f32 %v952, %v1121
        %v1177 = vmul.f32 %v953, %v1123
        %v1178 = vmul.f32 %v954, %v1125
        %v1179 = vmul.f32 %v955, %v1127
        %v1180 = vmul.f32 %v956, %v1129
        %v1181 = vmul.f32 %v957, %v1131
        %v1182 = vmul.f32 %v958, %v1133
        %v1183 = vmul.f32 %v959, %v1135
        %v1184 = vmul.f32 %v960, %v1137
        %v1185 = vmul.f32 %v961, %v1139
        %v1186 = vmul.f32 %v962, %v1141
        %v1187 = vmul.f32 %v963, %v1143
        %v1188 = vmul.f32 %v964, %v1145
        %v1189 = vmul.f32 %v965, %v1147
        %v1190 = vmul.f32 %v966, %v1149
        %v1191 = vmul.f32 %v967, %v1151
        %v1192 = vmul.f32 %v968, %v1153
        %v1193 = vmul.f32 %v969, %v1155
        %v1194 = vmul.f32 %v970, %v1157
        %v1195 = vmul.f32 %v971, %v1159
        %v1196 = vmul.f32 %v972, %v1161
        %v1197 = vmul.f32 %v973, %v1163
        %v1198 = vmul.f32 %v974, %v1165
        %v1199 = vmul.f32 %v975, %v1167
        %v1200 = vld [vmem:[%s6] sm:$0x1]
        %v1201 = vrot.slane %v1168, 7
        %v1202 = vrot.slane %v1169, 7
        %v1203 = vrot.slane %v1170, 7
        %v1204 = vrot.slane %v1171, 7
        %v1205 = vrot.slane %v1172, 7
        %v1206 = vrot.slane %v1173, 7
        %v1207 = vrot.slane %v1174, 7
        %v1208 = vrot.slane %v1175, 7
        %v1209 = vrot.slane %v1176, 7
        %v1210 = vrot.slane %v1177, 7
        %v1211 = vrot.slane %v1178, 7
        %v1212 = vrot.slane %v1179, 7
        %v1213 = vrot.slane %v1180, 7
        %v1214 = vrot.slane %v1181, 7
        %v1215 = vrot.slane %v1182, 7
        %v1216 = vrot.slane %v1183, 7
        %v1217 = vrot.slane %v1184, 7
        %v1218 = vrot.slane %v1185, 7
        %v1219 = vrot.slane %v1186, 7
        %v1220 = vrot.slane %v1187, 7
        %v1221 = vrot.slane %v1188, 7
        %v1222 = vrot.slane %v1189, 7
        %v1223 = vrot.slane %v1190, 7
        %v1224 = vrot.slane %v1191, 7
        %v1225 = vrot.slane %v1192, 7
        %v1226 = vrot.slane %v1193, 7
        %v1227 = vrot.slane %v1194, 7
        %v1228 = vrot.slane %v1195, 7
        %v1229 = vrot.slane %v1196, 7
        %v1230 = vrot.slane %v1197, 7
        %v1231 = vrot.slane %v1198, 7
        %v1232 = vrot.slane %v1199, 7
        %v1233 = vlaneseq
        %v1234 = vshrl.u32 %v1233, 7
        %vm1235 = vcmp.lt.s32.totalorder %v1234, 1
        %v1236 = vsel %vm1235, %v1231, %v1232
        %v1237 = vsel %vm1235, %v1230, %v1231
        %v1238 = vsel %vm1235, %v1229, %v1230
        %v1239 = vsel %vm1235, %v1228, %v1229
        %v1240 = vsel %vm1235, %v1227, %v1228
        %v1241 = vsel %vm1235, %v1226, %v1227
        %v1242 = vsel %vm1235, %v1225, %v1226
        %v1243 = vsel %vm1235, %v1224, %v1225
        %v1244 = vsel %vm1235, %v1223, %v1224
        %v1245 = vsel %vm1235, %v1222, %v1223
        %v1246 = vsel %vm1235, %v1221, %v1222
        %v1247 = vsel %vm1235, %v1220, %v1221
        %v1248 = vsel %vm1235, %v1219, %v1220
        %v1249 = vsel %vm1235, %v1218, %v1219
        %v1250 = vsel %vm1235, %v1217, %v1218
        %v1251 = vsel %vm1235, %v1216, %v1217
        %v1252 = vsel %vm1235, %v1215, %v1216
        %v1253 = vsel %vm1235, %v1214, %v1215
        %v1254 = vsel %vm1235, %v1213, %v1214
        %v1255 = vsel %vm1235, %v1212, %v1213
        %v1256 = vsel %vm1235, %v1211, %v1212
        %v1257 = vsel %vm1235, %v1210, %v1211
        %v1258 = vsel %vm1235, %v1209, %v1210
        %v1259 = vsel %vm1235, %v1208, %v1209
        %v1260 = vsel %vm1235, %v1207, %v1208
        %v1261 = vsel %vm1235, %v1206, %v1207
        %v1262 = vsel %vm1235, %v1205, %v1206
        %v1263 = vsel %vm1235, %v1204, %v1205
        %v1264 = vsel %vm1235, %v1203, %v1204
        %v1265 = vsel %vm1235, %v1202, %v1203
        %v1266 = vsel %vm1235, %v1201, %v1202
        %v1267 = vsel %vm1235, %v1232, %v1201
        %v1268 = vld [vmem:[%s1] sm:$0xff]
        %v1269 = vld [vmem:[%s1 + $0x8] sm:$0xff]
        %v1270 = vld [vmem:[%s1 + $0x10] sm:$0xff]
        %v1271 = vld [vmem:[%s1 + $0x18] sm:$0xff]
        %v1272 = vld [vmem:[%s1 + $0x20] sm:$0xff]
        %v1273 = vld [vmem:[%s1 + $0x28] sm:$0xff]
        %v1274 = vld [vmem:[%s1 + $0x30] sm:$0xff]
        %v1275 = vld [vmem:[%s1 + $0x38] sm:$0xff]
        %v1276 = vld [vmem:[%s1 + $0x40] sm:$0xff]
        %v1277 = vld [vmem:[%s1 + $0x48] sm:$0xff]
        %v1278 = vld [vmem:[%s1 + $0x50] sm:$0xff]
        %v1279 = vld [vmem:[%s1 + $0x58] sm:$0xff]
        %v1280 = vld [vmem:[%s1 + $0x60] sm:$0xff]
        %v1281 = vld [vmem:[%s1 + $0x68] sm:$0xff]
        %v1282 = vld [vmem:[%s1 + $0x70] sm:$0xff]
        %v1283 = vld [vmem:[%s1 + $0x78] sm:$0xff]
        %v1284 = vld [vmem:[%s1 + $0x80] sm:$0xff]
        %v1285 = vld [vmem:[%s1 + $0x88] sm:$0xff]
        %v1286 = vld [vmem:[%s1 + $0x90] sm:$0xff]
        %v1287 = vld [vmem:[%s1 + $0x98] sm:$0xff]
        %v1288 = vld [vmem:[%s1 + $0xa0] sm:$0xff]
        %v1289 = vld [vmem:[%s1 + $0xa8] sm:$0xff]
        %v1290 = vld [vmem:[%s1 + $0xb0] sm:$0xff]
        %v1291 = vld [vmem:[%s1 + $0xb8] sm:$0xff]
        %v1292 = vld [vmem:[%s1 + $0xc0] sm:$0xff]
        %v1293 = vld [vmem:[%s1 + $0xc8] sm:$0xff]
        %v1294 = vld [vmem:[%s1 + $0xd0] sm:$0xff]
        %v1295 = vld [vmem:[%s1 + $0xd8] sm:$0xff]
        %v1296 = vld [vmem:[%s1 + $0xe0] sm:$0xff]
        %v1297 = vld [vmem:[%s1 + $0xe8] sm:$0xff]
        %v1298 = vld [vmem:[%s1 + $0xf0] sm:$0xff]
        %v1299 = vld [vmem:[%s1 + $0xf8] sm:$0xff]
        %1301 = vset.pattern.permute.xlu0 0
        %1302 = vperm.xlu0 %1301, %v1268
        %v1303 = vpop.permute.xlu0 %1302
        %1306 = vset.pattern.permute.xlu0 0
        %1307 = vperm.xlu0 %1306, %v1269
        %v1308 = vpop.permute.xlu0 %1307
        %1311 = vset.pattern.permute.xlu0 0
        %1312 = vperm.xlu0 %1311, %v1270
        %v1313 = vpop.permute.xlu0 %1312
        %1316 = vset.pattern.permute.xlu0 0
        %1317 = vperm.xlu0 %1316, %v1271
        %v1318 = vpop.permute.xlu0 %1317
        %1321 = vset.pattern.permute.xlu0 0
        %1322 = vperm.xlu0 %1321, %v1272
        %v1323 = vpop.permute.xlu0 %1322
        %1326 = vset.pattern.permute.xlu0 0
        %1327 = vperm.xlu0 %1326, %v1273
        %v1328 = vpop.permute.xlu0 %1327
        %1331 = vset.pattern.permute.xlu0 0
        %1332 = vperm.xlu0 %1331, %v1274
        %v1333 = vpop.permute.xlu0 %1332
        %1336 = vset.pattern.permute.xlu0 0
        %1337 = vperm.xlu0 %1336, %v1275
        %v1338 = vpop.permute.xlu0 %1337
        %1341 = vset.pattern.permute.xlu0 0
        %1342 = vperm.xlu0 %1341, %v1276
        %v1343 = vpop.permute.xlu0 %1342
        %1346 = vset.pattern.permute.xlu0 0
        %1347 = vperm.xlu0 %1346, %v1277
        %v1348 = vpop.permute.xlu0 %1347
        %1351 = vset.pattern.permute.xlu0 0
        %1352 = vperm.xlu0 %1351, %v1278
        %v1353 = vpop.permute.xlu0 %1352
        %1356 = vset.pattern.permute.xlu0 0
        %1357 = vperm.xlu0 %1356, %v1279
        %v1358 = vpop.permute.xlu0 %1357
        %1361 = vset.pattern.permute.xlu0 0
        %1362 = vperm.xlu0 %1361, %v1280
        %v1363 = vpop.permute.xlu0 %1362
        %1366 = vset.pattern.permute.xlu0 0
        %1367 = vperm.xlu0 %1366, %v1281
        %v1368 = vpop.permute.xlu0 %1367
        %1371 = vset.pattern.permute.xlu0 0
        %1372 = vperm.xlu0 %1371, %v1282
        %v1373 = vpop.permute.xlu0 %1372
        %1376 = vset.pattern.permute.xlu0 0
        %1377 = vperm.xlu0 %1376, %v1283
        %v1378 = vpop.permute.xlu0 %1377
        %1381 = vset.pattern.permute.xlu0 0
        %1382 = vperm.xlu0 %1381, %v1284
        %v1383 = vpop.permute.xlu0 %1382
        %1386 = vset.pattern.permute.xlu0 0
        %1387 = vperm.xlu0 %1386, %v1285
        %v1388 = vpop.permute.xlu0 %1387
        %1391 = vset.pattern.permute.xlu0 0
        %1392 = vperm.xlu0 %1391, %v1286
        %v1393 = vpop.permute.xlu0 %1392
        %1396 = vset.pattern.permute.xlu0 0
        %1397 = vperm.xlu0 %1396, %v1287
        %v1398 = vpop.permute.xlu0 %1397
        %1401 = vset.pattern.permute.xlu0 0
        %1402 = vperm.xlu0 %1401, %v1288
        %v1403 = vpop.permute.xlu0 %1402
        %1406 = vset.pattern.permute.xlu0 0
        %1407 = vperm.xlu0 %1406, %v1289
        %v1408 = vpop.permute.xlu0 %1407
        %1411 = vset.pattern.permute.xlu0 0
        %1412 = vperm.xlu0 %1411, %v1290
        %v1413 = vpop.permute.xlu0 %1412
        %1416 = vset.pattern.permute.xlu0 0
        %1417 = vperm.xlu0 %1416, %v1291
        %v1418 = vpop.permute.xlu0 %1417
        %1421 = vset.pattern.permute.xlu0 0
        %1422 = vperm.xlu0 %1421, %v1292
        %v1423 = vpop.permute.xlu0 %1422
        %1426 = vset.pattern.permute.xlu0 0
        %1427 = vperm.xlu0 %1426, %v1293
        %v1428 = vpop.permute.xlu0 %1427
        %1431 = vset.pattern.permute.xlu0 0
        %1432 = vperm.xlu0 %1431, %v1294
        %v1433 = vpop.permute.xlu0 %1432
        %1436 = vset.pattern.permute.xlu0 0
        %1437 = vperm.xlu0 %1436, %v1295
        %v1438 = vpop.permute.xlu0 %1437
        %1441 = vset.pattern.permute.xlu0 0
        %1442 = vperm.xlu0 %1441, %v1296
        %v1443 = vpop.permute.xlu0 %1442
        %1446 = vset.pattern.permute.xlu0 0
        %1447 = vperm.xlu0 %1446, %v1297
        %v1448 = vpop.permute.xlu0 %1447
        %1451 = vset.pattern.permute.xlu0 0
        %1452 = vperm.xlu0 %1451, %v1298
        %v1453 = vpop.permute.xlu0 %1452
        %1456 = vset.pattern.permute.xlu0 0
        %1457 = vperm.xlu0 %1456, %v1299
        %v1458 = vpop.permute.xlu0 %1457
        %v1460 = vmul.f32 %v1237, %v1303
        %v1461 = vmul.f32 %v1236, %v1308
        %v1462 = vmul.f32 %v1267, %v1313
        %v1463 = vmul.f32 %v1266, %v1318
        %v1464 = vmul.f32 %v1265, %v1323
        %v1465 = vmul.f32 %v1264, %v1328
        %v1466 = vmul.f32 %v1263, %v1333
        %v1467 = vmul.f32 %v1262, %v1338
        %v1468 = vmul.f32 %v1261, %v1343
        %v1469 = vmul.f32 %v1260, %v1348
        %v1470 = vmul.f32 %v1259, %v1353
        %v1471 = vmul.f32 %v1258, %v1358
        %v1472 = vmul.f32 %v1257, %v1363
        %v1473 = vmul.f32 %v1256, %v1368
        %v1474 = vmul.f32 %v1255, %v1373
        %v1475 = vmul.f32 %v1254, %v1378
        %v1476 = vmul.f32 %v1253, %v1383
        %v1477 = vmul.f32 %v1252, %v1388
        %v1478 = vmul.f32 %v1251, %v1393
        %v1479 = vmul.f32 %v1250, %v1398
        %v1480 = vmul.f32 %v1249, %v1403
        %v1481 = vmul.f32 %v1248, %v1408
        %v1482 = vmul.f32 %v1247, %v1413
        %v1483 = vmul.f32 %v1246, %v1418
        %v1484 = vmul.f32 %v1245, %v1423
        %v1485 = vmul.f32 %v1244, %v1428
        %v1486 = vmul.f32 %v1243, %v1433
        %v1487 = vmul.f32 %v1242, %v1438
        %v1488 = vmul.f32 %v1241, %v1443
        %v1489 = vmul.f32 %v1240, %v1448
        %v1490 = vmul.f32 %v1239, %v1453
        %v1491 = vmul.f32 %v1238, %v1458
        %1492 = vst.msk [vmem:[#allocation2] sm:$0xff] %vm505, %v1460
        %1493 = vst.msk [vmem:[#allocation2 + $0x18] sm:$0xff] %vm505, %v1461
        %1494 = vst.msk [vmem:[#allocation2 + $0x30] sm:$0xff] %vm505, %v1462
        %1495 = vst.msk [vmem:[#allocation2 + $0x48] sm:$0xff] %vm505, %v1463
        %1496 = vst.msk [vmem:[#allocation2 + $0x60] sm:$0xff] %vm505, %v1464
        %1497 = vst.msk [vmem:[#allocation2 + $0x78] sm:$0xff] %vm505, %v1465
        %1498 = vst.msk [vmem:[#allocation2 + $0x90] sm:$0xff] %vm505, %v1466
        %1499 = vst.msk [vmem:[#allocation2 + $0xa8] sm:$0xff] %vm505, %v1467
        %1500 = vst.msk [vmem:[#allocation2 + $0xc0] sm:$0xff] %vm505, %v1468
        %1501 = vst.msk [vmem:[#allocation2 + $0xd8] sm:$0xff] %vm505, %v1469
        %1502 = vst.msk [vmem:[#allocation2 + $0xf0] sm:$0xff] %vm505, %v1470
        %1503 = vst.msk [vmem:[#allocation2 + $0x108] sm:$0xff] %vm505, %v1471
        %1504 = vst.msk [vmem:[#allocation2 + $0x120] sm:$0xff] %vm505, %v1472
        %1505 = vst.msk [vmem:[#allocation2 + $0x138] sm:$0xff] %vm505, %v1473
        %1506 = vst.msk [vmem:[#allocation2 + $0x150] sm:$0xff] %vm505, %v1474
        %1507 = vst.msk [vmem:[#allocation2 + $0x168] sm:$0xff] %vm505, %v1475
        %1508 = vst.msk [vmem:[#allocation2 + $0x180] sm:$0xff] %vm505, %v1476
        %1509 = vst.msk [vmem:[#allocation2 + $0x198] sm:$0xff] %vm505, %v1477
        %1510 = vst.msk [vmem:[#allocation2 + $0x1b0] sm:$0xff] %vm505, %v1478
        %1511 = vst.msk [vmem:[#allocation2 + $0x1c8] sm:$0xff] %vm505, %v1479
        %1512 = vst.msk [vmem:[#allocation2 + $0x1e0] sm:$0xff] %vm505, %v1480
        %1513 = vst.msk [vmem:[#allocation2 + $0x1f8] sm:$0xff] %vm505, %v1481
        %1514 = vst.msk [vmem:[#allocation2 + $0x210] sm:$0xff] %vm505, %v1482
        %1515 = vst.msk [vmem:[#allocation2 + $0x228] sm:$0xff] %vm505, %v1483
        %1516 = vst.msk [vmem:[#allocation2 + $0x240] sm:$0xff] %vm505, %v1484
        %1517 = vst.msk [vmem:[#allocation2 + $0x258] sm:$0xff] %vm505, %v1485
        %1518 = vst.msk [vmem:[#allocation2 + $0x270] sm:$0xff] %vm505, %v1486
        %1519 = vst.msk [vmem:[#allocation2 + $0x288] sm:$0xff] %vm505, %v1487
        %1520 = vst.msk [vmem:[#allocation2 + $0x2a0] sm:$0xff] %vm505, %v1488
        %1521 = vst.msk [vmem:[#allocation2 + $0x2b8] sm:$0xff] %vm505, %v1489
        %1522 = vst.msk [vmem:[#allocation2 + $0x2d0] sm:$0xff] %vm505, %v1490
        %1523 = vst.msk [vmem:[#allocation2 + $0x2e8] sm:$0xff] %vm505, %v1491
        %v1524 = vld [vmem:[%s1] sm:$0xff]
        %v1525 = vld [vmem:[%s1 + $0x8] sm:$0xff]
        %v1526 = vld [vmem:[%s1 + $0x10] sm:$0xff]
        %v1527 = vld [vmem:[%s1 + $0x18] sm:$0xff]
        %v1528 = vld [vmem:[%s1 + $0x20] sm:$0xff]
        %v1529 = vld [vmem:[%s1 + $0x28] sm:$0xff]
        %v1530 = vld [vmem:[%s1 + $0x30] sm:$0xff]
        %v1531 = vld [vmem:[%s1 + $0x38] sm:$0xff]
        %v1532 = vld [vmem:[%s1 + $0x40] sm:$0xff]
        %v1533 = vld [vmem:[%s1 + $0x48] sm:$0xff]
        %v1534 = vld [vmem:[%s1 + $0x50] sm:$0xff]
        %v1535 = vld [vmem:[%s1 + $0x58] sm:$0xff]
        %v1536 = vld [vmem:[%s1 + $0x60] sm:$0xff]
        %v1537 = vld [vmem:[%s1 + $0x68] sm:$0xff]
        %v1538 = vld [vmem:[%s1 + $0x70] sm:$0xff]
        %v1539 = vld [vmem:[%s1 + $0x78] sm:$0xff]
        %v1540 = vld [vmem:[%s1 + $0x80] sm:$0xff]
        %v1541 = vld [vmem:[%s1 + $0x88] sm:$0xff]
        %v1542 = vld [vmem:[%s1 + $0x90] sm:$0xff]
        %v1543 = vld [vmem:[%s1 + $0x98] sm:$0xff]
        %v1544 = vld [vmem:[%s1 + $0xa0] sm:$0xff]
        %v1545 = vld [vmem:[%s1 + $0xa8] sm:$0xff]
        %v1546 = vld [vmem:[%s1 + $0xb0] sm:$0xff]
        %v1547 = vld [vmem:[%s1 + $0xb8] sm:$0xff]
        %v1548 = vld [vmem:[%s1 + $0xc0] sm:$0xff]
        %v1549 = vld [vmem:[%s1 + $0xc8] sm:$0xff]
        %v1550 = vld [vmem:[%s1 + $0xd0] sm:$0xff]
        %v1551 = vld [vmem:[%s1 + $0xd8] sm:$0xff]
        %v1552 = vld [vmem:[%s1 + $0xe0] sm:$0xff]
        %v1553 = vld [vmem:[%s1 + $0xe8] sm:$0xff]
        %v1554 = vld [vmem:[%s1 + $0xf0] sm:$0xff]
        %v1555 = vld [vmem:[%s1 + $0xf8] sm:$0xff]
        %1557 = vset.pattern.permute.xlu0 1
        %1558 = vperm.xlu0 %1557, %v1524
        %v1559 = vpop.permute.xlu0 %1558
        %1562 = vset.pattern.permute.xlu0 1
        %1563 = vperm.xlu0 %1562, %v1525
        %v1564 = vpop.permute.xlu0 %1563
        %1567 = vset.pattern.permute.xlu0 1
        %1568 = vperm.xlu0 %1567, %v1526
        %v1569 = vpop.permute.xlu0 %1568
        %1572 = vset.pattern.permute.xlu0 1
        %1573 = vperm.xlu0 %1572, %v1527
        %v1574 = vpop.permute.xlu0 %1573
        %1577 = vset.pattern.permute.xlu0 1
        %1578 = vperm.xlu0 %1577, %v1528
        %v1579 = vpop.permute.xlu0 %1578
        %1582 = vset.pattern.permute.xlu0 1
        %1583 = vperm.xlu0 %1582, %v1529
        %v1584 = vpop.permute.xlu0 %1583
        %1587 = vset.pattern.permute.xlu0 1
        %1588 = vperm.xlu0 %1587, %v1530
        %v1589 = vpop.permute.xlu0 %1588
        %1592 = vset.pattern.permute.xlu0 1
        %1593 = vperm.xlu0 %1592, %v1531
        %v1594 = vpop.permute.xlu0 %1593
        %1597 = vset.pattern.permute.xlu0 1
        %1598 = vperm.xlu0 %1597, %v1532
        %v1599 = vpop.permute.xlu0 %1598
        %1602 = vset.pattern.permute.xlu0 1
        %1603 = vperm.xlu0 %1602, %v1533
        %v1604 = vpop.permute.xlu0 %1603
        %1607 = vset.pattern.permute.xlu0 1
        %1608 = vperm.xlu0 %1607, %v1534
        %v1609 = vpop.permute.xlu0 %1608
        %1612 = vset.pattern.permute.xlu0 1
        %1613 = vperm.xlu0 %1612, %v1535
        %v1614 = vpop.permute.xlu0 %1613
        %1617 = vset.pattern.permute.xlu0 1
        %1618 = vperm.xlu0 %1617, %v1536
        %v1619 = vpop.permute.xlu0 %1618
        %1622 = vset.pattern.permute.xlu0 1
        %1623 = vperm.xlu0 %1622, %v1537
        %v1624 = vpop.permute.xlu0 %1623
        %1627 = vset.pattern.permute.xlu0 1
        %1628 = vperm.xlu0 %1627, %v1538
        %v1629 = vpop.permute.xlu0 %1628
        %1632 = vset.pattern.permute.xlu0 1
        %1633 = vperm.xlu0 %1632, %v1539
        %v1634 = vpop.permute.xlu0 %1633
        %1637 = vset.pattern.permute.xlu0 1
        %1638 = vperm.xlu0 %1637, %v1540
        %v1639 = vpop.permute.xlu0 %1638
        %1642 = vset.pattern.permute.xlu0 1
        %1643 = vperm.xlu0 %1642, %v1541
        %v1644 = vpop.permute.xlu0 %1643
        %1647 = vset.pattern.permute.xlu0 1
        %1648 = vperm.xlu0 %1647, %v1542
        %v1649 = vpop.permute.xlu0 %1648
        %1652 = vset.pattern.permute.xlu0 1
        %1653 = vperm.xlu0 %1652, %v1543
        %v1654 = vpop.permute.xlu0 %1653
        %1657 = vset.pattern.permute.xlu0 1
        %1658 = vperm.xlu0 %1657, %v1544
        %v1659 = vpop.permute.xlu0 %1658
        %1662 = vset.pattern.permute.xlu0 1
        %1663 = vperm.xlu0 %1662, %v1545
        %v1664 = vpop.permute.xlu0 %1663
        %1667 = vset.pattern.permute.xlu0 1
        %1668 = vperm.xlu0 %1667, %v1546
        %v1669 = vpop.permute.xlu0 %1668
        %1672 = vset.pattern.permute.xlu0 1
        %1673 = vperm.xlu0 %1672, %v1547
        %v1674 = vpop.permute.xlu0 %1673
        %1677 = vset.pattern.permute.xlu0 1
        %1678 = vperm.xlu0 %1677, %v1548
        %v1679 = vpop.permute.xlu0 %1678
        %1682 = vset.pattern.permute.xlu0 1
        %1683 = vperm.xlu0 %1682, %v1549
        %v1684 = vpop.permute.xlu0 %1683
        %1687 = vset.pattern.permute.xlu0 1
        %1688 = vperm.xlu0 %1687, %v1550
        %v1689 = vpop.permute.xlu0 %1688
        %1692 = vset.pattern.permute.xlu0 1
        %1693 = vperm.xlu0 %1692, %v1551
        %v1694 = vpop.permute.xlu0 %1693
        %1697 = vset.pattern.permute.xlu0 1
        %1698 = vperm.xlu0 %1697, %v1552
        %v1699 = vpop.permute.xlu0 %1698
        %1702 = vset.pattern.permute.xlu0 1
        %1703 = vperm.xlu0 %1702, %v1553
        %v1704 = vpop.permute.xlu0 %1703
        %1707 = vset.pattern.permute.xlu0 1
        %1708 = vperm.xlu0 %1707, %v1554
        %v1709 = vpop.permute.xlu0 %1708
        %1712 = vset.pattern.permute.xlu0 1
        %1713 = vperm.xlu0 %1712, %v1555
        %v1714 = vpop.permute.xlu0 %1713
        %v1716 = vmul.f32 %v1198, %v1559
        %v1717 = vmul.f32 %v1199, %v1564
        %v1718 = vmul.f32 %v1168, %v1569
        %v1719 = vmul.f32 %v1169, %v1574
        %v1720 = vmul.f32 %v1170, %v1579
        %v1721 = vmul.f32 %v1171, %v1584
        %v1722 = vmul.f32 %v1172, %v1589
        %v1723 = vmul.f32 %v1173, %v1594
        %v1724 = vmul.f32 %v1174, %v1599
        %v1725 = vmul.f32 %v1175, %v1604
        %v1726 = vmul.f32 %v1176, %v1609
        %v1727 = vmul.f32 %v1177, %v1614
        %v1728 = vmul.f32 %v1178, %v1619
        %v1729 = vmul.f32 %v1179, %v1624
        %v1730 = vmul.f32 %v1180, %v1629
        %v1731 = vmul.f32 %v1181, %v1634
        %v1732 = vmul.f32 %v1182, %v1639
        %v1733 = vmul.f32 %v1183, %v1644
        %v1734 = vmul.f32 %v1184, %v1649
        %v1735 = vmul.f32 %v1185, %v1654
        %v1736 = vmul.f32 %v1186, %v1659
        %v1737 = vmul.f32 %v1187, %v1664
        %v1738 = vmul.f32 %v1188, %v1669
        %v1739 = vmul.f32 %v1189, %v1674
        %v1740 = vmul.f32 %v1190, %v1679
        %v1741 = vmul.f32 %v1191, %v1684
        %v1742 = vmul.f32 %v1192, %v1689
        %v1743 = vmul.f32 %v1193, %v1694
        %v1744 = vmul.f32 %v1194, %v1699
        %v1745 = vmul.f32 %v1195, %v1704
        %v1746 = vmul.f32 %v1196, %v1709
        %v1747 = vmul.f32 %v1197, %v1714
        %1780 = vrot.lane.b32.xlu0 %v1716, 32
        %v1781 = vpop.permute.xlu0 %1780
        %1782 = vrot.lane.b32.xlu0 %v1717, 32
        %v1783 = vpop.permute.xlu0 %1782
        %1784 = vrot.lane.b32.xlu0 %v1718, 32
        %v1785 = vpop.permute.xlu0 %1784
        %1786 = vrot.lane.b32.xlu0 %v1719, 32
        %v1787 = vpop.permute.xlu0 %1786
        %1788 = vrot.lane.b32.xlu0 %v1720, 32
        %v1789 = vpop.permute.xlu0 %1788
        %1790 = vrot.lane.b32.xlu0 %v1721, 32
        %v1791 = vpop.permute.xlu0 %1790
        %1792 = vrot.lane.b32.xlu0 %v1722, 32
        %v1793 = vpop.permute.xlu0 %1792
        %1794 = vrot.lane.b32.xlu0 %v1723, 32
        %v1795 = vpop.permute.xlu0 %1794
        %1796 = vrot.lane.b32.xlu0 %v1724, 32
        %v1797 = vpop.permute.xlu0 %1796
        %1798 = vrot.lane.b32.xlu0 %v1725, 32
        %v1799 = vpop.permute.xlu0 %1798
        %1800 = vrot.lane.b32.xlu0 %v1726, 32
        %v1801 = vpop.permute.xlu0 %1800
        %1802 = vrot.lane.b32.xlu0 %v1727, 32
        %v1803 = vpop.permute.xlu0 %1802
        %1804 = vrot.lane.b32.xlu0 %v1728, 32
        %v1805 = vpop.permute.xlu0 %1804
        %1806 = vrot.lane.b32.xlu0 %v1729, 32
        %v1807 = vpop.permute.xlu0 %1806
        %1808 = vrot.lane.b32.xlu0 %v1730, 32
        %v1809 = vpop.permute.xlu0 %1808
        %1810 = vrot.lane.b32.xlu0 %v1731, 32
        %v1811 = vpop.permute.xlu0 %1810
        %1812 = vrot.lane.b32.xlu0 %v1732, 32
        %v1813 = vpop.permute.xlu0 %1812
        %1814 = vrot.lane.b32.xlu0 %v1733, 32
        %v1815 = vpop.permute.xlu0 %1814
        %1816 = vrot.lane.b32.xlu0 %v1734, 32
        %v1817 = vpop.permute.xlu0 %1816
        %1818 = vrot.lane.b32.xlu0 %v1735, 32
        %v1819 = vpop.permute.xlu0 %1818
        %1820 = vrot.lane.b32.xlu0 %v1736, 32
        %v1821 = vpop.permute.xlu0 %1820
        %1822 = vrot.lane.b32.xlu0 %v1737, 32
        %v1823 = vpop.permute.xlu0 %1822
        %1824 = vrot.lane.b32.xlu0 %v1738, 32
        %v1825 = vpop.permute.xlu0 %1824
        %1826 = vrot.lane.b32.xlu0 %v1739, 32
        %v1827 = vpop.permute.xlu0 %1826
        %1828 = vrot.lane.b32.xlu0 %v1740, 32
        %v1829 = vpop.permute.xlu0 %1828
        %1830 = vrot.lane.b32.xlu0 %v1741, 32
        %v1831 = vpop.permute.xlu0 %1830
        %1832 = vrot.lane.b32.xlu0 %v1742, 32
        %v1833 = vpop.permute.xlu0 %1832
        %1834 = vrot.lane.b32.xlu0 %v1743, 32
        %v1835 = vpop.permute.xlu0 %1834
        %1836 = vrot.lane.b32.xlu0 %v1744, 32
        %v1837 = vpop.permute.xlu0 %1836
        %1838 = vrot.lane.b32.xlu0 %v1745, 32
        %v1839 = vpop.permute.xlu0 %1838
        %1840 = vrot.lane.b32.xlu0 %v1746, 32
        %v1841 = vpop.permute.xlu0 %1840
        %1842 = vrot.lane.b32.xlu0 %v1747, 32
        %v1843 = vpop.permute.xlu0 %1842
        %vm1876 = vcmask 523520
        %1877 = vst.msk [vmem:[#allocation2] sm:$0xff] %vm1876, %v1781
        %1878 = vst.msk [vmem:[#allocation2 + $0x18] sm:$0xff] %vm1876, %v1783
        %1879 = vst.msk [vmem:[#allocation2 + $0x30] sm:$0xff] %vm1876, %v1785
        %1880 = vst.msk [vmem:[#allocation2 + $0x48] sm:$0xff] %vm1876, %v1787
        %1881 = vst.msk [vmem:[#allocation2 + $0x60] sm:$0xff] %vm1876, %v1789
        %1882 = vst.msk [vmem:[#allocation2 + $0x78] sm:$0xff] %vm1876, %v1791
        %1883 = vst.msk [vmem:[#allocation2 + $0x90] sm:$0xff] %vm1876, %v1793
        %1884 = vst.msk [vmem:[#allocation2 + $0xa8] sm:$0xff] %vm1876, %v1795
        %1885 = vst.msk [vmem:[#allocation2 + $0xc0] sm:$0xff] %vm1876, %v1797
        %1886 = vst.msk [vmem:[#allocation2 + $0xd8] sm:$0xff] %vm1876, %v1799
        %1887 = vst.msk [vmem:[#allocation2 + $0xf0] sm:$0xff] %vm1876, %v1801
        %1888 = vst.msk [vmem:[#allocation2 + $0x108] sm:$0xff] %vm1876, %v1803
        %1889 = vst.msk [vmem:[#allocation2 + $0x120] sm:$0xff] %vm1876, %v1805
        %1890 = vst.msk [vmem:[#allocation2 + $0x138] sm:$0xff] %vm1876, %v1807
        %1891 = vst.msk [vmem:[#allocation2 + $0x150] sm:$0xff] %vm1876, %v1809
        %1892 = vst.msk [vmem:[#allocation2 + $0x168] sm:$0xff] %vm1876, %v1811
        %1893 = vst.msk [vmem:[#allocation2 + $0x180] sm:$0xff] %vm1876, %v1813
        %1894 = vst.msk [vmem:[#allocation2 + $0x198] sm:$0xff] %vm1876, %v1815
        %1895 = vst.msk [vmem:[#allocation2 + $0x1b0] sm:$0xff] %vm1876, %v1817
        %1896 = vst.msk [vmem:[#allocation2 + $0x1c8] sm:$0xff] %vm1876, %v1819
        %1897 = vst.msk [vmem:[#allocation2 + $0x1e0] sm:$0xff] %vm1876, %v1821
        %1898 = vst.msk [vmem:[#allocation2 + $0x1f8] sm:$0xff] %vm1876, %v1823
        %1899 = vst.msk [vmem:[#allocation2 + $0x210] sm:$0xff] %vm1876, %v1825
        %1900 = vst.msk [vmem:[#allocation2 + $0x228] sm:$0xff] %vm1876, %v1827
        %1901 = vst.msk [vmem:[#allocation2 + $0x240] sm:$0xff] %vm1876, %v1829
        %1902 = vst.msk [vmem:[#allocation2 + $0x258] sm:$0xff] %vm1876, %v1831
        %1903 = vst.msk [vmem:[#allocation2 + $0x270] sm:$0xff] %vm1876, %v1833
        %1904 = vst.msk [vmem:[#allocation2 + $0x288] sm:$0xff] %vm1876, %v1835
        %1905 = vst.msk [vmem:[#allocation2 + $0x2a0] sm:$0xff] %vm1876, %v1837
        %1906 = vst.msk [vmem:[#allocation2 + $0x2b8] sm:$0xff] %vm1876, %v1839
        %1907 = vst.msk [vmem:[#allocation2 + $0x2d0] sm:$0xff] %vm1876, %v1841
        %1908 = vst.msk [vmem:[#allocation2 + $0x2e8] sm:$0xff] %vm1876, %v1843
        %v1909 = vrot.slane %v1168, 1
        %v1910 = vrot.slane %v1169, 1
        %v1911 = vrot.slane %v1170, 1
        %v1912 = vrot.slane %v1171, 1
        %v1913 = vrot.slane %v1172, 1
        %v1914 = vrot.slane %v1173, 1
        %v1915 = vrot.slane %v1174, 1
        %v1916 = vrot.slane %v1175, 1
        %v1917 = vrot.slane %v1176, 1
        %v1918 = vrot.slane %v1177, 1
        %v1919 = vrot.slane %v1178, 1
        %v1920 = vrot.slane %v1179, 1
        %v1921 = vrot.slane %v1180, 1
        %v1922 = vrot.slane %v1181, 1
        %v1923 = vrot.slane %v1182, 1
        %v1924 = vrot.slane %v1183, 1
        %v1925 = vrot.slane %v1184, 1
        %v1926 = vrot.slane %v1185, 1
        %v1927 = vrot.slane %v1186, 1
        %v1928 = vrot.slane %v1187, 1
        %v1929 = vrot.slane %v1188, 1
        %v1930 = vrot.slane %v1189, 1
        %v1931 = vrot.slane %v1190, 1
        %v1932 = vrot.slane %v1191, 1
        %v1933 = vrot.slane %v1192, 1
        %v1934 = vrot.slane %v1193, 1
        %v1935 = vrot.slane %v1194, 1
        %v1936 = vrot.slane %v1195, 1
        %v1937 = vrot.slane %v1196, 1
        %v1938 = vrot.slane %v1197, 1
        %v1939 = vrot.slane %v1198, 1
        %v1940 = vrot.slane %v1199, 1
        %vm1941 = vcmp.lt.s32.totalorder %v1234, 7
        %v1942 = vsel %vm1941, %v1939, %v1940
        %v1943 = vsel %vm1941, %v1938, %v1939
        %v1944 = vsel %vm1941, %v1937, %v1938
        %v1945 = vsel %vm1941, %v1936, %v1937
        %v1946 = vsel %vm1941, %v1935, %v1936
        %v1947 = vsel %vm1941, %v1934, %v1935
        %v1948 = vsel %vm1941, %v1933, %v1934
        %v1949 = vsel %vm1941, %v1932, %v1933
        %v1950 = vsel %vm1941, %v1931, %v1932
        %v1951 = vsel %vm1941, %v1930, %v1931
        %v1952 = vsel %vm1941, %v1929, %v1930
        %v1953 = vsel %vm1941, %v1928, %v1929
        %v1954 = vsel %vm1941, %v1927, %v1928
        %v1955 = vsel %vm1941, %v1926, %v1927
        %v1956 = vsel %vm1941, %v1925, %v1926
        %v1957 = vsel %vm1941, %v1924, %v1925
        %v1958 = vsel %vm1941, %v1923, %v1924
        %v1959 = vsel %vm1941, %v1922, %v1923
        %v1960 = vsel %vm1941, %v1921, %v1922
        %v1961 = vsel %vm1941, %v1920, %v1921
        %v1962 = vsel %vm1941, %v1919, %v1920
        %v1963 = vsel %vm1941, %v1918, %v1919
        %v1964 = vsel %vm1941, %v1917, %v1918
        %v1965 = vsel %vm1941, %v1916, %v1917
        %v1966 = vsel %vm1941, %v1915, %v1916
        %v1967 = vsel %vm1941, %v1914, %v1915
        %v1968 = vsel %vm1941, %v1913, %v1914
        %v1969 = vsel %vm1941, %v1912, %v1913
        %v1970 = vsel %vm1941, %v1911, %v1912
        %v1971 = vsel %vm1941, %v1910, %v1911
        %v1972 = vsel %vm1941, %v1909, %v1910
        %v1973 = vsel %vm1941, %v1940, %v1909
        %v1974 = vld [vmem:[%s1] sm:$0xff]
        %v1975 = vld [vmem:[%s1 + $0x8] sm:$0xff]
        %v1976 = vld [vmem:[%s1 + $0x10] sm:$0xff]
        %v1977 = vld [vmem:[%s1 + $0x18] sm:$0xff]
        %v1978 = vld [vmem:[%s1 + $0x20] sm:$0xff]
        %v1979 = vld [vmem:[%s1 + $0x28] sm:$0xff]
        %v1980 = vld [vmem:[%s1 + $0x30] sm:$0xff]
        %v1981 = vld [vmem:[%s1 + $0x38] sm:$0xff]
        %v1982 = vld [vmem:[%s1 + $0x40] sm:$0xff]
        %v1983 = vld [vmem:[%s1 + $0x48] sm:$0xff]
        %v1984 = vld [vmem:[%s1 + $0x50] sm:$0xff]
        %v1985 = vld [vmem:[%s1 + $0x58] sm:$0xff]
        %v1986 = vld [vmem:[%s1 + $0x60] sm:$0xff]
        %v1987 = vld [vmem:[%s1 + $0x68] sm:$0xff]
        %v1988 = vld [vmem:[%s1 + $0x70] sm:$0xff]
        %v1989 = vld [vmem:[%s1 + $0x78] sm:$0xff]
        %v1990 = vld [vmem:[%s1 + $0x80] sm:$0xff]
        %v1991 = vld [vmem:[%s1 + $0x88] sm:$0xff]
        %v1992 = vld [vmem:[%s1 + $0x90] sm:$0xff]
        %v1993 = vld [vmem:[%s1 + $0x98] sm:$0xff]
        %v1994 = vld [vmem:[%s1 + $0xa0] sm:$0xff]
        %v1995 = vld [vmem:[%s1 + $0xa8] sm:$0xff]
        %v1996 = vld [vmem:[%s1 + $0xb0] sm:$0xff]
        %v1997 = vld [vmem:[%s1 + $0xb8] sm:$0xff]
        %v1998 = vld [vmem:[%s1 + $0xc0] sm:$0xff]
        %v1999 = vld [vmem:[%s1 + $0xc8] sm:$0xff]
        %v2000 = vld [vmem:[%s1 + $0xd0] sm:$0xff]
        %v2001 = vld [vmem:[%s1 + $0xd8] sm:$0xff]
        %v2002 = vld [vmem:[%s1 + $0xe0] sm:$0xff]
        %v2003 = vld [vmem:[%s1 + $0xe8] sm:$0xff]
        %v2004 = vld [vmem:[%s1 + $0xf0] sm:$0xff]
        %v2005 = vld [vmem:[%s1 + $0xf8] sm:$0xff]
        %2007 = vset.pattern.permute.xlu0 2
        %2008 = vperm.xlu0 %2007, %v1974
        %v2009 = vpop.permute.xlu0 %2008
        %2012 = vset.pattern.permute.xlu0 2
        %2013 = vperm.xlu0 %2012, %v1975
        %v2014 = vpop.permute.xlu0 %2013
        %2017 = vset.pattern.permute.xlu0 2
        %2018 = vperm.xlu0 %2017, %v1976
        %v2019 = vpop.permute.xlu0 %2018
        %2022 = vset.pattern.permute.xlu0 2
        %2023 = vperm.xlu0 %2022, %v1977
        %v2024 = vpop.permute.xlu0 %2023
        %2027 = vset.pattern.permute.xlu0 2
        %2028 = vperm.xlu0 %2027, %v1978
        %v2029 = vpop.permute.xlu0 %2028
        %2032 = vset.pattern.permute.xlu0 2
        %2033 = vperm.xlu0 %2032, %v1979
        %v2034 = vpop.permute.xlu0 %2033
        %2037 = vset.pattern.permute.xlu0 2
        %2038 = vperm.xlu0 %2037, %v1980
        %v2039 = vpop.permute.xlu0 %2038
        %2042 = vset.pattern.permute.xlu0 2
        %2043 = vperm.xlu0 %2042, %v1981
        %v2044 = vpop.permute.xlu0 %2043
        %2047 = vset.pattern.permute.xlu0 2
        %2048 = vperm.xlu0 %2047, %v1982
        %v2049 = vpop.permute.xlu0 %2048
        %2052 = vset.pattern.permute.xlu0 2
        %2053 = vperm.xlu0 %2052, %v1983
        %v2054 = vpop.permute.xlu0 %2053
        %2057 = vset.pattern.permute.xlu0 2
        %2058 = vperm.xlu0 %2057, %v1984
        %v2059 = vpop.permute.xlu0 %2058
        %2062 = vset.pattern.permute.xlu0 2
        %2063 = vperm.xlu0 %2062, %v1985
        %v2064 = vpop.permute.xlu0 %2063
        %2067 = vset.pattern.permute.xlu0 2
        %2068 = vperm.xlu0 %2067, %v1986
        %v2069 = vpop.permute.xlu0 %2068
        %2072 = vset.pattern.permute.xlu0 2
        %2073 = vperm.xlu0 %2072, %v1987
        %v2074 = vpop.permute.xlu0 %2073
        %2077 = vset.pattern.permute.xlu0 2
        %2078 = vperm.xlu0 %2077, %v1988
        %v2079 = vpop.permute.xlu0 %2078
        %2082 = vset.pattern.permute.xlu0 2
        %2083 = vperm.xlu0 %2082, %v1989
        %v2084 = vpop.permute.xlu0 %2083
        %2087 = vset.pattern.permute.xlu0 2
        %2088 = vperm.xlu0 %2087, %v1990
        %v2089 = vpop.permute.xlu0 %2088
        %2092 = vset.pattern.permute.xlu0 2
        %2093 = vperm.xlu0 %2092, %v1991
        %v2094 = vpop.permute.xlu0 %2093
        %2097 = vset.pattern.permute.xlu0 2
        %2098 = vperm.xlu0 %2097, %v1992
        %v2099 = vpop.permute.xlu0 %2098
        %2102 = vset.pattern.permute.xlu0 2
        %2103 = vperm.xlu0 %2102, %v1993
        %v2104 = vpop.permute.xlu0 %2103
        %2107 = vset.pattern.permute.xlu0 2
        %2108 = vperm.xlu0 %2107, %v1994
        %v2109 = vpop.permute.xlu0 %2108
        %2112 = vset.pattern.permute.xlu0 2
        %2113 = vperm.xlu0 %2112, %v1995
        %v2114 = vpop.permute.xlu0 %2113
        %2117 = vset.pattern.permute.xlu0 2
        %2118 = vperm.xlu0 %2117, %v1996
        %v2119 = vpop.permute.xlu0 %2118
        %2122 = vset.pattern.permute.xlu0 2
        %2123 = vperm.xlu0 %2122, %v1997
        %v2124 = vpop.permute.xlu0 %2123
        %2127 = vset.pattern.permute.xlu0 2
        %2128 = vperm.xlu0 %2127, %v1998
        %v2129 = vpop.permute.xlu0 %2128
        %2132 = vset.pattern.permute.xlu0 2
        %2133 = vperm.xlu0 %2132, %v1999
        %v2134 = vpop.permute.xlu0 %2133
        %2137 = vset.pattern.permute.xlu0 2
        %2138 = vperm.xlu0 %2137, %v2000
        %v2139 = vpop.permute.xlu0 %2138
        %2142 = vset.pattern.permute.xlu0 2
        %2143 = vperm.xlu0 %2142, %v2001
        %v2144 = vpop.permute.xlu0 %2143
        %2147 = vset.pattern.permute.xlu0 2
        %2148 = vperm.xlu0 %2147, %v2002
        %v2149 = vpop.permute.xlu0 %2148
        %2152 = vset.pattern.permute.xlu0 2
        %2153 = vperm.xlu0 %2152, %v2003
        %v2154 = vpop.permute.xlu0 %2153
        %2157 = vset.pattern.permute.xlu0 2
        %2158 = vperm.xlu0 %2157, %v2004
        %v2159 = vpop.permute.xlu0 %2158
        %2162 = vset.pattern.permute.xlu0 2
        %2163 = vperm.xlu0 %2162, %v2005
        %v2164 = vpop.permute.xlu0 %2163
        %v2166 = vmul.f32 %v1942, %v2009
        %v2167 = vmul.f32 %v1973, %v2014
        %v2168 = vmul.f32 %v1972, %v2019
        %v2169 = vmul.f32 %v1971, %v2024
        %v2170 = vmul.f32 %v1970, %v2029
        %v2171 = vmul.f32 %v1969, %v2034
        %v2172 = vmul.f32 %v1968, %v2039
        %v2173 = vmul.f32 %v1967, %v2044
        %v2174 = vmul.f32 %v1966, %v2049
        %v2175 = vmul.f32 %v1965, %v2054
        %v2176 = vmul.f32 %v1964, %v2059
        %v2177 = vmul.f32 %v1963, %v2064
        %v2178 = vmul.f32 %v1962, %v2069
        %v2179 = vmul.f32 %v1961, %v2074
        %v2180 = vmul.f32 %v1960, %v2079
        %v2181 = vmul.f32 %v1959, %v2084
        %v2182 = vmul.f32 %v1958, %v2089
        %v2183 = vmul.f32 %v1957, %v2094
        %v2184 = vmul.f32 %v1956, %v2099
        %v2185 = vmul.f32 %v1955, %v2104
        %v2186 = vmul.f32 %v1954, %v2109
        %v2187 = vmul.f32 %v1953, %v2114
        %v2188 = vmul.f32 %v1952, %v2119
        %v2189 = vmul.f32 %v1951, %v2124
        %v2190 = vmul.f32 %v1950, %v2129
        %v2191 = vmul.f32 %v1949, %v2134
        %v2192 = vmul.f32 %v1948, %v2139
        %v2193 = vmul.f32 %v1947, %v2144
        %v2194 = vmul.f32 %v1946, %v2149
        %v2195 = vmul.f32 %v1945, %v2154
        %v2196 = vmul.f32 %v1944, %v2159
        %v2197 = vmul.f32 %v1943, %v2164
        %2230 = vrot.lane.b32.xlu0 %v2166, 64
        %v2231 = vpop.permute.xlu0 %2230
        %2232 = vrot.lane.b32.xlu0 %v2167, 64
        %v2233 = vpop.permute.xlu0 %2232
        %2234 = vrot.lane.b32.xlu0 %v2168, 64
        %v2235 = vpop.permute.xlu0 %2234
        %2236 = vrot.lane.b32.xlu0 %v2169, 64
        %v2237 = vpop.permute.xlu0 %2236
        %2238 = vrot.lane.b32.xlu0 %v2170, 64
        %v2239 = vpop.permute.xlu0 %2238
        %2240 = vrot.lane.b32.xlu0 %v2171, 64
        %v2241 = vpop.permute.xlu0 %2240
        %2242 = vrot.lane.b32.xlu0 %v2172, 64
        %v2243 = vpop.permute.xlu0 %2242
        %2244 = vrot.lane.b32.xlu0 %v2173, 64
        %v2245 = vpop.permute.xlu0 %2244
        %2246 = vrot.lane.b32.xlu0 %v2174, 64
        %v2247 = vpop.permute.xlu0 %2246
        %2248 = vrot.lane.b32.xlu0 %v2175, 64
        %v2249 = vpop.permute.xlu0 %2248
        %2250 = vrot.lane.b32.xlu0 %v2176, 64
        %v2251 = vpop.permute.xlu0 %2250
        %2252 = vrot.lane.b32.xlu0 %v2177, 64
        %v2253 = vpop.permute.xlu0 %2252
        %2254 = vrot.lane.b32.xlu0 %v2178, 64
        %v2255 = vpop.permute.xlu0 %2254
        %2256 = vrot.lane.b32.xlu0 %v2179, 64
        %v2257 = vpop.permute.xlu0 %2256
        %2258 = vrot.lane.b32.xlu0 %v2180, 64
        %v2259 = vpop.permute.xlu0 %2258
        %2260 = vrot.lane.b32.xlu0 %v2181, 64
        %v2261 = vpop.permute.xlu0 %2260
        %2262 = vrot.lane.b32.xlu0 %v2182, 64
        %v2263 = vpop.permute.xlu0 %2262
        %2264 = vrot.lane.b32.xlu0 %v2183, 64
        %v2265 = vpop.permute.xlu0 %2264
        %2266 = vrot.lane.b32.xlu0 %v2184, 64
        %v2267 = vpop.permute.xlu0 %2266
        %2268 = vrot.lane.b32.xlu0 %v2185, 64
        %v2269 = vpop.permute.xlu0 %2268
        %2270 = vrot.lane.b32.xlu0 %v2186, 64
        %v2271 = vpop.permute.xlu0 %2270
        %2272 = vrot.lane.b32.xlu0 %v2187, 64
        %v2273 = vpop.permute.xlu0 %2272
        %2274 = vrot.lane.b32.xlu0 %v2188, 64
        %v2275 = vpop.permute.xlu0 %2274
        %2276 = vrot.lane.b32.xlu0 %v2189, 64
        %v2277 = vpop.permute.xlu0 %2276
        %2278 = vrot.lane.b32.xlu0 %v2190, 64
        %v2279 = vpop.permute.xlu0 %2278
        %2280 = vrot.lane.b32.xlu0 %v2191, 64
        %v2281 = vpop.permute.xlu0 %2280
        %2282 = vrot.lane.b32.xlu0 %v2192, 64
        %v2283 = vpop.permute.xlu0 %2282
        %2284 = vrot.lane.b32.xlu0 %v2193, 64
        %v2285 = vpop.permute.xlu0 %2284
        %2286 = vrot.lane.b32.xlu0 %v2194, 64
        %v2287 = vpop.permute.xlu0 %2286
        %2288 = vrot.lane.b32.xlu0 %v2195, 64
        %v2289 = vpop.permute.xlu0 %2288
        %2290 = vrot.lane.b32.xlu0 %v2196, 64
        %v2291 = vpop.permute.xlu0 %2290
        %2292 = vrot.lane.b32.xlu0 %v2197, 64
        %v2293 = vpop.permute.xlu0 %2292
        %vm2326 = vcmask 785920
        %2327 = vst.msk [vmem:[#allocation2] sm:$0xff] %vm2326, %v2231
        %2328 = vst.msk [vmem:[#allocation2 + $0x18] sm:$0xff] %vm2326, %v2233
        %2329 = vst.msk [vmem:[#allocation2 + $0x30] sm:$0xff] %vm2326, %v2235
        %2330 = vst.msk [vmem:[#allocation2 + $0x48] sm:$0xff] %vm2326, %v2237
        %2331 = vst.msk [vmem:[#allocation2 + $0x60] sm:$0xff] %vm2326, %v2239
        %2332 = vst.msk [vmem:[#allocation2 + $0x78] sm:$0xff] %vm2326, %v2241
        %2333 = vst.msk [vmem:[#allocation2 + $0x90] sm:$0xff] %vm2326, %v2243
        %2334 = vst.msk [vmem:[#allocation2 + $0xa8] sm:$0xff] %vm2326, %v2245
        %2335 = vst.msk [vmem:[#allocation2 + $0xc0] sm:$0xff] %vm2326, %v2247
        %2336 = vst.msk [vmem:[#allocation2 + $0xd8] sm:$0xff] %vm2326, %v2249
        %2337 = vst.msk [vmem:[#allocation2 + $0xf0] sm:$0xff] %vm2326, %v2251
        %2338 = vst.msk [vmem:[#allocation2 + $0x108] sm:$0xff] %vm2326, %v2253
        %2339 = vst.msk [vmem:[#allocation2 + $0x120] sm:$0xff] %vm2326, %v2255
        %2340 = vst.msk [vmem:[#allocation2 + $0x138] sm:$0xff] %vm2326, %v2257
        %2341 = vst.msk [vmem:[#allocation2 + $0x150] sm:$0xff] %vm2326, %v2259
        %2342 = vst.msk [vmem:[#allocation2 + $0x168] sm:$0xff] %vm2326, %v2261
        %2343 = vst.msk [vmem:[#allocation2 + $0x180] sm:$0xff] %vm2326, %v2263
        %2344 = vst.msk [vmem:[#allocation2 + $0x198] sm:$0xff] %vm2326, %v2265
        %2345 = vst.msk [vmem:[#allocation2 + $0x1b0] sm:$0xff] %vm2326, %v2267
        %2346 = vst.msk [vmem:[#allocation2 + $0x1c8] sm:$0xff] %vm2326, %v2269
        %2347 = vst.msk [vmem:[#allocation2 + $0x1e0] sm:$0xff] %vm2326, %v2271
        %2348 = vst.msk [vmem:[#allocation2 + $0x1f8] sm:$0xff] %vm2326, %v2273
        %2349 = vst.msk [vmem:[#allocation2 + $0x210] sm:$0xff] %vm2326, %v2275
        %2350 = vst.msk [vmem:[#allocation2 + $0x228] sm:$0xff] %vm2326, %v2277
        %2351 = vst.msk [vmem:[#allocation2 + $0x240] sm:$0xff] %vm2326, %v2279
        %2352 = vst.msk [vmem:[#allocation2 + $0x258] sm:$0xff] %vm2326, %v2281
        %2353 = vst.msk [vmem:[#allocation2 + $0x270] sm:$0xff] %vm2326, %v2283
        %2354 = vst.msk [vmem:[#allocation2 + $0x288] sm:$0xff] %vm2326, %v2285
        %2355 = vst.msk [vmem:[#allocation2 + $0x2a0] sm:$0xff] %vm2326, %v2287
        %2356 = vst.msk [vmem:[#allocation2 + $0x2b8] sm:$0xff] %vm2326, %v2289
        %2357 = vst.msk [vmem:[#allocation2 + $0x2d0] sm:$0xff] %vm2326, %v2291
        %2358 = vst.msk [vmem:[#allocation2 + $0x2e8] sm:$0xff] %vm2326, %v2293
        %v2359 = vld [vmem:[%s1] sm:$0xff]
        %v2360 = vld [vmem:[%s1 + $0x8] sm:$0xff]
        %v2361 = vld [vmem:[%s1 + $0x10] sm:$0xff]
        %v2362 = vld [vmem:[%s1 + $0x18] sm:$0xff]
        %v2363 = vld [vmem:[%s1 + $0x20] sm:$0xff]
        %v2364 = vld [vmem:[%s1 + $0x28] sm:$0xff]
        %v2365 = vld [vmem:[%s1 + $0x30] sm:$0xff]
        %v2366 = vld [vmem:[%s1 + $0x38] sm:$0xff]
        %v2367 = vld [vmem:[%s1 + $0x40] sm:$0xff]
        %v2368 = vld [vmem:[%s1 + $0x48] sm:$0xff]
        %v2369 = vld [vmem:[%s1 + $0x50] sm:$0xff]
        %v2370 = vld [vmem:[%s1 + $0x58] sm:$0xff]
        %v2371 = vld [vmem:[%s1 + $0x60] sm:$0xff]
        %v2372 = vld [vmem:[%s1 + $0x68] sm:$0xff]
        %v2373 = vld [vmem:[%s1 + $0x70] sm:$0xff]
        %v2374 = vld [vmem:[%s1 + $0x78] sm:$0xff]
        %v2375 = vld [vmem:[%s1 + $0x80] sm:$0xff]
        %v2376 = vld [vmem:[%s1 + $0x88] sm:$0xff]
        %v2377 = vld [vmem:[%s1 + $0x90] sm:$0xff]
        %v2378 = vld [vmem:[%s1 + $0x98] sm:$0xff]
        %v2379 = vld [vmem:[%s1 + $0xa0] sm:$0xff]
        %v2380 = vld [vmem:[%s1 + $0xa8] sm:$0xff]
        %v2381 = vld [vmem:[%s1 + $0xb0] sm:$0xff]
        %v2382 = vld [vmem:[%s1 + $0xb8] sm:$0xff]
        %v2383 = vld [vmem:[%s1 + $0xc0] sm:$0xff]
        %v2384 = vld [vmem:[%s1 + $0xc8] sm:$0xff]
        %v2385 = vld [vmem:[%s1 + $0xd0] sm:$0xff]
        %v2386 = vld [vmem:[%s1 + $0xd8] sm:$0xff]
        %v2387 = vld [vmem:[%s1 + $0xe0] sm:$0xff]
        %v2388 = vld [vmem:[%s1 + $0xe8] sm:$0xff]
        %v2389 = vld [vmem:[%s1 + $0xf0] sm:$0xff]
        %v2390 = vld [vmem:[%s1 + $0xf8] sm:$0xff]
        %2392 = vset.pattern.permute.xlu0 3
        %2393 = vperm.xlu0 %2392, %v2359
        %v2394 = vpop.permute.xlu0 %2393
        %2397 = vset.pattern.permute.xlu0 3
        %2398 = vperm.xlu0 %2397, %v2360
        %v2399 = vpop.permute.xlu0 %2398
        %2402 = vset.pattern.permute.xlu0 3
        %2403 = vperm.xlu0 %2402, %v2361
        %v2404 = vpop.permute.xlu0 %2403
        %2407 = vset.pattern.permute.xlu0 3
        %2408 = vperm.xlu0 %2407, %v2362
        %v2409 = vpop.permute.xlu0 %2408
        %2412 = vset.pattern.permute.xlu0 3
        %2413 = vperm.xlu0 %2412, %v2363
        %v2414 = vpop.permute.xlu0 %2413
        %2417 = vset.pattern.permute.xlu0 3
        %2418 = vperm.xlu0 %2417, %v2364
        %v2419 = vpop.permute.xlu0 %2418
        %2422 = vset.pattern.permute.xlu0 3
        %2423 = vperm.xlu0 %2422, %v2365
        %v2424 = vpop.permute.xlu0 %2423
        %2427 = vset.pattern.permute.xlu0 3
        %2428 = vperm.xlu0 %2427, %v2366
        %v2429 = vpop.permute.xlu0 %2428
        %2432 = vset.pattern.permute.xlu0 3
        %2433 = vperm.xlu0 %2432, %v2367
        %v2434 = vpop.permute.xlu0 %2433
        %2437 = vset.pattern.permute.xlu0 3
        %2438 = vperm.xlu0 %2437, %v2368
        %v2439 = vpop.permute.xlu0 %2438
        %2442 = vset.pattern.permute.xlu0 3
        %2443 = vperm.xlu0 %2442, %v2369
        %v2444 = vpop.permute.xlu0 %2443
        %2447 = vset.pattern.permute.xlu0 3
        %2448 = vperm.xlu0 %2447, %v2370
        %v2449 = vpop.permute.xlu0 %2448
        %2452 = vset.pattern.permute.xlu0 3
        %2453 = vperm.xlu0 %2452, %v2371
        %v2454 = vpop.permute.xlu0 %2453
        %2457 = vset.pattern.permute.xlu0 3
        %2458 = vperm.xlu0 %2457, %v2372
        %v2459 = vpop.permute.xlu0 %2458
        %2462 = vset.pattern.permute.xlu0 3
        %2463 = vperm.xlu0 %2462, %v2373
        %v2464 = vpop.permute.xlu0 %2463
        %2467 = vset.pattern.permute.xlu0 3
        %2468 = vperm.xlu0 %2467, %v2374
        %v2469 = vpop.permute.xlu0 %2468
        %2472 = vset.pattern.permute.xlu0 3
        %2473 = vperm.xlu0 %2472, %v2375
        %v2474 = vpop.permute.xlu0 %2473
        %2477 = vset.pattern.permute.xlu0 3
        %2478 = vperm.xlu0 %2477, %v2376
        %v2479 = vpop.permute.xlu0 %2478
        %2482 = vset.pattern.permute.xlu0 3
        %2483 = vperm.xlu0 %2482, %v2377
        %v2484 = vpop.permute.xlu0 %2483
        %2487 = vset.pattern.permute.xlu0 3
        %2488 = vperm.xlu0 %2487, %v2378
        %v2489 = vpop.permute.xlu0 %2488
        %2492 = vset.pattern.permute.xlu0 3
        %2493 = vperm.xlu0 %2492, %v2379
        %v2494 = vpop.permute.xlu0 %2493
        %2497 = vset.pattern.permute.xlu0 3
        %2498 = vperm.xlu0 %2497, %v2380
        %v2499 = vpop.permute.xlu0 %2498
        %2502 = vset.pattern.permute.xlu0 3
        %2503 = vperm.xlu0 %2502, %v2381
        %v2504 = vpop.permute.xlu0 %2503
        %2507 = vset.pattern.permute.xlu0 3
        %2508 = vperm.xlu0 %2507, %v2382
        %v2509 = vpop.permute.xlu0 %2508
        %2512 = vset.pattern.permute.xlu0 3
        %2513 = vperm.xlu0 %2512, %v2383
        %v2514 = vpop.permute.xlu0 %2513
        %2517 = vset.pattern.permute.xlu0 3
        %2518 = vperm.xlu0 %2517, %v2384
        %v2519 = vpop.permute.xlu0 %2518
        %2522 = vset.pattern.permute.xlu0 3
        %2523 = vperm.xlu0 %2522, %v2385
        %v2524 = vpop.permute.xlu0 %2523
        %2527 = vset.pattern.permute.xlu0 3
        %2528 = vperm.xlu0 %2527, %v2386
        %v2529 = vpop.permute.xlu0 %2528
        %2532 = vset.pattern.permute.xlu0 3
        %2533 = vperm.xlu0 %2532, %v2387
        %v2534 = vpop.permute.xlu0 %2533
        %2537 = vset.pattern.permute.xlu0 3
        %2538 = vperm.xlu0 %2537, %v2388
        %v2539 = vpop.permute.xlu0 %2538
        %2542 = vset.pattern.permute.xlu0 3
        %2543 = vperm.xlu0 %2542, %v2389
        %v2544 = vpop.permute.xlu0 %2543
        %2547 = vset.pattern.permute.xlu0 3
        %2548 = vperm.xlu0 %2547, %v2390
        %v2549 = vpop.permute.xlu0 %2548
        %v2551 = vmul.f32 %v1267, %v2394
        %v2552 = vmul.f32 %v1266, %v2399
        %v2553 = vmul.f32 %v1265, %v2404
        %v2554 = vmul.f32 %v1264, %v2409
        %v2555 = vmul.f32 %v1263, %v2414
        %v2556 = vmul.f32 %v1262, %v2419
        %v2557 = vmul.f32 %v1261, %v2424
        %v2558 = vmul.f32 %v1260, %v2429
        %v2559 = vmul.f32 %v1259, %v2434
        %v2560 = vmul.f32 %v1258, %v2439
        %v2561 = vmul.f32 %v1257, %v2444
        %v2562 = vmul.f32 %v1256, %v2449
        %v2563 = vmul.f32 %v1255, %v2454
        %v2564 = vmul.f32 %v1254, %v2459
        %v2565 = vmul.f32 %v1253, %v2464
        %v2566 = vmul.f32 %v1252, %v2469
        %v2567 = vmul.f32 %v1251, %v2474
        %v2568 = vmul.f32 %v1250, %v2479
        %v2569 = vmul.f32 %v1249, %v2484
        %v2570 = vmul.f32 %v1248, %v2489
        %v2571 = vmul.f32 %v1247, %v2494
        %v2572 = vmul.f32 %v1246, %v2499
        %v2573 = vmul.f32 %v1245, %v2504
        %v2574 = vmul.f32 %v1244, %v2509
        %v2575 = vmul.f32 %v1243, %v2514
        %v2576 = vmul.f32 %v1242, %v2519
        %v2577 = vmul.f32 %v1241, %v2524
        %v2578 = vmul.f32 %v1240, %v2529
        %v2579 = vmul.f32 %v1239, %v2534
        %v2580 = vmul.f32 %v1238, %v2539
        %v2581 = vmul.f32 %v1237, %v2544
        %v2582 = vmul.f32 %v1236, %v2549
        %2615 = vrot.lane.b32.xlu0 %v2551, 96
        %v2616 = vpop.permute.xlu0 %2615
        %2617 = vrot.lane.b32.xlu0 %v2552, 96
        %v2618 = vpop.permute.xlu0 %2617
        %2619 = vrot.lane.b32.xlu0 %v2553, 96
        %v2620 = vpop.permute.xlu0 %2619
        %2621 = vrot.lane.b32.xlu0 %v2554, 96
        %v2622 = vpop.permute.xlu0 %2621
        %2623 = vrot.lane.b32.xlu0 %v2555, 96
        %v2624 = vpop.permute.xlu0 %2623
        %2625 = vrot.lane.b32.xlu0 %v2556, 96
        %v2626 = vpop.permute.xlu0 %2625
        %2627 = vrot.lane.b32.xlu0 %v2557, 96
        %v2628 = vpop.permute.xlu0 %2627
        %2629 = vrot.lane.b32.xlu0 %v2558, 96
        %v2630 = vpop.permute.xlu0 %2629
        %2631 = vrot.lane.b32.xlu0 %v2559, 96
        %v2632 = vpop.permute.xlu0 %2631
        %2633 = vrot.lane.b32.xlu0 %v2560, 96
        %v2634 = vpop.permute.xlu0 %2633
        %2635 = vrot.lane.b32.xlu0 %v2561, 96
        %v2636 = vpop.permute.xlu0 %2635
        %2637 = vrot.lane.b32.xlu0 %v2562, 96
        %v2638 = vpop.permute.xlu0 %2637
        %2639 = vrot.lane.b32.xlu0 %v2563, 96
        %v2640 = vpop.permute.xlu0 %2639
        %2641 = vrot.lane.b32.xlu0 %v2564, 96
        %v2642 = vpop.permute.xlu0 %2641
        %2643 = vrot.lane.b32.xlu0 %v2565, 96
        %v2644 = vpop.permute.xlu0 %2643
        %2645 = vrot.lane.b32.xlu0 %v2566, 96
        %v2646 = vpop.permute.xlu0 %2645
        %2647 = vrot.lane.b32.xlu0 %v2567, 96
        %v2648 = vpop.permute.xlu0 %2647
        %2649 = vrot.lane.b32.xlu0 %v2568, 96
        %v2650 = vpop.permute.xlu0 %2649
        %2651 = vrot.lane.b32.xlu0 %v2569, 96
        %v2652 = vpop.permute.xlu0 %2651
        %2653 = vrot.lane.b32.xlu0 %v2570, 96
        %v2654 = vpop.permute.xlu0 %2653
        %2655 = vrot.lane.b32.xlu0 %v2571, 96
        %v2656 = vpop.permute.xlu0 %2655
        %2657 = vrot.lane.b32.xlu0 %v2572, 96
        %v2658 = vpop.permute.xlu0 %2657
        %2659 = vrot.lane.b32.xlu0 %v2573, 96
        %v2660 = vpop.permute.xlu0 %2659
        %2661 = vrot.lane.b32.xlu0 %v2574, 96
        %v2662 = vpop.permute.xlu0 %2661
        %2663 = vrot.lane.b32.xlu0 %v2575, 96
        %v2664 = vpop.permute.xlu0 %2663
        %2665 = vrot.lane.b32.xlu0 %v2576, 96
        %v2666 = vpop.permute.xlu0 %2665
        %2667 = vrot.lane.b32.xlu0 %v2577, 96
        %v2668 = vpop.permute.xlu0 %2667
        %2669 = vrot.lane.b32.xlu0 %v2578, 96
        %v2670 = vpop.permute.xlu0 %2669
        %2671 = vrot.lane.b32.xlu0 %v2579, 96
        %v2672 = vpop.permute.xlu0 %2671
        %2673 = vrot.lane.b32.xlu0 %v2580, 96
        %v2674 = vpop.permute.xlu0 %2673
        %2675 = vrot.lane.b32.xlu0 %v2581, 96
        %v2676 = vpop.permute.xlu0 %2675
        %2677 = vrot.lane.b32.xlu0 %v2582, 96
        %v2678 = vpop.permute.xlu0 %2677
        %vm2711 = vcmask 1048320
        %2712 = vst.msk [vmem:[#allocation2] sm:$0xff] %vm2711, %v2616
        %2713 = vst.msk [vmem:[#allocation2 + $0x18] sm:$0xff] %vm2711, %v2618
        %2714 = vst.msk [vmem:[#allocation2 + $0x30] sm:$0xff] %vm2711, %v2620
        %2715 = vst.msk [vmem:[#allocation2 + $0x48] sm:$0xff] %vm2711, %v2622
        %2716 = vst.msk [vmem:[#allocation2 + $0x60] sm:$0xff] %vm2711, %v2624
        %2717 = vst.msk [vmem:[#allocation2 + $0x78] sm:$0xff] %vm2711, %v2626
        %2718 = vst.msk [vmem:[#allocation2 + $0x90] sm:$0xff] %vm2711, %v2628
        %2719 = vst.msk [vmem:[#allocation2 + $0xa8] sm:$0xff] %vm2711, %v2630
        %2720 = vst.msk [vmem:[#allocation2 + $0xc0] sm:$0xff] %vm2711, %v2632
        %2721 = vst.msk [vmem:[#allocation2 + $0xd8] sm:$0xff] %vm2711, %v2634
        %2722 = vst.msk [vmem:[#allocation2 + $0xf0] sm:$0xff] %vm2711, %v2636
        %2723 = vst.msk [vmem:[#allocation2 + $0x108] sm:$0xff] %vm2711, %v2638
        %2724 = vst.msk [vmem:[#allocation2 + $0x120] sm:$0xff] %vm2711, %v2640
        %2725 = vst.msk [vmem:[#allocation2 + $0x138] sm:$0xff] %vm2711, %v2642
        %2726 = vst.msk [vmem:[#allocation2 + $0x150] sm:$0xff] %vm2711, %v2644
        %2727 = vst.msk [vmem:[#allocation2 + $0x168] sm:$0xff] %vm2711, %v2646
        %2728 = vst.msk [vmem:[#allocation2 + $0x180] sm:$0xff] %vm2711, %v2648
        %2729 = vst.msk [vmem:[#allocation2 + $0x198] sm:$0xff] %vm2711, %v2650
        %2730 = vst.msk [vmem:[#allocation2 + $0x1b0] sm:$0xff] %vm2711, %v2652
        %2731 = vst.msk [vmem:[#allocation2 + $0x1c8] sm:$0xff] %vm2711, %v2654
        %2732 = vst.msk [vmem:[#allocation2 + $0x1e0] sm:$0xff] %vm2711, %v2656
        %2733 = vst.msk [vmem:[#allocation2 + $0x1f8] sm:$0xff] %vm2711, %v2658
        %2734 = vst.msk [vmem:[#allocation2 + $0x210] sm:$0xff] %vm2711, %v2660
        %2735 = vst.msk [vmem:[#allocation2 + $0x228] sm:$0xff] %vm2711, %v2662
        %2736 = vst.msk [vmem:[#allocation2 + $0x240] sm:$0xff] %vm2711, %v2664
        %2737 = vst.msk [vmem:[#allocation2 + $0x258] sm:$0xff] %vm2711, %v2666
        %2738 = vst.msk [vmem:[#allocation2 + $0x270] sm:$0xff] %vm2711, %v2668
        %2739 = vst.msk [vmem:[#allocation2 + $0x288] sm:$0xff] %vm2711, %v2670
        %2740 = vst.msk [vmem:[#allocation2 + $0x2a0] sm:$0xff] %vm2711, %v2672
        %2741 = vst.msk [vmem:[#allocation2 + $0x2b8] sm:$0xff] %vm2711, %v2674
        %2742 = vst.msk [vmem:[#allocation2 + $0x2d0] sm:$0xff] %vm2711, %v2676
        %2743 = vst.msk [vmem:[#allocation2 + $0x2e8] sm:$0xff] %vm2711, %v2678
        %2744 = vst.msk [vmem:[#allocation2 + $0x8] sm:$0xff] %vm505, %v1168
        %2745 = vst.msk [vmem:[#allocation2 + $0x20] sm:$0xff] %vm505, %v1169
        %2746 = vst.msk [vmem:[#allocation2 + $0x38] sm:$0xff] %vm505, %v1170
        %2747 = vst.msk [vmem:[#allocation2 + $0x50] sm:$0xff] %vm505, %v1171
        %2748 = vst.msk [vmem:[#allocation2 + $0x68] sm:$0xff] %vm505, %v1172
        %2749 = vst.msk [vmem:[#allocation2 + $0x80] sm:$0xff] %vm505, %v1173
        %2750 = vst.msk [vmem:[#allocation2 + $0x98] sm:$0xff] %vm505, %v1174
        %2751 = vst.msk [vmem:[#allocation2 + $0xb0] sm:$0xff] %vm505, %v1175
        %2752 = vst.msk [vmem:[#allocation2 + $0xc8] sm:$0xff] %vm505, %v1176
        %2753 = vst.msk [vmem:[#allocation2 + $0xe0] sm:$0xff] %vm505, %v1177
        %2754 = vst.msk [vmem:[#allocation2 + $0xf8] sm:$0xff] %vm505, %v1178
        %2755 = vst.msk [vmem:[#allocation2 + $0x110] sm:$0xff] %vm505, %v1179
        %2756 = vst.msk [vmem:[#allocation2 + $0x128] sm:$0xff] %vm505, %v1180
        %2757 = vst.msk [vmem:[#allocation2 + $0x140] sm:$0xff] %vm505, %v1181
        %2758 = vst.msk [vmem:[#allocation2 + $0x158] sm:$0xff] %vm505, %v1182
        %2759 = vst.msk [vmem:[#allocation2 + $0x170] sm:$0xff] %vm505, %v1183
        %2760 = vst.msk [vmem:[#allocation2 + $0x188] sm:$0xff] %vm505, %v1184
        %2761 = vst.msk [vmem:[#allocation2 + $0x1a0] sm:$0xff] %vm505, %v1185
        %2762 = vst.msk [vmem:[#allocation2 + $0x1b8] sm:$0xff] %vm505, %v1186
        %2763 = vst.msk [vmem:[#allocation2 + $0x1d0] sm:$0xff] %vm505, %v1187
        %2764 = vst.msk [vmem:[#allocation2 + $0x1e8] sm:$0xff] %vm505, %v1188
        %2765 = vst.msk [vmem:[#allocation2 + $0x200] sm:$0xff] %vm505, %v1189
        %2766 = vst.msk [vmem:[#allocation2 + $0x218] sm:$0xff] %vm505, %v1190
        %2767 = vst.msk [vmem:[#allocation2 + $0x230] sm:$0xff] %vm505, %v1191
        %2768 = vst.msk [vmem:[#allocation2 + $0x248] sm:$0xff] %vm505, %v1192
        %2769 = vst.msk [vmem:[#allocation2 + $0x260] sm:$0xff] %vm505, %v1193
        %2770 = vst.msk [vmem:[#allocation2 + $0x278] sm:$0xff] %vm505, %v1194
        %2771 = vst.msk [vmem:[#allocation2 + $0x290] sm:$0xff] %vm505, %v1195
        %2772 = vst.msk [vmem:[#allocation2 + $0x2a8] sm:$0xff] %vm505, %v1196
        %2773 = vst.msk [vmem:[#allocation2 + $0x2c0] sm:$0xff] %vm505, %v1197
        %2774 = vst.msk [vmem:[#allocation2 + $0x2d8] sm:$0xff] %vm505, %v1198
        %2775 = vst.msk [vmem:[#allocation2 + $0x2f0] sm:$0xff] %vm505, %v1199
        %v2776 = vld [vmem:[%s1] sm:$0xff]
        %v2777 = vld [vmem:[%s1 + $0x8] sm:$0xff]
        %v2778 = vld [vmem:[%s1 + $0x10] sm:$0xff]
        %v2779 = vld [vmem:[%s1 + $0x18] sm:$0xff]
        %v2780 = vld [vmem:[%s1 + $0x20] sm:$0xff]
        %v2781 = vld [vmem:[%s1 + $0x28] sm:$0xff]
        %v2782 = vld [vmem:[%s1 + $0x30] sm:$0xff]
        %v2783 = vld [vmem:[%s1 + $0x38] sm:$0xff]
        %v2784 = vld [vmem:[%s1 + $0x40] sm:$0xff]
        %v2785 = vld [vmem:[%s1 + $0x48] sm:$0xff]
        %v2786 = vld [vmem:[%s1 + $0x50] sm:$0xff]
        %v2787 = vld [vmem:[%s1 + $0x58] sm:$0xff]
        %v2788 = vld [vmem:[%s1 + $0x60] sm:$0xff]
        %v2789 = vld [vmem:[%s1 + $0x68] sm:$0xff]
        %v2790 = vld [vmem:[%s1 + $0x70] sm:$0xff]
        %v2791 = vld [vmem:[%s1 + $0x78] sm:$0xff]
        %v2792 = vld [vmem:[%s1 + $0x80] sm:$0xff]
        %v2793 = vld [vmem:[%s1 + $0x88] sm:$0xff]
        %v2794 = vld [vmem:[%s1 + $0x90] sm:$0xff]
        %v2795 = vld [vmem:[%s1 + $0x98] sm:$0xff]
        %v2796 = vld [vmem:[%s1 + $0xa0] sm:$0xff]
        %v2797 = vld [vmem:[%s1 + $0xa8] sm:$0xff]
        %v2798 = vld [vmem:[%s1 + $0xb0] sm:$0xff]
        %v2799 = vld [vmem:[%s1 + $0xb8] sm:$0xff]
        %v2800 = vld [vmem:[%s1 + $0xc0] sm:$0xff]
        %v2801 = vld [vmem:[%s1 + $0xc8] sm:$0xff]
        %v2802 = vld [vmem:[%s1 + $0xd0] sm:$0xff]
        %v2803 = vld [vmem:[%s1 + $0xd8] sm:$0xff]
        %v2804 = vld [vmem:[%s1 + $0xe0] sm:$0xff]
        %v2805 = vld [vmem:[%s1 + $0xe8] sm:$0xff]
        %v2806 = vld [vmem:[%s1 + $0xf0] sm:$0xff]
        %v2807 = vld [vmem:[%s1 + $0xf8] sm:$0xff]
        %2809 = vset.pattern.permute.xlu0 5
        %2810 = vperm.xlu0 %2809, %v2776
        %v2811 = vpop.permute.xlu0 %2810
        %2814 = vset.pattern.permute.xlu0 5
        %2815 = vperm.xlu0 %2814, %v2777
        %v2816 = vpop.permute.xlu0 %2815
        %2819 = vset.pattern.permute.xlu0 5
        %2820 = vperm.xlu0 %2819, %v2778
        %v2821 = vpop.permute.xlu0 %2820
        %2824 = vset.pattern.permute.xlu0 5
        %2825 = vperm.xlu0 %2824, %v2779
        %v2826 = vpop.permute.xlu0 %2825
        %2829 = vset.pattern.permute.xlu0 5
        %2830 = vperm.xlu0 %2829, %v2780
        %v2831 = vpop.permute.xlu0 %2830
        %2834 = vset.pattern.permute.xlu0 5
        %2835 = vperm.xlu0 %2834, %v2781
        %v2836 = vpop.permute.xlu0 %2835
        %2839 = vset.pattern.permute.xlu0 5
        %2840 = vperm.xlu0 %2839, %v2782
        %v2841 = vpop.permute.xlu0 %2840
        %2844 = vset.pattern.permute.xlu0 5
        %2845 = vperm.xlu0 %2844, %v2783
        %v2846 = vpop.permute.xlu0 %2845
        %2849 = vset.pattern.permute.xlu0 5
        %2850 = vperm.xlu0 %2849, %v2784
        %v2851 = vpop.permute.xlu0 %2850
        %2854 = vset.pattern.permute.xlu0 5
        %2855 = vperm.xlu0 %2854, %v2785
        %v2856 = vpop.permute.xlu0 %2855
        %2859 = vset.pattern.permute.xlu0 5
        %2860 = vperm.xlu0 %2859, %v2786
        %v2861 = vpop.permute.xlu0 %2860
        %2864 = vset.pattern.permute.xlu0 5
        %2865 = vperm.xlu0 %2864, %v2787
        %v2866 = vpop.permute.xlu0 %2865
        %2869 = vset.pattern.permute.xlu0 5
        %2870 = vperm.xlu0 %2869, %v2788
        %v2871 = vpop.permute.xlu0 %2870
        %2874 = vset.pattern.permute.xlu0 5
        %2875 = vperm.xlu0 %2874, %v2789
        %v2876 = vpop.permute.xlu0 %2875
        %2879 = vset.pattern.permute.xlu0 5
        %2880 = vperm.xlu0 %2879, %v2790
        %v2881 = vpop.permute.xlu0 %2880
        %2884 = vset.pattern.permute.xlu0 5
        %2885 = vperm.xlu0 %2884, %v2791
        %v2886 = vpop.permute.xlu0 %2885
        %2889 = vset.pattern.permute.xlu0 5
        %2890 = vperm.xlu0 %2889, %v2792
        %v2891 = vpop.permute.xlu0 %2890
        %2894 = vset.pattern.permute.xlu0 5
        %2895 = vperm.xlu0 %2894, %v2793
        %v2896 = vpop.permute.xlu0 %2895
        %2899 = vset.pattern.permute.xlu0 5
        %2900 = vperm.xlu0 %2899, %v2794
        %v2901 = vpop.permute.xlu0 %2900
        %2904 = vset.pattern.permute.xlu0 5
        %2905 = vperm.xlu0 %2904, %v2795
        %v2906 = vpop.permute.xlu0 %2905
        %2909 = vset.pattern.permute.xlu0 5
        %2910 = vperm.xlu0 %2909, %v2796
        %v2911 = vpop.permute.xlu0 %2910
        %2914 = vset.pattern.permute.xlu0 5
        %2915 = vperm.xlu0 %2914, %v2797
        %v2916 = vpop.permute.xlu0 %2915
        %2919 = vset.pattern.permute.xlu0 5
        %2920 = vperm.xlu0 %2919, %v2798
        %v2921 = vpop.permute.xlu0 %2920
        %2924 = vset.pattern.permute.xlu0 5
        %2925 = vperm.xlu0 %2924, %v2799
        %v2926 = vpop.permute.xlu0 %2925
        %2929 = vset.pattern.permute.xlu0 5
        %2930 = vperm.xlu0 %2929, %v2800
        %v2931 = vpop.permute.xlu0 %2930
        %2934 = vset.pattern.permute.xlu0 5
        %2935 = vperm.xlu0 %2934, %v2801
        %v2936 = vpop.permute.xlu0 %2935
        %2939 = vset.pattern.permute.xlu0 5
        %2940 = vperm.xlu0 %2939, %v2802
        %v2941 = vpop.permute.xlu0 %2940
        %2944 = vset.pattern.permute.xlu0 5
        %2945 = vperm.xlu0 %2944, %v2803
        %v2946 = vpop.permute.xlu0 %2945
        %2949 = vset.pattern.permute.xlu0 5
        %2950 = vperm.xlu0 %2949, %v2804
        %v2951 = vpop.permute.xlu0 %2950
        %2954 = vset.pattern.permute.xlu0 5
        %2955 = vperm.xlu0 %2954, %v2805
        %v2956 = vpop.permute.xlu0 %2955
        %2959 = vset.pattern.permute.xlu0 5
        %2960 = vperm.xlu0 %2959, %v2806
        %v2961 = vpop.permute.xlu0 %2960
        %2964 = vset.pattern.permute.xlu0 5
        %2965 = vperm.xlu0 %2964, %v2807
        %v2966 = vpop.permute.xlu0 %2965
        %v2968 = vmul.f32 %v1972, %v2811
        %v2969 = vmul.f32 %v1971, %v2816
        %v2970 = vmul.f32 %v1970, %v2821
        %v2971 = vmul.f32 %v1969, %v2826
        %v2972 = vmul.f32 %v1968, %v2831
        %v2973 = vmul.f32 %v1967, %v2836
        %v2974 = vmul.f32 %v1966, %v2841
        %v2975 = vmul.f32 %v1965, %v2846
        %v2976 = vmul.f32 %v1964, %v2851
        %v2977 = vmul.f32 %v1963, %v2856
        %v2978 = vmul.f32 %v1962, %v2861
        %v2979 = vmul.f32 %v1961, %v2866
        %v2980 = vmul.f32 %v1960, %v2871
        %v2981 = vmul.f32 %v1959, %v2876
        %v2982 = vmul.f32 %v1958, %v2881
        %v2983 = vmul.f32 %v1957, %v2886
        %v2984 = vmul.f32 %v1956, %v2891
        %v2985 = vmul.f32 %v1955, %v2896
        %v2986 = vmul.f32 %v1954, %v2901
        %v2987 = vmul.f32 %v1953, %v2906
        %v2988 = vmul.f32 %v1952, %v2911
        %v2989 = vmul.f32 %v1951, %v2916
        %v2990 = vmul.f32 %v1950, %v2921
        %v2991 = vmul.f32 %v1949, %v2926
        %v2992 = vmul.f32 %v1948, %v2931
        %v2993 = vmul.f32 %v1947, %v2936
        %v2994 = vmul.f32 %v1946, %v2941
        %v2995 = vmul.f32 %v1945, %v2946
        %v2996 = vmul.f32 %v1944, %v2951
        %v2997 = vmul.f32 %v1943, %v2956
        %v2998 = vmul.f32 %v1942, %v2961
        %v2999 = vmul.f32 %v1973, %v2966
        %3032 = vrot.lane.b32.xlu0 %v2968, 32
        %v3033 = vpop.permute.xlu0 %3032
        %3034 = vrot.lane.b32.xlu0 %v2969, 32
        %v3035 = vpop.permute.xlu0 %3034
        %3036 = vrot.lane.b32.xlu0 %v2970, 32
        %v3037 = vpop.permute.xlu0 %3036
        %3038 = vrot.lane.b32.xlu0 %v2971, 32
        %v3039 = vpop.permute.xlu0 %3038
        %3040 = vrot.lane.b32.xlu0 %v2972, 32
        %v3041 = vpop.permute.xlu0 %3040
        %3042 = vrot.lane.b32.xlu0 %v2973, 32
        %v3043 = vpop.permute.xlu0 %3042
        %3044 = vrot.lane.b32.xlu0 %v2974, 32
        %v3045 = vpop.permute.xlu0 %3044
        %3046 = vrot.lane.b32.xlu0 %v2975, 32
        %v3047 = vpop.permute.xlu0 %3046
        %3048 = vrot.lane.b32.xlu0 %v2976, 32
        %v3049 = vpop.permute.xlu0 %3048
        %3050 = vrot.lane.b32.xlu0 %v2977, 32
        %v3051 = vpop.permute.xlu0 %3050
        %3052 = vrot.lane.b32.xlu0 %v2978, 32
        %v3053 = vpop.permute.xlu0 %3052
        %3054 = vrot.lane.b32.xlu0 %v2979, 32
        %v3055 = vpop.permute.xlu0 %3054
        %3056 = vrot.lane.b32.xlu0 %v2980, 32
        %v3057 = vpop.permute.xlu0 %3056
        %3058 = vrot.lane.b32.xlu0 %v2981, 32
        %v3059 = vpop.permute.xlu0 %3058
        %3060 = vrot.lane.b32.xlu0 %v2982, 32
        %v3061 = vpop.permute.xlu0 %3060
        %3062 = vrot.lane.b32.xlu0 %v2983, 32
        %v3063 = vpop.permute.xlu0 %3062
        %3064 = vrot.lane.b32.xlu0 %v2984, 32
        %v3065 = vpop.permute.xlu0 %3064
        %3066 = vrot.lane.b32.xlu0 %v2985, 32
        %v3067 = vpop.permute.xlu0 %3066
        %3068 = vrot.lane.b32.xlu0 %v2986, 32
        %v3069 = vpop.permute.xlu0 %3068
        %3070 = vrot.lane.b32.xlu0 %v2987, 32
        %v3071 = vpop.permute.xlu0 %3070
        %3072 = vrot.lane.b32.xlu0 %v2988, 32
        %v3073 = vpop.permute.xlu0 %3072
        %3074 = vrot.lane.b32.xlu0 %v2989, 32
        %v3075 = vpop.permute.xlu0 %3074
        %3076 = vrot.lane.b32.xlu0 %v2990, 32
        %v3077 = vpop.permute.xlu0 %3076
        %3078 = vrot.lane.b32.xlu0 %v2991, 32
        %v3079 = vpop.permute.xlu0 %3078
        %3080 = vrot.lane.b32.xlu0 %v2992, 32
        %v3081 = vpop.permute.xlu0 %3080
        %3082 = vrot.lane.b32.xlu0 %v2993, 32
        %v3083 = vpop.permute.xlu0 %3082
        %3084 = vrot.lane.b32.xlu0 %v2994, 32
        %v3085 = vpop.permute.xlu0 %3084
        %3086 = vrot.lane.b32.xlu0 %v2995, 32
        %v3087 = vpop.permute.xlu0 %3086
        %3088 = vrot.lane.b32.xlu0 %v2996, 32
        %v3089 = vpop.permute.xlu0 %3088
        %3090 = vrot.lane.b32.xlu0 %v2997, 32
        %v3091 = vpop.permute.xlu0 %3090
        %3092 = vrot.lane.b32.xlu0 %v2998, 32
        %v3093 = vpop.permute.xlu0 %3092
        %3094 = vrot.lane.b32.xlu0 %v2999, 32
        %v3095 = vpop.permute.xlu0 %3094
        %3128 = vst.msk [vmem:[#allocation2 + $0x8] sm:$0xff] %vm1876, %v3033
        %3129 = vst.msk [vmem:[#allocation2 + $0x20] sm:$0xff] %vm1876, %v3035
        %3130 = vst.msk [vmem:[#allocation2 + $0x38] sm:$0xff] %vm1876, %v3037
        %3131 = vst.msk [vmem:[#allocation2 + $0x50] sm:$0xff] %vm1876, %v3039
        %3132 = vst.msk [vmem:[#allocation2 + $0x68] sm:$0xff] %vm1876, %v3041
        %3133 = vst.msk [vmem:[#allocation2 + $0x80] sm:$0xff] %vm1876, %v3043
        %3134 = vst.msk [vmem:[#allocation2 + $0x98] sm:$0xff] %vm1876, %v3045
        %3135 = vst.msk [vmem:[#allocation2 + $0xb0] sm:$0xff] %vm1876, %v3047
        %3136 = vst.msk [vmem:[#allocation2 + $0xc8] sm:$0xff] %vm1876, %v3049
        %3137 = vst.msk [vmem:[#allocation2 + $0xe0] sm:$0xff] %vm1876, %v3051
        %3138 = vst.msk [vmem:[#allocation2 + $0xf8] sm:$0xff] %vm1876, %v3053
        %3139 = vst.msk [vmem:[#allocation2 + $0x110] sm:$0xff] %vm1876, %v3055
        %3140 = vst.msk [vmem:[#allocation2 + $0x128] sm:$0xff] %vm1876, %v3057
        %3141 = vst.msk [vmem:[#allocation2 + $0x140] sm:$0xff] %vm1876, %v3059
        %3142 = vst.msk [vmem:[#allocation2 + $0x158] sm:$0xff] %vm1876, %v3061
        %3143 = vst.msk [vmem:[#allocation2 + $0x170] sm:$0xff] %vm1876, %v3063
        %3144 = vst.msk [vmem:[#allocation2 + $0x188] sm:$0xff] %vm1876, %v3065
        %3145 = vst.msk [vmem:[#allocation2 + $0x1a0] sm:$0xff] %vm1876, %v3067
        %3146 = vst.msk [vmem:[#allocation2 + $0x1b8] sm:$0xff] %vm1876, %v3069
        %3147 = vst.msk [vmem:[#allocation2 + $0x1d0] sm:$0xff] %vm1876, %v3071
        %3148 = vst.msk [vmem:[#allocation2 + $0x1e8] sm:$0xff] %vm1876, %v3073
        %3149 = vst.msk [vmem:[#allocation2 + $0x200] sm:$0xff] %vm1876, %v3075
        %3150 = vst.msk [vmem:[#allocation2 + $0x218] sm:$0xff] %vm1876, %v3077
        %3151 = vst.msk [vmem:[#allocation2 + $0x230] sm:$0xff] %vm1876, %v3079
        %3152 = vst.msk [vmem:[#allocation2 + $0x248] sm:$0xff] %vm1876, %v3081
        %3153 = vst.msk [vmem:[#allocation2 + $0x260] sm:$0xff] %vm1876, %v3083
        %3154 = vst.msk [vmem:[#allocation2 + $0x278] sm:$0xff] %vm1876, %v3085
        %3155 = vst.msk [vmem:[#allocation2 + $0x290] sm:$0xff] %vm1876, %v3087
        %3156 = vst.msk [vmem:[#allocation2 + $0x2a8] sm:$0xff] %vm1876, %v3089
        %3157 = vst.msk [vmem:[#allocation2 + $0x2c0] sm:$0xff] %vm1876, %v3091
        %3158 = vst.msk [vmem:[#allocation2 + $0x2d8] sm:$0xff] %vm1876, %v3093
        %3159 = vst.msk [vmem:[#allocation2 + $0x2f0] sm:$0xff] %vm1876, %v3095
        %v3160 = vld [vmem:[%s1] sm:$0xff]
        %v3161 = vld [vmem:[%s1 + $0x8] sm:$0xff]
        %v3162 = vld [vmem:[%s1 + $0x10] sm:$0xff]
        %v3163 = vld [vmem:[%s1 + $0x18] sm:$0xff]
        %v3164 = vld [vmem:[%s1 + $0x20] sm:$0xff]
        %v3165 = vld [vmem:[%s1 + $0x28] sm:$0xff]
        %v3166 = vld [vmem:[%s1 + $0x30] sm:$0xff]
        %v3167 = vld [vmem:[%s1 + $0x38] sm:$0xff]
        %v3168 = vld [vmem:[%s1 + $0x40] sm:$0xff]
        %v3169 = vld [vmem:[%s1 + $0x48] sm:$0xff]
        %v3170 = vld [vmem:[%s1 + $0x50] sm:$0xff]
        %v3171 = vld [vmem:[%s1 + $0x58] sm:$0xff]
        %v3172 = vld [vmem:[%s1 + $0x60] sm:$0xff]
        %v3173 = vld [vmem:[%s1 + $0x68] sm:$0xff]
        %v3174 = vld [vmem:[%s1 + $0x70] sm:$0xff]
        %v3175 = vld [vmem:[%s1 + $0x78] sm:$0xff]
        %v3176 = vld [vmem:[%s1 + $0x80] sm:$0xff]
        %v3177 = vld [vmem:[%s1 + $0x88] sm:$0xff]
        %v3178 = vld [vmem:[%s1 + $0x90] sm:$0xff]
        %v3179 = vld [vmem:[%s1 + $0x98] sm:$0xff]
        %v3180 = vld [vmem:[%s1 + $0xa0] sm:$0xff]
        %v3181 = vld [vmem:[%s1 + $0xa8] sm:$0xff]
        %v3182 = vld [vmem:[%s1 + $0xb0] sm:$0xff]
        %v3183 = vld [vmem:[%s1 + $0xb8] sm:$0xff]
        %v3184 = vld [vmem:[%s1 + $0xc0] sm:$0xff]
        %v3185 = vld [vmem:[%s1 + $0xc8] sm:$0xff]
        %v3186 = vld [vmem:[%s1 + $0xd0] sm:$0xff]
        %v3187 = vld [vmem:[%s1 + $0xd8] sm:$0xff]
        %v3188 = vld [vmem:[%s1 + $0xe0] sm:$0xff]
        %v3189 = vld [vmem:[%s1 + $0xe8] sm:$0xff]
        %v3190 = vld [vmem:[%s1 + $0xf0] sm:$0xff]
        %v3191 = vld [vmem:[%s1 + $0xf8] sm:$0xff]
        %3193 = vset.pattern.permute.xlu0 6
        %3194 = vperm.xlu0 %3193, %v3160
        %v3195 = vpop.permute.xlu0 %3194
        %3198 = vset.pattern.permute.xlu0 6
        %3199 = vperm.xlu0 %3198, %v3161
        %v3200 = vpop.permute.xlu0 %3199
        %3203 = vset.pattern.permute.xlu0 6
        %3204 = vperm.xlu0 %3203, %v3162
        %v3205 = vpop.permute.xlu0 %3204
        %3208 = vset.pattern.permute.xlu0 6
        %3209 = vperm.xlu0 %3208, %v3163
        %v3210 = vpop.permute.xlu0 %3209
        %3213 = vset.pattern.permute.xlu0 6
        %3214 = vperm.xlu0 %3213, %v3164
        %v3215 = vpop.permute.xlu0 %3214
        %3218 = vset.pattern.permute.xlu0 6
        %3219 = vperm.xlu0 %3218, %v3165
        %v3220 = vpop.permute.xlu0 %3219
        %3223 = vset.pattern.permute.xlu0 6
        %3224 = vperm.xlu0 %3223, %v3166
        %v3225 = vpop.permute.xlu0 %3224
        %3228 = vset.pattern.permute.xlu0 6
        %3229 = vperm.xlu0 %3228, %v3167
        %v3230 = vpop.permute.xlu0 %3229
        %3233 = vset.pattern.permute.xlu0 6
        %3234 = vperm.xlu0 %3233, %v3168
        %v3235 = vpop.permute.xlu0 %3234
        %3238 = vset.pattern.permute.xlu0 6
        %3239 = vperm.xlu0 %3238, %v3169
        %v3240 = vpop.permute.xlu0 %3239
        %3243 = vset.pattern.permute.xlu0 6
        %3244 = vperm.xlu0 %3243, %v3170
        %v3245 = vpop.permute.xlu0 %3244
        %3248 = vset.pattern.permute.xlu0 6
        %3249 = vperm.xlu0 %3248, %v3171
        %v3250 = vpop.permute.xlu0 %3249
        %3253 = vset.pattern.permute.xlu0 6
        %3254 = vperm.xlu0 %3253, %v3172
        %v3255 = vpop.permute.xlu0 %3254
        %3258 = vset.pattern.permute.xlu0 6
        %3259 = vperm.xlu0 %3258, %v3173
        %v3260 = vpop.permute.xlu0 %3259
        %3263 = vset.pattern.permute.xlu0 6
        %3264 = vperm.xlu0 %3263, %v3174
        %v3265 = vpop.permute.xlu0 %3264
        %3268 = vset.pattern.permute.xlu0 6
        %3269 = vperm.xlu0 %3268, %v3175
        %v3270 = vpop.permute.xlu0 %3269
        %3273 = vset.pattern.permute.xlu0 6
        %3274 = vperm.xlu0 %3273, %v3176
        %v3275 = vpop.permute.xlu0 %3274
        %3278 = vset.pattern.permute.xlu0 6
        %3279 = vperm.xlu0 %3278, %v3177
        %v3280 = vpop.permute.xlu0 %3279
        %3283 = vset.pattern.permute.xlu0 6
        %3284 = vperm.xlu0 %3283, %v3178
        %v3285 = vpop.permute.xlu0 %3284
        %3288 = vset.pattern.permute.xlu0 6
        %3289 = vperm.xlu0 %3288, %v3179
        %v3290 = vpop.permute.xlu0 %3289
        %3293 = vset.pattern.permute.xlu0 6
        %3294 = vperm.xlu0 %3293, %v3180
        %v3295 = vpop.permute.xlu0 %3294
        %3298 = vset.pattern.permute.xlu0 6
        %3299 = vperm.xlu0 %3298, %v3181
        %v3300 = vpop.permute.xlu0 %3299
        %3303 = vset.pattern.permute.xlu0 6
        %3304 = vperm.xlu0 %3303, %v3182
        %v3305 = vpop.permute.xlu0 %3304
        %3308 = vset.pattern.permute.xlu0 6
        %3309 = vperm.xlu0 %3308, %v3183
        %v3310 = vpop.permute.xlu0 %3309
        %3313 = vset.pattern.permute.xlu0 6
        %3314 = vperm.xlu0 %3313, %v3184
        %v3315 = vpop.permute.xlu0 %3314
        %3318 = vset.pattern.permute.xlu0 6
        %3319 = vperm.xlu0 %3318, %v3185
        %v3320 = vpop.permute.xlu0 %3319
        %3323 = vset.pattern.permute.xlu0 6
        %3324 = vperm.xlu0 %3323, %v3186
        %v3325 = vpop.permute.xlu0 %3324
        %3328 = vset.pattern.permute.xlu0 6
        %3329 = vperm.xlu0 %3328, %v3187
        %v3330 = vpop.permute.xlu0 %3329
        %3333 = vset.pattern.permute.xlu0 6
        %3334 = vperm.xlu0 %3333, %v3188
        %v3335 = vpop.permute.xlu0 %3334
        %3338 = vset.pattern.permute.xlu0 6
        %3339 = vperm.xlu0 %3338, %v3189
        %v3340 = vpop.permute.xlu0 %3339
        %3343 = vset.pattern.permute.xlu0 6
        %3344 = vperm.xlu0 %3343, %v3190
        %v3345 = vpop.permute.xlu0 %3344
        %3348 = vset.pattern.permute.xlu0 6
        %3349 = vperm.xlu0 %3348, %v3191
        %v3350 = vpop.permute.xlu0 %3349
        %v3352 = vmul.f32 %v1265, %v3195
        %v3353 = vmul.f32 %v1264, %v3200
        %v3354 = vmul.f32 %v1263, %v3205
        %v3355 = vmul.f32 %v1262, %v3210
        %v3356 = vmul.f32 %v1261, %v3215
        %v3357 = vmul.f32 %v1260, %v3220
        %v3358 = vmul.f32 %v1259, %v3225
        %v3359 = vmul.f32 %v1258, %v3230
        %v3360 = vmul.f32 %v1257, %v3235
        %v3361 = vmul.f32 %v1256, %v3240
        %v3362 = vmul.f32 %v1255, %v3245
        %v3363 = vmul.f32 %v1254, %v3250
        %v3364 = vmul.f32 %v1253, %v3255
        %v3365 = vmul.f32 %v1252, %v3260
        %v3366 = vmul.f32 %v1251, %v3265
        %v3367 = vmul.f32 %v1250, %v3270
        %v3368 = vmul.f32 %v1249, %v3275
        %v3369 = vmul.f32 %v1248, %v3280
        %v3370 = vmul.f32 %v1247, %v3285
        %v3371 = vmul.f32 %v1246, %v3290
        %v3372 = vmul.f32 %v1245, %v3295
        %v3373 = vmul.f32 %v1244, %v3300
        %v3374 = vmul.f32 %v1243, %v3305
        %v3375 = vmul.f32 %v1242, %v3310
        %v3376 = vmul.f32 %v1241, %v3315
        %v3377 = vmul.f32 %v1240, %v3320
        %v3378 = vmul.f32 %v1239, %v3325
        %v3379 = vmul.f32 %v1238, %v3330
        %v3380 = vmul.f32 %v1237, %v3335
        %v3381 = vmul.f32 %v1236, %v3340
        %v3382 = vmul.f32 %v1267, %v3345
        %v3383 = vmul.f32 %v1266, %v3350
        %3416 = vrot.lane.b32.xlu0 %v3352, 64
        %v3417 = vpop.permute.xlu0 %3416
        %3418 = vrot.lane.b32.xlu0 %v3353, 64
        %v3419 = vpop.permute.xlu0 %3418
        %3420 = vrot.lane.b32.xlu0 %v3354, 64
        %v3421 = vpop.permute.xlu0 %3420
        %3422 = vrot.lane.b32.xlu0 %v3355, 64
        %v3423 = vpop.permute.xlu0 %3422
        %3424 = vrot.lane.b32.xlu0 %v3356, 64
        %v3425 = vpop.permute.xlu0 %3424
        %3426 = vrot.lane.b32.xlu0 %v3357, 64
        %v3427 = vpop.permute.xlu0 %3426
        %3428 = vrot.lane.b32.xlu0 %v3358, 64
        %v3429 = vpop.permute.xlu0 %3428
        %3430 = vrot.lane.b32.xlu0 %v3359, 64
        %v3431 = vpop.permute.xlu0 %3430
        %3432 = vrot.lane.b32.xlu0 %v3360, 64
        %v3433 = vpop.permute.xlu0 %3432
        %3434 = vrot.lane.b32.xlu0 %v3361, 64
        %v3435 = vpop.permute.xlu0 %3434
        %3436 = vrot.lane.b32.xlu0 %v3362, 64
        %v3437 = vpop.permute.xlu0 %3436
        %3438 = vrot.lane.b32.xlu0 %v3363, 64
        %v3439 = vpop.permute.xlu0 %3438
        %3440 = vrot.lane.b32.xlu0 %v3364, 64
        %v3441 = vpop.permute.xlu0 %3440
        %3442 = vrot.lane.b32.xlu0 %v3365, 64
        %v3443 = vpop.permute.xlu0 %3442
        %3444 = vrot.lane.b32.xlu0 %v3366, 64
        %v3445 = vpop.permute.xlu0 %3444
        %3446 = vrot.lane.b32.xlu0 %v3367, 64
        %v3447 = vpop.permute.xlu0 %3446
        %3448 = vrot.lane.b32.xlu0 %v3368, 64
        %v3449 = vpop.permute.xlu0 %3448
        %3450 = vrot.lane.b32.xlu0 %v3369, 64
        %v3451 = vpop.permute.xlu0 %3450
        %3452 = vrot.lane.b32.xlu0 %v3370, 64
        %v3453 = vpop.permute.xlu0 %3452
        %3454 = vrot.lane.b32.xlu0 %v3371, 64
        %v3455 = vpop.permute.xlu0 %3454
        %3456 = vrot.lane.b32.xlu0 %v3372, 64
        %v3457 = vpop.permute.xlu0 %3456
        %3458 = vrot.lane.b32.xlu0 %v3373, 64
        %v3459 = vpop.permute.xlu0 %3458
        %3460 = vrot.lane.b32.xlu0 %v3374, 64
        %v3461 = vpop.permute.xlu0 %3460
        %3462 = vrot.lane.b32.xlu0 %v3375, 64
        %v3463 = vpop.permute.xlu0 %3462
        %3464 = vrot.lane.b32.xlu0 %v3376, 64
        %v3465 = vpop.permute.xlu0 %3464
        %3466 = vrot.lane.b32.xlu0 %v3377, 64
        %v3467 = vpop.permute.xlu0 %3466
        %3468 = vrot.lane.b32.xlu0 %v3378, 64
        %v3469 = vpop.permute.xlu0 %3468
        %3470 = vrot.lane.b32.xlu0 %v3379, 64
        %v3471 = vpop.permute.xlu0 %3470
        %3472 = vrot.lane.b32.xlu0 %v3380, 64
        %v3473 = vpop.permute.xlu0 %3472
        %3474 = vrot.lane.b32.xlu0 %v3381, 64
        %v3475 = vpop.permute.xlu0 %3474
        %3476 = vrot.lane.b32.xlu0 %v3382, 64
        %v3477 = vpop.permute.xlu0 %3476
        %3478 = vrot.lane.b32.xlu0 %v3383, 64
        %v3479 = vpop.permute.xlu0 %3478
        %3512 = vst.msk [vmem:[#allocation2 + $0x8] sm:$0xff] %vm2326, %v3417
        %3513 = vst.msk [vmem:[#allocation2 + $0x20] sm:$0xff] %vm2326, %v3419
        %3514 = vst.msk [vmem:[#allocation2 + $0x38] sm:$0xff] %vm2326, %v3421
        %3515 = vst.msk [vmem:[#allocation2 + $0x50] sm:$0xff] %vm2326, %v3423
        %3516 = vst.msk [vmem:[#allocation2 + $0x68] sm:$0xff] %vm2326, %v3425
        %3517 = vst.msk [vmem:[#allocation2 + $0x80] sm:$0xff] %vm2326, %v3427
        %3518 = vst.msk [vmem:[#allocation2 + $0x98] sm:$0xff] %vm2326, %v3429
        %3519 = vst.msk [vmem:[#allocation2 + $0xb0] sm:$0xff] %vm2326, %v3431
        %3520 = vst.msk [vmem:[#allocation2 + $0xc8] sm:$0xff] %vm2326, %v3433
        %3521 = vst.msk [vmem:[#allocation2 + $0xe0] sm:$0xff] %vm2326, %v3435
        %3522 = vst.msk [vmem:[#allocation2 + $0xf8] sm:$0xff] %vm2326, %v3437
        %3523 = vst.msk [vmem:[#allocation2 + $0x110] sm:$0xff] %vm2326, %v3439
        %3524 = vst.msk [vmem:[#allocation2 + $0x128] sm:$0xff] %vm2326, %v3441
        %3525 = vst.msk [vmem:[#allocation2 + $0x140] sm:$0xff] %vm2326, %v3443
        %3526 = vst.msk [vmem:[#allocation2 + $0x158] sm:$0xff] %vm2326, %v3445
        %3527 = vst.msk [vmem:[#allocation2 + $0x170] sm:$0xff] %vm2326, %v3447
        %3528 = vst.msk [vmem:[#allocation2 + $0x188] sm:$0xff] %vm2326, %v3449
        %3529 = vst.msk [vmem:[#allocation2 + $0x1a0] sm:$0xff] %vm2326, %v3451
        %3530 = vst.msk [vmem:[#allocation2 + $0x1b8] sm:$0xff] %vm2326, %v3453
        %3531 = vst.msk [vmem:[#allocation2 + $0x1d0] sm:$0xff] %vm2326, %v3455
        %3532 = vst.msk [vmem:[#allocation2 + $0x1e8] sm:$0xff] %vm2326, %v3457
        %3533 = vst.msk [vmem:[#allocation2 + $0x200] sm:$0xff] %vm2326, %v3459
        %3534 = vst.msk [vmem:[#allocation2 + $0x218] sm:$0xff] %vm2326, %v3461
        %3535 = vst.msk [vmem:[#allocation2 + $0x230] sm:$0xff] %vm2326, %v3463
        %3536 = vst.msk [vmem:[#allocation2 + $0x248] sm:$0xff] %vm2326, %v3465
        %3537 = vst.msk [vmem:[#allocation2 + $0x260] sm:$0xff] %vm2326, %v3467
        %3538 = vst.msk [vmem:[#allocation2 + $0x278] sm:$0xff] %vm2326, %v3469
        %3539 = vst.msk [vmem:[#allocation2 + $0x290] sm:$0xff] %vm2326, %v3471
        %3540 = vst.msk [vmem:[#allocation2 + $0x2a8] sm:$0xff] %vm2326, %v3473
        %3541 = vst.msk [vmem:[#allocation2 + $0x2c0] sm:$0xff] %vm2326, %v3475
        %3542 = vst.msk [vmem:[#allocation2 + $0x2d8] sm:$0xff] %vm2326, %v3477
        %3543 = vst.msk [vmem:[#allocation2 + $0x2f0] sm:$0xff] %vm2326, %v3479
        %v3544 = vld [vmem:[%s1] sm:$0xff]
        %v3545 = vld [vmem:[%s1 + $0x8] sm:$0xff]
        %v3546 = vld [vmem:[%s1 + $0x10] sm:$0xff]
        %v3547 = vld [vmem:[%s1 + $0x18] sm:$0xff]
        %v3548 = vld [vmem:[%s1 + $0x20] sm:$0xff]
        %v3549 = vld [vmem:[%s1 + $0x28] sm:$0xff]
        %v3550 = vld [vmem:[%s1 + $0x30] sm:$0xff]
        %v3551 = vld [vmem:[%s1 + $0x38] sm:$0xff]
        %v3552 = vld [vmem:[%s1 + $0x40] sm:$0xff]
        %v3553 = vld [vmem:[%s1 + $0x48] sm:$0xff]
        %v3554 = vld [vmem:[%s1 + $0x50] sm:$0xff]
        %v3555 = vld [vmem:[%s1 + $0x58] sm:$0xff]
        %v3556 = vld [vmem:[%s1 + $0x60] sm:$0xff]
        %v3557 = vld [vmem:[%s1 + $0x68] sm:$0xff]
        %v3558 = vld [vmem:[%s1 + $0x70] sm:$0xff]
        %v3559 = vld [vmem:[%s1 + $0x78] sm:$0xff]
        %v3560 = vld [vmem:[%s1 + $0x80] sm:$0xff]
        %v3561 = vld [vmem:[%s1 + $0x88] sm:$0xff]
        %v3562 = vld [vmem:[%s1 + $0x90] sm:$0xff]
        %v3563 = vld [vmem:[%s1 + $0x98] sm:$0xff]
        %v3564 = vld [vmem:[%s1 + $0xa0] sm:$0xff]
        %v3565 = vld [vmem:[%s1 + $0xa8] sm:$0xff]
        %v3566 = vld [vmem:[%s1 + $0xb0] sm:$0xff]
        %v3567 = vld [vmem:[%s1 + $0xb8] sm:$0xff]
        %v3568 = vld [vmem:[%s1 + $0xc0] sm:$0xff]
        %v3569 = vld [vmem:[%s1 + $0xc8] sm:$0xff]
        %v3570 = vld [vmem:[%s1 + $0xd0] sm:$0xff]
        %v3571 = vld [vmem:[%s1 + $0xd8] sm:$0xff]
        %v3572 = vld [vmem:[%s1 + $0xe0] sm:$0xff]
        %v3573 = vld [vmem:[%s1 + $0xe8] sm:$0xff]
        %v3574 = vld [vmem:[%s1 + $0xf0] sm:$0xff]
        %v3575 = vld [vmem:[%s1 + $0xf8] sm:$0xff]
        %3577 = vset.pattern.permute.xlu0 7
        %3578 = vperm.xlu0 %3577, %v3544
        %v3579 = vpop.permute.xlu0 %3578
        %3582 = vset.pattern.permute.xlu0 7
        %3583 = vperm.xlu0 %3582, %v3545
        %v3584 = vpop.permute.xlu0 %3583
        %3587 = vset.pattern.permute.xlu0 7
        %3588 = vperm.xlu0 %3587, %v3546
        %v3589 = vpop.permute.xlu0 %3588
        %3592 = vset.pattern.permute.xlu0 7
        %3593 = vperm.xlu0 %3592, %v3547
        %v3594 = vpop.permute.xlu0 %3593
        %3597 = vset.pattern.permute.xlu0 7
        %3598 = vperm.xlu0 %3597, %v3548
        %v3599 = vpop.permute.xlu0 %3598
        %3602 = vset.pattern.permute.xlu0 7
        %3603 = vperm.xlu0 %3602, %v3549
        %v3604 = vpop.permute.xlu0 %3603
        %3607 = vset.pattern.permute.xlu0 7
        %3608 = vperm.xlu0 %3607, %v3550
        %v3609 = vpop.permute.xlu0 %3608
        %3612 = vset.pattern.permute.xlu0 7
        %3613 = vperm.xlu0 %3612, %v3551
        %v3614 = vpop.permute.xlu0 %3613
        %3617 = vset.pattern.permute.xlu0 7
        %3618 = vperm.xlu0 %3617, %v3552
        %v3619 = vpop.permute.xlu0 %3618
        %3622 = vset.pattern.permute.xlu0 7
        %3623 = vperm.xlu0 %3622, %v3553
        %v3624 = vpop.permute.xlu0 %3623
        %3627 = vset.pattern.permute.xlu0 7
        %3628 = vperm.xlu0 %3627, %v3554
        %v3629 = vpop.permute.xlu0 %3628
        %3632 = vset.pattern.permute.xlu0 7
        %3633 = vperm.xlu0 %3632, %v3555
        %v3634 = vpop.permute.xlu0 %3633
        %3637 = vset.pattern.permute.xlu0 7
        %3638 = vperm.xlu0 %3637, %v3556
        %v3639 = vpop.permute.xlu0 %3638
        %3642 = vset.pattern.permute.xlu0 7
        %3643 = vperm.xlu0 %3642, %v3557
        %v3644 = vpop.permute.xlu0 %3643
        %3647 = vset.pattern.permute.xlu0 7
        %3648 = vperm.xlu0 %3647, %v3558
        %v3649 = vpop.permute.xlu0 %3648
        %3652 = vset.pattern.permute.xlu0 7
        %3653 = vperm.xlu0 %3652, %v3559
        %v3654 = vpop.permute.xlu0 %3653
        %3657 = vset.pattern.permute.xlu0 7
        %3658 = vperm.xlu0 %3657, %v3560
        %v3659 = vpop.permute.xlu0 %3658
        %3662 = vset.pattern.permute.xlu0 7
        %3663 = vperm.xlu0 %3662, %v3561
        %v3664 = vpop.permute.xlu0 %3663
        %3667 = vset.pattern.permute.xlu0 7
        %3668 = vperm.xlu0 %3667, %v3562
        %v3669 = vpop.permute.xlu0 %3668
        %3672 = vset.pattern.permute.xlu0 7
        %3673 = vperm.xlu0 %3672, %v3563
        %v3674 = vpop.permute.xlu0 %3673
        %3677 = vset.pattern.permute.xlu0 7
        %3678 = vperm.xlu0 %3677, %v3564
        %v3679 = vpop.permute.xlu0 %3678
        %3682 = vset.pattern.permute.xlu0 7
        %3683 = vperm.xlu0 %3682, %v3565
        %v3684 = vpop.permute.xlu0 %3683
        %3687 = vset.pattern.permute.xlu0 7
        %3688 = vperm.xlu0 %3687, %v3566
        %v3689 = vpop.permute.xlu0 %3688
        %3692 = vset.pattern.permute.xlu0 7
        %3693 = vperm.xlu0 %3692, %v3567
        %v3694 = vpop.permute.xlu0 %3693
        %3697 = vset.pattern.permute.xlu0 7
        %3698 = vperm.xlu0 %3697, %v3568
        %v3699 = vpop.permute.xlu0 %3698
        %3702 = vset.pattern.permute.xlu0 7
        %3703 = vperm.xlu0 %3702, %v3569
        %v3704 = vpop.permute.xlu0 %3703
        %3707 = vset.pattern.permute.xlu0 7
        %3708 = vperm.xlu0 %3707, %v3570
        %v3709 = vpop.permute.xlu0 %3708
        %3712 = vset.pattern.permute.xlu0 7
        %3713 = vperm.xlu0 %3712, %v3571
        %v3714 = vpop.permute.xlu0 %3713
        %3717 = vset.pattern.permute.xlu0 7
        %3718 = vperm.xlu0 %3717, %v3572
        %v3719 = vpop.permute.xlu0 %3718
        %3722 = vset.pattern.permute.xlu0 7
        %3723 = vperm.xlu0 %3722, %v3573
        %v3724 = vpop.permute.xlu0 %3723
        %3727 = vset.pattern.permute.xlu0 7
        %3728 = vperm.xlu0 %3727, %v3574
        %v3729 = vpop.permute.xlu0 %3728
        %3732 = vset.pattern.permute.xlu0 7
        %3733 = vperm.xlu0 %3732, %v3575
        %v3734 = vpop.permute.xlu0 %3733
        %v3736 = vmul.f32 %v1170, %v3579
        %v3737 = vmul.f32 %v1171, %v3584
        %v3738 = vmul.f32 %v1172, %v3589
        %v3739 = vmul.f32 %v1173, %v3594
        %v3740 = vmul.f32 %v1174, %v3599
        %v3741 = vmul.f32 %v1175, %v3604
        %v3742 = vmul.f32 %v1176, %v3609
        %v3743 = vmul.f32 %v1177, %v3614
        %v3744 = vmul.f32 %v1178, %v3619
        %v3745 = vmul.f32 %v1179, %v3624
        %v3746 = vmul.f32 %v1180, %v3629
        %v3747 = vmul.f32 %v1181, %v3634
        %v3748 = vmul.f32 %v1182, %v3639
        %v3749 = vmul.f32 %v1183, %v3644
        %v3750 = vmul.f32 %v1184, %v3649
        %v3751 = vmul.f32 %v1185, %v3654
        %v3752 = vmul.f32 %v1186, %v3659
        %v3753 = vmul.f32 %v1187, %v3664
        %v3754 = vmul.f32 %v1188, %v3669
        %v3755 = vmul.f32 %v1189, %v3674
        %v3756 = vmul.f32 %v1190, %v3679
        %v3757 = vmul.f32 %v1191, %v3684
        %v3758 = vmul.f32 %v1192, %v3689
        %v3759 = vmul.f32 %v1193, %v3694
        %v3760 = vmul.f32 %v1194, %v3699
        %v3761 = vmul.f32 %v1195, %v3704
        %v3762 = vmul.f32 %v1196, %v3709
        %v3763 = vmul.f32 %v1197, %v3714
        %v3764 = vmul.f32 %v1198, %v3719
        %v3765 = vmul.f32 %v1199, %v3724
        %v3766 = vmul.f32 %v1168, %v3729
        %v3767 = vmul.f32 %v1169, %v3734
        %3800 = vrot.lane.b32.xlu0 %v3736, 96
        %v3801 = vpop.permute.xlu0 %3800
        %3802 = vrot.lane.b32.xlu0 %v3737, 96
        %v3803 = vpop.permute.xlu0 %3802
        %3804 = vrot.lane.b32.xlu0 %v3738, 96
        %v3805 = vpop.permute.xlu0 %3804
        %3806 = vrot.lane.b32.xlu0 %v3739, 96
        %v3807 = vpop.permute.xlu0 %3806
        %3808 = vrot.lane.b32.xlu0 %v3740, 96
        %v3809 = vpop.permute.xlu0 %3808
        %3810 = vrot.lane.b32.xlu0 %v3741, 96
        %v3811 = vpop.permute.xlu0 %3810
        %3812 = vrot.lane.b32.xlu0 %v3742, 96
        %v3813 = vpop.permute.xlu0 %3812
        %3814 = vrot.lane.b32.xlu0 %v3743, 96
        %v3815 = vpop.permute.xlu0 %3814
        %3816 = vrot.lane.b32.xlu0 %v3744, 96
        %v3817 = vpop.permute.xlu0 %3816
        %3818 = vrot.lane.b32.xlu0 %v3745, 96
        %v3819 = vpop.permute.xlu0 %3818
        %3820 = vrot.lane.b32.xlu0 %v3746, 96
        %v3821 = vpop.permute.xlu0 %3820
        %3822 = vrot.lane.b32.xlu0 %v3747, 96
        %v3823 = vpop.permute.xlu0 %3822
        %3824 = vrot.lane.b32.xlu0 %v3748, 96
        %v3825 = vpop.permute.xlu0 %3824
        %3826 = vrot.lane.b32.xlu0 %v3749, 96
        %v3827 = vpop.permute.xlu0 %3826
        %3828 = vrot.lane.b32.xlu0 %v3750, 96
        %v3829 = vpop.permute.xlu0 %3828
        %3830 = vrot.lane.b32.xlu0 %v3751, 96
        %v3831 = vpop.permute.xlu0 %3830
        %3832 = vrot.lane.b32.xlu0 %v3752, 96
        %v3833 = vpop.permute.xlu0 %3832
        %3834 = vrot.lane.b32.xlu0 %v3753, 96
        %v3835 = vpop.permute.xlu0 %3834
        %3836 = vrot.lane.b32.xlu0 %v3754, 96
        %v3837 = vpop.permute.xlu0 %3836
        %3838 = vrot.lane.b32.xlu0 %v3755, 96
        %v3839 = vpop.permute.xlu0 %3838
        %3840 = vrot.lane.b32.xlu0 %v3756, 96
        %v3841 = vpop.permute.xlu0 %3840
        %3842 = vrot.lane.b32.xlu0 %v3757, 96
        %v3843 = vpop.permute.xlu0 %3842
        %3844 = vrot.lane.b32.xlu0 %v3758, 96
        %v3845 = vpop.permute.xlu0 %3844
        %3846 = vrot.lane.b32.xlu0 %v3759, 96
        %v3847 = vpop.permute.xlu0 %3846
        %3848 = vrot.lane.b32.xlu0 %v3760, 96
        %v3849 = vpop.permute.xlu0 %3848
        %3850 = vrot.lane.b32.xlu0 %v3761, 96
        %v3851 = vpop.permute.xlu0 %3850
        %3852 = vrot.lane.b32.xlu0 %v3762, 96
        %v3853 = vpop.permute.xlu0 %3852
        %3854 = vrot.lane.b32.xlu0 %v3763, 96
        %v3855 = vpop.permute.xlu0 %3854
        %3856 = vrot.lane.b32.xlu0 %v3764, 96
        %v3857 = vpop.permute.xlu0 %3856
        %3858 = vrot.lane.b32.xlu0 %v3765, 96
        %v3859 = vpop.permute.xlu0 %3858
        %3860 = vrot.lane.b32.xlu0 %v3766, 96
        %v3861 = vpop.permute.xlu0 %3860
        %3862 = vrot.lane.b32.xlu0 %v3767, 96
        %v3863 = vpop.permute.xlu0 %3862
        %3896 = vst.msk [vmem:[#allocation2 + $0x8] sm:$0xff] %vm2711, %v3801
        %3897 = vst.msk [vmem:[#allocation2 + $0x20] sm:$0xff] %vm2711, %v3803
        %3898 = vst.msk [vmem:[#allocation2 + $0x38] sm:$0xff] %vm2711, %v3805
        %3899 = vst.msk [vmem:[#allocation2 + $0x50] sm:$0xff] %vm2711, %v3807
        %3900 = vst.msk [vmem:[#allocation2 + $0x68] sm:$0xff] %vm2711, %v3809
        %3901 = vst.msk [vmem:[#allocation2 + $0x80] sm:$0xff] %vm2711, %v3811
        %3902 = vst.msk [vmem:[#allocation2 + $0x98] sm:$0xff] %vm2711, %v3813
        %3903 = vst.msk [vmem:[#allocation2 + $0xb0] sm:$0xff] %vm2711, %v3815
        %3904 = vst.msk [vmem:[#allocation2 + $0xc8] sm:$0xff] %vm2711, %v3817
        %3905 = vst.msk [vmem:[#allocation2 + $0xe0] sm:$0xff] %vm2711, %v3819
        %3906 = vst.msk [vmem:[#allocation2 + $0xf8] sm:$0xff] %vm2711, %v3821
        %3907 = vst.msk [vmem:[#allocation2 + $0x110] sm:$0xff] %vm2711, %v3823
        %3908 = vst.msk [vmem:[#allocation2 + $0x128] sm:$0xff] %vm2711, %v3825
        %3909 = vst.msk [vmem:[#allocation2 + $0x140] sm:$0xff] %vm2711, %v3827
        %3910 = vst.msk [vmem:[#allocation2 + $0x158] sm:$0xff] %vm2711, %v3829
        %3911 = vst.msk [vmem:[#allocation2 + $0x170] sm:$0xff] %vm2711, %v3831
        %3912 = vst.msk [vmem:[#allocation2 + $0x188] sm:$0xff] %vm2711, %v3833
        %3913 = vst.msk [vmem:[#allocation2 + $0x1a0] sm:$0xff] %vm2711, %v3835
        %3914 = vst.msk [vmem:[#allocation2 + $0x1b8] sm:$0xff] %vm2711, %v3837
        %3915 = vst.msk [vmem:[#allocation2 + $0x1d0] sm:$0xff] %vm2711, %v3839
        %3916 = vst.msk [vmem:[#allocation2 + $0x1e8] sm:$0xff] %vm2711, %v3841
        %3917 = vst.msk [vmem:[#allocation2 + $0x200] sm:$0xff] %vm2711, %v3843
        %3918 = vst.msk [vmem:[#allocation2 + $0x218] sm:$0xff] %vm2711, %v3845
        %3919 = vst.msk [vmem:[#allocation2 + $0x230] sm:$0xff] %vm2711, %v3847
        %3920 = vst.msk [vmem:[#allocation2 + $0x248] sm:$0xff] %vm2711, %v3849
        %3921 = vst.msk [vmem:[#allocation2 + $0x260] sm:$0xff] %vm2711, %v3851
        %3922 = vst.msk [vmem:[#allocation2 + $0x278] sm:$0xff] %vm2711, %v3853
        %3923 = vst.msk [vmem:[#allocation2 + $0x290] sm:$0xff] %vm2711, %v3855
        %3924 = vst.msk [vmem:[#allocation2 + $0x2a8] sm:$0xff] %vm2711, %v3857
        %3925 = vst.msk [vmem:[#allocation2 + $0x2c0] sm:$0xff] %vm2711, %v3859
        %3926 = vst.msk [vmem:[#allocation2 + $0x2d8] sm:$0xff] %vm2711, %v3861
        %3927 = vst.msk [vmem:[#allocation2 + $0x2f0] sm:$0xff] %vm2711, %v3863
        %v3928 = vld [vmem:[%s1] sm:$0xff]
        %v3929 = vld [vmem:[%s1 + $0x8] sm:$0xff]
        %v3930 = vld [vmem:[%s1 + $0x10] sm:$0xff]
        %v3931 = vld [vmem:[%s1 + $0x18] sm:$0xff]
        %v3932 = vld [vmem:[%s1 + $0x20] sm:$0xff]
        %v3933 = vld [vmem:[%s1 + $0x28] sm:$0xff]
        %v3934 = vld [vmem:[%s1 + $0x30] sm:$0xff]
        %v3935 = vld [vmem:[%s1 + $0x38] sm:$0xff]
        %v3936 = vld [vmem:[%s1 + $0x40] sm:$0xff]
        %v3937 = vld [vmem:[%s1 + $0x48] sm:$0xff]
        %v3938 = vld [vmem:[%s1 + $0x50] sm:$0xff]
        %v3939 = vld [vmem:[%s1 + $0x58] sm:$0xff]
        %v3940 = vld [vmem:[%s1 + $0x60] sm:$0xff]
        %v3941 = vld [vmem:[%s1 + $0x68] sm:$0xff]
        %v3942 = vld [vmem:[%s1 + $0x70] sm:$0xff]
        %v3943 = vld [vmem:[%s1 + $0x78] sm:$0xff]
        %v3944 = vld [vmem:[%s1 + $0x80] sm:$0xff]
        %v3945 = vld [vmem:[%s1 + $0x88] sm:$0xff]
        %v3946 = vld [vmem:[%s1 + $0x90] sm:$0xff]
        %v3947 = vld [vmem:[%s1 + $0x98] sm:$0xff]
        %v3948 = vld [vmem:[%s1 + $0xa0] sm:$0xff]
        %v3949 = vld [vmem:[%s1 + $0xa8] sm:$0xff]
        %v3950 = vld [vmem:[%s1 + $0xb0] sm:$0xff]
        %v3951 = vld [vmem:[%s1 + $0xb8] sm:$0xff]
        %v3952 = vld [vmem:[%s1 + $0xc0] sm:$0xff]
        %v3953 = vld [vmem:[%s1 + $0xc8] sm:$0xff]
        %v3954 = vld [vmem:[%s1 + $0xd0] sm:$0xff]
        %v3955 = vld [vmem:[%s1 + $0xd8] sm:$0xff]
        %v3956 = vld [vmem:[%s1 + $0xe0] sm:$0xff]
        %v3957 = vld [vmem:[%s1 + $0xe8] sm:$0xff]
        %v3958 = vld [vmem:[%s1 + $0xf0] sm:$0xff]
        %v3959 = vld [vmem:[%s1 + $0xf8] sm:$0xff]
        %3961 = vset.pattern.permute.xlu0 8
        %3962 = vperm.xlu0 %3961, %v3928
        %v3963 = vpop.permute.xlu0 %3962
        %3966 = vset.pattern.permute.xlu0 8
        %3967 = vperm.xlu0 %3966, %v3929
        %v3968 = vpop.permute.xlu0 %3967
        %3971 = vset.pattern.permute.xlu0 8
        %3972 = vperm.xlu0 %3971, %v3930
        %v3973 = vpop.permute.xlu0 %3972
        %3976 = vset.pattern.permute.xlu0 8
        %3977 = vperm.xlu0 %3976, %v3931
        %v3978 = vpop.permute.xlu0 %3977
        %3981 = vset.pattern.permute.xlu0 8
        %3982 = vperm.xlu0 %3981, %v3932
        %v3983 = vpop.permute.xlu0 %3982
        %3986 = vset.pattern.permute.xlu0 8
        %3987 = vperm.xlu0 %3986, %v3933
        %v3988 = vpop.permute.xlu0 %3987
        %3991 = vset.pattern.permute.xlu0 8
        %3992 = vperm.xlu0 %3991, %v3934
        %v3993 = vpop.permute.xlu0 %3992
        %3996 = vset.pattern.permute.xlu0 8
        %3997 = vperm.xlu0 %3996, %v3935
        %v3998 = vpop.permute.xlu0 %3997
        %4001 = vset.pattern.permute.xlu0 8
        %4002 = vperm.xlu0 %4001, %v3936
        %v4003 = vpop.permute.xlu0 %4002
        %4006 = vset.pattern.permute.xlu0 8
        %4007 = vperm.xlu0 %4006, %v3937
        %v4008 = vpop.permute.xlu0 %4007
        %4011 = vset.pattern.permute.xlu0 8
        %4012 = vperm.xlu0 %4011, %v3938
        %v4013 = vpop.permute.xlu0 %4012
        %4016 = vset.pattern.permute.xlu0 8
        %4017 = vperm.xlu0 %4016, %v3939
        %v4018 = vpop.permute.xlu0 %4017
        %4021 = vset.pattern.permute.xlu0 8
        %4022 = vperm.xlu0 %4021, %v3940
        %v4023 = vpop.permute.xlu0 %4022
        %4026 = vset.pattern.permute.xlu0 8
        %4027 = vperm.xlu0 %4026, %v3941
        %v4028 = vpop.permute.xlu0 %4027
        %4031 = vset.pattern.permute.xlu0 8
        %4032 = vperm.xlu0 %4031, %v3942
        %v4033 = vpop.permute.xlu0 %4032
        %4036 = vset.pattern.permute.xlu0 8
        %4037 = vperm.xlu0 %4036, %v3943
        %v4038 = vpop.permute.xlu0 %4037
        %4041 = vset.pattern.permute.xlu0 8
        %4042 = vperm.xlu0 %4041, %v3944
        %v4043 = vpop.permute.xlu0 %4042
        %4046 = vset.pattern.permute.xlu0 8
        %4047 = vperm.xlu0 %4046, %v3945
        %v4048 = vpop.permute.xlu0 %4047
        %4051 = vset.pattern.permute.xlu0 8
        %4052 = vperm.xlu0 %4051, %v3946
        %v4053 = vpop.permute.xlu0 %4052
        %4056 = vset.pattern.permute.xlu0 8
        %4057 = vperm.xlu0 %4056, %v3947
        %v4058 = vpop.permute.xlu0 %4057
        %4061 = vset.pattern.permute.xlu0 8
        %4062 = vperm.xlu0 %4061, %v3948
        %v4063 = vpop.permute.xlu0 %4062
        %4066 = vset.pattern.permute.xlu0 8
        %4067 = vperm.xlu0 %4066, %v3949
        %v4068 = vpop.permute.xlu0 %4067
        %4071 = vset.pattern.permute.xlu0 8
        %4072 = vperm.xlu0 %4071, %v3950
        %v4073 = vpop.permute.xlu0 %4072
        %4076 = vset.pattern.permute.xlu0 8
        %4077 = vperm.xlu0 %4076, %v3951
        %v4078 = vpop.permute.xlu0 %4077
        %4081 = vset.pattern.permute.xlu0 8
        %4082 = vperm.xlu0 %4081, %v3952
        %v4083 = vpop.permute.xlu0 %4082
        %4086 = vset.pattern.permute.xlu0 8
        %4087 = vperm.xlu0 %4086, %v3953
        %v4088 = vpop.permute.xlu0 %4087
        %4091 = vset.pattern.permute.xlu0 8
        %4092 = vperm.xlu0 %4091, %v3954
        %v4093 = vpop.permute.xlu0 %4092
        %4096 = vset.pattern.permute.xlu0 8
        %4097 = vperm.xlu0 %4096, %v3955
        %v4098 = vpop.permute.xlu0 %4097
        %4101 = vset.pattern.permute.xlu0 8
        %4102 = vperm.xlu0 %4101, %v3956
        %v4103 = vpop.permute.xlu0 %4102
        %4106 = vset.pattern.permute.xlu0 8
        %4107 = vperm.xlu0 %4106, %v3957
        %v4108 = vpop.permute.xlu0 %4107
        %4111 = vset.pattern.permute.xlu0 8
        %4112 = vperm.xlu0 %4111, %v3958
        %v4113 = vpop.permute.xlu0 %4112
        %4116 = vset.pattern.permute.xlu0 8
        %4117 = vperm.xlu0 %4116, %v3959
        %v4118 = vpop.permute.xlu0 %4117
        %v4120 = vmul.f32 %v1970, %v3963
        %v4121 = vmul.f32 %v1969, %v3968
        %v4122 = vmul.f32 %v1968, %v3973
        %v4123 = vmul.f32 %v1967, %v3978
        %v4124 = vmul.f32 %v1966, %v3983
        %v4125 = vmul.f32 %v1965, %v3988
        %v4126 = vmul.f32 %v1964, %v3993
        %v4127 = vmul.f32 %v1963, %v3998
        %v4128 = vmul.f32 %v1962, %v4003
        %v4129 = vmul.f32 %v1961, %v4008
        %v4130 = vmul.f32 %v1960, %v4013
        %v4131 = vmul.f32 %v1959, %v4018
        %v4132 = vmul.f32 %v1958, %v4023
        %v4133 = vmul.f32 %v1957, %v4028
        %v4134 = vmul.f32 %v1956, %v4033
        %v4135 = vmul.f32 %v1955, %v4038
        %v4136 = vmul.f32 %v1954, %v4043
        %v4137 = vmul.f32 %v1953, %v4048
        %v4138 = vmul.f32 %v1952, %v4053
        %v4139 = vmul.f32 %v1951, %v4058
        %v4140 = vmul.f32 %v1950, %v4063
        %v4141 = vmul.f32 %v1949, %v4068
        %v4142 = vmul.f32 %v1948, %v4073
        %v4143 = vmul.f32 %v1947, %v4078
        %v4144 = vmul.f32 %v1946, %v4083
        %v4145 = vmul.f32 %v1945, %v4088
        %v4146 = vmul.f32 %v1944, %v4093
        %v4147 = vmul.f32 %v1943, %v4098
        %v4148 = vmul.f32 %v1942, %v4103
        %v4149 = vmul.f32 %v1973, %v4108
        %v4150 = vmul.f32 %v1972, %v4113
        %v4151 = vmul.f32 %v1971, %v4118
        %4152 = vst.msk [vmem:[#allocation2 + $0x10] sm:$0xff] %vm505, %v4120
        %4153 = vst.msk [vmem:[#allocation2 + $0x28] sm:$0xff] %vm505, %v4121
        %4154 = vst.msk [vmem:[#allocation2 + $0x40] sm:$0xff] %vm505, %v4122
        %4155 = vst.msk [vmem:[#allocation2 + $0x58] sm:$0xff] %vm505, %v4123
        %4156 = vst.msk [vmem:[#allocation2 + $0x70] sm:$0xff] %vm505, %v4124
        %4157 = vst.msk [vmem:[#allocation2 + $0x88] sm:$0xff] %vm505, %v4125
        %4158 = vst.msk [vmem:[#allocation2 + $0xa0] sm:$0xff] %vm505, %v4126
        %4159 = vst.msk [vmem:[#allocation2 + $0xb8] sm:$0xff] %vm505, %v4127
        %4160 = vst.msk [vmem:[#allocation2 + $0xd0] sm:$0xff] %vm505, %v4128
        %4161 = vst.msk [vmem:[#allocation2 + $0xe8] sm:$0xff] %vm505, %v4129
        %4162 = vst.msk [vmem:[#allocation2 + $0x100] sm:$0xff] %vm505, %v4130
        %4163 = vst.msk [vmem:[#allocation2 + $0x118] sm:$0xff] %vm505, %v4131
        %4164 = vst.msk [vmem:[#allocation2 + $0x130] sm:$0xff] %vm505, %v4132
        %4165 = vst.msk [vmem:[#allocation2 + $0x148] sm:$0xff] %vm505, %v4133
        %4166 = vst.msk [vmem:[#allocation2 + $0x160] sm:$0xff] %vm505, %v4134
        %4167 = vst.msk [vmem:[#allocation2 + $0x178] sm:$0xff] %vm505, %v4135
        %4168 = vst.msk [vmem:[#allocation2 + $0x190] sm:$0xff] %vm505, %v4136
        %4169 = vst.msk [vmem:[#allocation2 + $0x1a8] sm:$0xff] %vm505, %v4137
        %4170 = vst.msk [vmem:[#allocation2 + $0x1c0] sm:$0xff] %vm505, %v4138
        %4171 = vst.msk [vmem:[#allocation2 + $0x1d8] sm:$0xff] %vm505, %v4139
        %4172 = vst.msk [vmem:[#allocation2 + $0x1f0] sm:$0xff] %vm505, %v4140
        %4173 = vst.msk [vmem:[#allocation2 + $0x208] sm:$0xff] %vm505, %v4141
        %4174 = vst.msk [vmem:[#allocation2 + $0x220] sm:$0xff] %vm505, %v4142
        %4175 = vst.msk [vmem:[#allocation2 + $0x238] sm:$0xff] %vm505, %v4143
        %4176 = vst.msk [vmem:[#allocation2 + $0x250] sm:$0xff] %vm505, %v4144
        %4177 = vst.msk [vmem:[#allocation2 + $0x268] sm:$0xff] %vm505, %v4145
        %4178 = vst.msk [vmem:[#allocation2 + $0x280] sm:$0xff] %vm505, %v4146
        %4179 = vst.msk [vmem:[#allocation2 + $0x298] sm:$0xff] %vm505, %v4147
        %4180 = vst.msk [vmem:[#allocation2 + $0x2b0] sm:$0xff] %vm505, %v4148
        %4181 = vst.msk [vmem:[#allocation2 + $0x2c8] sm:$0xff] %vm505, %v4149
        %4182 = vst.msk [vmem:[#allocation2 + $0x2e0] sm:$0xff] %vm505, %v4150
        %4183 = vst.msk [vmem:[#allocation2 + $0x2f8] sm:$0xff] %vm505, %v4151
        %v4184 = vld [vmem:[#allocation2] sm:$0xff]
        %v4185 = vld [vmem:[#allocation2 + $0x8] sm:$0xff]
        %v4186 = vld [vmem:[#allocation2 + $0x10] sm:$0xff]
        %v4187 = vld [vmem:[#allocation2 + $0x18] sm:$0xff]
        %v4188 = vld [vmem:[#allocation2 + $0x20] sm:$0xff]
        %v4189 = vld [vmem:[#allocation2 + $0x28] sm:$0xff]
        %v4190 = vld [vmem:[#allocation2 + $0x30] sm:$0xff]
        %v4191 = vld [vmem:[#allocation2 + $0x38] sm:$0xff]
        %v4192 = vld [vmem:[#allocation2 + $0x40] sm:$0xff]
        %v4193 = vld [vmem:[#allocation2 + $0x48] sm:$0xff]
        %v4194 = vld [vmem:[#allocation2 + $0x50] sm:$0xff]
        %v4195 = vld [vmem:[#allocation2 + $0x58] sm:$0xff]
        %v4196 = vld [vmem:[#allocation2 + $0x60] sm:$0xff]
        %v4197 = vld [vmem:[#allocation2 + $0x68] sm:$0xff]
        %v4198 = vld [vmem:[#allocation2 + $0x70] sm:$0xff]
        %v4199 = vld [vmem:[#allocation2 + $0x78] sm:$0xff]
        %v4200 = vld [vmem:[#allocation2 + $0x80] sm:$0xff]
        %v4201 = vld [vmem:[#allocation2 + $0x88] sm:$0xff]
        %v4202 = vld [vmem:[#allocation2 + $0x90] sm:$0xff]
        %v4203 = vld [vmem:[#allocation2 + $0x98] sm:$0xff]
        %v4204 = vld [vmem:[#allocation2 + $0xa0] sm:$0xff]
        %v4205 = vld [vmem:[#allocation2 + $0xa8] sm:$0xff]
        %v4206 = vld [vmem:[#allocation2 + $0xb0] sm:$0xff]
        %v4207 = vld [vmem:[#allocation2 + $0xb8] sm:$0xff]
        %v4208 = vld [vmem:[#allocation2 + $0xc0] sm:$0xff]
        %v4209 = vld [vmem:[#allocation2 + $0xc8] sm:$0xff]
        %v4210 = vld [vmem:[#allocation2 + $0xd0] sm:$0xff]
        %v4211 = vld [vmem:[#allocation2 + $0xd8] sm:$0xff]
        %v4212 = vld [vmem:[#allocation2 + $0xe0] sm:$0xff]
        %v4213 = vld [vmem:[#allocation2 + $0xe8] sm:$0xff]
        %v4214 = vld [vmem:[#allocation2 + $0xf0] sm:$0xff]
        %v4215 = vld [vmem:[#allocation2 + $0xf8] sm:$0xff]
        %v4216 = vld [vmem:[#allocation2 + $0x100] sm:$0xff]
        %v4217 = vld [vmem:[#allocation2 + $0x108] sm:$0xff]
        %v4218 = vld [vmem:[#allocation2 + $0x110] sm:$0xff]
        %v4219 = vld [vmem:[#allocation2 + $0x118] sm:$0xff]
        %v4220 = vld [vmem:[#allocation2 + $0x120] sm:$0xff]
        %v4221 = vld [vmem:[#allocation2 + $0x128] sm:$0xff]
        %v4222 = vld [vmem:[#allocation2 + $0x130] sm:$0xff]
        %v4223 = vld [vmem:[#allocation2 + $0x138] sm:$0xff]
        %v4224 = vld [vmem:[#allocation2 + $0x140] sm:$0xff]
        %v4225 = vld [vmem:[#allocation2 + $0x148] sm:$0xff]
        %v4226 = vld [vmem:[#allocation2 + $0x150] sm:$0xff]
        %v4227 = vld [vmem:[#allocation2 + $0x158] sm:$0xff]
        %v4228 = vld [vmem:[#allocation2 + $0x160] sm:$0xff]
        %v4229 = vld [vmem:[#allocation2 + $0x168] sm:$0xff]
        %v4230 = vld [vmem:[#allocation2 + $0x170] sm:$0xff]
        %v4231 = vld [vmem:[#allocation2 + $0x178] sm:$0xff]
        %v4232 = vld [vmem:[#allocation2 + $0x180] sm:$0xff]
        %v4233 = vld [vmem:[#allocation2 + $0x188] sm:$0xff]
        %v4234 = vld [vmem:[#allocation2 + $0x190] sm:$0xff]
        %v4235 = vld [vmem:[#allocation2 + $0x198] sm:$0xff]
        %v4236 = vld [vmem:[#allocation2 + $0x1a0] sm:$0xff]
        %v4237 = vld [vmem:[#allocation2 + $0x1a8] sm:$0xff]
        %v4238 = vld [vmem:[#allocation2 + $0x1b0] sm:$0xff]
        %v4239 = vld [vmem:[#allocation2 + $0x1b8] sm:$0xff]
        %v4240 = vld [vmem:[#allocation2 + $0x1c0] sm:$0xff]
        %v4241 = vld [vmem:[#allocation2 + $0x1c8] sm:$0xff]
        %v4242 = vld [vmem:[#allocation2 + $0x1d0] sm:$0xff]
        %v4243 = vld [vmem:[#allocation2 + $0x1d8] sm:$0xff]
        %v4244 = vld [vmem:[#allocation2 + $0x1e0] sm:$0xff]
        %v4245 = vld [vmem:[#allocation2 + $0x1e8] sm:$0xff]
        %v4246 = vld [vmem:[#allocation2 + $0x1f0] sm:$0xff]
        %v4247 = vld [vmem:[#allocation2 + $0x1f8] sm:$0xff]
        %v4248 = vld [vmem:[#allocation2 + $0x200] sm:$0xff]
        %v4249 = vld [vmem:[#allocation2 + $0x208] sm:$0xff]
        %v4250 = vld [vmem:[#allocation2 + $0x210] sm:$0xff]
        %v4251 = vld [vmem:[#allocation2 + $0x218] sm:$0xff]
        %v4252 = vld [vmem:[#allocation2 + $0x220] sm:$0xff]
        %v4253 = vld [vmem:[#allocation2 + $0x228] sm:$0xff]
        %v4254 = vld [vmem:[#allocation2 + $0x230] sm:$0xff]
        %v4255 = vld [vmem:[#allocation2 + $0x238] sm:$0xff]
        %v4256 = vld [vmem:[#allocation2 + $0x240] sm:$0xff]
        %v4257 = vld [vmem:[#allocation2 + $0x248] sm:$0xff]
        %v4258 = vld [vmem:[#allocation2 + $0x250] sm:$0xff]
        %v4259 = vld [vmem:[#allocation2 + $0x258] sm:$0xff]
        %v4260 = vld [vmem:[#allocation2 + $0x260] sm:$0xff]
        %v4261 = vld [vmem:[#allocation2 + $0x268] sm:$0xff]
        %v4262 = vld [vmem:[#allocation2 + $0x270] sm:$0xff]
        %v4263 = vld [vmem:[#allocation2 + $0x278] sm:$0xff]
        %v4264 = vld [vmem:[#allocation2 + $0x280] sm:$0xff]
        %v4265 = vld [vmem:[#allocation2 + $0x288] sm:$0xff]
        %v4266 = vld [vmem:[#allocation2 + $0x290] sm:$0xff]
        %v4267 = vld [vmem:[#allocation2 + $0x298] sm:$0xff]
        %v4268 = vld [vmem:[#allocation2 + $0x2a0] sm:$0xff]
        %v4269 = vld [vmem:[#allocation2 + $0x2a8] sm:$0xff]
        %v4270 = vld [vmem:[#allocation2 + $0x2b0] sm:$0xff]
        %v4271 = vld [vmem:[#allocation2 + $0x2b8] sm:$0xff]
        %v4272 = vld [vmem:[#allocation2 + $0x2c0] sm:$0xff]
        %v4273 = vld [vmem:[#allocation2 + $0x2c8] sm:$0xff]
        %v4274 = vld [vmem:[#allocation2 + $0x2d0] sm:$0xff]
        %v4275 = vld [vmem:[#allocation2 + $0x2d8] sm:$0xff]
        %v4276 = vld [vmem:[#allocation2 + $0x2e0] sm:$0xff]
        %v4277 = vld [vmem:[#allocation2 + $0x2e8] sm:$0xff]
        %v4278 = vld [vmem:[#allocation2 + $0x2f0] sm:$0xff]
        %v4279 = vld [vmem:[#allocation2 + $0x2f8] sm:$0xff]
        %v4280 = vpack.c.bf16 %v4187, %v4184
        %v4281 = vpack.c.bf16 %v4188, %v4185
        %v4282 = vpack.c.bf16 %v4189, %v4186
        %v4283 = vpack.c.bf16 %v4193, %v4190
        %v4284 = vpack.c.bf16 %v4194, %v4191
        %v4285 = vpack.c.bf16 %v4195, %v4192
        %v4286 = vpack.c.bf16 %v4199, %v4196
        %v4287 = vpack.c.bf16 %v4200, %v4197
        %v4288 = vpack.c.bf16 %v4201, %v4198
        %v4289 = vpack.c.bf16 %v4205, %v4202
        %v4290 = vpack.c.bf16 %v4206, %v4203
        %v4291 = vpack.c.bf16 %v4207, %v4204
        %v4292 = vpack.c.bf16 %v4211, %v4208
        %v4293 = vpack.c.bf16 %v4212, %v4209
        %v4294 = vpack.c.bf16 %v4213, %v4210
        %v4295 = vpack.c.bf16 %v4217, %v4214
        %v4296 = vpack.c.bf16 %v4218, %v4215
        %v4297 = vpack.c.bf16 %v4219, %v4216
        %v4298 = vpack.c.bf16 %v4223, %v4220
        %v4299 = vpack.c.bf16 %v4224, %v4221
        %v4300 = vpack.c.bf16 %v4225, %v4222
        %v4301 = vpack.c.bf16 %v4229, %v4226
        %v4302 = vpack.c.bf16 %v4230, %v4227
        %v4303 = vpack.c.bf16 %v4231, %v4228
        %v4304 = vpack.c.bf16 %v4235, %v4232
        %v4305 = vpack.c.bf16 %v4236, %v4233
        %v4306 = vpack.c.bf16 %v4237, %v4234
        %v4307 = vpack.c.bf16 %v4241, %v4238
        %v4308 = vpack.c.bf16 %v4242, %v4239
        %v4309 = vpack.c.bf16 %v4243, %v4240
        %v4310 = vpack.c.bf16 %v4247, %v4244
        %v4311 = vpack.c.bf16 %v4248, %v4245
        %v4312 = vpack.c.bf16 %v4249, %v4246
        %v4313 = vpack.c.bf16 %v4253, %v4250
        %v4314 = vpack.c.bf16 %v4254, %v4251
        %v4315 = vpack.c.bf16 %v4255, %v4252
        %v4316 = vpack.c.bf16 %v4259, %v4256
        %v4317 = vpack.c.bf16 %v4260, %v4257
        %v4318 = vpack.c.bf16 %v4261, %v4258
        %v4319 = vpack.c.bf16 %v4265, %v4262
        %v4320 = vpack.c.bf16 %v4266, %v4263
        %v4321 = vpack.c.bf16 %v4267, %v4264
        %v4322 = vpack.c.bf16 %v4271, %v4268
        %v4323 = vpack.c.bf16 %v4272, %v4269
        %v4324 = vpack.c.bf16 %v4273, %v4270
        %v4325 = vpack.c.bf16 %v4277, %v4274
        %v4326 = vpack.c.bf16 %v4278, %v4275
        %v4327 = vpack.c.bf16 %v4279, %v4276
        %v4328 = vld [vmem:[%s5] sm:$0xf]
        %v4329 = vld [vmem:[%s5 + $0x4] sm:$0xf]
        %v4330 = vld [vmem:[%s5 + $0x8] sm:$0xf]
        %v4331 = vld [vmem:[%s5 + $0xc] sm:$0xf]
        %v4332 = vld [vmem:[%s5 + $0x10] sm:$0xf]
        %v4333 = vld [vmem:[%s5 + $0x14] sm:$0xf]
        %v4334 = vld [vmem:[%s5 + $0x18] sm:$0xf]
        %v4335 = vld [vmem:[%s5 + $0x1c] sm:$0xf]
        %v4336 = vld [vmem:[%s5 + $0x20] sm:$0xf]
        %v4337 = vld [vmem:[%s5 + $0x24] sm:$0xf]
        %v4338 = vld [vmem:[%s5 + $0x28] sm:$0xf]
        %v4339 = vld [vmem:[%s5 + $0x2c] sm:$0xf]
        %v4340 = vld [vmem:[%s5 + $0x30] sm:$0xf]
        %v4341 = vld [vmem:[%s5 + $0x34] sm:$0xf]
        %v4342 = vld [vmem:[%s5 + $0x38] sm:$0xf]
        %v4343 = vld [vmem:[%s5 + $0x3c] sm:$0xf]
        %v4344 = vld [vmem:[%s5 + $0x40] sm:$0xf]
        %v4345 = vld [vmem:[%s5 + $0x44] sm:$0xf]
        %v4346 = vld [vmem:[%s5 + $0x48] sm:$0xf]
        %v4347 = vld [vmem:[%s5 + $0x4c] sm:$0xf]
        %v4348 = vld [vmem:[%s5 + $0x50] sm:$0xf]
        %v4349 = vld [vmem:[%s5 + $0x54] sm:$0xf]
        %v4350 = vld [vmem:[%s5 + $0x58] sm:$0xf]
        %v4351 = vld [vmem:[%s5 + $0x5c] sm:$0xf]
        %v4352 = vld [vmem:[%s5 + $0x60] sm:$0xf]
        %v4353 = vld [vmem:[%s5 + $0x64] sm:$0xf]
        %v4354 = vld [vmem:[%s5 + $0x68] sm:$0xf]
        %v4355 = vld [vmem:[%s5 + $0x6c] sm:$0xf]
        %v4356 = vld [vmem:[%s5 + $0x70] sm:$0xf]
        %v4357 = vld [vmem:[%s5 + $0x74] sm:$0xf]
        %v4358 = vld [vmem:[%s5 + $0x78] sm:$0xf]
        %v4359 = vld [vmem:[%s5 + $0x7c] sm:$0xf]
        %v4360 = vld [vmem:[%s5 + $0x80] sm:$0xf]
        %v4361 = vld [vmem:[%s5 + $0x84] sm:$0xf]
        %v4362 = vld [vmem:[%s5 + $0x88] sm:$0xf]
        %v4363 = vld [vmem:[%s5 + $0x8c] sm:$0xf]
        %v4365 = vlaneseq
        %v4366 = vshrl.u32 %v4365, 7
        %v4367 = vsub.s32 0, %v4366
        %v4368 = vrot.slane %v1200, %v4367
        %v4406 = vunpack.c.l.b16 %v4328
        %v4407 = vunpack.c.l.b16 %v4329
        %v4408 = vunpack.c.l.b16 %v4330
        %v4409 = vunpack.c.l.b16 %v4331
        %v4410 = vunpack.c.l.b16 %v4332
        %v4411 = vunpack.c.l.b16 %v4333
        %v4412 = vunpack.c.l.b16 %v4334
        %v4413 = vunpack.c.l.b16 %v4335
        %v4414 = vunpack.c.l.b16 %v4336
        %v4415 = vunpack.c.l.b16 %v4337
        %v4416 = vunpack.c.l.b16 %v4338
        %v4417 = vunpack.c.l.b16 %v4339
        %v4418 = vunpack.c.l.b16 %v4340
        %v4419 = vunpack.c.l.b16 %v4341
        %v4420 = vunpack.c.l.b16 %v4342
        %v4421 = vunpack.c.l.b16 %v4343
        %v4422 = vunpack.c.l.b16 %v4344
        %v4423 = vunpack.c.l.b16 %v4345
        %v4424 = vunpack.c.l.b16 %v4346
        %v4425 = vunpack.c.l.b16 %v4347
        %v4426 = vunpack.c.l.b16 %v4348
        %v4427 = vunpack.c.l.b16 %v4349
        %v4428 = vunpack.c.l.b16 %v4350
        %v4429 = vunpack.c.l.b16 %v4351
        %v4430 = vunpack.c.l.b16 %v4352
        %v4431 = vunpack.c.l.b16 %v4353
        %v4432 = vunpack.c.l.b16 %v4354
        %v4433 = vunpack.c.l.b16 %v4355
        %v4434 = vunpack.c.l.b16 %v4356
        %v4435 = vunpack.c.l.b16 %v4357
        %v4436 = vunpack.c.l.b16 %v4358
        %v4437 = vunpack.c.l.b16 %v4359
        %v4438 = vunpack.c.l.b16 %v4360
        %v4439 = vunpack.c.l.b16 %v4361
        %v4440 = vunpack.c.l.b16 %v4362
        %v4441 = vunpack.c.l.b16 %v4363
        %v4442 = vpack.c.b16 %v4407, %v4406
        %v4443 = vpack.c.b16 %v4409, %v4408
        %v4444 = vpack.c.b16 %v4411, %v4410
        %v4445 = vpack.c.b16 %v4413, %v4412
        %v4446 = vpack.c.b16 %v4415, %v4414
        %v4447 = vpack.c.b16 %v4417, %v4416
        %v4448 = vpack.c.b16 %v4419, %v4418
        %v4449 = vpack.c.b16 %v4421, %v4420
        %v4450 = vpack.c.b16 %v4423, %v4422
        %v4451 = vpack.c.b16 %v4425, %v4424
        %v4452 = vpack.c.b16 %v4427, %v4426
        %v4453 = vpack.c.b16 %v4429, %v4428
        %v4454 = vpack.c.b16 %v4431, %v4430
        %v4455 = vpack.c.b16 %v4433, %v4432
        %v4456 = vpack.c.b16 %v4435, %v4434
        %v4457 = vpack.c.b16 %v4437, %v4436
        %v4458 = vpack.c.b16 %v4439, %v4438
        %v4459 = vpack.c.b16 %v4441, %v4440
        %v4479 = vsel %vm505, %v4282, 0
        %v4482 = vsel %vm505, %v4285, 0
        %v4485 = vsel %vm505, %v4288, 0
        %v4488 = vsel %vm505, %v4291, 0
        %v4491 = vsel %vm505, %v4294, 0
        %v4494 = vsel %vm505, %v4297, 0
        %v4497 = vsel %vm505, %v4300, 0
        %v4500 = vsel %vm505, %v4303, 0
        %v4503 = vsel %vm505, %v4306, 0
        %v4506 = vsel %vm505, %v4309, 0
        %v4509 = vsel %vm505, %v4312, 0
        %v4512 = vsel %vm505, %v4315, 0
        %v4515 = vsel %vm505, %v4318, 0
        %v4518 = vsel %vm505, %v4321, 0
        %v4521 = vsel %vm505, %v4324, 0
        %v4524 = vsel %vm505, %v4327, 0
        %4526 = vmatprep.subr.bf16.mxu0 0
        %4527 = vmatpush1.bf16.msra.mxu0 %v4442
        %4528 = vmatprep.subr.bf16.mxu0 0
        %4529 = vmatpush1.bf16.msra.mxu0 %v4443
        %4530 = vmatprep.subr.bf16.mxu0 0
        %4531 = vmatpush1.bf16.msra.mxu0 %v4444
        %4532 = vmatprep.subr.bf16.mxu0 0
        %4533 = vmatpush1.bf16.msra.mxu0 %v4445
        %4534 = vmatprep.subr.bf16.mxu0 0
        %4535 = vmatpush1.bf16.msra.mxu0 %v4446
        %4536 = vmatprep.subr.bf16.mxu0 0
        %4537 = vmatpush1.bf16.msra.mxu0 %v4447
        %4538 = vmatprep.subr.bf16.mxu0 0
        %4539 = vmatpush1.bf16.msra.mxu0 %v4448
        %4540 = vmatprep.subr.bf16.mxu0 0
        %4541 = vmatpush1.bf16.msra.mxu0 %v4449
        %4542 = vmatprep.subr.bf16.mxu0 0
        %4543 = vmatpush1.bf16.msra.mxu0 %v4450
        %4544 = vmatprep.subr.bf16.mxu0 0
        %4545 = vmatpush1.bf16.msra.mxu0 %v4451
        %4546 = vmatprep.subr.bf16.mxu0 0
        %4547 = vmatpush1.bf16.msra.mxu0 %v4452
        %4548 = vmatprep.subr.bf16.mxu0 0
        %4549 = vmatpush1.bf16.msra.mxu0 %v4453
        %4550 = vmatprep.subr.bf16.mxu0 0
        %4551 = vmatpush1.bf16.msra.mxu0 %v4454
        %4552 = vmatprep.subr.bf16.mxu0 0
        %4553 = vmatpush1.bf16.msra.mxu0 %v4455
        %4554 = vmatprep.subr.bf16.mxu0 0
        %4555 = vmatpush1.bf16.msra.mxu0 %v4456
        %4556 = vmatprep.subr.bf16.mxu0 0
        %4557 = vmatpush1.bf16.msra.mxu0 %v4457
        %4558 = vmatprep.mubr.bf16.mxu0 %v4281
        %4559 = vmatmul.mubr.bf16.gmra.mrb[0].mxu0 %v4280
        %v4560 = vpop.f32.mrb[0].mxu0
        %v4561 = vadd.f32 %v4368, %v4560
        %v4562 = vpop.f32.mrb[0].mxu0
        %v4563 = vpop.f32.mrb[0].mxu0
        %v4564 = vadd.f32 %v4368, %v4563
        %v4565 = vpop.f32.mrb[0].mxu0
        %4566 = vmatprep.mubr.bf16.mxu0 %v4284
        %4567 = vmatmul.mubr.bf16.gmra.mrb[0].mxu0 %v4283
        %v4568 = vpop.f32.mrb[0].mxu0
        %v4569 = vadd.f32 %v4368, %v4568
        %v4570 = vpop.f32.mrb[0].mxu0
        %v4571 = vpop.f32.mrb[0].mxu0
        %v4572 = vadd.f32 %v4368, %v4571
        %v4573 = vpop.f32.mrb[0].mxu0
        %4574 = vmatprep.mubr.bf16.mxu0 %v4287
        %4575 = vmatmul.mubr.bf16.gmra.mrb[0].mxu0 %v4286
        %v4576 = vpop.f32.mrb[0].mxu0
        %v4577 = vadd.f32 %v4368, %v4576
        %v4578 = vpop.f32.mrb[0].mxu0
        %v4579 = vpop.f32.mrb[0].mxu0
        %v4580 = vadd.f32 %v4368, %v4579
        %v4581 = vpop.f32.mrb[0].mxu0
        %4582 = vmatprep.mubr.bf16.mxu0 %v4290
        %4583 = vmatmul.mubr.bf16.gmra.mrb[0].mxu0 %v4289
        %v4584 = vpop.f32.mrb[0].mxu0
        %v4585 = vadd.f32 %v4368, %v4584
        %v4586 = vpop.f32.mrb[0].mxu0
        %v4587 = vpop.f32.mrb[0].mxu0
        %v4588 = vadd.f32 %v4368, %v4587
        %v4589 = vpop.f32.mrb[0].mxu0
        %4590 = vmatprep.mubr.bf16.mxu0 %v4293
        %4591 = vmatmul.mubr.bf16.gmra.mrb[0].mxu0 %v4292
        %v4592 = vpop.f32.mrb[0].mxu0
        %v4593 = vadd.f32 %v4368, %v4592
        %v4594 = vpop.f32.mrb[0].mxu0
        %v4595 = vpop.f32.mrb[0].mxu0
        %v4596 = vadd.f32 %v4368, %v4595
        %v4597 = vpop.f32.mrb[0].mxu0
        %4598 = vmatprep.mubr.bf16.mxu0 %v4296
        %4599 = vmatmul.mubr.bf16.gmra.mrb[0].mxu0 %v4295
        %v4600 = vpop.f32.mrb[0].mxu0
        %v4601 = vadd.f32 %v4368, %v4600
        %v4602 = vpop.f32.mrb[0].mxu0
        %v4603 = vpop.f32.mrb[0].mxu0
        %v4604 = vadd.f32 %v4368, %v4603
        %v4605 = vpop.f32.mrb[0].mxu0
        %4606 = vmatprep.mubr.bf16.mxu0 %v4299
        %4607 = vmatmul.mubr.bf16.gmra.mrb[0].mxu0 %v4298
        %v4608 = vpop.f32.mrb[0].mxu0
        %v4609 = vadd.f32 %v4368, %v4608
        %v4610 = vpop.f32.mrb[0].mxu0
        %v4611 = vpop.f32.mrb[0].mxu0
        %v4612 = vadd.f32 %v4368, %v4611
        %v4613 = vpop.f32.mrb[0].mxu0
        %4614 = vmatprep.mubr.bf16.mxu0 %v4302
        %4615 = vmatmul.mubr.bf16.gmra.mrb[0].mxu0 %v4301
        %v4616 = vpop.f32.mrb[0].mxu0
        %v4617 = vadd.f32 %v4368, %v4616
        %v4618 = vpop.f32.mrb[0].mxu0
        %v4619 = vpop.f32.mrb[0].mxu0
        %v4620 = vadd.f32 %v4368, %v4619
        %v4621 = vpop.f32.mrb[0].mxu0
        %4622 = vmatprep.mubr.bf16.mxu0 %v4305
        %4623 = vmatmul.mubr.bf16.gmra.mrb[0].mxu0 %v4304
        %v4624 = vpop.f32.mrb[0].mxu0
        %v4625 = vadd.f32 %v4368, %v4624
        %v4626 = vpop.f32.mrb[0].mxu0
        %v4627 = vpop.f32.mrb[0].mxu0
        %v4628 = vadd.f32 %v4368, %v4627
        %v4629 = vpop.f32.mrb[0].mxu0
        %4630 = vmatprep.mubr.bf16.mxu0 %v4308
        %4631 = vmatmul.mubr.bf16.gmra.mrb[0].mxu0 %v4307
        %v4632 = vpop.f32.mrb[0].mxu0
        %v4633 = vadd.f32 %v4368, %v4632
        %v4634 = vpop.f32.mrb[0].mxu0
        %v4635 = vpop.f32.mrb[0].mxu0
        %v4636 = vadd.f32 %v4368, %v4635
        %v4637 = vpop.f32.mrb[0].mxu0
        %4638 = vmatprep.mubr.bf16.mxu0 %v4311
        %4639 = vmatmul.mubr.bf16.gmra.mrb[0].mxu0 %v4310
        %v4640 = vpop.f32.mrb[0].mxu0
        %v4641 = vadd.f32 %v4368, %v4640
        %v4642 = vpop.f32.mrb[0].mxu0
        %v4643 = vpop.f32.mrb[0].mxu0
        %v4644 = vadd.f32 %v4368, %v4643
        %v4645 = vpop.f32.mrb[0].mxu0
        %4646 = vmatprep.mubr.bf16.mxu0 %v4314
        %4647 = vmatmul.mubr.bf16.gmra.mrb[0].mxu0 %v4313
        %v4648 = vpop.f32.mrb[0].mxu0
        %v4649 = vadd.f32 %v4368, %v4648
        %v4650 = vpop.f32.mrb[0].mxu0
        %v4651 = vpop.f32.mrb[0].mxu0
        %v4652 = vadd.f32 %v4368, %v4651
        %v4653 = vpop.f32.mrb[0].mxu0
        %4654 = vmatprep.mubr.bf16.mxu0 %v4317
        %4655 = vmatmul.mubr.bf16.gmra.mrb[0].mxu0 %v4316
        %v4656 = vpop.f32.mrb[0].mxu0
        %v4657 = vadd.f32 %v4368, %v4656
        %v4658 = vpop.f32.mrb[0].mxu0
        %v4659 = vpop.f32.mrb[0].mxu0
        %v4660 = vadd.f32 %v4368, %v4659
        %v4661 = vpop.f32.mrb[0].mxu0
        %4662 = vmatprep.mubr.bf16.mxu0 %v4320
        %4663 = vmatmul.mubr.bf16.gmra.mrb[0].mxu0 %v4319
        %v4664 = vpop.f32.mrb[0].mxu0
        %v4665 = vadd.f32 %v4368, %v4664
        %v4666 = vpop.f32.mrb[0].mxu0
        %v4667 = vpop.f32.mrb[0].mxu0
        %v4668 = vadd.f32 %v4368, %v4667
        %v4669 = vpop.f32.mrb[0].mxu0
        %4670 = vmatprep.mubr.bf16.mxu0 %v4323
        %4671 = vmatmul.mubr.bf16.gmra.mrb[0].mxu0 %v4322
        %v4672 = vpop.f32.mrb[0].mxu0
        %v4673 = vadd.f32 %v4368, %v4672
        %v4674 = vpop.f32.mrb[0].mxu0
        %v4675 = vpop.f32.mrb[0].mxu0
        %v4676 = vadd.f32 %v4368, %v4675
        %v4677 = vpop.f32.mrb[0].mxu0
        %4678 = vmatprep.mubr.bf16.mxu0 %v4326
        %4679 = vmatmul.mubr.bf16.gmra.mrb[0].mxu0 %v4325
        %v4680 = vpop.f32.mrb[0].mxu0
        %v4681 = vadd.f32 %v4368, %v4680
        %v4682 = vpop.f32.mrb[0].mxu0
        %v4683 = vpop.f32.mrb[0].mxu0
        %v4684 = vadd.f32 %v4368, %v4683
        %v4685 = vpop.f32.mrb[0].mxu0
        %4686 = vdwg.mxu0
        %4687 = vmatprep.subr.bf16.mxu0 0
        %4688 = vmatpush1.bf16.msra.mxu0 %v4458
        %4689 = vmatprep.subr.bf16.mxu0 0
        %4690 = vmatpush1.bf16.msra.mxu0 %v4459
        %4691 = vmatprep.subr.bf16.mxu0 0
        %4692 = vmatpush1.bf16.msra.mxu0 0
        %4693 = vmatprep.subr.bf16.mxu0 0
        %4694 = vmatpush1.bf16.msra.mxu0 0
        %4695 = vmatprep.subr.bf16.mxu0 0
        %4696 = vmatpush1.bf16.msra.mxu0 0
        %4697 = vmatprep.subr.bf16.mxu0 0
        %4698 = vmatpush1.bf16.msra.mxu0 0
        %4699 = vmatprep.subr.bf16.mxu0 0
        %4700 = vmatpush1.bf16.msra.mxu0 0
        %4701 = vmatprep.subr.bf16.mxu0 0
        %4702 = vmatpush1.bf16.msra.mxu0 0
        %4703 = vmatprep.subr.bf16.mxu0 0
        %4704 = vmatpush1.bf16.msra.mxu0 0
        %4705 = vmatprep.subr.bf16.mxu0 0
        %4706 = vmatpush1.bf16.msra.mxu0 0
        %4707 = vmatprep.subr.bf16.mxu0 0
        %4708 = vmatpush1.bf16.msra.mxu0 0
        %4709 = vmatprep.subr.bf16.mxu0 0
        %4710 = vmatpush1.bf16.msra.mxu0 0
        %4711 = vmatprep.subr.bf16.mxu0 0
        %4712 = vmatpush1.bf16.msra.mxu0 0
        %4713 = vmatprep.subr.bf16.mxu0 0
        %4714 = vmatpush1.bf16.msra.mxu0 0
        %4715 = vmatprep.subr.bf16.mxu0 0
        %4716 = vmatpush1.bf16.msra.mxu0 0
        %4717 = vmatprep.subr.bf16.mxu0 0
        %4718 = vmatpush1.bf16.msra.mxu0 0
        %4719 = vmatprep.mubr.bf16.mxu0 0
        %4720 = vmatmul.mubr.bf16.gmra.mrb[0].mxu0 %v4479
        %v4721 = vpop.f32.mrb[0].mxu0
        %v4722 = vadd.f32 %v4561, %v4721
        %v4723 = vpop.f32.mrb[0].mxu0
        %v4724 = vpop.f32.mrb[0].mxu0
        %v4725 = vadd.f32 %v4564, %v4724
        %v4726 = vpop.f32.mrb[0].mxu0
        %4727 = vmatprep.mubr.bf16.mxu0 0
        %4728 = vmatmul.mubr.bf16.gmra.mrb[0].mxu0 %v4482
        %v4729 = vpop.f32.mrb[0].mxu0
        %v4730 = vadd.f32 %v4569, %v4729
        %v4731 = vpop.f32.mrb[0].mxu0
        %v4732 = vpop.f32.mrb[0].mxu0
        %v4733 = vadd.f32 %v4572, %v4732
        %v4734 = vpop.f32.mrb[0].mxu0
        %4735 = vmatprep.mubr.bf16.mxu0 0
        %4736 = vmatmul.mubr.bf16.gmra.mrb[0].mxu0 %v4485
        %v4737 = vpop.f32.mrb[0].mxu0
        %v4738 = vadd.f32 %v4577, %v4737
        %v4739 = vpop.f32.mrb[0].mxu0
        %v4740 = vpop.f32.mrb[0].mxu0
        %v4741 = vadd.f32 %v4580, %v4740
        %v4742 = vpop.f32.mrb[0].mxu0
        %4743 = vmatprep.mubr.bf16.mxu0 0
        %4744 = vmatmul.mubr.bf16.gmra.mrb[0].mxu0 %v4488
        %v4745 = vpop.f32.mrb[0].mxu0
        %v4746 = vadd.f32 %v4585, %v4745
        %v4747 = vpop.f32.mrb[0].mxu0
        %v4748 = vpop.f32.mrb[0].mxu0
        %v4749 = vadd.f32 %v4588, %v4748
        %v4750 = vpop.f32.mrb[0].mxu0
        %4751 = vmatprep.mubr.bf16.mxu0 0
        %4752 = vmatmul.mubr.bf16.gmra.mrb[0].mxu0 %v4491
        %v4753 = vpop.f32.mrb[0].mxu0
        %v4754 = vadd.f32 %v4593, %v4753
        %v4755 = vpop.f32.mrb[0].mxu0
        %v4756 = vpop.f32.mrb[0].mxu0
        %v4757 = vadd.f32 %v4596, %v4756
        %v4758 = vpop.f32.mrb[0].mxu0
        %4759 = vmatprep.mubr.bf16.mxu0 0
        %4760 = vmatmul.mubr.bf16.gmra.mrb[0].mxu0 %v4494
        %v4761 = vpop.f32.mrb[0].mxu0
        %v4762 = vadd.f32 %v4601, %v4761
        %v4763 = vpop.f32.mrb[0].mxu0
        %v4764 = vpop.f32.mrb[0].mxu0
        %v4765 = vadd.f32 %v4604, %v4764
        %v4766 = vpop.f32.mrb[0].mxu0
        %4767 = vmatprep.mubr.bf16.mxu0 0
        %4768 = vmatmul.mubr.bf16.gmra.mrb[0].mxu0 %v4497
        %v4769 = vpop.f32.mrb[0].mxu0
        %v4770 = vadd.f32 %v4609, %v4769
        %v4771 = vpop.f32.mrb[0].mxu0
        %v4772 = vpop.f32.mrb[0].mxu0
        %v4773 = vadd.f32 %v4612, %v4772
        %v4774 = vpop.f32.mrb[0].mxu0
        %4775 = vmatprep.mubr.bf16.mxu0 0
        %4776 = vmatmul.mubr.bf16.gmra.mrb[0].mxu0 %v4500
        %v4777 = vpop.f32.mrb[0].mxu0
        %v4778 = vadd.f32 %v4617, %v4777
        %v4779 = vpop.f32.mrb[0].mxu0
        %v4780 = vpop.f32.mrb[0].mxu0
        %v4781 = vadd.f32 %v4620, %v4780
        %v4782 = vpop.f32.mrb[0].mxu0
        %4783 = vmatprep.mubr.bf16.mxu0 0
        %4784 = vmatmul.mubr.bf16.gmra.mrb[0].mxu0 %v4503
        %v4785 = vpop.f32.mrb[0].mxu0
        %v4786 = vadd.f32 %v4625, %v4785
        %v4787 = vpop.f32.mrb[0].mxu0
        %v4788 = vpop.f32.mrb[0].mxu0
        %v4789 = vadd.f32 %v4628, %v4788
        %v4790 = vpop.f32.mrb[0].mxu0
        %4791 = vmatprep.mubr.bf16.mxu0 0
        %4792 = vmatmul.mubr.bf16.gmra.mrb[0].mxu0 %v4506
        %v4793 = vpop.f32.mrb[0].mxu0
        %v4794 = vadd.f32 %v4633, %v4793
        %v4795 = vpop.f32.mrb[0].mxu0
        %v4796 = vpop.f32.mrb[0].mxu0
        %v4797 = vadd.f32 %v4636, %v4796
        %v4798 = vpop.f32.mrb[0].mxu0
        %4799 = vmatprep.mubr.bf16.mxu0 0
        %4800 = vmatmul.mubr.bf16.gmra.mrb[0].mxu0 %v4509
        %v4801 = vpop.f32.mrb[0].mxu0
        %v4802 = vadd.f32 %v4641, %v4801
        %v4803 = vpop.f32.mrb[0].mxu0
        %v4804 = vpop.f32.mrb[0].mxu0
        %v4805 = vadd.f32 %v4644, %v4804
        %v4806 = vpop.f32.mrb[0].mxu0
        %4807 = vmatprep.mubr.bf16.mxu0 0
        %4808 = vmatmul.mubr.bf16.gmra.mrb[0].mxu0 %v4512
        %v4809 = vpop.f32.mrb[0].mxu0
        %v4810 = vadd.f32 %v4649, %v4809
        %v4811 = vpop.f32.mrb[0].mxu0
        %v4812 = vpop.f32.mrb[0].mxu0
        %v4813 = vadd.f32 %v4652, %v4812
        %v4814 = vpop.f32.mrb[0].mxu0
        %4815 = vmatprep.mubr.bf16.mxu0 0
        %4816 = vmatmul.mubr.bf16.gmra.mrb[0].mxu0 %v4515
        %v4817 = vpop.f32.mrb[0].mxu0
        %v4818 = vadd.f32 %v4657, %v4817
        %v4819 = vpop.f32.mrb[0].mxu0
        %v4820 = vpop.f32.mrb[0].mxu0
        %v4821 = vadd.f32 %v4660, %v4820
        %v4822 = vpop.f32.mrb[0].mxu0
        %4823 = vmatprep.mubr.bf16.mxu0 0
        %4824 = vmatmul.mubr.bf16.gmra.mrb[0].mxu0 %v4518
        %v4825 = vpop.f32.mrb[0].mxu0
        %v4826 = vadd.f32 %v4665, %v4825
        %v4827 = vpop.f32.mrb[0].mxu0
        %v4828 = vpop.f32.mrb[0].mxu0
        %v4829 = vadd.f32 %v4668, %v4828
        %v4830 = vpop.f32.mrb[0].mxu0
        %4831 = vmatprep.mubr.bf16.mxu0 0
        %4832 = vmatmul.mubr.bf16.gmra.mrb[0].mxu0 %v4521
        %v4833 = vpop.f32.mrb[0].mxu0
        %v4834 = vadd.f32 %v4673, %v4833
        %v4835 = vpop.f32.mrb[0].mxu0
        %v4836 = vpop.f32.mrb[0].mxu0
        %v4837 = vadd.f32 %v4676, %v4836
        %v4838 = vpop.f32.mrb[0].mxu0
        %4839 = vmatprep.mubr.bf16.mxu0 0
        %4840 = vmatmul.mubr.bf16.gmra.mrb[0].mxu0 %v4524
        %v4841 = vpop.f32.mrb[0].mxu0
        %v4842 = vadd.f32 %v4681, %v4841
        %v4843 = vpop.f32.mrb[0].mxu0
        %v4844 = vpop.f32.mrb[0].mxu0
        %v4845 = vadd.f32 %v4684, %v4844
        %v4846 = vpop.f32.mrb[0].mxu0
        %4847 = vdwg.mxu0
        %v4848 = vld [vmem:[%s9] sm:$0xff]
        %v4849 = vld [vmem:[%s9 + $0x8] sm:$0xff]
        %v4850 = vld [vmem:[%s9 + $0x10] sm:$0xff]
        %v4851 = vld [vmem:[%s9 + $0x18] sm:$0xff]
        %v4852 = vld [vmem:[%s9 + $0x20] sm:$0xff]
        %v4853 = vld [vmem:[%s9 + $0x28] sm:$0xff]
        %v4854 = vld [vmem:[%s9 + $0x30] sm:$0xff]
        %v4855 = vld [vmem:[%s9 + $0x38] sm:$0xff]
        %v4856 = vld [vmem:[%s7] sm:$0x1]
        %v4857 = vld [vmem:[%s8] sm:$0x1]
        %vm4858 = vcmask 523264
        %v4859 = vsel %vm4858, %v4722, 0.0
        %v4860 = vsel %vm4858, %v4725, 0.0
        %v4861 = vadd.f32 %v4859, %v4860
        %v4862 = vsel %vm4858, %v4730, 0.0
        %v4863 = vadd.f32 %v4861, %v4862
        %v4864 = vsel %vm4858, %v4733, 0.0
        %v4865 = vadd.f32 %v4863, %v4864
        %v4866 = vsel %vm4858, %v4738, 0.0
        %v4867 = vadd.f32 %v4865, %v4866
        %v4868 = vsel %vm4858, %v4741, 0.0
        %v4869 = vadd.f32 %v4867, %v4868
        %v4870 = vsel %vm4858, %v4746, 0.0
        %v4871 = vadd.f32 %v4869, %v4870
        %v4872 = vsel %vm4858, %v4749, 0.0
        %v4873 = vadd.f32 %v4871, %v4872
        %v4874 = vsel %vm4858, %v4754, 0.0
        %v4875 = vadd.f32 %v4873, %v4874
        %v4876 = vsel %vm4858, %v4757, 0.0
        %v4877 = vadd.f32 %v4875, %v4876
        %v4878 = vsel %vm4858, %v4762, 0.0
        %v4879 = vadd.f32 %v4877, %v4878
        %v4880 = vsel %vm4858, %v4765, 0.0
        %v4881 = vadd.f32 %v4879, %v4880
        %v4882 = vsel %vm4858, %v4770, 0.0
        %v4883 = vadd.f32 %v4881, %v4882
        %v4884 = vsel %vm4858, %v4773, 0.0
        %v4885 = vadd.f32 %v4883, %v4884
        %v4886 = vsel %vm4858, %v4778, 0.0
        %v4887 = vadd.f32 %v4885, %v4886
        %v4888 = vsel %vm4858, %v4781, 0.0
        %v4889 = vadd.f32 %v4887, %v4888
        %v4890 = vsel %vm4858, %v4786, 0.0
        %v4891 = vadd.f32 %v4889, %v4890
        %v4892 = vsel %vm4858, %v4789, 0.0
        %v4893 = vadd.f32 %v4891, %v4892
        %v4894 = vsel %vm4858, %v4794, 0.0
        %v4895 = vadd.f32 %v4893, %v4894
        %v4896 = vsel %vm4858, %v4797, 0.0
        %v4897 = vadd.f32 %v4895, %v4896
        %v4898 = vsel %vm4858, %v4802, 0.0
        %v4899 = vadd.f32 %v4897, %v4898
        %v4900 = vsel %vm4858, %v4805, 0.0
        %v4901 = vadd.f32 %v4899, %v4900
        %v4902 = vsel %vm4858, %v4810, 0.0
        %v4903 = vadd.f32 %v4901, %v4902
        %v4904 = vsel %vm4858, %v4813, 0.0
        %v4905 = vadd.f32 %v4903, %v4904
        %v4906 = vsel %vm4858, %v4818, 0.0
        %v4907 = vadd.f32 %v4905, %v4906
        %v4908 = vsel %vm4858, %v4821, 0.0
        %v4909 = vadd.f32 %v4907, %v4908
        %v4910 = vsel %vm4858, %v4826, 0.0
        %v4911 = vadd.f32 %v4909, %v4910
        %v4912 = vsel %vm4858, %v4829, 0.0
        %v4913 = vadd.f32 %v4911, %v4912
        %v4914 = vsel %vm4858, %v4834, 0.0
        %v4915 = vadd.f32 %v4913, %v4914
        %v4916 = vsel %vm4858, %v4837, 0.0
        %v4917 = vadd.f32 %v4915, %v4916
        %v4918 = vsel %vm4858, %v4842, 0.0
        %v4919 = vadd.f32 %v4917, %v4918
        %v4920 = vsel %vm4858, %v4845, 0.0
        %v4921 = vadd.f32 %v4919, %v4920
        %v4922 = vrot.slane %v4921, 4
        %v4923 = vadd.f32 %v4921, %v4922
        %v4924 = vrot.slane %v4923, 2
        %v4925 = vadd.f32 %v4923, %v4924
        %v4926 = vrot.slane %v4925, 1
        %v4927 = vadd.f32 %v4925, %v4926
        %v4928 = vmul.f32 %v4722, %v4722
        %v4929 = vmul.f32 %v4725, %v4725
        %v4930 = vmul.f32 %v4730, %v4730
        %v4931 = vmul.f32 %v4733, %v4733
        %v4932 = vmul.f32 %v4738, %v4738
        %v4933 = vmul.f32 %v4741, %v4741
        %v4934 = vmul.f32 %v4746, %v4746
        %v4935 = vmul.f32 %v4749, %v4749
        %v4936 = vmul.f32 %v4754, %v4754
        %v4937 = vmul.f32 %v4757, %v4757
        %v4938 = vmul.f32 %v4762, %v4762
        %v4939 = vmul.f32 %v4765, %v4765
        %v4940 = vmul.f32 %v4770, %v4770
        %v4941 = vmul.f32 %v4773, %v4773
        %v4942 = vmul.f32 %v4778, %v4778
        %v4943 = vmul.f32 %v4781, %v4781
        %v4944 = vmul.f32 %v4786, %v4786
        %v4945 = vmul.f32 %v4789, %v4789
        %v4946 = vmul.f32 %v4794, %v4794
        %v4947 = vmul.f32 %v4797, %v4797
        %v4948 = vmul.f32 %v4802, %v4802
        %v4949 = vmul.f32 %v4805, %v4805
        %v4950 = vmul.f32 %v4810, %v4810
        %v4951 = vmul.f32 %v4813, %v4813
        %v4952 = vmul.f32 %v4818, %v4818
        %v4953 = vmul.f32 %v4821, %v4821
        %v4954 = vmul.f32 %v4826, %v4826
        %v4955 = vmul.f32 %v4829, %v4829
        %v4956 = vmul.f32 %v4834, %v4834
        %v4957 = vmul.f32 %v4837, %v4837
        %v4958 = vmul.f32 %v4842, %v4842
        %v4959 = vmul.f32 %v4845, %v4845
        %v4960 = vsel %vm4858, %v4928, 0.0
        %v4961 = vsel %vm4858, %v4929, 0.0
        %v4962 = vadd.f32 %v4960, %v4961
        %v4963 = vsel %vm4858, %v4930, 0.0
        %v4964 = vadd.f32 %v4962, %v4963
        %v4965 = vsel %vm4858, %v4931, 0.0
        %v4966 = vadd.f32 %v4964, %v4965
        %v4967 = vsel %vm4858, %v4932, 0.0
        %v4968 = vadd.f32 %v4966, %v4967
        %v4969 = vsel %vm4858, %v4933, 0.0
        %v4970 = vadd.f32 %v4968, %v4969
        %v4971 = vsel %vm4858, %v4934, 0.0
        %v4972 = vadd.f32 %v4970, %v4971
        %v4973 = vsel %vm4858, %v4935, 0.0
        %v4974 = vadd.f32 %v4972, %v4973
        %v4975 = vsel %vm4858, %v4936, 0.0
        %v4976 = vadd.f32 %v4974, %v4975
        %v4977 = vsel %vm4858, %v4937, 0.0
        %v4978 = vadd.f32 %v4976, %v4977
        %v4979 = vsel %vm4858, %v4938, 0.0
        %v4980 = vadd.f32 %v4978, %v4979
        %v4981 = vsel %vm4858, %v4939, 0.0
        %v4982 = vadd.f32 %v4980, %v4981
        %v4983 = vsel %vm4858, %v4940, 0.0
        %v4984 = vadd.f32 %v4982, %v4983
        %v4985 = vsel %vm4858, %v4941, 0.0
        %v4986 = vadd.f32 %v4984, %v4985
        %v4987 = vsel %vm4858, %v4942, 0.0
        %v4988 = vadd.f32 %v4986, %v4987
        %v4989 = vsel %vm4858, %v4943, 0.0
        %v4990 = vadd.f32 %v4988, %v4989
        %v4991 = vsel %vm4858, %v4944, 0.0
        %v4992 = vadd.f32 %v4990, %v4991
        %v4993 = vsel %vm4858, %v4945, 0.0
        %v4994 = vadd.f32 %v4992, %v4993
        %v4995 = vsel %vm4858, %v4946, 0.0
        %v4996 = vadd.f32 %v4994, %v4995
        %v4997 = vsel %vm4858, %v4947, 0.0
        %v4998 = vadd.f32 %v4996, %v4997
        %v4999 = vsel %vm4858, %v4948, 0.0
        %v5000 = vadd.f32 %v4998, %v4999
        %v5001 = vsel %vm4858, %v4949, 0.0
        %v5002 = vadd.f32 %v5000, %v5001
        %v5003 = vsel %vm4858, %v4950, 0.0
        %v5004 = vadd.f32 %v5002, %v5003
        %v5005 = vsel %vm4858, %v4951, 0.0
        %v5006 = vadd.f32 %v5004, %v5005
        %v5007 = vsel %vm4858, %v4952, 0.0
        %v5008 = vadd.f32 %v5006, %v5007
        %v5009 = vsel %vm4858, %v4953, 0.0
        %v5010 = vadd.f32 %v5008, %v5009
        %v5011 = vsel %vm4858, %v4954, 0.0
        %v5012 = vadd.f32 %v5010, %v5011
        %v5013 = vsel %vm4858, %v4955, 0.0
        %v5014 = vadd.f32 %v5012, %v5013
        %v5015 = vsel %vm4858, %v4956, 0.0
        %v5016 = vadd.f32 %v5014, %v5015
        %v5017 = vsel %vm4858, %v4957, 0.0
        %v5018 = vadd.f32 %v5016, %v5017
        %v5019 = vsel %vm4858, %v4958, 0.0
        %v5020 = vadd.f32 %v5018, %v5019
        %v5021 = vsel %vm4858, %v4959, 0.0
        %v5022 = vadd.f32 %v5020, %v5021
        %v5023 = vrot.slane %v5022, 4
        %v5024 = vadd.f32 %v5022, %v5023
        %v5025 = vrot.slane %v5024, 2
        %v5026 = vadd.f32 %v5024, %v5025
        %v5027 = vrot.slane %v5026, 1
        %v5028 = vadd.f32 %v5026, %v5027
        %v5030 = vsel %vm4858, %v4927, 0
        %5032 = vmatprep.subr.mxu0 0.0
        %5033 = vmatpush1.msra.mxu0 %v4848
        %5034 = vmatprep.subr.mxu0 0.0
        %5035 = vmatpush1.msra.mxu0 %v4849
        %5036 = vmatprep.subr.mxu0 0.0
        %5037 = vmatpush1.msra.mxu0 %v4850
        %5038 = vmatprep.subr.mxu0 0.0
        %5039 = vmatpush1.msra.mxu0 %v4851
        %5040 = vmatprep.subr.mxu0 0.0
        %5041 = vmatpush1.msra.mxu0 %v4852
        %5042 = vmatprep.subr.mxu0 0.0
        %5043 = vmatpush1.msra.mxu0 %v4853
        %5044 = vmatprep.subr.mxu0 0.0
        %5045 = vmatpush1.msra.mxu0 %v4854
        %5046 = vmatprep.subr.mxu0 0.0
        %5047 = vmatpush1.msra.mxu0 %v4855
        %5048 = vmatprep.subr.mxu0 0.0
        %5049 = vmatpush1.msra.mxu0 0.0
        %5050 = vmatprep.subr.mxu0 0.0
        %5051 = vmatpush1.msra.mxu0 0.0
        %5052 = vmatprep.subr.mxu0 0.0
        %5053 = vmatpush1.msra.mxu0 0.0
        %5054 = vmatprep.subr.mxu0 0.0
        %5055 = vmatpush1.msra.mxu0 0.0
        %5056 = vmatprep.subr.mxu0 0.0
        %5057 = vmatpush1.msra.mxu0 0.0
        %5058 = vmatprep.subr.mxu0 0.0
        %5059 = vmatpush1.msra.mxu0 0.0
        %5060 = vmatprep.subr.mxu0 0.0
        %5061 = vmatpush1.msra.mxu0 0.0
        %5062 = vmatprep.subr.mxu0 0.0
        %5063 = vmatpush1.msra.mxu0 0.0
        %5064 = vmatprep.subr.mxu0 0.0
        %5065 = vmatpush1.msra.mxu0 0.0
        %5066 = vmatprep.subr.mxu0 0.0
        %5067 = vmatpush1.msra.mxu0 0.0
        %5068 = vmatprep.subr.mxu0 0.0
        %5069 = vmatpush1.msra.mxu0 0.0
        %5070 = vmatprep.subr.mxu0 0.0
        %5071 = vmatpush1.msra.mxu0 0.0
        %5072 = vmatprep.subr.mxu0 0.0
        %5073 = vmatpush1.msra.mxu0 0.0
        %5074 = vmatprep.subr.mxu0 0.0
        %5075 = vmatpush1.msra.mxu0 0.0
        %5076 = vmatprep.subr.mxu0 0.0
        %5077 = vmatpush1.msra.mxu0 0.0
        %5078 = vmatprep.subr.mxu0 0.0
        %5079 = vmatpush1.msra.mxu0 0.0
        %5080 = vmatprep.subr.mxu0 0.0
        %5081 = vmatpush1.msra.mxu0 0.0
        %5082 = vmatprep.subr.mxu0 0.0
        %5083 = vmatpush1.msra.mxu0 0.0
        %5084 = vmatprep.subr.mxu0 0.0
        %5085 = vmatpush1.msra.mxu0 0.0
        %5086 = vmatprep.subr.mxu0 0.0
        %5087 = vmatpush1.msra.mxu0 0.0
        %5088 = vmatprep.subr.mxu0 0.0
        %5089 = vmatpush1.msra.mxu0 0.0
        %5090 = vmatprep.subr.mxu0 0.0
        %5091 = vmatpush1.msra.mxu0 0.0
        %5092 = vmatprep.subr.mxu0 0.0
        %5093 = vmatpush1.msra.mxu0 0.0
        %5094 = vmatprep.subr.mxu0 0.0
        %5095 = vmatpush1.msra.mxu0 0.0
        %5096 = vmatprep.mubr.f32.mxu0 0.0
        %5097 = vmatmul.mubr.f32.gmra.mrb[0].mxu0 %v5030
        %v5098 = vpop.f32.mrb[0].mxu0
        %v5099 = vadd.f32 0.0, %v5098
        %v5100 = vpop.f32.mrb[0].mxu0
        %5101 = vdwg.mxu0
        %v5102 = vmul.f32 %v5099, 0.00390625
        %v5104 = vsel %vm4858, %v5028, 0
        %5106 = vmatprep.subr.mxu0 0.0
        %5107 = vmatpush1.msra.mxu0 %v4848
        %5108 = vmatprep.subr.mxu0 0.0
        %5109 = vmatpush1.msra.mxu0 %v4849
        %5110 = vmatprep.subr.mxu0 0.0
        %5111 = vmatpush1.msra.mxu0 %v4850
        %5112 = vmatprep.subr.mxu0 0.0
        %5113 = vmatpush1.msra.mxu0 %v4851
        %5114 = vmatprep.subr.mxu0 0.0
        %5115 = vmatpush1.msra.mxu0 %v4852
        %5116 = vmatprep.subr.mxu0 0.0
        %5117 = vmatpush1.msra.mxu0 %v4853
        %5118 = vmatprep.subr.mxu0 0.0
        %5119 = vmatpush1.msra.mxu0 %v4854
        %5120 = vmatprep.subr.mxu0 0.0
        %5121 = vmatpush1.msra.mxu0 %v4855
        %5122 = vmatprep.subr.mxu0 0.0
        %5123 = vmatpush1.msra.mxu0 0.0
        %5124 = vmatprep.subr.mxu0 0.0
        %5125 = vmatpush1.msra.mxu0 0.0
        %5126 = vmatprep.subr.mxu0 0.0
        %5127 = vmatpush1.msra.mxu0 0.0
        %5128 = vmatprep.subr.mxu0 0.0
        %5129 = vmatpush1.msra.mxu0 0.0
        %5130 = vmatprep.subr.mxu0 0.0
        %5131 = vmatpush1.msra.mxu0 0.0
        %5132 = vmatprep.subr.mxu0 0.0
        %5133 = vmatpush1.msra.mxu0 0.0
        %5134 = vmatprep.subr.mxu0 0.0
        %5135 = vmatpush1.msra.mxu0 0.0
        %5136 = vmatprep.subr.mxu0 0.0
        %5137 = vmatpush1.msra.mxu0 0.0
        %5138 = vmatprep.subr.mxu0 0.0
        %5139 = vmatpush1.msra.mxu0 0.0
        %5140 = vmatprep.subr.mxu0 0.0
        %5141 = vmatpush1.msra.mxu0 0.0
        %5142 = vmatprep.subr.mxu0 0.0
        %5143 = vmatpush1.msra.mxu0 0.0
        %5144 = vmatprep.subr.mxu0 0.0
        %5145 = vmatpush1.msra.mxu0 0.0
        %5146 = vmatprep.subr.mxu0 0.0
        %5147 = vmatpush1.msra.mxu0 0.0
        %5148 = vmatprep.subr.mxu0 0.0
        %5149 = vmatpush1.msra.mxu0 0.0
        %5150 = vmatprep.subr.mxu0 0.0
        %5151 = vmatpush1.msra.mxu0 0.0
        %5152 = vmatprep.subr.mxu0 0.0
        %5153 = vmatpush1.msra.mxu0 0.0
        %5154 = vmatprep.subr.mxu0 0.0
        %5155 = vmatpush1.msra.mxu0 0.0
        %5156 = vmatprep.subr.mxu0 0.0
        %5157 = vmatpush1.msra.mxu0 0.0
        %5158 = vmatprep.subr.mxu0 0.0
        %5159 = vmatpush1.msra.mxu0 0.0
        %5160 = vmatprep.subr.mxu0 0.0
        %5161 = vmatpush1.msra.mxu0 0.0
        %5162 = vmatprep.subr.mxu0 0.0
        %5163 = vmatpush1.msra.mxu0 0.0
        %5164 = vmatprep.subr.mxu0 0.0
        %5165 = vmatpush1.msra.mxu0 0.0
        %5166 = vmatprep.subr.mxu0 0.0
        %5167 = vmatpush1.msra.mxu0 0.0
        %5168 = vmatprep.subr.mxu0 0.0
        %5169 = vmatpush1.msra.mxu0 0.0
        %5170 = vmatprep.mubr.f32.mxu0 0.0
        %5171 = vmatmul.mubr.f32.gmra.mrb[0].mxu0 %v5104
        %v5172 = vpop.f32.mrb[0].mxu0
        %v5173 = vadd.f32 0.0, %v5172
        %v5174 = vpop.f32.mrb[0].mxu0
        %5175 = vdwg.mxu0
        %v5176 = vmul.f32 %v5173, 0.00390625
        %v5177 = vmul.f32 %v5102, %v5102
        %v5178 = vsub.f32 %v5176, %v5177
        %v5179 = vlaneseq
        %v5180 = vshrl.u32 %v5179, 7
        %v5181 = vsub.s32 0, %v5180
        %v5182 = vrot.slane %v5102, %v5181
        %v5183 = vsub.f32 %v4722, %v5182
        %v5184 = vsub.f32 %v4725, %v5182
        %v5185 = vsub.f32 %v4730, %v5182
        %v5186 = vsub.f32 %v4733, %v5182
        %v5187 = vsub.f32 %v4738, %v5182
        %v5188 = vsub.f32 %v4741, %v5182
        %v5189 = vsub.f32 %v4746, %v5182
        %v5190 = vsub.f32 %v4749, %v5182
        %v5191 = vsub.f32 %v4754, %v5182
        %v5192 = vsub.f32 %v4757, %v5182
        %v5193 = vsub.f32 %v4762, %v5182
        %v5194 = vsub.f32 %v4765, %v5182
        %v5195 = vsub.f32 %v4770, %v5182
        %v5196 = vsub.f32 %v4773, %v5182
        %v5197 = vsub.f32 %v4778, %v5182
        %v5198 = vsub.f32 %v4781, %v5182
        %v5199 = vsub.f32 %v4786, %v5182
        %v5200 = vsub.f32 %v4789, %v5182
        %v5201 = vsub.f32 %v4794, %v5182
        %v5202 = vsub.f32 %v4797, %v5182
        %v5203 = vsub.f32 %v4802, %v5182
        %v5204 = vsub.f32 %v4805, %v5182
        %v5205 = vsub.f32 %v4810, %v5182
        %v5206 = vsub.f32 %v4813, %v5182
        %v5207 = vsub.f32 %v4818, %v5182
        %v5208 = vsub.f32 %v4821, %v5182
        %v5209 = vsub.f32 %v4826, %v5182
        %v5210 = vsub.f32 %v4829, %v5182
        %v5211 = vsub.f32 %v4834, %v5182
        %v5212 = vsub.f32 %v4837, %v5182
        %v5213 = vsub.f32 %v4842, %v5182
        %v5214 = vsub.f32 %v4845, %v5182
        %v5215 = vadd.f32 %v5178, 1e-05
        %v5216 = vrsqrt.pop %v5215
        %v5217 = vlaneseq
        %v5218 = vshrl.u32 %v5217, 7
        %v5219 = vsub.s32 0, %v5218
        %v5220 = vrot.slane %v5216, %v5219
        %v5221 = vmul.f32 %v5183, %v5220
        %v5222 = vmul.f32 %v5184, %v5220
        %v5223 = vmul.f32 %v5185, %v5220
        %v5224 = vmul.f32 %v5186, %v5220
        %v5225 = vmul.f32 %v5187, %v5220
        %v5226 = vmul.f32 %v5188, %v5220
        %v5227 = vmul.f32 %v5189, %v5220
        %v5228 = vmul.f32 %v5190, %v5220
        %v5229 = vmul.f32 %v5191, %v5220
        %v5230 = vmul.f32 %v5192, %v5220
        %v5231 = vmul.f32 %v5193, %v5220
        %v5232 = vmul.f32 %v5194, %v5220
        %v5233 = vmul.f32 %v5195, %v5220
        %v5234 = vmul.f32 %v5196, %v5220
        %v5235 = vmul.f32 %v5197, %v5220
        %v5236 = vmul.f32 %v5198, %v5220
        %v5237 = vmul.f32 %v5199, %v5220
        %v5238 = vmul.f32 %v5200, %v5220
        %v5239 = vmul.f32 %v5201, %v5220
        %v5240 = vmul.f32 %v5202, %v5220
        %v5241 = vmul.f32 %v5203, %v5220
        %v5242 = vmul.f32 %v5204, %v5220
        %v5243 = vmul.f32 %v5205, %v5220
        %v5244 = vmul.f32 %v5206, %v5220
        %v5245 = vmul.f32 %v5207, %v5220
        %v5246 = vmul.f32 %v5208, %v5220
        %v5247 = vmul.f32 %v5209, %v5220
        %v5248 = vmul.f32 %v5210, %v5220
        %v5249 = vmul.f32 %v5211, %v5220
        %v5250 = vmul.f32 %v5212, %v5220
        %v5251 = vmul.f32 %v5213, %v5220
        %v5252 = vmul.f32 %v5214, %v5220
        %v5254 = vlaneseq
        %v5255 = vshrl.u32 %v5254, 7
        %v5256 = vsub.s32 0, %v5255
        %v5257 = vrot.slane %v4856, %v5256
        %v5259 = vmul.f32 %v5221, %v5257
        %v5260 = vmul.f32 %v5222, %v5257
        %v5261 = vmul.f32 %v5223, %v5257
        %v5262 = vmul.f32 %v5224, %v5257
        %v5263 = vmul.f32 %v5225, %v5257
        %v5264 = vmul.f32 %v5226, %v5257
        %v5265 = vmul.f32 %v5227, %v5257
        %v5266 = vmul.f32 %v5228, %v5257
        %v5267 = vmul.f32 %v5229, %v5257
        %v5268 = vmul.f32 %v5230, %v5257
        %v5269 = vmul.f32 %v5231, %v5257
        %v5270 = vmul.f32 %v5232, %v5257
        %v5271 = vmul.f32 %v5233, %v5257
        %v5272 = vmul.f32 %v5234, %v5257
        %v5273 = vmul.f32 %v5235, %v5257
        %v5274 = vmul.f32 %v5236, %v5257
        %v5275 = vmul.f32 %v5237, %v5257
        %v5276 = vmul.f32 %v5238, %v5257
        %v5277 = vmul.f32 %v5239, %v5257
        %v5278 = vmul.f32 %v5240, %v5257
        %v5279 = vmul.f32 %v5241, %v5257
        %v5280 = vmul.f32 %v5242, %v5257
        %v5281 = vmul.f32 %v5243, %v5257
        %v5282 = vmul.f32 %v5244, %v5257
        %v5283 = vmul.f32 %v5245, %v5257
        %v5284 = vmul.f32 %v5246, %v5257
        %v5285 = vmul.f32 %v5247, %v5257
        %v5286 = vmul.f32 %v5248, %v5257
        %v5287 = vmul.f32 %v5249, %v5257
        %v5288 = vmul.f32 %v5250, %v5257
        %v5289 = vmul.f32 %v5251, %v5257
        %v5290 = vmul.f32 %v5252, %v5257
        %v5292 = vlaneseq
        %v5293 = vshrl.u32 %v5292, 7
        %v5294 = vsub.s32 0, %v5293
        %v5295 = vrot.slane %v4857, %v5294
        %v5297 = vadd.f32 %v5259, %v5295
        %v5298 = vadd.f32 %v5260, %v5295
        %v5299 = vadd.f32 %v5261, %v5295
        %v5300 = vadd.f32 %v5262, %v5295
        %v5301 = vadd.f32 %v5263, %v5295
        %v5302 = vadd.f32 %v5264, %v5295
        %v5303 = vadd.f32 %v5265, %v5295
        %v5304 = vadd.f32 %v5266, %v5295
        %v5305 = vadd.f32 %v5267, %v5295
        %v5306 = vadd.f32 %v5268, %v5295
        %v5307 = vadd.f32 %v5269, %v5295
        %v5308 = vadd.f32 %v5270, %v5295
        %v5309 = vadd.f32 %v5271, %v5295
        %v5310 = vadd.f32 %v5272, %v5295
        %v5311 = vadd.f32 %v5273, %v5295
        %v5312 = vadd.f32 %v5274, %v5295
        %v5313 = vadd.f32 %v5275, %v5295
        %v5314 = vadd.f32 %v5276, %v5295
        %v5315 = vadd.f32 %v5277, %v5295
        %v5316 = vadd.f32 %v5278, %v5295
        %v5317 = vadd.f32 %v5279, %v5295
        %v5318 = vadd.f32 %v5280, %v5295
        %v5319 = vadd.f32 %v5281, %v5295
        %v5320 = vadd.f32 %v5282, %v5295
        %v5321 = vadd.f32 %v5283, %v5295
        %v5322 = vadd.f32 %v5284, %v5295
        %v5323 = vadd.f32 %v5285, %v5295
        %v5324 = vadd.f32 %v5286, %v5295
        %v5325 = vadd.f32 %v5287, %v5295
        %v5326 = vadd.f32 %v5288, %v5295
        %v5327 = vadd.f32 %v5289, %v5295
        %v5328 = vadd.f32 %v5290, %v5295
        %v5329 = vxor.u32 %v5297, 2147483648
        %v5330 = vxor.u32 %v5298, 2147483648
        %v5331 = vxor.u32 %v5299, 2147483648
        %v5332 = vxor.u32 %v5300, 2147483648
        %v5333 = vxor.u32 %v5301, 2147483648
        %v5334 = vxor.u32 %v5302, 2147483648
        %v5335 = vxor.u32 %v5303, 2147483648
        %v5336 = vxor.u32 %v5304, 2147483648
        %v5337 = vxor.u32 %v5305, 2147483648
        %v5338 = vxor.u32 %v5306, 2147483648
        %v5339 = vxor.u32 %v5307, 2147483648
        %v5340 = vxor.u32 %v5308, 2147483648
        %v5341 = vxor.u32 %v5309, 2147483648
        %v5342 = vxor.u32 %v5310, 2147483648
        %v5343 = vxor.u32 %v5311, 2147483648
        %v5344 = vxor.u32 %v5312, 2147483648
        %v5345 = vxor.u32 %v5313, 2147483648
        %v5346 = vxor.u32 %v5314, 2147483648
        %v5347 = vxor.u32 %v5315, 2147483648
        %v5348 = vxor.u32 %v5316, 2147483648
        %v5349 = vxor.u32 %v5317, 2147483648
        %v5350 = vxor.u32 %v5318, 2147483648
        %v5351 = vxor.u32 %v5319, 2147483648
        %v5352 = vxor.u32 %v5320, 2147483648
        %v5353 = vxor.u32 %v5321, 2147483648
        %v5354 = vxor.u32 %v5322, 2147483648
        %v5355 = vxor.u32 %v5323, 2147483648
        %v5356 = vxor.u32 %v5324, 2147483648
        %v5357 = vxor.u32 %v5325, 2147483648
        %v5358 = vxor.u32 %v5326, 2147483648
        %v5359 = vxor.u32 %v5327, 2147483648
        %v5360 = vxor.u32 %v5328, 2147483648
        %v5361 = vmul.f32 %v5329, 1.442695
        %v5362 = vpow.pop %v5361
        %v5363 = vmul.f32 %v5330, 1.442695
        %v5364 = vpow.pop %v5363
        %v5365 = vmul.f32 %v5331, 1.442695
        %v5366 = vpow.pop %v5365
        %v5367 = vmul.f32 %v5332, 1.442695
        %v5368 = vpow.pop %v5367
        %v5369 = vmul.f32 %v5333, 1.442695
        %v5370 = vpow.pop %v5369
        %v5371 = vmul.f32 %v5334, 1.442695
        %v5372 = vpow.pop %v5371
        %v5373 = vmul.f32 %v5335, 1.442695
        %v5374 = vpow.pop %v5373
        %v5375 = vmul.f32 %v5336, 1.442695
        %v5376 = vpow.pop %v5375
        %v5377 = vmul.f32 %v5337, 1.442695
        %v5378 = vpow.pop %v5377
        %v5379 = vmul.f32 %v5338, 1.442695
        %v5380 = vpow.pop %v5379
        %v5381 = vmul.f32 %v5339, 1.442695
        %v5382 = vpow.pop %v5381
        %v5383 = vmul.f32 %v5340, 1.442695
        %v5384 = vpow.pop %v5383
        %v5385 = vmul.f32 %v5341, 1.442695
        %v5386 = vpow.pop %v5385
        %v5387 = vmul.f32 %v5342, 1.442695
        %v5388 = vpow.pop %v5387
        %v5389 = vmul.f32 %v5343, 1.442695
        %v5390 = vpow.pop %v5389
        %v5391 = vmul.f32 %v5344, 1.442695
        %v5392 = vpow.pop %v5391
        %v5393 = vmul.f32 %v5345, 1.442695
        %v5394 = vpow.pop %v5393
        %v5395 = vmul.f32 %v5346, 1.442695
        %v5396 = vpow.pop %v5395
        %v5397 = vmul.f32 %v5347, 1.442695
        %v5398 = vpow.pop %v5397
        %v5399 = vmul.f32 %v5348, 1.442695
        %v5400 = vpow.pop %v5399
        %v5401 = vmul.f32 %v5349, 1.442695
        %v5402 = vpow.pop %v5401
        %v5403 = vmul.f32 %v5350, 1.442695
        %v5404 = vpow.pop %v5403
        %v5405 = vmul.f32 %v5351, 1.442695
        %v5406 = vpow.pop %v5405
        %v5407 = vmul.f32 %v5352, 1.442695
        %v5408 = vpow.pop %v5407
        %v5409 = vmul.f32 %v5353, 1.442695
        %v5410 = vpow.pop %v5409
        %v5411 = vmul.f32 %v5354, 1.442695
        %v5412 = vpow.pop %v5411
        %v5413 = vmul.f32 %v5355, 1.442695
        %v5414 = vpow.pop %v5413
        %v5415 = vmul.f32 %v5356, 1.442695
        %v5416 = vpow.pop %v5415
        %v5417 = vmul.f32 %v5357, 1.442695
        %v5418 = vpow.pop %v5417
        %v5419 = vmul.f32 %v5358, 1.442695
        %v5420 = vpow.pop %v5419
        %v5421 = vmul.f32 %v5359, 1.442695
        %v5422 = vpow.pop %v5421
        %v5423 = vmul.f32 %v5360, 1.442695
        %v5424 = vpow.pop %v5423
        %v5425 = vadd.f32 %v5362, 1.0
        %v5426 = vadd.f32 %v5364, 1.0
        %v5427 = vadd.f32 %v5366, 1.0
        %v5428 = vadd.f32 %v5368, 1.0
        %v5429 = vadd.f32 %v5370, 1.0
        %v5430 = vadd.f32 %v5372, 1.0
        %v5431 = vadd.f32 %v5374, 1.0
        %v5432 = vadd.f32 %v5376, 1.0
        %v5433 = vadd.f32 %v5378, 1.0
        %v5434 = vadd.f32 %v5380, 1.0
        %v5435 = vadd.f32 %v5382, 1.0
        %v5436 = vadd.f32 %v5384, 1.0
        %v5437 = vadd.f32 %v5386, 1.0
        %v5438 = vadd.f32 %v5388, 1.0
        %v5439 = vadd.f32 %v5390, 1.0
        %v5440 = vadd.f32 %v5392, 1.0
        %v5441 = vadd.f32 %v5394, 1.0
        %v5442 = vadd.f32 %v5396, 1.0
        %v5443 = vadd.f32 %v5398, 1.0
        %v5444 = vadd.f32 %v5400, 1.0
        %v5445 = vadd.f32 %v5402, 1.0
        %v5446 = vadd.f32 %v5404, 1.0
        %v5447 = vadd.f32 %v5406, 1.0
        %v5448 = vadd.f32 %v5408, 1.0
        %v5449 = vadd.f32 %v5410, 1.0
        %v5450 = vadd.f32 %v5412, 1.0
        %v5451 = vadd.f32 %v5414, 1.0
        %v5452 = vadd.f32 %v5416, 1.0
        %v5453 = vadd.f32 %v5418, 1.0
        %v5454 = vadd.f32 %v5420, 1.0
        %v5455 = vadd.f32 %v5422, 1.0
        %v5456 = vadd.f32 %v5424, 1.0
        %v5457 = vrcp.pop %v5425
        %v5458 = vmul.f32 1.0, %v5457
        %v5459 = vrcp.pop %v5426
        %v5460 = vmul.f32 1.0, %v5459
        %v5461 = vrcp.pop %v5427
        %v5462 = vmul.f32 1.0, %v5461
        %v5463 = vrcp.pop %v5428
        %v5464 = vmul.f32 1.0, %v5463
        %v5465 = vrcp.pop %v5429
        %v5466 = vmul.f32 1.0, %v5465
        %v5467 = vrcp.pop %v5430
        %v5468 = vmul.f32 1.0, %v5467
        %v5469 = vrcp.pop %v5431
        %v5470 = vmul.f32 1.0, %v5469
        %v5471 = vrcp.pop %v5432
        %v5472 = vmul.f32 1.0, %v5471
        %v5473 = vrcp.pop %v5433
        %v5474 = vmul.f32 1.0, %v5473
        %v5475 = vrcp.pop %v5434
        %v5476 = vmul.f32 1.0, %v5475
        %v5477 = vrcp.pop %v5435
        %v5478 = vmul.f32 1.0, %v5477
        %v5479 = vrcp.pop %v5436
        %v5480 = vmul.f32 1.0, %v5479
        %v5481 = vrcp.pop %v5437
        %v5482 = vmul.f32 1.0, %v5481
        %v5483 = vrcp.pop %v5438
        %v5484 = vmul.f32 1.0, %v5483
        %v5485 = vrcp.pop %v5439
        %v5486 = vmul.f32 1.0, %v5485
        %v5487 = vrcp.pop %v5440
        %v5488 = vmul.f32 1.0, %v5487
        %v5489 = vrcp.pop %v5441
        %v5490 = vmul.f32 1.0, %v5489
        %v5491 = vrcp.pop %v5442
        %v5492 = vmul.f32 1.0, %v5491
        %v5493 = vrcp.pop %v5443
        %v5494 = vmul.f32 1.0, %v5493
        %v5495 = vrcp.pop %v5444
        %v5496 = vmul.f32 1.0, %v5495
        %v5497 = vrcp.pop %v5445
        %v5498 = vmul.f32 1.0, %v5497
        %v5499 = vrcp.pop %v5446
        %v5500 = vmul.f32 1.0, %v5499
        %v5501 = vrcp.pop %v5447
        %v5502 = vmul.f32 1.0, %v5501
        %v5503 = vrcp.pop %v5448
        %v5504 = vmul.f32 1.0, %v5503
        %v5505 = vrcp.pop %v5449
        %v5506 = vmul.f32 1.0, %v5505
        %v5507 = vrcp.pop %v5450
        %v5508 = vmul.f32 1.0, %v5507
        %v5509 = vrcp.pop %v5451
        %v5510 = vmul.f32 1.0, %v5509
        %v5511 = vrcp.pop %v5452
        %v5512 = vmul.f32 1.0, %v5511
        %v5513 = vrcp.pop %v5453
        %v5514 = vmul.f32 1.0, %v5513
        %v5515 = vrcp.pop %v5454
        %v5516 = vmul.f32 1.0, %v5515
        %v5517 = vrcp.pop %v5455
        %v5518 = vmul.f32 1.0, %v5517
        %v5519 = vrcp.pop %v5456
        %v5520 = vmul.f32 1.0, %v5519
        %v5521 = vmul.f32 %v5297, %v5458
        %v5522 = vmul.f32 %v5298, %v5460
        %v5523 = vmul.f32 %v5299, %v5462
        %v5524 = vmul.f32 %v5300, %v5464
        %v5525 = vmul.f32 %v5301, %v5466
        %v5526 = vmul.f32 %v5302, %v5468
        %v5527 = vmul.f32 %v5303, %v5470
        %v5528 = vmul.f32 %v5304, %v5472
        %v5529 = vmul.f32 %v5305, %v5474
        %v5530 = vmul.f32 %v5306, %v5476
        %v5531 = vmul.f32 %v5307, %v5478
        %v5532 = vmul.f32 %v5308, %v5480
        %v5533 = vmul.f32 %v5309, %v5482
        %v5534 = vmul.f32 %v5310, %v5484
        %v5535 = vmul.f32 %v5311, %v5486
        %v5536 = vmul.f32 %v5312, %v5488
        %v5537 = vmul.f32 %v5313, %v5490
        %v5538 = vmul.f32 %v5314, %v5492
        %v5539 = vmul.f32 %v5315, %v5494
        %v5540 = vmul.f32 %v5316, %v5496
        %v5541 = vmul.f32 %v5317, %v5498
        %v5542 = vmul.f32 %v5318, %v5500
        %v5543 = vmul.f32 %v5319, %v5502
        %v5544 = vmul.f32 %v5320, %v5504
        %v5545 = vmul.f32 %v5321, %v5506
        %v5546 = vmul.f32 %v5322, %v5508
        %v5547 = vmul.f32 %v5323, %v5510
        %v5548 = vmul.f32 %v5324, %v5512
        %v5549 = vmul.f32 %v5325, %v5514
        %v5550 = vmul.f32 %v5326, %v5516
        %v5551 = vmul.f32 %v5327, %v5518
        %v5552 = vmul.f32 %v5328, %v5520
        %v5553 = vld [vmem:[%s11] sm:$0x1]
        %v5554 = vrot.slane %v5521, 7
        %v5555 = vrot.slane %v5522, 7
        %v5556 = vrot.slane %v5523, 7
        %v5557 = vrot.slane %v5524, 7
        %v5558 = vrot.slane %v5525, 7
        %v5559 = vrot.slane %v5526, 7
        %v5560 = vrot.slane %v5527, 7
        %v5561 = vrot.slane %v5528, 7
        %v5562 = vrot.slane %v5529, 7
        %v5563 = vrot.slane %v5530, 7
        %v5564 = vrot.slane %v5531, 7
        %v5565 = vrot.slane %v5532, 7
        %v5566 = vrot.slane %v5533, 7
        %v5567 = vrot.slane %v5534, 7
        %v5568 = vrot.slane %v5535, 7
        %v5569 = vrot.slane %v5536, 7
        %v5570 = vrot.slane %v5537, 7
        %v5571 = vrot.slane %v5538, 7
        %v5572 = vrot.slane %v5539, 7
        %v5573 = vrot.slane %v5540, 7
        %v5574 = vrot.slane %v5541, 7
        %v5575 = vrot.slane %v5542, 7
        %v5576 = vrot.slane %v5543, 7
        %v5577 = vrot.slane %v5544, 7
        %v5578 = vrot.slane %v5545, 7
        %v5579 = vrot.slane %v5546, 7
        %v5580 = vrot.slane %v5547, 7
        %v5581 = vrot.slane %v5548, 7
        %v5582 = vrot.slane %v5549, 7
        %v5583 = vrot.slane %v5550, 7
        %v5584 = vrot.slane %v5551, 7
        %v5585 = vrot.slane %v5552, 7
        %v5586 = vsel %vm1235, %v5584, %v5585
        %v5587 = vsel %vm1235, %v5583, %v5584
        %v5588 = vsel %vm1235, %v5582, %v5583
        %v5589 = vsel %vm1235, %v5581, %v5582
        %v5590 = vsel %vm1235, %v5580, %v5581
        %v5591 = vsel %vm1235, %v5579, %v5580
        %v5592 = vsel %vm1235, %v5578, %v5579
        %v5593 = vsel %vm1235, %v5577, %v5578
        %v5594 = vsel %vm1235, %v5576, %v5577
        %v5595 = vsel %vm1235, %v5575, %v5576
        %v5596 = vsel %vm1235, %v5574, %v5575
        %v5597 = vsel %vm1235, %v5573, %v5574
        %v5598 = vsel %vm1235, %v5572, %v5573
        %v5599 = vsel %vm1235, %v5571, %v5572
        %v5600 = vsel %vm1235, %v5570, %v5571
        %v5601 = vsel %vm1235, %v5569, %v5570
        %v5602 = vsel %vm1235, %v5568, %v5569
        %v5603 = vsel %vm1235, %v5567, %v5568
        %v5604 = vsel %vm1235, %v5566, %v5567
        %v5605 = vsel %vm1235, %v5565, %v5566
        %v5606 = vsel %vm1235, %v5564, %v5565
        %v5607 = vsel %vm1235, %v5563, %v5564
        %v5608 = vsel %vm1235, %v5562, %v5563
        %v5609 = vsel %vm1235, %v5561, %v5562
        %v5610 = vsel %vm1235, %v5560, %v5561
        %v5611 = vsel %vm1235, %v5559, %v5560
        %v5612 = vsel %vm1235, %v5558, %v5559
        %v5613 = vsel %vm1235, %v5557, %v5558
        %v5614 = vsel %vm1235, %v5556, %v5557
        %v5615 = vsel %vm1235, %v5555, %v5556
        %v5616 = vsel %vm1235, %v5554, %v5555
        %v5617 = vsel %vm1235, %v5585, %v5554
        %v5618 = vld [vmem:[%s1] sm:$0xff]
        %v5619 = vld [vmem:[%s1 + $0x8] sm:$0xff]
        %v5620 = vld [vmem:[%s1 + $0x10] sm:$0xff]
        %v5621 = vld [vmem:[%s1 + $0x18] sm:$0xff]
        %v5622 = vld [vmem:[%s1 + $0x20] sm:$0xff]
        %v5623 = vld [vmem:[%s1 + $0x28] sm:$0xff]
        %v5624 = vld [vmem:[%s1 + $0x30] sm:$0xff]
        %v5625 = vld [vmem:[%s1 + $0x38] sm:$0xff]
        %v5626 = vld [vmem:[%s1 + $0x40] sm:$0xff]
        %v5627 = vld [vmem:[%s1 + $0x48] sm:$0xff]
        %v5628 = vld [vmem:[%s1 + $0x50] sm:$0xff]
        %v5629 = vld [vmem:[%s1 + $0x58] sm:$0xff]
        %v5630 = vld [vmem:[%s1 + $0x60] sm:$0xff]
        %v5631 = vld [vmem:[%s1 + $0x68] sm:$0xff]
        %v5632 = vld [vmem:[%s1 + $0x70] sm:$0xff]
        %v5633 = vld [vmem:[%s1 + $0x78] sm:$0xff]
        %v5634 = vld [vmem:[%s1 + $0x80] sm:$0xff]
        %v5635 = vld [vmem:[%s1 + $0x88] sm:$0xff]
        %v5636 = vld [vmem:[%s1 + $0x90] sm:$0xff]
        %v5637 = vld [vmem:[%s1 + $0x98] sm:$0xff]
        %v5638 = vld [vmem:[%s1 + $0xa0] sm:$0xff]
        %v5639 = vld [vmem:[%s1 + $0xa8] sm:$0xff]
        %v5640 = vld [vmem:[%s1 + $0xb0] sm:$0xff]
        %v5641 = vld [vmem:[%s1 + $0xb8] sm:$0xff]
        %v5642 = vld [vmem:[%s1 + $0xc0] sm:$0xff]
        %v5643 = vld [vmem:[%s1 + $0xc8] sm:$0xff]
        %v5644 = vld [vmem:[%s1 + $0xd0] sm:$0xff]
        %v5645 = vld [vmem:[%s1 + $0xd8] sm:$0xff]
        %v5646 = vld [vmem:[%s1 + $0xe0] sm:$0xff]
        %v5647 = vld [vmem:[%s1 + $0xe8] sm:$0xff]
        %v5648 = vld [vmem:[%s1 + $0xf0] sm:$0xff]
        %v5649 = vld [vmem:[%s1 + $0xf8] sm:$0xff]
        %5651 = vset.pattern.permute.xlu0 0
        %5652 = vperm.xlu0 %5651, %v5618
        %v5653 = vpop.permute.xlu0 %5652
        %5656 = vset.pattern.permute.xlu0 0
        %5657 = vperm.xlu0 %5656, %v5619
        %v5658 = vpop.permute.xlu0 %5657
        %5661 = vset.pattern.permute.xlu0 0
        %5662 = vperm.xlu0 %5661, %v5620
        %v5663 = vpop.permute.xlu0 %5662
        %5666 = vset.pattern.permute.xlu0 0
        %5667 = vperm.xlu0 %5666, %v5621
        %v5668 = vpop.permute.xlu0 %5667
        %5671 = vset.pattern.permute.xlu0 0
        %5672 = vperm.xlu0 %5671, %v5622
        %v5673 = vpop.permute.xlu0 %5672
        %5676 = vset.pattern.permute.xlu0 0
        %5677 = vperm.xlu0 %5676, %v5623
        %v5678 = vpop.permute.xlu0 %5677
        %5681 = vset.pattern.permute.xlu0 0
        %5682 = vperm.xlu0 %5681, %v5624
        %v5683 = vpop.permute.xlu0 %5682
        %5686 = vset.pattern.permute.xlu0 0
        %5687 = vperm.xlu0 %5686, %v5625
        %v5688 = vpop.permute.xlu0 %5687
        %5691 = vset.pattern.permute.xlu0 0
        %5692 = vperm.xlu0 %5691, %v5626
        %v5693 = vpop.permute.xlu0 %5692
        %5696 = vset.pattern.permute.xlu0 0
        %5697 = vperm.xlu0 %5696, %v5627
        %v5698 = vpop.permute.xlu0 %5697
        %5701 = vset.pattern.permute.xlu0 0
        %5702 = vperm.xlu0 %5701, %v5628
        %v5703 = vpop.permute.xlu0 %5702
        %5706 = vset.pattern.permute.xlu0 0
        %5707 = vperm.xlu0 %5706, %v5629
        %v5708 = vpop.permute.xlu0 %5707
        %5711 = vset.pattern.permute.xlu0 0
        %5712 = vperm.xlu0 %5711, %v5630
        %v5713 = vpop.permute.xlu0 %5712
        %5716 = vset.pattern.permute.xlu0 0
        %5717 = vperm.xlu0 %5716, %v5631
        %v5718 = vpop.permute.xlu0 %5717
        %5721 = vset.pattern.permute.xlu0 0
        %5722 = vperm.xlu0 %5721, %v5632
        %v5723 = vpop.permute.xlu0 %5722
        %5726 = vset.pattern.permute.xlu0 0
        %5727 = vperm.xlu0 %5726, %v5633
        %v5728 = vpop.permute.xlu0 %5727
        %5731 = vset.pattern.permute.xlu0 0
        %5732 = vperm.xlu0 %5731, %v5634
        %v5733 = vpop.permute.xlu0 %5732
        %5736 = vset.pattern.permute.xlu0 0
        %5737 = vperm.xlu0 %5736, %v5635
        %v5738 = vpop.permute.xlu0 %5737
        %5741 = vset.pattern.permute.xlu0 0
        %5742 = vperm.xlu0 %5741, %v5636
        %v5743 = vpop.permute.xlu0 %5742
        %5746 = vset.pattern.permute.xlu0 0
        %5747 = vperm.xlu0 %5746, %v5637
        %v5748 = vpop.permute.xlu0 %5747
        %5751 = vset.pattern.permute.xlu0 0
        %5752 = vperm.xlu0 %5751, %v5638
        %v5753 = vpop.permute.xlu0 %5752
        %5756 = vset.pattern.permute.xlu0 0
        %5757 = vperm.xlu0 %5756, %v5639
        %v5758 = vpop.permute.xlu0 %5757
        %5761 = vset.pattern.permute.xlu0 0
        %5762 = vperm.xlu0 %5761, %v5640
        %v5763 = vpop.permute.xlu0 %5762
        %5766 = vset.pattern.permute.xlu0 0
        %5767 = vperm.xlu0 %5766, %v5641
        %v5768 = vpop.permute.xlu0 %5767
        %5771 = vset.pattern.permute.xlu0 0
        %5772 = vperm.xlu0 %5771, %v5642
        %v5773 = vpop.permute.xlu0 %5772
        %5776 = vset.pattern.permute.xlu0 0
        %5777 = vperm.xlu0 %5776, %v5643
        %v5778 = vpop.permute.xlu0 %5777
        %5781 = vset.pattern.permute.xlu0 0
        %5782 = vperm.xlu0 %5781, %v5644
        %v5783 = vpop.permute.xlu0 %5782
        %5786 = vset.pattern.permute.xlu0 0
        %5787 = vperm.xlu0 %5786, %v5645
        %v5788 = vpop.permute.xlu0 %5787
        %5791 = vset.pattern.permute.xlu0 0
        %5792 = vperm.xlu0 %5791, %v5646
        %v5793 = vpop.permute.xlu0 %5792
        %5796 = vset.pattern.permute.xlu0 0
        %5797 = vperm.xlu0 %5796, %v5647
        %v5798 = vpop.permute.xlu0 %5797
        %5801 = vset.pattern.permute.xlu0 0
        %5802 = vperm.xlu0 %5801, %v5648
        %v5803 = vpop.permute.xlu0 %5802
        %5806 = vset.pattern.permute.xlu0 0
        %5807 = vperm.xlu0 %5806, %v5649
        %v5808 = vpop.permute.xlu0 %5807
        %v5810 = vmul.f32 %v5587, %v5653
        %v5811 = vmul.f32 %v5586, %v5658
        %v5812 = vmul.f32 %v5617, %v5663
        %v5813 = vmul.f32 %v5616, %v5668
        %v5814 = vmul.f32 %v5615, %v5673
        %v5815 = vmul.f32 %v5614, %v5678
        %v5816 = vmul.f32 %v5613, %v5683
        %v5817 = vmul.f32 %v5612, %v5688
        %v5818 = vmul.f32 %v5611, %v5693
        %v5819 = vmul.f32 %v5610, %v5698
        %v5820 = vmul.f32 %v5609, %v5703
        %v5821 = vmul.f32 %v5608, %v5708
        %v5822 = vmul.f32 %v5607, %v5713
        %v5823 = vmul.f32 %v5606, %v5718
        %v5824 = vmul.f32 %v5605, %v5723
        %v5825 = vmul.f32 %v5604, %v5728
        %v5826 = vmul.f32 %v5603, %v5733
        %v5827 = vmul.f32 %v5602, %v5738
        %v5828 = vmul.f32 %v5601, %v5743
        %v5829 = vmul.f32 %v5600, %v5748
        %v5830 = vmul.f32 %v5599, %v5753
        %v5831 = vmul.f32 %v5598, %v5758
        %v5832 = vmul.f32 %v5597, %v5763
        %v5833 = vmul.f32 %v5596, %v5768
        %v5834 = vmul.f32 %v5595, %v5773
        %v5835 = vmul.f32 %v5594, %v5778
        %v5836 = vmul.f32 %v5593, %v5783
        %v5837 = vmul.f32 %v5592, %v5788
        %v5838 = vmul.f32 %v5591, %v5793
        %v5839 = vmul.f32 %v5590, %v5798
        %v5840 = vmul.f32 %v5589, %v5803
        %v5841 = vmul.f32 %v5588, %v5808
        %5842 = vst.msk [vmem:[#allocation3] sm:$0xff] %vm4858, %v5810
        %5843 = vst.msk [vmem:[#allocation3 + $0x28] sm:$0xff] %vm4858, %v5811
        %5844 = vst.msk [vmem:[#allocation3 + $0x50] sm:$0xff] %vm4858, %v5812
        %5845 = vst.msk [vmem:[#allocation3 + $0x78] sm:$0xff] %vm4858, %v5813
        %5846 = vst.msk [vmem:[#allocation3 + $0xa0] sm:$0xff] %vm4858, %v5814
        %5847 = vst.msk [vmem:[#allocation3 + $0xc8] sm:$0xff] %vm4858, %v5815
        %5848 = vst.msk [vmem:[#allocation3 + $0xf0] sm:$0xff] %vm4858, %v5816
        %5849 = vst.msk [vmem:[#allocation3 + $0x118] sm:$0xff] %vm4858, %v5817
        %5850 = vst.msk [vmem:[#allocation3 + $0x140] sm:$0xff] %vm4858, %v5818
        %5851 = vst.msk [vmem:[#allocation3 + $0x168] sm:$0xff] %vm4858, %v5819
        %5852 = vst.msk [vmem:[#allocation3 + $0x190] sm:$0xff] %vm4858, %v5820
        %5853 = vst.msk [vmem:[#allocation3 + $0x1b8] sm:$0xff] %vm4858, %v5821
        %5854 = vst.msk [vmem:[#allocation3 + $0x1e0] sm:$0xff] %vm4858, %v5822
        %5855 = vst.msk [vmem:[#allocation3 + $0x208] sm:$0xff] %vm4858, %v5823
        %5856 = vst.msk [vmem:[#allocation3 + $0x230] sm:$0xff] %vm4858, %v5824
        %5857 = vst.msk [vmem:[#allocation3 + $0x258] sm:$0xff] %vm4858, %v5825
        %5858 = vst.msk [vmem:[#allocation3 + $0x280] sm:$0xff] %vm4858, %v5826
        %5859 = vst.msk [vmem:[#allocation3 + $0x2a8] sm:$0xff] %vm4858, %v5827
        %5860 = vst.msk [vmem:[#allocation3 + $0x2d0] sm:$0xff] %vm4858, %v5828
        %5861 = vst.msk [vmem:[#allocation3 + $0x2f8] sm:$0xff] %vm4858, %v5829
        %5862 = vst.msk [vmem:[#allocation3 + $0x320] sm:$0xff] %vm4858, %v5830
        %5863 = vst.msk [vmem:[#allocation3 + $0x348] sm:$0xff] %vm4858, %v5831
        %5864 = vst.msk [vmem:[#allocation3 + $0x370] sm:$0xff] %vm4858, %v5832
        %5865 = vst.msk [vmem:[#allocation3 + $0x398] sm:$0xff] %vm4858, %v5833
        %5866 = vst.msk [vmem:[#allocation3 + $0x3c0] sm:$0xff] %vm4858, %v5834
        %5867 = vst.msk [vmem:[#allocation3 + $0x3e8] sm:$0xff] %vm4858, %v5835
        %5868 = vst.msk [vmem:[#allocation3 + $0x410] sm:$0xff] %vm4858, %v5836
        %5869 = vst.msk [vmem:[#allocation3 + $0x438] sm:$0xff] %vm4858, %v5837
        %5870 = vst.msk [vmem:[#allocation3 + $0x460] sm:$0xff] %vm4858, %v5838
        %5871 = vst.msk [vmem:[#allocation3 + $0x488] sm:$0xff] %vm4858, %v5839
        %5872 = vst.msk [vmem:[#allocation3 + $0x4b0] sm:$0xff] %vm4858, %v5840
        %5873 = vst.msk [vmem:[#allocation3 + $0x4d8] sm:$0xff] %vm4858, %v5841
        %v5874 = vld [vmem:[%s1] sm:$0xff]
        %v5875 = vld [vmem:[%s1 + $0x8] sm:$0xff]
        %v5876 = vld [vmem:[%s1 + $0x10] sm:$0xff]
        %v5877 = vld [vmem:[%s1 + $0x18] sm:$0xff]
        %v5878 = vld [vmem:[%s1 + $0x20] sm:$0xff]
        %v5879 = vld [vmem:[%s1 + $0x28] sm:$0xff]
        %v5880 = vld [vmem:[%s1 + $0x30] sm:$0xff]
        %v5881 = vld [vmem:[%s1 + $0x38] sm:$0xff]
        %v5882 = vld [vmem:[%s1 + $0x40] sm:$0xff]
        %v5883 = vld [vmem:[%s1 + $0x48] sm:$0xff]
        %v5884 = vld [vmem:[%s1 + $0x50] sm:$0xff]
        %v5885 = vld [vmem:[%s1 + $0x58] sm:$0xff]
        %v5886 = vld [vmem:[%s1 + $0x60] sm:$0xff]
        %v5887 = vld [vmem:[%s1 + $0x68] sm:$0xff]
        %v5888 = vld [vmem:[%s1 + $0x70] sm:$0xff]
        %v5889 = vld [vmem:[%s1 + $0x78] sm:$0xff]
        %v5890 = vld [vmem:[%s1 + $0x80] sm:$0xff]
        %v5891 = vld [vmem:[%s1 + $0x88] sm:$0xff]
        %v5892 = vld [vmem:[%s1 + $0x90] sm:$0xff]
        %v5893 = vld [vmem:[%s1 + $0x98] sm:$0xff]
        %v5894 = vld [vmem:[%s1 + $0xa0] sm:$0xff]
        %v5895 = vld [vmem:[%s1 + $0xa8] sm:$0xff]
        %v5896 = vld [vmem:[%s1 + $0xb0] sm:$0xff]
        %v5897 = vld [vmem:[%s1 + $0xb8] sm:$0xff]
        %v5898 = vld [vmem:[%s1 + $0xc0] sm:$0xff]
        %v5899 = vld [vmem:[%s1 + $0xc8] sm:$0xff]
        %v5900 = vld [vmem:[%s1 + $0xd0] sm:$0xff]
        %v5901 = vld [vmem:[%s1 + $0xd8] sm:$0xff]
        %v5902 = vld [vmem:[%s1 + $0xe0] sm:$0xff]
        %v5903 = vld [vmem:[%s1 + $0xe8] sm:$0xff]
        %v5904 = vld [vmem:[%s1 + $0xf0] sm:$0xff]
        %v5905 = vld [vmem:[%s1 + $0xf8] sm:$0xff]
        %5907 = vset.pattern.permute.xlu0 1
        %5908 = vperm.xlu0 %5907, %v5874
        %v5909 = vpop.permute.xlu0 %5908
        %5912 = vset.pattern.permute.xlu0 1
        %5913 = vperm.xlu0 %5912, %v5875
        %v5914 = vpop.permute.xlu0 %5913
        %5917 = vset.pattern.permute.xlu0 1
        %5918 = vperm.xlu0 %5917, %v5876
        %v5919 = vpop.permute.xlu0 %5918
        %5922 = vset.pattern.permute.xlu0 1
        %5923 = vperm.xlu0 %5922, %v5877
        %v5924 = vpop.permute.xlu0 %5923
        %5927 = vset.pattern.permute.xlu0 1
        %5928 = vperm.xlu0 %5927, %v5878
        %v5929 = vpop.permute.xlu0 %5928
        %5932 = vset.pattern.permute.xlu0 1
        %5933 = vperm.xlu0 %5932, %v5879
        %v5934 = vpop.permute.xlu0 %5933
        %5937 = vset.pattern.permute.xlu0 1
        %5938 = vperm.xlu0 %5937, %v5880
        %v5939 = vpop.permute.xlu0 %5938
        %5942 = vset.pattern.permute.xlu0 1
        %5943 = vperm.xlu0 %5942, %v5881
        %v5944 = vpop.permute.xlu0 %5943
        %5947 = vset.pattern.permute.xlu0 1
        %5948 = vperm.xlu0 %5947, %v5882
        %v5949 = vpop.permute.xlu0 %5948
        %5952 = vset.pattern.permute.xlu0 1
        %5953 = vperm.xlu0 %5952, %v5883
        %v5954 = vpop.permute.xlu0 %5953
        %5957 = vset.pattern.permute.xlu0 1
        %5958 = vperm.xlu0 %5957, %v5884
        %v5959 = vpop.permute.xlu0 %5958
        %5962 = vset.pattern.permute.xlu0 1
        %5963 = vperm.xlu0 %5962, %v5885
        %v5964 = vpop.permute.xlu0 %5963
        %5967 = vset.pattern.permute.xlu0 1
        %5968 = vperm.xlu0 %5967, %v5886
        %v5969 = vpop.permute.xlu0 %5968
        %5972 = vset.pattern.permute.xlu0 1
        %5973 = vperm.xlu0 %5972, %v5887
        %v5974 = vpop.permute.xlu0 %5973
        %5977 = vset.pattern.permute.xlu0 1
        %5978 = vperm.xlu0 %5977, %v5888
        %v5979 = vpop.permute.xlu0 %5978
        %5982 = vset.pattern.permute.xlu0 1
        %5983 = vperm.xlu0 %5982, %v5889
        %v5984 = vpop.permute.xlu0 %5983
        %5987 = vset.pattern.permute.xlu0 1
        %5988 = vperm.xlu0 %5987, %v5890
        %v5989 = vpop.permute.xlu0 %5988
        %5992 = vset.pattern.permute.xlu0 1
        %5993 = vperm.xlu0 %5992, %v5891
        %v5994 = vpop.permute.xlu0 %5993
        %5997 = vset.pattern.permute.xlu0 1
        %5998 = vperm.xlu0 %5997, %v5892
        %v5999 = vpop.permute.xlu0 %5998
        %6002 = vset.pattern.permute.xlu0 1
        %6003 = vperm.xlu0 %6002, %v5893
        %v6004 = vpop.permute.xlu0 %6003
        %6007 = vset.pattern.permute.xlu0 1
        %6008 = vperm.xlu0 %6007, %v5894
        %v6009 = vpop.permute.xlu0 %6008
        %6012 = vset.pattern.permute.xlu0 1
        %6013 = vperm.xlu0 %6012, %v5895
        %v6014 = vpop.permute.xlu0 %6013
        %6017 = vset.pattern.permute.xlu0 1
        %6018 = vperm.xlu0 %6017, %v5896
        %v6019 = vpop.permute.xlu0 %6018
        %6022 = vset.pattern.permute.xlu0 1
        %6023 = vperm.xlu0 %6022, %v5897
        %v6024 = vpop.permute.xlu0 %6023
        %6027 = vset.pattern.permute.xlu0 1
        %6028 = vperm.xlu0 %6027, %v5898
        %v6029 = vpop.permute.xlu0 %6028
        %6032 = vset.pattern.permute.xlu0 1
        %6033 = vperm.xlu0 %6032, %v5899
        %v6034 = vpop.permute.xlu0 %6033
        %6037 = vset.pattern.permute.xlu0 1
        %6038 = vperm.xlu0 %6037, %v5900
        %v6039 = vpop.permute.xlu0 %6038
        %6042 = vset.pattern.permute.xlu0 1
        %6043 = vperm.xlu0 %6042, %v5901
        %v6044 = vpop.permute.xlu0 %6043
        %6047 = vset.pattern.permute.xlu0 1
        %6048 = vperm.xlu0 %6047, %v5902
        %v6049 = vpop.permute.xlu0 %6048
        %6052 = vset.pattern.permute.xlu0 1
        %6053 = vperm.xlu0 %6052, %v5903
        %v6054 = vpop.permute.xlu0 %6053
        %6057 = vset.pattern.permute.xlu0 1
        %6058 = vperm.xlu0 %6057, %v5904
        %v6059 = vpop.permute.xlu0 %6058
        %6062 = vset.pattern.permute.xlu0 1
        %6063 = vperm.xlu0 %6062, %v5905
        %v6064 = vpop.permute.xlu0 %6063
        %v6066 = vmul.f32 %v5551, %v5909
        %v6067 = vmul.f32 %v5552, %v5914
        %v6068 = vmul.f32 %v5521, %v5919
        %v6069 = vmul.f32 %v5522, %v5924
        %v6070 = vmul.f32 %v5523, %v5929
        %v6071 = vmul.f32 %v5524, %v5934
        %v6072 = vmul.f32 %v5525, %v5939
        %v6073 = vmul.f32 %v5526, %v5944
        %v6074 = vmul.f32 %v5527, %v5949
        %v6075 = vmul.f32 %v5528, %v5954
        %v6076 = vmul.f32 %v5529, %v5959
        %v6077 = vmul.f32 %v5530, %v5964
        %v6078 = vmul.f32 %v5531, %v5969
        %v6079 = vmul.f32 %v5532, %v5974
        %v6080 = vmul.f32 %v5533, %v5979
        %v6081 = vmul.f32 %v5534, %v5984
        %v6082 = vmul.f32 %v5535, %v5989
        %v6083 = vmul.f32 %v5536, %v5994
        %v6084 = vmul.f32 %v5537, %v5999
        %v6085 = vmul.f32 %v5538, %v6004
        %v6086 = vmul.f32 %v5539, %v6009
        %v6087 = vmul.f32 %v5540, %v6014
        %v6088 = vmul.f32 %v5541, %v6019
        %v6089 = vmul.f32 %v5542, %v6024
        %v6090 = vmul.f32 %v5543, %v6029
        %v6091 = vmul.f32 %v5544, %v6034
        %v6092 = vmul.f32 %v5545, %v6039
        %v6093 = vmul.f32 %v5546, %v6044
        %v6094 = vmul.f32 %v5547, %v6049
        %v6095 = vmul.f32 %v5548, %v6054
        %v6096 = vmul.f32 %v5549, %v6059
        %v6097 = vmul.f32 %v5550, %v6064
        %6130 = vrot.lane.b32.xlu0 %v6066, 64
        %v6131 = vpop.permute.xlu0 %6130
        %6132 = vrot.lane.b32.xlu0 %v6067, 64
        %v6133 = vpop.permute.xlu0 %6132
        %6134 = vrot.lane.b32.xlu0 %v6068, 64
        %v6135 = vpop.permute.xlu0 %6134
        %6136 = vrot.lane.b32.xlu0 %v6069, 64
        %v6137 = vpop.permute.xlu0 %6136
        %6138 = vrot.lane.b32.xlu0 %v6070, 64
        %v6139 = vpop.permute.xlu0 %6138
        %6140 = vrot.lane.b32.xlu0 %v6071, 64
        %v6141 = vpop.permute.xlu0 %6140
        %6142 = vrot.lane.b32.xlu0 %v6072, 64
        %v6143 = vpop.permute.xlu0 %6142
        %6144 = vrot.lane.b32.xlu0 %v6073, 64
        %v6145 = vpop.permute.xlu0 %6144
        %6146 = vrot.lane.b32.xlu0 %v6074, 64
        %v6147 = vpop.permute.xlu0 %6146
        %6148 = vrot.lane.b32.xlu0 %v6075, 64
        %v6149 = vpop.permute.xlu0 %6148
        %6150 = vrot.lane.b32.xlu0 %v6076, 64
        %v6151 = vpop.permute.xlu0 %6150
        %6152 = vrot.lane.b32.xlu0 %v6077, 64
        %v6153 = vpop.permute.xlu0 %6152
        %6154 = vrot.lane.b32.xlu0 %v6078, 64
        %v6155 = vpop.permute.xlu0 %6154
        %6156 = vrot.lane.b32.xlu0 %v6079, 64
        %v6157 = vpop.permute.xlu0 %6156
        %6158 = vrot.lane.b32.xlu0 %v6080, 64
        %v6159 = vpop.permute.xlu0 %6158
        %6160 = vrot.lane.b32.xlu0 %v6081, 64
        %v6161 = vpop.permute.xlu0 %6160
        %6162 = vrot.lane.b32.xlu0 %v6082, 64
        %v6163 = vpop.permute.xlu0 %6162
        %6164 = vrot.lane.b32.xlu0 %v6083, 64
        %v6165 = vpop.permute.xlu0 %6164
        %6166 = vrot.lane.b32.xlu0 %v6084, 64
        %v6167 = vpop.permute.xlu0 %6166
        %6168 = vrot.lane.b32.xlu0 %v6085, 64
        %v6169 = vpop.permute.xlu0 %6168
        %6170 = vrot.lane.b32.xlu0 %v6086, 64
        %v6171 = vpop.permute.xlu0 %6170
        %6172 = vrot.lane.b32.xlu0 %v6087, 64
        %v6173 = vpop.permute.xlu0 %6172
        %6174 = vrot.lane.b32.xlu0 %v6088, 64
        %v6175 = vpop.permute.xlu0 %6174
        %6176 = vrot.lane.b32.xlu0 %v6089, 64
        %v6177 = vpop.permute.xlu0 %6176
        %6178 = vrot.lane.b32.xlu0 %v6090, 64
        %v6179 = vpop.permute.xlu0 %6178
        %6180 = vrot.lane.b32.xlu0 %v6091, 64
        %v6181 = vpop.permute.xlu0 %6180
        %6182 = vrot.lane.b32.xlu0 %v6092, 64
        %v6183 = vpop.permute.xlu0 %6182
        %6184 = vrot.lane.b32.xlu0 %v6093, 64
        %v6185 = vpop.permute.xlu0 %6184
        %6186 = vrot.lane.b32.xlu0 %v6094, 64
        %v6187 = vpop.permute.xlu0 %6186
        %6188 = vrot.lane.b32.xlu0 %v6095, 64
        %v6189 = vpop.permute.xlu0 %6188
        %6190 = vrot.lane.b32.xlu0 %v6096, 64
        %v6191 = vpop.permute.xlu0 %6190
        %6192 = vrot.lane.b32.xlu0 %v6097, 64
        %v6193 = vpop.permute.xlu0 %6192
        %vm6226 = vcmask 1048064
        %6227 = vst.msk [vmem:[#allocation3] sm:$0xff] %vm6226, %v6131
        %6228 = vst.msk [vmem:[#allocation3 + $0x28] sm:$0xff] %vm6226, %v6133
        %6229 = vst.msk [vmem:[#allocation3 + $0x50] sm:$0xff] %vm6226, %v6135
        %6230 = vst.msk [vmem:[#allocation3 + $0x78] sm:$0xff] %vm6226, %v6137
        %6231 = vst.msk [vmem:[#allocation3 + $0xa0] sm:$0xff] %vm6226, %v6139
        %6232 = vst.msk [vmem:[#allocation3 + $0xc8] sm:$0xff] %vm6226, %v6141
        %6233 = vst.msk [vmem:[#allocation3 + $0xf0] sm:$0xff] %vm6226, %v6143
        %6234 = vst.msk [vmem:[#allocation3 + $0x118] sm:$0xff] %vm6226, %v6145
        %6235 = vst.msk [vmem:[#allocation3 + $0x140] sm:$0xff] %vm6226, %v6147
        %6236 = vst.msk [vmem:[#allocation3 + $0x168] sm:$0xff] %vm6226, %v6149
        %6237 = vst.msk [vmem:[#allocation3 + $0x190] sm:$0xff] %vm6226, %v6151
        %6238 = vst.msk [vmem:[#allocation3 + $0x1b8] sm:$0xff] %vm6226, %v6153
        %6239 = vst.msk [vmem:[#allocation3 + $0x1e0] sm:$0xff] %vm6226, %v6155
        %6240 = vst.msk [vmem:[#allocation3 + $0x208] sm:$0xff] %vm6226, %v6157
        %6241 = vst.msk [vmem:[#allocation3 + $0x230] sm:$0xff] %vm6226, %v6159
        %6242 = vst.msk [vmem:[#allocation3 + $0x258] sm:$0xff] %vm6226, %v6161
        %6243 = vst.msk [vmem:[#allocation3 + $0x280] sm:$0xff] %vm6226, %v6163
        %6244 = vst.msk [vmem:[#allocation3 + $0x2a8] sm:$0xff] %vm6226, %v6165
        %6245 = vst.msk [vmem:[#allocation3 + $0x2d0] sm:$0xff] %vm6226, %v6167
        %6246 = vst.msk [vmem:[#allocation3 + $0x2f8] sm:$0xff] %vm6226, %v6169
        %6247 = vst.msk [vmem:[#allocation3 + $0x320] sm:$0xff] %vm6226, %v6171
        %6248 = vst.msk [vmem:[#allocation3 + $0x348] sm:$0xff] %vm6226, %v6173
        %6249 = vst.msk [vmem:[#allocation3 + $0x370] sm:$0xff] %vm6226, %v6175
        %6250 = vst.msk [vmem:[#allocation3 + $0x398] sm:$0xff] %vm6226, %v6177
        %6251 = vst.msk [vmem:[#allocation3 + $0x3c0] sm:$0xff] %vm6226, %v6179
        %6252 = vst.msk [vmem:[#allocation3 + $0x3e8] sm:$0xff] %vm6226, %v6181
        %6253 = vst.msk [vmem:[#allocation3 + $0x410] sm:$0xff] %vm6226, %v6183
        %6254 = vst.msk [vmem:[#allocation3 + $0x438] sm:$0xff] %vm6226, %v6185
        %6255 = vst.msk [vmem:[#allocation3 + $0x460] sm:$0xff] %vm6226, %v6187
        %6256 = vst.msk [vmem:[#allocation3 + $0x488] sm:$0xff] %vm6226, %v6189
        %6257 = vst.msk [vmem:[#allocation3 + $0x4b0] sm:$0xff] %vm6226, %v6191
        %6258 = vst.msk [vmem:[#allocation3 + $0x4d8] sm:$0xff] %vm6226, %v6193
        %v6259 = vrot.slane %v5521, 1
        %v6260 = vrot.slane %v5522, 1
        %v6261 = vrot.slane %v5523, 1
        %v6262 = vrot.slane %v5524, 1
        %v6263 = vrot.slane %v5525, 1
        %v6264 = vrot.slane %v5526, 1
        %v6265 = vrot.slane %v5527, 1
        %v6266 = vrot.slane %v5528, 1
        %v6267 = vrot.slane %v5529, 1
        %v6268 = vrot.slane %v5530, 1
        %v6269 = vrot.slane %v5531, 1
        %v6270 = vrot.slane %v5532, 1
        %v6271 = vrot.slane %v5533, 1
        %v6272 = vrot.slane %v5534, 1
        %v6273 = vrot.slane %v5535, 1
        %v6274 = vrot.slane %v5536, 1
        %v6275 = vrot.slane %v5537, 1
        %v6276 = vrot.slane %v5538, 1
        %v6277 = vrot.slane %v5539, 1
        %v6278 = vrot.slane %v5540, 1
        %v6279 = vrot.slane %v5541, 1
        %v6280 = vrot.slane %v5542, 1
        %v6281 = vrot.slane %v5543, 1
        %v6282 = vrot.slane %v5544, 1
        %v6283 = vrot.slane %v5545, 1
        %v6284 = vrot.slane %v5546, 1
        %v6285 = vrot.slane %v5547, 1
        %v6286 = vrot.slane %v5548, 1
        %v6287 = vrot.slane %v5549, 1
        %v6288 = vrot.slane %v5550, 1
        %v6289 = vrot.slane %v5551, 1
        %v6290 = vrot.slane %v5552, 1
        %v6291 = vsel %vm1941, %v6289, %v6290
        %v6292 = vsel %vm1941, %v6288, %v6289
        %v6293 = vsel %vm1941, %v6287, %v6288
        %v6294 = vsel %vm1941, %v6286, %v6287
        %v6295 = vsel %vm1941, %v6285, %v6286
        %v6296 = vsel %vm1941, %v6284, %v6285
        %v6297 = vsel %vm1941, %v6283, %v6284
        %v6298 = vsel %vm1941, %v6282, %v6283
        %v6299 = vsel %vm1941, %v6281, %v6282
        %v6300 = vsel %vm1941, %v6280, %v6281
        %v6301 = vsel %vm1941, %v6279, %v6280
        %v6302 = vsel %vm1941, %v6278, %v6279
        %v6303 = vsel %vm1941, %v6277, %v6278
        %v6304 = vsel %vm1941, %v6276, %v6277
        %v6305 = vsel %vm1941, %v6275, %v6276
        %v6306 = vsel %vm1941, %v6274, %v6275
        %v6307 = vsel %vm1941, %v6273, %v6274
        %v6308 = vsel %vm1941, %v6272, %v6273
        %v6309 = vsel %vm1941, %v6271, %v6272
        %v6310 = vsel %vm1941, %v6270, %v6271
        %v6311 = vsel %vm1941, %v6269, %v6270
        %v6312 = vsel %vm1941, %v6268, %v6269
        %v6313 = vsel %vm1941, %v6267, %v6268
        %v6314 = vsel %vm1941, %v6266, %v6267
        %v6315 = vsel %vm1941, %v6265, %v6266
        %v6316 = vsel %vm1941, %v6264, %v6265
        %v6317 = vsel %vm1941, %v6263, %v6264
        %v6318 = vsel %vm1941, %v6262, %v6263
        %v6319 = vsel %vm1941, %v6261, %v6262
        %v6320 = vsel %vm1941, %v6260, %v6261
        %v6321 = vsel %vm1941, %v6259, %v6260
        %v6322 = vsel %vm1941, %v6290, %v6259
        %v6323 = vld [vmem:[%s1] sm:$0xff]
        %v6324 = vld [vmem:[%s1 + $0x8] sm:$0xff]
        %v6325 = vld [vmem:[%s1 + $0x10] sm:$0xff]
        %v6326 = vld [vmem:[%s1 + $0x18] sm:$0xff]
        %v6327 = vld [vmem:[%s1 + $0x20] sm:$0xff]
        %v6328 = vld [vmem:[%s1 + $0x28] sm:$0xff]
        %v6329 = vld [vmem:[%s1 + $0x30] sm:$0xff]
        %v6330 = vld [vmem:[%s1 + $0x38] sm:$0xff]
        %v6331 = vld [vmem:[%s1 + $0x40] sm:$0xff]
        %v6332 = vld [vmem:[%s1 + $0x48] sm:$0xff]
        %v6333 = vld [vmem:[%s1 + $0x50] sm:$0xff]
        %v6334 = vld [vmem:[%s1 + $0x58] sm:$0xff]
        %v6335 = vld [vmem:[%s1 + $0x60] sm:$0xff]
        %v6336 = vld [vmem:[%s1 + $0x68] sm:$0xff]
        %v6337 = vld [vmem:[%s1 + $0x70] sm:$0xff]
        %v6338 = vld [vmem:[%s1 + $0x78] sm:$0xff]
        %v6339 = vld [vmem:[%s1 + $0x80] sm:$0xff]
        %v6340 = vld [vmem:[%s1 + $0x88] sm:$0xff]
        %v6341 = vld [vmem:[%s1 + $0x90] sm:$0xff]
        %v6342 = vld [vmem:[%s1 + $0x98] sm:$0xff]
        %v6343 = vld [vmem:[%s1 + $0xa0] sm:$0xff]
        %v6344 = vld [vmem:[%s1 + $0xa8] sm:$0xff]
        %v6345 = vld [vmem:[%s1 + $0xb0] sm:$0xff]
        %v6346 = vld [vmem:[%s1 + $0xb8] sm:$0xff]
        %v6347 = vld [vmem:[%s1 + $0xc0] sm:$0xff]
        %v6348 = vld [vmem:[%s1 + $0xc8] sm:$0xff]
        %v6349 = vld [vmem:[%s1 + $0xd0] sm:$0xff]
        %v6350 = vld [vmem:[%s1 + $0xd8] sm:$0xff]
        %v6351 = vld [vmem:[%s1 + $0xe0] sm:$0xff]
        %v6352 = vld [vmem:[%s1 + $0xe8] sm:$0xff]
        %v6353 = vld [vmem:[%s1 + $0xf0] sm:$0xff]
        %v6354 = vld [vmem:[%s1 + $0xf8] sm:$0xff]
        %6356 = vset.pattern.permute.xlu0 2
        %6357 = vperm.xlu0 %6356, %v6323
        %v6358 = vpop.permute.xlu0 %6357
        %6361 = vset.pattern.permute.xlu0 2
        %6362 = vperm.xlu0 %6361, %v6324
        %v6363 = vpop.permute.xlu0 %6362
        %6366 = vset.pattern.permute.xlu0 2
        %6367 = vperm.xlu0 %6366, %v6325
        %v6368 = vpop.permute.xlu0 %6367
        %6371 = vset.pattern.permute.xlu0 2
        %6372 = vperm.xlu0 %6371, %v6326
        %v6373 = vpop.permute.xlu0 %6372
        %6376 = vset.pattern.permute.xlu0 2
        %6377 = vperm.xlu0 %6376, %v6327
        %v6378 = vpop.permute.xlu0 %6377
        %6381 = vset.pattern.permute.xlu0 2
        %6382 = vperm.xlu0 %6381, %v6328
        %v6383 = vpop.permute.xlu0 %6382
        %6386 = vset.pattern.permute.xlu0 2
        %6387 = vperm.xlu0 %6386, %v6329
        %v6388 = vpop.permute.xlu0 %6387
        %6391 = vset.pattern.permute.xlu0 2
        %6392 = vperm.xlu0 %6391, %v6330
        %v6393 = vpop.permute.xlu0 %6392
        %6396 = vset.pattern.permute.xlu0 2
        %6397 = vperm.xlu0 %6396, %v6331
        %v6398 = vpop.permute.xlu0 %6397
        %6401 = vset.pattern.permute.xlu0 2
        %6402 = vperm.xlu0 %6401, %v6332
        %v6403 = vpop.permute.xlu0 %6402
        %6406 = vset.pattern.permute.xlu0 2
        %6407 = vperm.xlu0 %6406, %v6333
        %v6408 = vpop.permute.xlu0 %6407
        %6411 = vset.pattern.permute.xlu0 2
        %6412 = vperm.xlu0 %6411, %v6334
        %v6413 = vpop.permute.xlu0 %6412
        %6416 = vset.pattern.permute.xlu0 2
        %6417 = vperm.xlu0 %6416, %v6335
        %v6418 = vpop.permute.xlu0 %6417
        %6421 = vset.pattern.permute.xlu0 2
        %6422 = vperm.xlu0 %6421, %v6336
        %v6423 = vpop.permute.xlu0 %6422
        %6426 = vset.pattern.permute.xlu0 2
        %6427 = vperm.xlu0 %6426, %v6337
        %v6428 = vpop.permute.xlu0 %6427
        %6431 = vset.pattern.permute.xlu0 2
        %6432 = vperm.xlu0 %6431, %v6338
        %v6433 = vpop.permute.xlu0 %6432
        %6436 = vset.pattern.permute.xlu0 2
        %6437 = vperm.xlu0 %6436, %v6339
        %v6438 = vpop.permute.xlu0 %6437
        %6441 = vset.pattern.permute.xlu0 2
        %6442 = vperm.xlu0 %6441, %v6340
        %v6443 = vpop.permute.xlu0 %6442
        %6446 = vset.pattern.permute.xlu0 2
        %6447 = vperm.xlu0 %6446, %v6341
        %v6448 = vpop.permute.xlu0 %6447
        %6451 = vset.pattern.permute.xlu0 2
        %6452 = vperm.xlu0 %6451, %v6342
        %v6453 = vpop.permute.xlu0 %6452
        %6456 = vset.pattern.permute.xlu0 2
        %6457 = vperm.xlu0 %6456, %v6343
        %v6458 = vpop.permute.xlu0 %6457
        %6461 = vset.pattern.permute.xlu0 2
        %6462 = vperm.xlu0 %6461, %v6344
        %v6463 = vpop.permute.xlu0 %6462
        %6466 = vset.pattern.permute.xlu0 2
        %6467 = vperm.xlu0 %6466, %v6345
        %v6468 = vpop.permute.xlu0 %6467
        %6471 = vset.pattern.permute.xlu0 2
        %6472 = vperm.xlu0 %6471, %v6346
        %v6473 = vpop.permute.xlu0 %6472
        %6476 = vset.pattern.permute.xlu0 2
        %6477 = vperm.xlu0 %6476, %v6347
        %v6478 = vpop.permute.xlu0 %6477
        %6481 = vset.pattern.permute.xlu0 2
        %6482 = vperm.xlu0 %6481, %v6348
        %v6483 = vpop.permute.xlu0 %6482
        %6486 = vset.pattern.permute.xlu0 2
        %6487 = vperm.xlu0 %6486, %v6349
        %v6488 = vpop.permute.xlu0 %6487
        %6491 = vset.pattern.permute.xlu0 2
        %6492 = vperm.xlu0 %6491, %v6350
        %v6493 = vpop.permute.xlu0 %6492
        %6496 = vset.pattern.permute.xlu0 2
        %6497 = vperm.xlu0 %6496, %v6351
        %v6498 = vpop.permute.xlu0 %6497
        %6501 = vset.pattern.permute.xlu0 2
        %6502 = vperm.xlu0 %6501, %v6352
        %v6503 = vpop.permute.xlu0 %6502
        %6506 = vset.pattern.permute.xlu0 2
        %6507 = vperm.xlu0 %6506, %v6353
        %v6508 = vpop.permute.xlu0 %6507
        %6511 = vset.pattern.permute.xlu0 2
        %6512 = vperm.xlu0 %6511, %v6354
        %v6513 = vpop.permute.xlu0 %6512
        %v6515 = vmul.f32 %v6291, %v6358
        %v6516 = vmul.f32 %v6322, %v6363
        %v6517 = vmul.f32 %v6321, %v6368
        %v6518 = vmul.f32 %v6320, %v6373
        %v6519 = vmul.f32 %v6319, %v6378
        %v6520 = vmul.f32 %v6318, %v6383
        %v6521 = vmul.f32 %v6317, %v6388
        %v6522 = vmul.f32 %v6316, %v6393
        %v6523 = vmul.f32 %v6315, %v6398
        %v6524 = vmul.f32 %v6314, %v6403
        %v6525 = vmul.f32 %v6313, %v6408
        %v6526 = vmul.f32 %v6312, %v6413
        %v6527 = vmul.f32 %v6311, %v6418
        %v6528 = vmul.f32 %v6310, %v6423
        %v6529 = vmul.f32 %v6309, %v6428
        %v6530 = vmul.f32 %v6308, %v6433
        %v6531 = vmul.f32 %v6307, %v6438
        %v6532 = vmul.f32 %v6306, %v6443
        %v6533 = vmul.f32 %v6305, %v6448
        %v6534 = vmul.f32 %v6304, %v6453
        %v6535 = vmul.f32 %v6303, %v6458
        %v6536 = vmul.f32 %v6302, %v6463
        %v6537 = vmul.f32 %v6301, %v6468
        %v6538 = vmul.f32 %v6300, %v6473
        %v6539 = vmul.f32 %v6299, %v6478
        %v6540 = vmul.f32 %v6298, %v6483
        %v6541 = vmul.f32 %v6297, %v6488
        %v6542 = vmul.f32 %v6296, %v6493
        %v6543 = vmul.f32 %v6295, %v6498
        %v6544 = vmul.f32 %v6294, %v6503
        %v6545 = vmul.f32 %v6293, %v6508
        %v6546 = vmul.f32 %v6292, %v6513
        %6547 = vst.msk [vmem:[#allocation3 + $0x8] sm:$0xff] %vm4858, %v6515
        %6548 = vst.msk [vmem:[#allocation3 + $0x30] sm:$0xff] %vm4858, %v6516
        %6549 = vst.msk [vmem:[#allocation3 + $0x58] sm:$0xff] %vm4858, %v6517
        %6550 = vst.msk [vmem:[#allocation3 + $0x80] sm:$0xff] %vm4858, %v6518
        %6551 = vst.msk [vmem:[#allocation3 + $0xa8] sm:$0xff] %vm4858, %v6519
        %6552 = vst.msk [vmem:[#allocation3 + $0xd0] sm:$0xff] %vm4858, %v6520
        %6553 = vst.msk [vmem:[#allocation3 + $0xf8] sm:$0xff] %vm4858, %v6521
        %6554 = vst.msk [vmem:[#allocation3 + $0x120] sm:$0xff] %vm4858, %v6522
        %6555 = vst.msk [vmem:[#allocation3 + $0x148] sm:$0xff] %vm4858, %v6523
        %6556 = vst.msk [vmem:[#allocation3 + $0x170] sm:$0xff] %vm4858, %v6524
        %6557 = vst.msk [vmem:[#allocation3 + $0x198] sm:$0xff] %vm4858, %v6525
        %6558 = vst.msk [vmem:[#allocation3 + $0x1c0] sm:$0xff] %vm4858, %v6526
        %6559 = vst.msk [vmem:[#allocation3 + $0x1e8] sm:$0xff] %vm4858, %v6527
        %6560 = vst.msk [vmem:[#allocation3 + $0x210] sm:$0xff] %vm4858, %v6528
        %6561 = vst.msk [vmem:[#allocation3 + $0x238] sm:$0xff] %vm4858, %v6529
        %6562 = vst.msk [vmem:[#allocation3 + $0x260] sm:$0xff] %vm4858, %v6530
        %6563 = vst.msk [vmem:[#allocation3 + $0x288] sm:$0xff] %vm4858, %v6531
        %6564 = vst.msk [vmem:[#allocation3 + $0x2b0] sm:$0xff] %vm4858, %v6532
        %6565 = vst.msk [vmem:[#allocation3 + $0x2d8] sm:$0xff] %vm4858, %v6533
        %6566 = vst.msk [vmem:[#allocation3 + $0x300] sm:$0xff] %vm4858, %v6534
        %6567 = vst.msk [vmem:[#allocation3 + $0x328] sm:$0xff] %vm4858, %v6535
        %6568 = vst.msk [vmem:[#allocation3 + $0x350] sm:$0xff] %vm4858, %v6536
        %6569 = vst.msk [vmem:[#allocation3 + $0x378] sm:$0xff] %vm4858, %v6537
        %6570 = vst.msk [vmem:[#allocation3 + $0x3a0] sm:$0xff] %vm4858, %v6538
        %6571 = vst.msk [vmem:[#allocation3 + $0x3c8] sm:$0xff] %vm4858, %v6539
        %6572 = vst.msk [vmem:[#allocation3 + $0x3f0] sm:$0xff] %vm4858, %v6540
        %6573 = vst.msk [vmem:[#allocation3 + $0x418] sm:$0xff] %vm4858, %v6541
        %6574 = vst.msk [vmem:[#allocation3 + $0x440] sm:$0xff] %vm4858, %v6542
        %6575 = vst.msk [vmem:[#allocation3 + $0x468] sm:$0xff] %vm4858, %v6543
        %6576 = vst.msk [vmem:[#allocation3 + $0x490] sm:$0xff] %vm4858, %v6544
        %6577 = vst.msk [vmem:[#allocation3 + $0x4b8] sm:$0xff] %vm4858, %v6545
        %6578 = vst.msk [vmem:[#allocation3 + $0x4e0] sm:$0xff] %vm4858, %v6546
        %v6579 = vld [vmem:[%s1] sm:$0xff]
        %v6580 = vld [vmem:[%s1 + $0x8] sm:$0xff]
        %v6581 = vld [vmem:[%s1 + $0x10] sm:$0xff]
        %v6582 = vld [vmem:[%s1 + $0x18] sm:$0xff]
        %v6583 = vld [vmem:[%s1 + $0x20] sm:$0xff]
        %v6584 = vld [vmem:[%s1 + $0x28] sm:$0xff]
        %v6585 = vld [vmem:[%s1 + $0x30] sm:$0xff]
        %v6586 = vld [vmem:[%s1 + $0x38] sm:$0xff]
        %v6587 = vld [vmem:[%s1 + $0x40] sm:$0xff]
        %v6588 = vld [vmem:[%s1 + $0x48] sm:$0xff]
        %v6589 = vld [vmem:[%s1 + $0x50] sm:$0xff]
        %v6590 = vld [vmem:[%s1 + $0x58] sm:$0xff]
        %v6591 = vld [vmem:[%s1 + $0x60] sm:$0xff]
        %v6592 = vld [vmem:[%s1 + $0x68] sm:$0xff]
        %v6593 = vld [vmem:[%s1 + $0x70] sm:$0xff]
        %v6594 = vld [vmem:[%s1 + $0x78] sm:$0xff]
        %v6595 = vld [vmem:[%s1 + $0x80] sm:$0xff]
        %v6596 = vld [vmem:[%s1 + $0x88] sm:$0xff]
        %v6597 = vld [vmem:[%s1 + $0x90] sm:$0xff]
        %v6598 = vld [vmem:[%s1 + $0x98] sm:$0xff]
        %v6599 = vld [vmem:[%s1 + $0xa0] sm:$0xff]
        %v6600 = vld [vmem:[%s1 + $0xa8] sm:$0xff]
        %v6601 = vld [vmem:[%s1 + $0xb0] sm:$0xff]
        %v6602 = vld [vmem:[%s1 + $0xb8] sm:$0xff]
        %v6603 = vld [vmem:[%s1 + $0xc0] sm:$0xff]
        %v6604 = vld [vmem:[%s1 + $0xc8] sm:$0xff]
        %v6605 = vld [vmem:[%s1 + $0xd0] sm:$0xff]
        %v6606 = vld [vmem:[%s1 + $0xd8] sm:$0xff]
        %v6607 = vld [vmem:[%s1 + $0xe0] sm:$0xff]
        %v6608 = vld [vmem:[%s1 + $0xe8] sm:$0xff]
        %v6609 = vld [vmem:[%s1 + $0xf0] sm:$0xff]
        %v6610 = vld [vmem:[%s1 + $0xf8] sm:$0xff]
        %6612 = vset.pattern.permute.xlu0 3
        %6613 = vperm.xlu0 %6612, %v6579
        %v6614 = vpop.permute.xlu0 %6613
        %6617 = vset.pattern.permute.xlu0 3
        %6618 = vperm.xlu0 %6617, %v6580
        %v6619 = vpop.permute.xlu0 %6618
        %6622 = vset.pattern.permute.xlu0 3
        %6623 = vperm.xlu0 %6622, %v6581
        %v6624 = vpop.permute.xlu0 %6623
        %6627 = vset.pattern.permute.xlu0 3
        %6628 = vperm.xlu0 %6627, %v6582
        %v6629 = vpop.permute.xlu0 %6628
        %6632 = vset.pattern.permute.xlu0 3
        %6633 = vperm.xlu0 %6632, %v6583
        %v6634 = vpop.permute.xlu0 %6633
        %6637 = vset.pattern.permute.xlu0 3
        %6638 = vperm.xlu0 %6637, %v6584
        %v6639 = vpop.permute.xlu0 %6638
        %6642 = vset.pattern.permute.xlu0 3
        %6643 = vperm.xlu0 %6642, %v6585
        %v6644 = vpop.permute.xlu0 %6643
        %6647 = vset.pattern.permute.xlu0 3
        %6648 = vperm.xlu0 %6647, %v6586
        %v6649 = vpop.permute.xlu0 %6648
        %6652 = vset.pattern.permute.xlu0 3
        %6653 = vperm.xlu0 %6652, %v6587
        %v6654 = vpop.permute.xlu0 %6653
        %6657 = vset.pattern.permute.xlu0 3
        %6658 = vperm.xlu0 %6657, %v6588
        %v6659 = vpop.permute.xlu0 %6658
        %6662 = vset.pattern.permute.xlu0 3
        %6663 = vperm.xlu0 %6662, %v6589
        %v6664 = vpop.permute.xlu0 %6663
        %6667 = vset.pattern.permute.xlu0 3
        %6668 = vperm.xlu0 %6667, %v6590
        %v6669 = vpop.permute.xlu0 %6668
        %6672 = vset.pattern.permute.xlu0 3
        %6673 = vperm.xlu0 %6672, %v6591
        %v6674 = vpop.permute.xlu0 %6673
        %6677 = vset.pattern.permute.xlu0 3
        %6678 = vperm.xlu0 %6677, %v6592
        %v6679 = vpop.permute.xlu0 %6678
        %6682 = vset.pattern.permute.xlu0 3
        %6683 = vperm.xlu0 %6682, %v6593
        %v6684 = vpop.permute.xlu0 %6683
        %6687 = vset.pattern.permute.xlu0 3
        %6688 = vperm.xlu0 %6687, %v6594
        %v6689 = vpop.permute.xlu0 %6688
        %6692 = vset.pattern.permute.xlu0 3
        %6693 = vperm.xlu0 %6692, %v6595
        %v6694 = vpop.permute.xlu0 %6693
        %6697 = vset.pattern.permute.xlu0 3
        %6698 = vperm.xlu0 %6697, %v6596
        %v6699 = vpop.permute.xlu0 %6698
        %6702 = vset.pattern.permute.xlu0 3
        %6703 = vperm.xlu0 %6702, %v6597
        %v6704 = vpop.permute.xlu0 %6703
        %6707 = vset.pattern.permute.xlu0 3
        %6708 = vperm.xlu0 %6707, %v6598
        %v6709 = vpop.permute.xlu0 %6708
        %6712 = vset.pattern.permute.xlu0 3
        %6713 = vperm.xlu0 %6712, %v6599
        %v6714 = vpop.permute.xlu0 %6713
        %6717 = vset.pattern.permute.xlu0 3
        %6718 = vperm.xlu0 %6717, %v6600
        %v6719 = vpop.permute.xlu0 %6718
        %6722 = vset.pattern.permute.xlu0 3
        %6723 = vperm.xlu0 %6722, %v6601
        %v6724 = vpop.permute.xlu0 %6723
        %6727 = vset.pattern.permute.xlu0 3
        %6728 = vperm.xlu0 %6727, %v6602
        %v6729 = vpop.permute.xlu0 %6728
        %6732 = vset.pattern.permute.xlu0 3
        %6733 = vperm.xlu0 %6732, %v6603
        %v6734 = vpop.permute.xlu0 %6733
        %6737 = vset.pattern.permute.xlu0 3
        %6738 = vperm.xlu0 %6737, %v6604
        %v6739 = vpop.permute.xlu0 %6738
        %6742 = vset.pattern.permute.xlu0 3
        %6743 = vperm.xlu0 %6742, %v6605
        %v6744 = vpop.permute.xlu0 %6743
        %6747 = vset.pattern.permute.xlu0 3
        %6748 = vperm.xlu0 %6747, %v6606
        %v6749 = vpop.permute.xlu0 %6748
        %6752 = vset.pattern.permute.xlu0 3
        %6753 = vperm.xlu0 %6752, %v6607
        %v6754 = vpop.permute.xlu0 %6753
        %6757 = vset.pattern.permute.xlu0 3
        %6758 = vperm.xlu0 %6757, %v6608
        %v6759 = vpop.permute.xlu0 %6758
        %6762 = vset.pattern.permute.xlu0 3
        %6763 = vperm.xlu0 %6762, %v6609
        %v6764 = vpop.permute.xlu0 %6763
        %6767 = vset.pattern.permute.xlu0 3
        %6768 = vperm.xlu0 %6767, %v6610
        %v6769 = vpop.permute.xlu0 %6768
        %v6771 = vmul.f32 %v5617, %v6614
        %v6772 = vmul.f32 %v5616, %v6619
        %v6773 = vmul.f32 %v5615, %v6624
        %v6774 = vmul.f32 %v5614, %v6629
        %v6775 = vmul.f32 %v5613, %v6634
        %v6776 = vmul.f32 %v5612, %v6639
        %v6777 = vmul.f32 %v5611, %v6644
        %v6778 = vmul.f32 %v5610, %v6649
        %v6779 = vmul.f32 %v5609, %v6654
        %v6780 = vmul.f32 %v5608, %v6659
        %v6781 = vmul.f32 %v5607, %v6664
        %v6782 = vmul.f32 %v5606, %v6669
        %v6783 = vmul.f32 %v5605, %v6674
        %v6784 = vmul.f32 %v5604, %v6679
        %v6785 = vmul.f32 %v5603, %v6684
        %v6786 = vmul.f32 %v5602, %v6689
        %v6787 = vmul.f32 %v5601, %v6694
        %v6788 = vmul.f32 %v5600, %v6699
        %v6789 = vmul.f32 %v5599, %v6704
        %v6790 = vmul.f32 %v5598, %v6709
        %v6791 = vmul.f32 %v5597, %v6714
        %v6792 = vmul.f32 %v5596, %v6719
        %v6793 = vmul.f32 %v5595, %v6724
        %v6794 = vmul.f32 %v5594, %v6729
        %v6795 = vmul.f32 %v5593, %v6734
        %v6796 = vmul.f32 %v5592, %v6739
        %v6797 = vmul.f32 %v5591, %v6744
        %v6798 = vmul.f32 %v5590, %v6749
        %v6799 = vmul.f32 %v5589, %v6754
        %v6800 = vmul.f32 %v5588, %v6759
        %v6801 = vmul.f32 %v5587, %v6764
        %v6802 = vmul.f32 %v5586, %v6769
        %6835 = vrot.lane.b32.xlu0 %v6771, 64
        %v6836 = vpop.permute.xlu0 %6835
        %6837 = vrot.lane.b32.xlu0 %v6772, 64
        %v6838 = vpop.permute.xlu0 %6837
        %6839 = vrot.lane.b32.xlu0 %v6773, 64
        %v6840 = vpop.permute.xlu0 %6839
        %6841 = vrot.lane.b32.xlu0 %v6774, 64
        %v6842 = vpop.permute.xlu0 %6841
        %6843 = vrot.lane.b32.xlu0 %v6775, 64
        %v6844 = vpop.permute.xlu0 %6843
        %6845 = vrot.lane.b32.xlu0 %v6776, 64
        %v6846 = vpop.permute.xlu0 %6845
        %6847 = vrot.lane.b32.xlu0 %v6777, 64
        %v6848 = vpop.permute.xlu0 %6847
        %6849 = vrot.lane.b32.xlu0 %v6778, 64
        %v6850 = vpop.permute.xlu0 %6849
        %6851 = vrot.lane.b32.xlu0 %v6779, 64
        %v6852 = vpop.permute.xlu0 %6851
        %6853 = vrot.lane.b32.xlu0 %v6780, 64
        %v6854 = vpop.permute.xlu0 %6853
        %6855 = vrot.lane.b32.xlu0 %v6781, 64
        %v6856 = vpop.permute.xlu0 %6855
        %6857 = vrot.lane.b32.xlu0 %v6782, 64
        %v6858 = vpop.permute.xlu0 %6857
        %6859 = vrot.lane.b32.xlu0 %v6783, 64
        %v6860 = vpop.permute.xlu0 %6859
        %6861 = vrot.lane.b32.xlu0 %v6784, 64
        %v6862 = vpop.permute.xlu0 %6861
        %6863 = vrot.lane.b32.xlu0 %v6785, 64
        %v6864 = vpop.permute.xlu0 %6863
        %6865 = vrot.lane.b32.xlu0 %v6786, 64
        %v6866 = vpop.permute.xlu0 %6865
        %6867 = vrot.lane.b32.xlu0 %v6787, 64
        %v6868 = vpop.permute.xlu0 %6867
        %6869 = vrot.lane.b32.xlu0 %v6788, 64
        %v6870 = vpop.permute.xlu0 %6869
        %6871 = vrot.lane.b32.xlu0 %v6789, 64
        %v6872 = vpop.permute.xlu0 %6871
        %6873 = vrot.lane.b32.xlu0 %v6790, 64
        %v6874 = vpop.permute.xlu0 %6873
        %6875 = vrot.lane.b32.xlu0 %v6791, 64
        %v6876 = vpop.permute.xlu0 %6875
        %6877 = vrot.lane.b32.xlu0 %v6792, 64
        %v6878 = vpop.permute.xlu0 %6877
        %6879 = vrot.lane.b32.xlu0 %v6793, 64
        %v6880 = vpop.permute.xlu0 %6879
        %6881 = vrot.lane.b32.xlu0 %v6794, 64
        %v6882 = vpop.permute.xlu0 %6881
        %6883 = vrot.lane.b32.xlu0 %v6795, 64
        %v6884 = vpop.permute.xlu0 %6883
        %6885 = vrot.lane.b32.xlu0 %v6796, 64
        %v6886 = vpop.permute.xlu0 %6885
        %6887 = vrot.lane.b32.xlu0 %v6797, 64
        %v6888 = vpop.permute.xlu0 %6887
        %6889 = vrot.lane.b32.xlu0 %v6798, 64
        %v6890 = vpop.permute.xlu0 %6889
        %6891 = vrot.lane.b32.xlu0 %v6799, 64
        %v6892 = vpop.permute.xlu0 %6891
        %6893 = vrot.lane.b32.xlu0 %v6800, 64
        %v6894 = vpop.permute.xlu0 %6893
        %6895 = vrot.lane.b32.xlu0 %v6801, 64
        %v6896 = vpop.permute.xlu0 %6895
        %6897 = vrot.lane.b32.xlu0 %v6802, 64
        %v6898 = vpop.permute.xlu0 %6897
        %6931 = vst.msk [vmem:[#allocation3 + $0x8] sm:$0xff] %vm6226, %v6836
        %6932 = vst.msk [vmem:[#allocation3 + $0x30] sm:$0xff] %vm6226, %v6838
        %6933 = vst.msk [vmem:[#allocation3 + $0x58] sm:$0xff] %vm6226, %v6840
        %6934 = vst.msk [vmem:[#allocation3 + $0x80] sm:$0xff] %vm6226, %v6842
        %6935 = vst.msk [vmem:[#allocation3 + $0xa8] sm:$0xff] %vm6226, %v6844
        %6936 = vst.msk [vmem:[#allocation3 + $0xd0] sm:$0xff] %vm6226, %v6846
        %6937 = vst.msk [vmem:[#allocation3 + $0xf8] sm:$0xff] %vm6226, %v6848
        %6938 = vst.msk [vmem:[#allocation3 + $0x120] sm:$0xff] %vm6226, %v6850
        %6939 = vst.msk [vmem:[#allocation3 + $0x148] sm:$0xff] %vm6226, %v6852
        %6940 = vst.msk [vmem:[#allocation3 + $0x170] sm:$0xff] %vm6226, %v6854
        %6941 = vst.msk [vmem:[#allocation3 + $0x198] sm:$0xff] %vm6226, %v6856
        %6942 = vst.msk [vmem:[#allocation3 + $0x1c0] sm:$0xff] %vm6226, %v6858
        %6943 = vst.msk [vmem:[#allocation3 + $0x1e8] sm:$0xff] %vm6226, %v6860
        %6944 = vst.msk [vmem:[#allocation3 + $0x210] sm:$0xff] %vm6226, %v6862
        %6945 = vst.msk [vmem:[#allocation3 + $0x238] sm:$0xff] %vm6226, %v6864
        %6946 = vst.msk [vmem:[#allocation3 + $0x260] sm:$0xff] %vm6226, %v6866
        %6947 = vst.msk [vmem:[#allocation3 + $0x288] sm:$0xff] %vm6226, %v6868
        %6948 = vst.msk [vmem:[#allocation3 + $0x2b0] sm:$0xff] %vm6226, %v6870
        %6949 = vst.msk [vmem:[#allocation3 + $0x2d8] sm:$0xff] %vm6226, %v6872
        %6950 = vst.msk [vmem:[#allocation3 + $0x300] sm:$0xff] %vm6226, %v6874
        %6951 = vst.msk [vmem:[#allocation3 + $0x328] sm:$0xff] %vm6226, %v6876
        %6952 = vst.msk [vmem:[#allocation3 + $0x350] sm:$0xff] %vm6226, %v6878
        %6953 = vst.msk [vmem:[#allocation3 + $0x378] sm:$0xff] %vm6226, %v6880
        %6954 = vst.msk [vmem:[#allocation3 + $0x3a0] sm:$0xff] %vm6226, %v6882
        %6955 = vst.msk [vmem:[#allocation3 + $0x3c8] sm:$0xff] %vm6226, %v6884
        %6956 = vst.msk [vmem:[#allocation3 + $0x3f0] sm:$0xff] %vm6226, %v6886
        %6957 = vst.msk [vmem:[#allocation3 + $0x418] sm:$0xff] %vm6226, %v6888
        %6958 = vst.msk [vmem:[#allocation3 + $0x440] sm:$0xff] %vm6226, %v6890
        %6959 = vst.msk [vmem:[#allocation3 + $0x468] sm:$0xff] %vm6226, %v6892
        %6960 = vst.msk [vmem:[#allocation3 + $0x490] sm:$0xff] %vm6226, %v6894
        %6961 = vst.msk [vmem:[#allocation3 + $0x4b8] sm:$0xff] %vm6226, %v6896
        %6962 = vst.msk [vmem:[#allocation3 + $0x4e0] sm:$0xff] %vm6226, %v6898
        %6963 = vst.msk [vmem:[#allocation3 + $0x10] sm:$0xff] %vm4858, %v5521
        %6964 = vst.msk [vmem:[#allocation3 + $0x38] sm:$0xff] %vm4858, %v5522
        %6965 = vst.msk [vmem:[#allocation3 + $0x60] sm:$0xff] %vm4858, %v5523
        %6966 = vst.msk [vmem:[#allocation3 + $0x88] sm:$0xff] %vm4858, %v5524
        %6967 = vst.msk [vmem:[#allocation3 + $0xb0] sm:$0xff] %vm4858, %v5525
        %6968 = vst.msk [vmem:[#allocation3 + $0xd8] sm:$0xff] %vm4858, %v5526
        %6969 = vst.msk [vmem:[#allocation3 + $0x100] sm:$0xff] %vm4858, %v5527
        %6970 = vst.msk [vmem:[#allocation3 + $0x128] sm:$0xff] %vm4858, %v5528
        %6971 = vst.msk [vmem:[#allocation3 + $0x150] sm:$0xff] %vm4858, %v5529
        %6972 = vst.msk [vmem:[#allocation3 + $0x178] sm:$0xff] %vm4858, %v5530
        %6973 = vst.msk [vmem:[#allocation3 + $0x1a0] sm:$0xff] %vm4858, %v5531
        %6974 = vst.msk [vmem:[#allocation3 + $0x1c8] sm:$0xff] %vm4858, %v5532
        %6975 = vst.msk [vmem:[#allocation3 + $0x1f0] sm:$0xff] %vm4858, %v5533
        %6976 = vst.msk [vmem:[#allocation3 + $0x218] sm:$0xff] %vm4858, %v5534
        %6977 = vst.msk [vmem:[#allocation3 + $0x240] sm:$0xff] %vm4858, %v5535
        %6978 = vst.msk [vmem:[#allocation3 + $0x268] sm:$0xff] %vm4858, %v5536
        %6979 = vst.msk [vmem:[#allocation3 + $0x290] sm:$0xff] %vm4858, %v5537
        %6980 = vst.msk [vmem:[#allocation3 + $0x2b8] sm:$0xff] %vm4858, %v5538
        %6981 = vst.msk [vmem:[#allocation3 + $0x2e0] sm:$0xff] %vm4858, %v5539
        %6982 = vst.msk [vmem:[#allocation3 + $0x308] sm:$0xff] %vm4858, %v5540
        %6983 = vst.msk [vmem:[#allocation3 + $0x330] sm:$0xff] %vm4858, %v5541
        %6984 = vst.msk [vmem:[#allocation3 + $0x358] sm:$0xff] %vm4858, %v5542
        %6985 = vst.msk [vmem:[#allocation3 + $0x380] sm:$0xff] %vm4858, %v5543
        %6986 = vst.msk [vmem:[#allocation3 + $0x3a8] sm:$0xff] %vm4858, %v5544
        %6987 = vst.msk [vmem:[#allocation3 + $0x3d0] sm:$0xff] %vm4858, %v5545
        %6988 = vst.msk [vmem:[#allocation3 + $0x3f8] sm:$0xff] %vm4858, %v5546
        %6989 = vst.msk [vmem:[#allocation3 + $0x420] sm:$0xff] %vm4858, %v5547
        %6990 = vst.msk [vmem:[#allocation3 + $0x448] sm:$0xff] %vm4858, %v5548
        %6991 = vst.msk [vmem:[#allocation3 + $0x470] sm:$0xff] %vm4858, %v5549
        %6992 = vst.msk [vmem:[#allocation3 + $0x498] sm:$0xff] %vm4858, %v5550
        %6993 = vst.msk [vmem:[#allocation3 + $0x4c0] sm:$0xff] %vm4858, %v5551
        %6994 = vst.msk [vmem:[#allocation3 + $0x4e8] sm:$0xff] %vm4858, %v5552
        %v6995 = vld [vmem:[%s1] sm:$0xff]
        %v6996 = vld [vmem:[%s1 + $0x8] sm:$0xff]
        %v6997 = vld [vmem:[%s1 + $0x10] sm:$0xff]
        %v6998 = vld [vmem:[%s1 + $0x18] sm:$0xff]
        %v6999 = vld [vmem:[%s1 + $0x20] sm:$0xff]
        %v7000 = vld [vmem:[%s1 + $0x28] sm:$0xff]
        %v7001 = vld [vmem:[%s1 + $0x30] sm:$0xff]
        %v7002 = vld [vmem:[%s1 + $0x38] sm:$0xff]
        %v7003 = vld [vmem:[%s1 + $0x40] sm:$0xff]
        %v7004 = vld [vmem:[%s1 + $0x48] sm:$0xff]
        %v7005 = vld [vmem:[%s1 + $0x50] sm:$0xff]
        %v7006 = vld [vmem:[%s1 + $0x58] sm:$0xff]
        %v7007 = vld [vmem:[%s1 + $0x60] sm:$0xff]
        %v7008 = vld [vmem:[%s1 + $0x68] sm:$0xff]
        %v7009 = vld [vmem:[%s1 + $0x70] sm:$0xff]
        %v7010 = vld [vmem:[%s1 + $0x78] sm:$0xff]
        %v7011 = vld [vmem:[%s1 + $0x80] sm:$0xff]
        %v7012 = vld [vmem:[%s1 + $0x88] sm:$0xff]
        %v7013 = vld [vmem:[%s1 + $0x90] sm:$0xff]
        %v7014 = vld [vmem:[%s1 + $0x98] sm:$0xff]
        %v7015 = vld [vmem:[%s1 + $0xa0] sm:$0xff]
        %v7016 = vld [vmem:[%s1 + $0xa8] sm:$0xff]
        %v7017 = vld [vmem:[%s1 + $0xb0] sm:$0xff]
        %v7018 = vld [vmem:[%s1 + $0xb8] sm:$0xff]
        %v7019 = vld [vmem:[%s1 + $0xc0] sm:$0xff]
        %v7020 = vld [vmem:[%s1 + $0xc8] sm:$0xff]
        %v7021 = vld [vmem:[%s1 + $0xd0] sm:$0xff]
        %v7022 = vld [vmem:[%s1 + $0xd8] sm:$0xff]
        %v7023 = vld [vmem:[%s1 + $0xe0] sm:$0xff]
        %v7024 = vld [vmem:[%s1 + $0xe8] sm:$0xff]
        %v7025 = vld [vmem:[%s1 + $0xf0] sm:$0xff]
        %v7026 = vld [vmem:[%s1 + $0xf8] sm:$0xff]
        %7028 = vset.pattern.permute.xlu0 5
        %7029 = vperm.xlu0 %7028, %v6995
        %v7030 = vpop.permute.xlu0 %7029
        %7033 = vset.pattern.permute.xlu0 5
        %7034 = vperm.xlu0 %7033, %v6996
        %v7035 = vpop.permute.xlu0 %7034
        %7038 = vset.pattern.permute.xlu0 5
        %7039 = vperm.xlu0 %7038, %v6997
        %v7040 = vpop.permute.xlu0 %7039
        %7043 = vset.pattern.permute.xlu0 5
        %7044 = vperm.xlu0 %7043, %v6998
        %v7045 = vpop.permute.xlu0 %7044
        %7048 = vset.pattern.permute.xlu0 5
        %7049 = vperm.xlu0 %7048, %v6999
        %v7050 = vpop.permute.xlu0 %7049
        %7053 = vset.pattern.permute.xlu0 5
        %7054 = vperm.xlu0 %7053, %v7000
        %v7055 = vpop.permute.xlu0 %7054
        %7058 = vset.pattern.permute.xlu0 5
        %7059 = vperm.xlu0 %7058, %v7001
        %v7060 = vpop.permute.xlu0 %7059
        %7063 = vset.pattern.permute.xlu0 5
        %7064 = vperm.xlu0 %7063, %v7002
        %v7065 = vpop.permute.xlu0 %7064
        %7068 = vset.pattern.permute.xlu0 5
        %7069 = vperm.xlu0 %7068, %v7003
        %v7070 = vpop.permute.xlu0 %7069
        %7073 = vset.pattern.permute.xlu0 5
        %7074 = vperm.xlu0 %7073, %v7004
        %v7075 = vpop.permute.xlu0 %7074
        %7078 = vset.pattern.permute.xlu0 5
        %7079 = vperm.xlu0 %7078, %v7005
        %v7080 = vpop.permute.xlu0 %7079
        %7083 = vset.pattern.permute.xlu0 5
        %7084 = vperm.xlu0 %7083, %v7006
        %v7085 = vpop.permute.xlu0 %7084
        %7088 = vset.pattern.permute.xlu0 5
        %7089 = vperm.xlu0 %7088, %v7007
        %v7090 = vpop.permute.xlu0 %7089
        %7093 = vset.pattern.permute.xlu0 5
        %7094 = vperm.xlu0 %7093, %v7008
        %v7095 = vpop.permute.xlu0 %7094
        %7098 = vset.pattern.permute.xlu0 5
        %7099 = vperm.xlu0 %7098, %v7009
        %v7100 = vpop.permute.xlu0 %7099
        %7103 = vset.pattern.permute.xlu0 5
        %7104 = vperm.xlu0 %7103, %v7010
        %v7105 = vpop.permute.xlu0 %7104
        %7108 = vset.pattern.permute.xlu0 5
        %7109 = vperm.xlu0 %7108, %v7011
        %v7110 = vpop.permute.xlu0 %7109
        %7113 = vset.pattern.permute.xlu0 5
        %7114 = vperm.xlu0 %7113, %v7012
        %v7115 = vpop.permute.xlu0 %7114
        %7118 = vset.pattern.permute.xlu0 5
        %7119 = vperm.xlu0 %7118, %v7013
        %v7120 = vpop.permute.xlu0 %7119
        %7123 = vset.pattern.permute.xlu0 5
        %7124 = vperm.xlu0 %7123, %v7014
        %v7125 = vpop.permute.xlu0 %7124
        %7128 = vset.pattern.permute.xlu0 5
        %7129 = vperm.xlu0 %7128, %v7015
        %v7130 = vpop.permute.xlu0 %7129
        %7133 = vset.pattern.permute.xlu0 5
        %7134 = vperm.xlu0 %7133, %v7016
        %v7135 = vpop.permute.xlu0 %7134
        %7138 = vset.pattern.permute.xlu0 5
        %7139 = vperm.xlu0 %7138, %v7017
        %v7140 = vpop.permute.xlu0 %7139
        %7143 = vset.pattern.permute.xlu0 5
        %7144 = vperm.xlu0 %7143, %v7018
        %v7145 = vpop.permute.xlu0 %7144
        %7148 = vset.pattern.permute.xlu0 5
        %7149 = vperm.xlu0 %7148, %v7019
        %v7150 = vpop.permute.xlu0 %7149
        %7153 = vset.pattern.permute.xlu0 5
        %7154 = vperm.xlu0 %7153, %v7020
        %v7155 = vpop.permute.xlu0 %7154
        %7158 = vset.pattern.permute.xlu0 5
        %7159 = vperm.xlu0 %7158, %v7021
        %v7160 = vpop.permute.xlu0 %7159
        %7163 = vset.pattern.permute.xlu0 5
        %7164 = vperm.xlu0 %7163, %v7022
        %v7165 = vpop.permute.xlu0 %7164
        %7168 = vset.pattern.permute.xlu0 5
        %7169 = vperm.xlu0 %7168, %v7023
        %v7170 = vpop.permute.xlu0 %7169
        %7173 = vset.pattern.permute.xlu0 5
        %7174 = vperm.xlu0 %7173, %v7024
        %v7175 = vpop.permute.xlu0 %7174
        %7178 = vset.pattern.permute.xlu0 5
        %7179 = vperm.xlu0 %7178, %v7025
        %v7180 = vpop.permute.xlu0 %7179
        %7183 = vset.pattern.permute.xlu0 5
        %7184 = vperm.xlu0 %7183, %v7026
        %v7185 = vpop.permute.xlu0 %7184
        %v7187 = vmul.f32 %v6321, %v7030
        %v7188 = vmul.f32 %v6320, %v7035
        %v7189 = vmul.f32 %v6319, %v7040
        %v7190 = vmul.f32 %v6318, %v7045
        %v7191 = vmul.f32 %v6317, %v7050
        %v7192 = vmul.f32 %v6316, %v7055
        %v7193 = vmul.f32 %v6315, %v7060
        %v7194 = vmul.f32 %v6314, %v7065
        %v7195 = vmul.f32 %v6313, %v7070
        %v7196 = vmul.f32 %v6312, %v7075
        %v7197 = vmul.f32 %v6311, %v7080
        %v7198 = vmul.f32 %v6310, %v7085
        %v7199 = vmul.f32 %v6309, %v7090
        %v7200 = vmul.f32 %v6308, %v7095
        %v7201 = vmul.f32 %v6307, %v7100
        %v7202 = vmul.f32 %v6306, %v7105
        %v7203 = vmul.f32 %v6305, %v7110
        %v7204 = vmul.f32 %v6304, %v7115
        %v7205 = vmul.f32 %v6303, %v7120
        %v7206 = vmul.f32 %v6302, %v7125
        %v7207 = vmul.f32 %v6301, %v7130
        %v7208 = vmul.f32 %v6300, %v7135
        %v7209 = vmul.f32 %v6299, %v7140
        %v7210 = vmul.f32 %v6298, %v7145
        %v7211 = vmul.f32 %v6297, %v7150
        %v7212 = vmul.f32 %v6296, %v7155
        %v7213 = vmul.f32 %v6295, %v7160
        %v7214 = vmul.f32 %v6294, %v7165
        %v7215 = vmul.f32 %v6293, %v7170
        %v7216 = vmul.f32 %v6292, %v7175
        %v7217 = vmul.f32 %v6291, %v7180
        %v7218 = vmul.f32 %v6322, %v7185
        %7251 = vrot.lane.b32.xlu0 %v7187, 64
        %v7252 = vpop.permute.xlu0 %7251
        %7253 = vrot.lane.b32.xlu0 %v7188, 64
        %v7254 = vpop.permute.xlu0 %7253
        %7255 = vrot.lane.b32.xlu0 %v7189, 64
        %v7256 = vpop.permute.xlu0 %7255
        %7257 = vrot.lane.b32.xlu0 %v7190, 64
        %v7258 = vpop.permute.xlu0 %7257
        %7259 = vrot.lane.b32.xlu0 %v7191, 64
        %v7260 = vpop.permute.xlu0 %7259
        %7261 = vrot.lane.b32.xlu0 %v7192, 64
        %v7262 = vpop.permute.xlu0 %7261
        %7263 = vrot.lane.b32.xlu0 %v7193, 64
        %v7264 = vpop.permute.xlu0 %7263
        %7265 = vrot.lane.b32.xlu0 %v7194, 64
        %v7266 = vpop.permute.xlu0 %7265
        %7267 = vrot.lane.b32.xlu0 %v7195, 64
        %v7268 = vpop.permute.xlu0 %7267
        %7269 = vrot.lane.b32.xlu0 %v7196, 64
        %v7270 = vpop.permute.xlu0 %7269
        %7271 = vrot.lane.b32.xlu0 %v7197, 64
        %v7272 = vpop.permute.xlu0 %7271
        %7273 = vrot.lane.b32.xlu0 %v7198, 64
        %v7274 = vpop.permute.xlu0 %7273
        %7275 = vrot.lane.b32.xlu0 %v7199, 64
        %v7276 = vpop.permute.xlu0 %7275
        %7277 = vrot.lane.b32.xlu0 %v7200, 64
        %v7278 = vpop.permute.xlu0 %7277
        %7279 = vrot.lane.b32.xlu0 %v7201, 64
        %v7280 = vpop.permute.xlu0 %7279
        %7281 = vrot.lane.b32.xlu0 %v7202, 64
        %v7282 = vpop.permute.xlu0 %7281
        %7283 = vrot.lane.b32.xlu0 %v7203, 64
        %v7284 = vpop.permute.xlu0 %7283
        %7285 = vrot.lane.b32.xlu0 %v7204, 64
        %v7286 = vpop.permute.xlu0 %7285
        %7287 = vrot.lane.b32.xlu0 %v7205, 64
        %v7288 = vpop.permute.xlu0 %7287
        %7289 = vrot.lane.b32.xlu0 %v7206, 64
        %v7290 = vpop.permute.xlu0 %7289
        %7291 = vrot.lane.b32.xlu0 %v7207, 64
        %v7292 = vpop.permute.xlu0 %7291
        %7293 = vrot.lane.b32.xlu0 %v7208, 64
        %v7294 = vpop.permute.xlu0 %7293
        %7295 = vrot.lane.b32.xlu0 %v7209, 64
        %v7296 = vpop.permute.xlu0 %7295
        %7297 = vrot.lane.b32.xlu0 %v7210, 64
        %v7298 = vpop.permute.xlu0 %7297
        %7299 = vrot.lane.b32.xlu0 %v7211, 64
        %v7300 = vpop.permute.xlu0 %7299
        %7301 = vrot.lane.b32.xlu0 %v7212, 64
        %v7302 = vpop.permute.xlu0 %7301
        %7303 = vrot.lane.b32.xlu0 %v7213, 64
        %v7304 = vpop.permute.xlu0 %7303
        %7305 = vrot.lane.b32.xlu0 %v7214, 64
        %v7306 = vpop.permute.xlu0 %7305
        %7307 = vrot.lane.b32.xlu0 %v7215, 64
        %v7308 = vpop.permute.xlu0 %7307
        %7309 = vrot.lane.b32.xlu0 %v7216, 64
        %v7310 = vpop.permute.xlu0 %7309
        %7311 = vrot.lane.b32.xlu0 %v7217, 64
        %v7312 = vpop.permute.xlu0 %7311
        %7313 = vrot.lane.b32.xlu0 %v7218, 64
        %v7314 = vpop.permute.xlu0 %7313
        %7347 = vst.msk [vmem:[#allocation3 + $0x10] sm:$0xff] %vm6226, %v7252
        %7348 = vst.msk [vmem:[#allocation3 + $0x38] sm:$0xff] %vm6226, %v7254
        %7349 = vst.msk [vmem:[#allocation3 + $0x60] sm:$0xff] %vm6226, %v7256
        %7350 = vst.msk [vmem:[#allocation3 + $0x88] sm:$0xff] %vm6226, %v7258
        %7351 = vst.msk [vmem:[#allocation3 + $0xb0] sm:$0xff] %vm6226, %v7260
        %7352 = vst.msk [vmem:[#allocation3 + $0xd8] sm:$0xff] %vm6226, %v7262
        %7353 = vst.msk [vmem:[#allocation3 + $0x100] sm:$0xff] %vm6226, %v7264
        %7354 = vst.msk [vmem:[#allocation3 + $0x128] sm:$0xff] %vm6226, %v7266
        %7355 = vst.msk [vmem:[#allocation3 + $0x150] sm:$0xff] %vm6226, %v7268
        %7356 = vst.msk [vmem:[#allocation3 + $0x178] sm:$0xff] %vm6226, %v7270
        %7357 = vst.msk [vmem:[#allocation3 + $0x1a0] sm:$0xff] %vm6226, %v7272
        %7358 = vst.msk [vmem:[#allocation3 + $0x1c8] sm:$0xff] %vm6226, %v7274
        %7359 = vst.msk [vmem:[#allocation3 + $0x1f0] sm:$0xff] %vm6226, %v7276
        %7360 = vst.msk [vmem:[#allocation3 + $0x218] sm:$0xff] %vm6226, %v7278
        %7361 = vst.msk [vmem:[#allocation3 + $0x240] sm:$0xff] %vm6226, %v7280
        %7362 = vst.msk [vmem:[#allocation3 + $0x268] sm:$0xff] %vm6226, %v7282
        %7363 = vst.msk [vmem:[#allocation3 + $0x290] sm:$0xff] %vm6226, %v7284
        %7364 = vst.msk [vmem:[#allocation3 + $0x2b8] sm:$0xff] %vm6226, %v7286
        %7365 = vst.msk [vmem:[#allocation3 + $0x2e0] sm:$0xff] %vm6226, %v7288
        %7366 = vst.msk [vmem:[#allocation3 + $0x308] sm:$0xff] %vm6226, %v7290
        %7367 = vst.msk [vmem:[#allocation3 + $0x330] sm:$0xff] %vm6226, %v7292
        %7368 = vst.msk [vmem:[#allocation3 + $0x358] sm:$0xff] %vm6226, %v7294
        %7369 = vst.msk [vmem:[#allocation3 + $0x380] sm:$0xff] %vm6226, %v7296
        %7370 = vst.msk [vmem:[#allocation3 + $0x3a8] sm:$0xff] %vm6226, %v7298
        %7371 = vst.msk [vmem:[#allocation3 + $0x3d0] sm:$0xff] %vm6226, %v7300
        %7372 = vst.msk [vmem:[#allocation3 + $0x3f8] sm:$0xff] %vm6226, %v7302
        %7373 = vst.msk [vmem:[#allocation3 + $0x420] sm:$0xff] %vm6226, %v7304
        %7374 = vst.msk [vmem:[#allocation3 + $0x448] sm:$0xff] %vm6226, %v7306
        %7375 = vst.msk [vmem:[#allocation3 + $0x470] sm:$0xff] %vm6226, %v7308
        %7376 = vst.msk [vmem:[#allocation3 + $0x498] sm:$0xff] %vm6226, %v7310
        %7377 = vst.msk [vmem:[#allocation3 + $0x4c0] sm:$0xff] %vm6226, %v7312
        %7378 = vst.msk [vmem:[#allocation3 + $0x4e8] sm:$0xff] %vm6226, %v7314
        %v7379 = vld [vmem:[%s1] sm:$0xff]
        %v7380 = vld [vmem:[%s1 + $0x8] sm:$0xff]
        %v7381 = vld [vmem:[%s1 + $0x10] sm:$0xff]
        %v7382 = vld [vmem:[%s1 + $0x18] sm:$0xff]
        %v7383 = vld [vmem:[%s1 + $0x20] sm:$0xff]
        %v7384 = vld [vmem:[%s1 + $0x28] sm:$0xff]
        %v7385 = vld [vmem:[%s1 + $0x30] sm:$0xff]
        %v7386 = vld [vmem:[%s1 + $0x38] sm:$0xff]
        %v7387 = vld [vmem:[%s1 + $0x40] sm:$0xff]
        %v7388 = vld [vmem:[%s1 + $0x48] sm:$0xff]
        %v7389 = vld [vmem:[%s1 + $0x50] sm:$0xff]
        %v7390 = vld [vmem:[%s1 + $0x58] sm:$0xff]
        %v7391 = vld [vmem:[%s1 + $0x60] sm:$0xff]
        %v7392 = vld [vmem:[%s1 + $0x68] sm:$0xff]
        %v7393 = vld [vmem:[%s1 + $0x70] sm:$0xff]
        %v7394 = vld [vmem:[%s1 + $0x78] sm:$0xff]
        %v7395 = vld [vmem:[%s1 + $0x80] sm:$0xff]
        %v7396 = vld [vmem:[%s1 + $0x88] sm:$0xff]
        %v7397 = vld [vmem:[%s1 + $0x90] sm:$0xff]
        %v7398 = vld [vmem:[%s1 + $0x98] sm:$0xff]
        %v7399 = vld [vmem:[%s1 + $0xa0] sm:$0xff]
        %v7400 = vld [vmem:[%s1 + $0xa8] sm:$0xff]
        %v7401 = vld [vmem:[%s1 + $0xb0] sm:$0xff]
        %v7402 = vld [vmem:[%s1 + $0xb8] sm:$0xff]
        %v7403 = vld [vmem:[%s1 + $0xc0] sm:$0xff]
        %v7404 = vld [vmem:[%s1 + $0xc8] sm:$0xff]
        %v7405 = vld [vmem:[%s1 + $0xd0] sm:$0xff]
        %v7406 = vld [vmem:[%s1 + $0xd8] sm:$0xff]
        %v7407 = vld [vmem:[%s1 + $0xe0] sm:$0xff]
        %v7408 = vld [vmem:[%s1 + $0xe8] sm:$0xff]
        %v7409 = vld [vmem:[%s1 + $0xf0] sm:$0xff]
        %v7410 = vld [vmem:[%s1 + $0xf8] sm:$0xff]
        %7412 = vset.pattern.permute.xlu0 6
        %7413 = vperm.xlu0 %7412, %v7379
        %v7414 = vpop.permute.xlu0 %7413
        %7417 = vset.pattern.permute.xlu0 6
        %7418 = vperm.xlu0 %7417, %v7380
        %v7419 = vpop.permute.xlu0 %7418
        %7422 = vset.pattern.permute.xlu0 6
        %7423 = vperm.xlu0 %7422, %v7381
        %v7424 = vpop.permute.xlu0 %7423
        %7427 = vset.pattern.permute.xlu0 6
        %7428 = vperm.xlu0 %7427, %v7382
        %v7429 = vpop.permute.xlu0 %7428
        %7432 = vset.pattern.permute.xlu0 6
        %7433 = vperm.xlu0 %7432, %v7383
        %v7434 = vpop.permute.xlu0 %7433
        %7437 = vset.pattern.permute.xlu0 6
        %7438 = vperm.xlu0 %7437, %v7384
        %v7439 = vpop.permute.xlu0 %7438
        %7442 = vset.pattern.permute.xlu0 6
        %7443 = vperm.xlu0 %7442, %v7385
        %v7444 = vpop.permute.xlu0 %7443
        %7447 = vset.pattern.permute.xlu0 6
        %7448 = vperm.xlu0 %7447, %v7386
        %v7449 = vpop.permute.xlu0 %7448
        %7452 = vset.pattern.permute.xlu0 6
        %7453 = vperm.xlu0 %7452, %v7387
        %v7454 = vpop.permute.xlu0 %7453
        %7457 = vset.pattern.permute.xlu0 6
        %7458 = vperm.xlu0 %7457, %v7388
        %v7459 = vpop.permute.xlu0 %7458
        %7462 = vset.pattern.permute.xlu0 6
        %7463 = vperm.xlu0 %7462, %v7389
        %v7464 = vpop.permute.xlu0 %7463
        %7467 = vset.pattern.permute.xlu0 6
        %7468 = vperm.xlu0 %7467, %v7390
        %v7469 = vpop.permute.xlu0 %7468
        %7472 = vset.pattern.permute.xlu0 6
        %7473 = vperm.xlu0 %7472, %v7391
        %v7474 = vpop.permute.xlu0 %7473
        %7477 = vset.pattern.permute.xlu0 6
        %7478 = vperm.xlu0 %7477, %v7392
        %v7479 = vpop.permute.xlu0 %7478
        %7482 = vset.pattern.permute.xlu0 6
        %7483 = vperm.xlu0 %7482, %v7393
        %v7484 = vpop.permute.xlu0 %7483
        %7487 = vset.pattern.permute.xlu0 6
        %7488 = vperm.xlu0 %7487, %v7394
        %v7489 = vpop.permute.xlu0 %7488
        %7492 = vset.pattern.permute.xlu0 6
        %7493 = vperm.xlu0 %7492, %v7395
        %v7494 = vpop.permute.xlu0 %7493
        %7497 = vset.pattern.permute.xlu0 6
        %7498 = vperm.xlu0 %7497, %v7396
        %v7499 = vpop.permute.xlu0 %7498
        %7502 = vset.pattern.permute.xlu0 6
        %7503 = vperm.xlu0 %7502, %v7397
        %v7504 = vpop.permute.xlu0 %7503
        %7507 = vset.pattern.permute.xlu0 6
        %7508 = vperm.xlu0 %7507, %v7398
        %v7509 = vpop.permute.xlu0 %7508
        %7512 = vset.pattern.permute.xlu0 6
        %7513 = vperm.xlu0 %7512, %v7399
        %v7514 = vpop.permute.xlu0 %7513
        %7517 = vset.pattern.permute.xlu0 6
        %7518 = vperm.xlu0 %7517, %v7400
        %v7519 = vpop.permute.xlu0 %7518
        %7522 = vset.pattern.permute.xlu0 6
        %7523 = vperm.xlu0 %7522, %v7401
        %v7524 = vpop.permute.xlu0 %7523
        %7527 = vset.pattern.permute.xlu0 6
        %7528 = vperm.xlu0 %7527, %v7402
        %v7529 = vpop.permute.xlu0 %7528
        %7532 = vset.pattern.permute.xlu0 6
        %7533 = vperm.xlu0 %7532, %v7403
        %v7534 = vpop.permute.xlu0 %7533
        %7537 = vset.pattern.permute.xlu0 6
        %7538 = vperm.xlu0 %7537, %v7404
        %v7539 = vpop.permute.xlu0 %7538
        %7542 = vset.pattern.permute.xlu0 6
        %7543 = vperm.xlu0 %7542, %v7405
        %v7544 = vpop.permute.xlu0 %7543
        %7547 = vset.pattern.permute.xlu0 6
        %7548 = vperm.xlu0 %7547, %v7406
        %v7549 = vpop.permute.xlu0 %7548
        %7552 = vset.pattern.permute.xlu0 6
        %7553 = vperm.xlu0 %7552, %v7407
        %v7554 = vpop.permute.xlu0 %7553
        %7557 = vset.pattern.permute.xlu0 6
        %7558 = vperm.xlu0 %7557, %v7408
        %v7559 = vpop.permute.xlu0 %7558
        %7562 = vset.pattern.permute.xlu0 6
        %7563 = vperm.xlu0 %7562, %v7409
        %v7564 = vpop.permute.xlu0 %7563
        %7567 = vset.pattern.permute.xlu0 6
        %7568 = vperm.xlu0 %7567, %v7410
        %v7569 = vpop.permute.xlu0 %7568
        %v7571 = vmul.f32 %v5615, %v7414
        %v7572 = vmul.f32 %v5614, %v7419
        %v7573 = vmul.f32 %v5613, %v7424
        %v7574 = vmul.f32 %v5612, %v7429
        %v7575 = vmul.f32 %v5611, %v7434
        %v7576 = vmul.f32 %v5610, %v7439
        %v7577 = vmul.f32 %v5609, %v7444
        %v7578 = vmul.f32 %v5608, %v7449
        %v7579 = vmul.f32 %v5607, %v7454
        %v7580 = vmul.f32 %v5606, %v7459
        %v7581 = vmul.f32 %v5605, %v7464
        %v7582 = vmul.f32 %v5604, %v7469
        %v7583 = vmul.f32 %v5603, %v7474
        %v7584 = vmul.f32 %v5602, %v7479
        %v7585 = vmul.f32 %v5601, %v7484
        %v7586 = vmul.f32 %v5600, %v7489
        %v7587 = vmul.f32 %v5599, %v7494
        %v7588 = vmul.f32 %v5598, %v7499
        %v7589 = vmul.f32 %v5597, %v7504
        %v7590 = vmul.f32 %v5596, %v7509
        %v7591 = vmul.f32 %v5595, %v7514
        %v7592 = vmul.f32 %v5594, %v7519
        %v7593 = vmul.f32 %v5593, %v7524
        %v7594 = vmul.f32 %v5592, %v7529
        %v7595 = vmul.f32 %v5591, %v7534
        %v7596 = vmul.f32 %v5590, %v7539
        %v7597 = vmul.f32 %v5589, %v7544
        %v7598 = vmul.f32 %v5588, %v7549
        %v7599 = vmul.f32 %v5587, %v7554
        %v7600 = vmul.f32 %v5586, %v7559
        %v7601 = vmul.f32 %v5617, %v7564
        %v7602 = vmul.f32 %v5616, %v7569
        %7603 = vst.msk [vmem:[#allocation3 + $0x18] sm:$0xff] %vm4858, %v7571
        %7604 = vst.msk [vmem:[#allocation3 + $0x40] sm:$0xff] %vm4858, %v7572
        %7605 = vst.msk [vmem:[#allocation3 + $0x68] sm:$0xff] %vm4858, %v7573
        %7606 = vst.msk [vmem:[#allocation3 + $0x90] sm:$0xff] %vm4858, %v7574
        %7607 = vst.msk [vmem:[#allocation3 + $0xb8] sm:$0xff] %vm4858, %v7575
        %7608 = vst.msk [vmem:[#allocation3 + $0xe0] sm:$0xff] %vm4858, %v7576
        %7609 = vst.msk [vmem:[#allocation3 + $0x108] sm:$0xff] %vm4858, %v7577
        %7610 = vst.msk [vmem:[#allocation3 + $0x130] sm:$0xff] %vm4858, %v7578
        %7611 = vst.msk [vmem:[#allocation3 + $0x158] sm:$0xff] %vm4858, %v7579
        %7612 = vst.msk [vmem:[#allocation3 + $0x180] sm:$0xff] %vm4858, %v7580
        %7613 = vst.msk [vmem:[#allocation3 + $0x1a8] sm:$0xff] %vm4858, %v7581
        %7614 = vst.msk [vmem:[#allocation3 + $0x1d0] sm:$0xff] %vm4858, %v7582
        %7615 = vst.msk [vmem:[#allocation3 + $0x1f8] sm:$0xff] %vm4858, %v7583
        %7616 = vst.msk [vmem:[#allocation3 + $0x220] sm:$0xff] %vm4858, %v7584
        %7617 = vst.msk [vmem:[#allocation3 + $0x248] sm:$0xff] %vm4858, %v7585
        %7618 = vst.msk [vmem:[#allocation3 + $0x270] sm:$0xff] %vm4858, %v7586
        %7619 = vst.msk [vmem:[#allocation3 + $0x298] sm:$0xff] %vm4858, %v7587
        %7620 = vst.msk [vmem:[#allocation3 + $0x2c0] sm:$0xff] %vm4858, %v7588
        %7621 = vst.msk [vmem:[#allocation3 + $0x2e8] sm:$0xff] %vm4858, %v7589
        %7622 = vst.msk [vmem:[#allocation3 + $0x310] sm:$0xff] %vm4858, %v7590
        %7623 = vst.msk [vmem:[#allocation3 + $0x338] sm:$0xff] %vm4858, %v7591
        %7624 = vst.msk [vmem:[#allocation3 + $0x360] sm:$0xff] %vm4858, %v7592
        %7625 = vst.msk [vmem:[#allocation3 + $0x388] sm:$0xff] %vm4858, %v7593
        %7626 = vst.msk [vmem:[#allocation3 + $0x3b0] sm:$0xff] %vm4858, %v7594
        %7627 = vst.msk [vmem:[#allocation3 + $0x3d8] sm:$0xff] %vm4858, %v7595
        %7628 = vst.msk [vmem:[#allocation3 + $0x400] sm:$0xff] %vm4858, %v7596
        %7629 = vst.msk [vmem:[#allocation3 + $0x428] sm:$0xff] %vm4858, %v7597
        %7630 = vst.msk [vmem:[#allocation3 + $0x450] sm:$0xff] %vm4858, %v7598
        %7631 = vst.msk [vmem:[#allocation3 + $0x478] sm:$0xff] %vm4858, %v7599
        %7632 = vst.msk [vmem:[#allocation3 + $0x4a0] sm:$0xff] %vm4858, %v7600
        %7633 = vst.msk [vmem:[#allocation3 + $0x4c8] sm:$0xff] %vm4858, %v7601
        %7634 = vst.msk [vmem:[#allocation3 + $0x4f0] sm:$0xff] %vm4858, %v7602
        %v7635 = vld [vmem:[%s1] sm:$0xff]
        %v7636 = vld [vmem:[%s1 + $0x8] sm:$0xff]
        %v7637 = vld [vmem:[%s1 + $0x10] sm:$0xff]
        %v7638 = vld [vmem:[%s1 + $0x18] sm:$0xff]
        %v7639 = vld [vmem:[%s1 + $0x20] sm:$0xff]
        %v7640 = vld [vmem:[%s1 + $0x28] sm:$0xff]
        %v7641 = vld [vmem:[%s1 + $0x30] sm:$0xff]
        %v7642 = vld [vmem:[%s1 + $0x38] sm:$0xff]
        %v7643 = vld [vmem:[%s1 + $0x40] sm:$0xff]
        %v7644 = vld [vmem:[%s1 + $0x48] sm:$0xff]
        %v7645 = vld [vmem:[%s1 + $0x50] sm:$0xff]
        %v7646 = vld [vmem:[%s1 + $0x58] sm:$0xff]
        %v7647 = vld [vmem:[%s1 + $0x60] sm:$0xff]
        %v7648 = vld [vmem:[%s1 + $0x68] sm:$0xff]
        %v7649 = vld [vmem:[%s1 + $0x70] sm:$0xff]
        %v7650 = vld [vmem:[%s1 + $0x78] sm:$0xff]
        %v7651 = vld [vmem:[%s1 + $0x80] sm:$0xff]
        %v7652 = vld [vmem:[%s1 + $0x88] sm:$0xff]
        %v7653 = vld [vmem:[%s1 + $0x90] sm:$0xff]
        %v7654 = vld [vmem:[%s1 + $0x98] sm:$0xff]
        %v7655 = vld [vmem:[%s1 + $0xa0] sm:$0xff]
        %v7656 = vld [vmem:[%s1 + $0xa8] sm:$0xff]
        %v7657 = vld [vmem:[%s1 + $0xb0] sm:$0xff]
        %v7658 = vld [vmem:[%s1 + $0xb8] sm:$0xff]
        %v7659 = vld [vmem:[%s1 + $0xc0] sm:$0xff]
        %v7660 = vld [vmem:[%s1 + $0xc8] sm:$0xff]
        %v7661 = vld [vmem:[%s1 + $0xd0] sm:$0xff]
        %v7662 = vld [vmem:[%s1 + $0xd8] sm:$0xff]
        %v7663 = vld [vmem:[%s1 + $0xe0] sm:$0xff]
        %v7664 = vld [vmem:[%s1 + $0xe8] sm:$0xff]
        %v7665 = vld [vmem:[%s1 + $0xf0] sm:$0xff]
        %v7666 = vld [vmem:[%s1 + $0xf8] sm:$0xff]
        %7668 = vset.pattern.permute.xlu0 7
        %7669 = vperm.xlu0 %7668, %v7635
        %v7670 = vpop.permute.xlu0 %7669
        %7673 = vset.pattern.permute.xlu0 7
        %7674 = vperm.xlu0 %7673, %v7636
        %v7675 = vpop.permute.xlu0 %7674
        %7678 = vset.pattern.permute.xlu0 7
        %7679 = vperm.xlu0 %7678, %v7637
        %v7680 = vpop.permute.xlu0 %7679
        %7683 = vset.pattern.permute.xlu0 7
        %7684 = vperm.xlu0 %7683, %v7638
        %v7685 = vpop.permute.xlu0 %7684
        %7688 = vset.pattern.permute.xlu0 7
        %7689 = vperm.xlu0 %7688, %v7639
        %v7690 = vpop.permute.xlu0 %7689
        %7693 = vset.pattern.permute.xlu0 7
        %7694 = vperm.xlu0 %7693, %v7640
        %v7695 = vpop.permute.xlu0 %7694
        %7698 = vset.pattern.permute.xlu0 7
        %7699 = vperm.xlu0 %7698, %v7641
        %v7700 = vpop.permute.xlu0 %7699
        %7703 = vset.pattern.permute.xlu0 7
        %7704 = vperm.xlu0 %7703, %v7642
        %v7705 = vpop.permute.xlu0 %7704
        %7708 = vset.pattern.permute.xlu0 7
        %7709 = vperm.xlu0 %7708, %v7643
        %v7710 = vpop.permute.xlu0 %7709
        %7713 = vset.pattern.permute.xlu0 7
        %7714 = vperm.xlu0 %7713, %v7644
        %v7715 = vpop.permute.xlu0 %7714
        %7718 = vset.pattern.permute.xlu0 7
        %7719 = vperm.xlu0 %7718, %v7645
        %v7720 = vpop.permute.xlu0 %7719
        %7723 = vset.pattern.permute.xlu0 7
        %7724 = vperm.xlu0 %7723, %v7646
        %v7725 = vpop.permute.xlu0 %7724
        %7728 = vset.pattern.permute.xlu0 7
        %7729 = vperm.xlu0 %7728, %v7647
        %v7730 = vpop.permute.xlu0 %7729
        %7733 = vset.pattern.permute.xlu0 7
        %7734 = vperm.xlu0 %7733, %v7648
        %v7735 = vpop.permute.xlu0 %7734
        %7738 = vset.pattern.permute.xlu0 7
        %7739 = vperm.xlu0 %7738, %v7649
        %v7740 = vpop.permute.xlu0 %7739
        %7743 = vset.pattern.permute.xlu0 7
        %7744 = vperm.xlu0 %7743, %v7650
        %v7745 = vpop.permute.xlu0 %7744
        %7748 = vset.pattern.permute.xlu0 7
        %7749 = vperm.xlu0 %7748, %v7651
        %v7750 = vpop.permute.xlu0 %7749
        %7753 = vset.pattern.permute.xlu0 7
        %7754 = vperm.xlu0 %7753, %v7652
        %v7755 = vpop.permute.xlu0 %7754
        %7758 = vset.pattern.permute.xlu0 7
        %7759 = vperm.xlu0 %7758, %v7653
        %v7760 = vpop.permute.xlu0 %7759
        %7763 = vset.pattern.permute.xlu0 7
        %7764 = vperm.xlu0 %7763, %v7654
        %v7765 = vpop.permute.xlu0 %7764
        %7768 = vset.pattern.permute.xlu0 7
        %7769 = vperm.xlu0 %7768, %v7655
        %v7770 = vpop.permute.xlu0 %7769
        %7773 = vset.pattern.permute.xlu0 7
        %7774 = vperm.xlu0 %7773, %v7656
        %v7775 = vpop.permute.xlu0 %7774
        %7778 = vset.pattern.permute.xlu0 7
        %7779 = vperm.xlu0 %7778, %v7657
        %v7780 = vpop.permute.xlu0 %7779
        %7783 = vset.pattern.permute.xlu0 7
        %7784 = vperm.xlu0 %7783, %v7658
        %v7785 = vpop.permute.xlu0 %7784
        %7788 = vset.pattern.permute.xlu0 7
        %7789 = vperm.xlu0 %7788, %v7659
        %v7790 = vpop.permute.xlu0 %7789
        %7793 = vset.pattern.permute.xlu0 7
        %7794 = vperm.xlu0 %7793, %v7660
        %v7795 = vpop.permute.xlu0 %7794
        %7798 = vset.pattern.permute.xlu0 7
        %7799 = vperm.xlu0 %7798, %v7661
        %v7800 = vpop.permute.xlu0 %7799
        %7803 = vset.pattern.permute.xlu0 7
        %7804 = vperm.xlu0 %7803, %v7662
        %v7805 = vpop.permute.xlu0 %7804
        %7808 = vset.pattern.permute.xlu0 7
        %7809 = vperm.xlu0 %7808, %v7663
        %v7810 = vpop.permute.xlu0 %7809
        %7813 = vset.pattern.permute.xlu0 7
        %7814 = vperm.xlu0 %7813, %v7664
        %v7815 = vpop.permute.xlu0 %7814
        %7818 = vset.pattern.permute.xlu0 7
        %7819 = vperm.xlu0 %7818, %v7665
        %v7820 = vpop.permute.xlu0 %7819
        %7823 = vset.pattern.permute.xlu0 7
        %7824 = vperm.xlu0 %7823, %v7666
        %v7825 = vpop.permute.xlu0 %7824
        %v7827 = vmul.f32 %v5523, %v7670
        %v7828 = vmul.f32 %v5524, %v7675
        %v7829 = vmul.f32 %v5525, %v7680
        %v7830 = vmul.f32 %v5526, %v7685
        %v7831 = vmul.f32 %v5527, %v7690
        %v7832 = vmul.f32 %v5528, %v7695
        %v7833 = vmul.f32 %v5529, %v7700
        %v7834 = vmul.f32 %v5530, %v7705
        %v7835 = vmul.f32 %v5531, %v7710
        %v7836 = vmul.f32 %v5532, %v7715
        %v7837 = vmul.f32 %v5533, %v7720
        %v7838 = vmul.f32 %v5534, %v7725
        %v7839 = vmul.f32 %v5535, %v7730
        %v7840 = vmul.f32 %v5536, %v7735
        %v7841 = vmul.f32 %v5537, %v7740
        %v7842 = vmul.f32 %v5538, %v7745
        %v7843 = vmul.f32 %v5539, %v7750
        %v7844 = vmul.f32 %v5540, %v7755
        %v7845 = vmul.f32 %v5541, %v7760
        %v7846 = vmul.f32 %v5542, %v7765
        %v7847 = vmul.f32 %v5543, %v7770
        %v7848 = vmul.f32 %v5544, %v7775
        %v7849 = vmul.f32 %v5545, %v7780
        %v7850 = vmul.f32 %v5546, %v7785
        %v7851 = vmul.f32 %v5547, %v7790
        %v7852 = vmul.f32 %v5548, %v7795
        %v7853 = vmul.f32 %v5549, %v7800
        %v7854 = vmul.f32 %v5550, %v7805
        %v7855 = vmul.f32 %v5551, %v7810
        %v7856 = vmul.f32 %v5552, %v7815
        %v7857 = vmul.f32 %v5521, %v7820
        %v7858 = vmul.f32 %v5522, %v7825
        %7891 = vrot.lane.b32.xlu0 %v7827, 64
        %v7892 = vpop.permute.xlu0 %7891
        %7893 = vrot.lane.b32.xlu0 %v7828, 64
        %v7894 = vpop.permute.xlu0 %7893
        %7895 = vrot.lane.b32.xlu0 %v7829, 64
        %v7896 = vpop.permute.xlu0 %7895
        %7897 = vrot.lane.b32.xlu0 %v7830, 64
        %v7898 = vpop.permute.xlu0 %7897
        %7899 = vrot.lane.b32.xlu0 %v7831, 64
        %v7900 = vpop.permute.xlu0 %7899
        %7901 = vrot.lane.b32.xlu0 %v7832, 64
        %v7902 = vpop.permute.xlu0 %7901
        %7903 = vrot.lane.b32.xlu0 %v7833, 64
        %v7904 = vpop.permute.xlu0 %7903
        %7905 = vrot.lane.b32.xlu0 %v7834, 64
        %v7906 = vpop.permute.xlu0 %7905
        %7907 = vrot.lane.b32.xlu0 %v7835, 64
        %v7908 = vpop.permute.xlu0 %7907
        %7909 = vrot.lane.b32.xlu0 %v7836, 64
        %v7910 = vpop.permute.xlu0 %7909
        %7911 = vrot.lane.b32.xlu0 %v7837, 64
        %v7912 = vpop.permute.xlu0 %7911
        %7913 = vrot.lane.b32.xlu0 %v7838, 64
        %v7914 = vpop.permute.xlu0 %7913
        %7915 = vrot.lane.b32.xlu0 %v7839, 64
        %v7916 = vpop.permute.xlu0 %7915
        %7917 = vrot.lane.b32.xlu0 %v7840, 64
        %v7918 = vpop.permute.xlu0 %7917
        %7919 = vrot.lane.b32.xlu0 %v7841, 64
        %v7920 = vpop.permute.xlu0 %7919
        %7921 = vrot.lane.b32.xlu0 %v7842, 64
        %v7922 = vpop.permute.xlu0 %7921
        %7923 = vrot.lane.b32.xlu0 %v7843, 64
        %v7924 = vpop.permute.xlu0 %7923
        %7925 = vrot.lane.b32.xlu0 %v7844, 64
        %v7926 = vpop.permute.xlu0 %7925
        %7927 = vrot.lane.b32.xlu0 %v7845, 64
        %v7928 = vpop.permute.xlu0 %7927
        %7929 = vrot.lane.b32.xlu0 %v7846, 64
        %v7930 = vpop.permute.xlu0 %7929
        %7931 = vrot.lane.b32.xlu0 %v7847, 64
        %v7932 = vpop.permute.xlu0 %7931
        %7933 = vrot.lane.b32.xlu0 %v7848, 64
        %v7934 = vpop.permute.xlu0 %7933
        %7935 = vrot.lane.b32.xlu0 %v7849, 64
        %v7936 = vpop.permute.xlu0 %7935
        %7937 = vrot.lane.b32.xlu0 %v7850, 64
        %v7938 = vpop.permute.xlu0 %7937
        %7939 = vrot.lane.b32.xlu0 %v7851, 64
        %v7940 = vpop.permute.xlu0 %7939
        %7941 = vrot.lane.b32.xlu0 %v7852, 64
        %v7942 = vpop.permute.xlu0 %7941
        %7943 = vrot.lane.b32.xlu0 %v7853, 64
        %v7944 = vpop.permute.xlu0 %7943
        %7945 = vrot.lane.b32.xlu0 %v7854, 64
        %v7946 = vpop.permute.xlu0 %7945
        %7947 = vrot.lane.b32.xlu0 %v7855, 64
        %v7948 = vpop.permute.xlu0 %7947
        %7949 = vrot.lane.b32.xlu0 %v7856, 64
        %v7950 = vpop.permute.xlu0 %7949
        %7951 = vrot.lane.b32.xlu0 %v7857, 64
        %v7952 = vpop.permute.xlu0 %7951
        %7953 = vrot.lane.b32.xlu0 %v7858, 64
        %v7954 = vpop.permute.xlu0 %7953
        %7987 = vst.msk [vmem:[#allocation3 + $0x18] sm:$0xff] %vm6226, %v7892
        %7988 = vst.msk [vmem:[#allocation3 + $0x40] sm:$0xff] %vm6226, %v7894
        %7989 = vst.msk [vmem:[#allocation3 + $0x68] sm:$0xff] %vm6226, %v7896
        %7990 = vst.msk [vmem:[#allocation3 + $0x90] sm:$0xff] %vm6226, %v7898
        %7991 = vst.msk [vmem:[#allocation3 + $0xb8] sm:$0xff] %vm6226, %v7900
        %7992 = vst.msk [vmem:[#allocation3 + $0xe0] sm:$0xff] %vm6226, %v7902
        %7993 = vst.msk [vmem:[#allocation3 + $0x108] sm:$0xff] %vm6226, %v7904
        %7994 = vst.msk [vmem:[#allocation3 + $0x130] sm:$0xff] %vm6226, %v7906
        %7995 = vst.msk [vmem:[#allocation3 + $0x158] sm:$0xff] %vm6226, %v7908
        %7996 = vst.msk [vmem:[#allocation3 + $0x180] sm:$0xff] %vm6226, %v7910
        %7997 = vst.msk [vmem:[#allocation3 + $0x1a8] sm:$0xff] %vm6226, %v7912
        %7998 = vst.msk [vmem:[#allocation3 + $0x1d0] sm:$0xff] %vm6226, %v7914
        %7999 = vst.msk [vmem:[#allocation3 + $0x1f8] sm:$0xff] %vm6226, %v7916
        %8000 = vst.msk [vmem:[#allocation3 + $0x220] sm:$0xff] %vm6226, %v7918
        %8001 = vst.msk [vmem:[#allocation3 + $0x248] sm:$0xff] %vm6226, %v7920
        %8002 = vst.msk [vmem:[#allocation3 + $0x270] sm:$0xff] %vm6226, %v7922
        %8003 = vst.msk [vmem:[#allocation3 + $0x298] sm:$0xff] %vm6226, %v7924
        %8004 = vst.msk [vmem:[#allocation3 + $0x2c0] sm:$0xff] %vm6226, %v7926
        %8005 = vst.msk [vmem:[#allocation3 + $0x2e8] sm:$0xff] %vm6226, %v7928
        %8006 = vst.msk [vmem:[#allocation3 + $0x310] sm:$0xff] %vm6226, %v7930
        %8007 = vst.msk [vmem:[#allocation3 + $0x338] sm:$0xff] %vm6226, %v7932
        %8008 = vst.msk [vmem:[#allocation3 + $0x360] sm:$0xff] %vm6226, %v7934
        %8009 = vst.msk [vmem:[#allocation3 + $0x388] sm:$0xff] %vm6226, %v7936
        %8010 = vst.msk [vmem:[#allocation3 + $0x3b0] sm:$0xff] %vm6226, %v7938
        %8011 = vst.msk [vmem:[#allocation3 + $0x3d8] sm:$0xff] %vm6226, %v7940
        %8012 = vst.msk [vmem:[#allocation3 + $0x400] sm:$0xff] %vm6226, %v7942
        %8013 = vst.msk [vmem:[#allocation3 + $0x428] sm:$0xff] %vm6226, %v7944
        %8014 = vst.msk [vmem:[#allocation3 + $0x450] sm:$0xff] %vm6226, %v7946
        %8015 = vst.msk [vmem:[#allocation3 + $0x478] sm:$0xff] %vm6226, %v7948
        %8016 = vst.msk [vmem:[#allocation3 + $0x4a0] sm:$0xff] %vm6226, %v7950
        %8017 = vst.msk [vmem:[#allocation3 + $0x4c8] sm:$0xff] %vm6226, %v7952
        %8018 = vst.msk [vmem:[#allocation3 + $0x4f0] sm:$0xff] %vm6226, %v7954
        %v8019 = vld [vmem:[%s1] sm:$0xff]
        %v8020 = vld [vmem:[%s1 + $0x8] sm:$0xff]
        %v8021 = vld [vmem:[%s1 + $0x10] sm:$0xff]
        %v8022 = vld [vmem:[%s1 + $0x18] sm:$0xff]
        %v8023 = vld [vmem:[%s1 + $0x20] sm:$0xff]
        %v8024 = vld [vmem:[%s1 + $0x28] sm:$0xff]
        %v8025 = vld [vmem:[%s1 + $0x30] sm:$0xff]
        %v8026 = vld [vmem:[%s1 + $0x38] sm:$0xff]
        %v8027 = vld [vmem:[%s1 + $0x40] sm:$0xff]
        %v8028 = vld [vmem:[%s1 + $0x48] sm:$0xff]
        %v8029 = vld [vmem:[%s1 + $0x50] sm:$0xff]
        %v8030 = vld [vmem:[%s1 + $0x58] sm:$0xff]
        %v8031 = vld [vmem:[%s1 + $0x60] sm:$0xff]
        %v8032 = vld [vmem:[%s1 + $0x68] sm:$0xff]
        %v8033 = vld [vmem:[%s1 + $0x70] sm:$0xff]
        %v8034 = vld [vmem:[%s1 + $0x78] sm:$0xff]
        %v8035 = vld [vmem:[%s1 + $0x80] sm:$0xff]
        %v8036 = vld [vmem:[%s1 + $0x88] sm:$0xff]
        %v8037 = vld [vmem:[%s1 + $0x90] sm:$0xff]
        %v8038 = vld [vmem:[%s1 + $0x98] sm:$0xff]
        %v8039 = vld [vmem:[%s1 + $0xa0] sm:$0xff]
        %v8040 = vld [vmem:[%s1 + $0xa8] sm:$0xff]
        %v8041 = vld [vmem:[%s1 + $0xb0] sm:$0xff]
        %v8042 = vld [vmem:[%s1 + $0xb8] sm:$0xff]
        %v8043 = vld [vmem:[%s1 + $0xc0] sm:$0xff]
        %v8044 = vld [vmem:[%s1 + $0xc8] sm:$0xff]
        %v8045 = vld [vmem:[%s1 + $0xd0] sm:$0xff]
        %v8046 = vld [vmem:[%s1 + $0xd8] sm:$0xff]
        %v8047 = vld [vmem:[%s1 + $0xe0] sm:$0xff]
        %v8048 = vld [vmem:[%s1 + $0xe8] sm:$0xff]
        %v8049 = vld [vmem:[%s1 + $0xf0] sm:$0xff]
        %v8050 = vld [vmem:[%s1 + $0xf8] sm:$0xff]
        %8052 = vset.pattern.permute.xlu0 8
        %8053 = vperm.xlu0 %8052, %v8019
        %v8054 = vpop.permute.xlu0 %8053
        %8057 = vset.pattern.permute.xlu0 8
        %8058 = vperm.xlu0 %8057, %v8020
        %v8059 = vpop.permute.xlu0 %8058
        %8062 = vset.pattern.permute.xlu0 8
        %8063 = vperm.xlu0 %8062, %v8021
        %v8064 = vpop.permute.xlu0 %8063
        %8067 = vset.pattern.permute.xlu0 8
        %8068 = vperm.xlu0 %8067, %v8022
        %v8069 = vpop.permute.xlu0 %8068
        %8072 = vset.pattern.permute.xlu0 8
        %8073 = vperm.xlu0 %8072, %v8023
        %v8074 = vpop.permute.xlu0 %8073
        %8077 = vset.pattern.permute.xlu0 8
        %8078 = vperm.xlu0 %8077, %v8024
        %v8079 = vpop.permute.xlu0 %8078
        %8082 = vset.pattern.permute.xlu0 8
        %8083 = vperm.xlu0 %8082, %v8025
        %v8084 = vpop.permute.xlu0 %8083
        %8087 = vset.pattern.permute.xlu0 8
        %8088 = vperm.xlu0 %8087, %v8026
        %v8089 = vpop.permute.xlu0 %8088
        %8092 = vset.pattern.permute.xlu0 8
        %8093 = vperm.xlu0 %8092, %v8027
        %v8094 = vpop.permute.xlu0 %8093
        %8097 = vset.pattern.permute.xlu0 8
        %8098 = vperm.xlu0 %8097, %v8028
        %v8099 = vpop.permute.xlu0 %8098
        %8102 = vset.pattern.permute.xlu0 8
        %8103 = vperm.xlu0 %8102, %v8029
        %v8104 = vpop.permute.xlu0 %8103
        %8107 = vset.pattern.permute.xlu0 8
        %8108 = vperm.xlu0 %8107, %v8030
        %v8109 = vpop.permute.xlu0 %8108
        %8112 = vset.pattern.permute.xlu0 8
        %8113 = vperm.xlu0 %8112, %v8031
        %v8114 = vpop.permute.xlu0 %8113
        %8117 = vset.pattern.permute.xlu0 8
        %8118 = vperm.xlu0 %8117, %v8032
        %v8119 = vpop.permute.xlu0 %8118
        %8122 = vset.pattern.permute.xlu0 8
        %8123 = vperm.xlu0 %8122, %v8033
        %v8124 = vpop.permute.xlu0 %8123
        %8127 = vset.pattern.permute.xlu0 8
        %8128 = vperm.xlu0 %8127, %v8034
        %v8129 = vpop.permute.xlu0 %8128
        %8132 = vset.pattern.permute.xlu0 8
        %8133 = vperm.xlu0 %8132, %v8035
        %v8134 = vpop.permute.xlu0 %8133
        %8137 = vset.pattern.permute.xlu0 8
        %8138 = vperm.xlu0 %8137, %v8036
        %v8139 = vpop.permute.xlu0 %8138
        %8142 = vset.pattern.permute.xlu0 8
        %8143 = vperm.xlu0 %8142, %v8037
        %v8144 = vpop.permute.xlu0 %8143
        %8147 = vset.pattern.permute.xlu0 8
        %8148 = vperm.xlu0 %8147, %v8038
        %v8149 = vpop.permute.xlu0 %8148
        %8152 = vset.pattern.permute.xlu0 8
        %8153 = vperm.xlu0 %8152, %v8039
        %v8154 = vpop.permute.xlu0 %8153
        %8157 = vset.pattern.permute.xlu0 8
        %8158 = vperm.xlu0 %8157, %v8040
        %v8159 = vpop.permute.xlu0 %8158
        %8162 = vset.pattern.permute.xlu0 8
        %8163 = vperm.xlu0 %8162, %v8041
        %v8164 = vpop.permute.xlu0 %8163
        %8167 = vset.pattern.permute.xlu0 8
        %8168 = vperm.xlu0 %8167, %v8042
        %v8169 = vpop.permute.xlu0 %8168
        %8172 = vset.pattern.permute.xlu0 8
        %8173 = vperm.xlu0 %8172, %v8043
        %v8174 = vpop.permute.xlu0 %8173
        %8177 = vset.pattern.permute.xlu0 8
        %8178 = vperm.xlu0 %8177, %v8044
        %v8179 = vpop.permute.xlu0 %8178
        %8182 = vset.pattern.permute.xlu0 8
        %8183 = vperm.xlu0 %8182, %v8045
        %v8184 = vpop.permute.xlu0 %8183
        %8187 = vset.pattern.permute.xlu0 8
        %8188 = vperm.xlu0 %8187, %v8046
        %v8189 = vpop.permute.xlu0 %8188
        %8192 = vset.pattern.permute.xlu0 8
        %8193 = vperm.xlu0 %8192, %v8047
        %v8194 = vpop.permute.xlu0 %8193
        %8197 = vset.pattern.permute.xlu0 8
        %8198 = vperm.xlu0 %8197, %v8048
        %v8199 = vpop.permute.xlu0 %8198
        %8202 = vset.pattern.permute.xlu0 8
        %8203 = vperm.xlu0 %8202, %v8049
        %v8204 = vpop.permute.xlu0 %8203
        %8207 = vset.pattern.permute.xlu0 8
        %8208 = vperm.xlu0 %8207, %v8050
        %v8209 = vpop.permute.xlu0 %8208
        %v8211 = vmul.f32 %v6319, %v8054
        %v8212 = vmul.f32 %v6318, %v8059
        %v8213 = vmul.f32 %v6317, %v8064
        %v8214 = vmul.f32 %v6316, %v8069
        %v8215 = vmul.f32 %v6315, %v8074
        %v8216 = vmul.f32 %v6314, %v8079
        %v8217 = vmul.f32 %v6313, %v8084
        %v8218 = vmul.f32 %v6312, %v8089
        %v8219 = vmul.f32 %v6311, %v8094
        %v8220 = vmul.f32 %v6310, %v8099
        %v8221 = vmul.f32 %v6309, %v8104
        %v8222 = vmul.f32 %v6308, %v8109
        %v8223 = vmul.f32 %v6307, %v8114
        %v8224 = vmul.f32 %v6306, %v8119
        %v8225 = vmul.f32 %v6305, %v8124
        %v8226 = vmul.f32 %v6304, %v8129
        %v8227 = vmul.f32 %v6303, %v8134
        %v8228 = vmul.f32 %v6302, %v8139
        %v8229 = vmul.f32 %v6301, %v8144
        %v8230 = vmul.f32 %v6300, %v8149
        %v8231 = vmul.f32 %v6299, %v8154
        %v8232 = vmul.f32 %v6298, %v8159
        %v8233 = vmul.f32 %v6297, %v8164
        %v8234 = vmul.f32 %v6296, %v8169
        %v8235 = vmul.f32 %v6295, %v8174
        %v8236 = vmul.f32 %v6294, %v8179
        %v8237 = vmul.f32 %v6293, %v8184
        %v8238 = vmul.f32 %v6292, %v8189
        %v8239 = vmul.f32 %v6291, %v8194
        %v8240 = vmul.f32 %v6322, %v8199
        %v8241 = vmul.f32 %v6321, %v8204
        %v8242 = vmul.f32 %v6320, %v8209
        %8243 = vst.msk [vmem:[#allocation3 + $0x20] sm:$0xff] %vm4858, %v8211
        %8244 = vst.msk [vmem:[#allocation3 + $0x48] sm:$0xff] %vm4858, %v8212
        %8245 = vst.msk [vmem:[#allocation3 + $0x70] sm:$0xff] %vm4858, %v8213
        %8246 = vst.msk [vmem:[#allocation3 + $0x98] sm:$0xff] %vm4858, %v8214
        %8247 = vst.msk [vmem:[#allocation3 + $0xc0] sm:$0xff] %vm4858, %v8215
        %8248 = vst.msk [vmem:[#allocation3 + $0xe8] sm:$0xff] %vm4858, %v8216
        %8249 = vst.msk [vmem:[#allocation3 + $0x110] sm:$0xff] %vm4858, %v8217
        %8250 = vst.msk [vmem:[#allocation3 + $0x138] sm:$0xff] %vm4858, %v8218
        %8251 = vst.msk [vmem:[#allocation3 + $0x160] sm:$0xff] %vm4858, %v8219
        %8252 = vst.msk [vmem:[#allocation3 + $0x188] sm:$0xff] %vm4858, %v8220
        %8253 = vst.msk [vmem:[#allocation3 + $0x1b0] sm:$0xff] %vm4858, %v8221
        %8254 = vst.msk [vmem:[#allocation3 + $0x1d8] sm:$0xff] %vm4858, %v8222
        %8255 = vst.msk [vmem:[#allocation3 + $0x200] sm:$0xff] %vm4858, %v8223
        %8256 = vst.msk [vmem:[#allocation3 + $0x228] sm:$0xff] %vm4858, %v8224
        %8257 = vst.msk [vmem:[#allocation3 + $0x250] sm:$0xff] %vm4858, %v8225
        %8258 = vst.msk [vmem:[#allocation3 + $0x278] sm:$0xff] %vm4858, %v8226
        %8259 = vst.msk [vmem:[#allocation3 + $0x2a0] sm:$0xff] %vm4858, %v8227
        %8260 = vst.msk [vmem:[#allocation3 + $0x2c8] sm:$0xff] %vm4858, %v8228
        %8261 = vst.msk [vmem:[#allocation3 + $0x2f0] sm:$0xff] %vm4858, %v8229
        %8262 = vst.msk [vmem:[#allocation3 + $0x318] sm:$0xff] %vm4858, %v8230
        %8263 = vst.msk [vmem:[#allocation3 + $0x340] sm:$0xff] %vm4858, %v8231
        %8264 = vst.msk [vmem:[#allocation3 + $0x368] sm:$0xff] %vm4858, %v8232
        %8265 = vst.msk [vmem:[#allocation3 + $0x390] sm:$0xff] %vm4858, %v8233
        %8266 = vst.msk [vmem:[#allocation3 + $0x3b8] sm:$0xff] %vm4858, %v8234
        %8267 = vst.msk [vmem:[#allocation3 + $0x3e0] sm:$0xff] %vm4858, %v8235
        %8268 = vst.msk [vmem:[#allocation3 + $0x408] sm:$0xff] %vm4858, %v8236
        %8269 = vst.msk [vmem:[#allocation3 + $0x430] sm:$0xff] %vm4858, %v8237
        %8270 = vst.msk [vmem:[#allocation3 + $0x458] sm:$0xff] %vm4858, %v8238
        %8271 = vst.msk [vmem:[#allocation3 + $0x480] sm:$0xff] %vm4858, %v8239
        %8272 = vst.msk [vmem:[#allocation3 + $0x4a8] sm:$0xff] %vm4858, %v8240
        %8273 = vst.msk [vmem:[#allocation3 + $0x4d0] sm:$0xff] %vm4858, %v8241
        %8274 = vst.msk [vmem:[#allocation3 + $0x4f8] sm:$0xff] %vm4858, %v8242
        %v8275 = vld [vmem:[#allocation3] sm:$0xff]
        %v8276 = vld [vmem:[#allocation3 + $0x8] sm:$0xff]
        %v8277 = vld [vmem:[#allocation3 + $0x10] sm:$0xff]
        %v8278 = vld [vmem:[#allocation3 + $0x18] sm:$0xff]
        %v8279 = vld [vmem:[#allocation3 + $0x20] sm:$0xff]
        %v8280 = vld [vmem:[#allocation3 + $0x28] sm:$0xff]
        %v8281 = vld [vmem:[#allocation3 + $0x30] sm:$0xff]
        %v8282 = vld [vmem:[#allocation3 + $0x38] sm:$0xff]
        %v8283 = vld [vmem:[#allocation3 + $0x40] sm:$0xff]
        %v8284 = vld [vmem:[#allocation3 + $0x48] sm:$0xff]
        %v8285 = vld [vmem:[#allocation3 + $0x50] sm:$0xff]
        %v8286 = vld [vmem:[#allocation3 + $0x58] sm:$0xff]
        %v8287 = vld [vmem:[#allocation3 + $0x60] sm:$0xff]
        %v8288 = vld [vmem:[#allocation3 + $0x68] sm:$0xff]
        %v8289 = vld [vmem:[#allocation3 + $0x70] sm:$0xff]
        %v8290 = vld [vmem:[#allocation3 + $0x78] sm:$0xff]
        %v8291 = vld [vmem:[#allocation3 + $0x80] sm:$0xff]
        %v8292 = vld [vmem:[#allocation3 + $0x88] sm:$0xff]
        %v8293 = vld [vmem:[#allocation3 + $0x90] sm:$0xff]
        %v8294 = vld [vmem:[#allocation3 + $0x98] sm:$0xff]
        %v8295 = vld [vmem:[#allocation3 + $0xa0] sm:$0xff]
        %v8296 = vld [vmem:[#allocation3 + $0xa8] sm:$0xff]
        %v8297 = vld [vmem:[#allocation3 + $0xb0] sm:$0xff]
        %v8298 = vld [vmem:[#allocation3 + $0xb8] sm:$0xff]
        %v8299 = vld [vmem:[#allocation3 + $0xc0] sm:$0xff]
        %v8300 = vld [vmem:[#allocation3 + $0xc8] sm:$0xff]
        %v8301 = vld [vmem:[#allocation3 + $0xd0] sm:$0xff]
        %v8302 = vld [vmem:[#allocation3 + $0xd8] sm:$0xff]
        %v8303 = vld [vmem:[#allocation3 + $0xe0] sm:$0xff]
        %v8304 = vld [vmem:[#allocation3 + $0xe8] sm:$0xff]
        %v8305 = vld [vmem:[#allocation3 + $0xf0] sm:$0xff]
        %v8306 = vld [vmem:[#allocation3 + $0xf8] sm:$0xff]
        %v8307 = vld [vmem:[#allocation3 + $0x100] sm:$0xff]
        %v8308 = vld [vmem:[#allocation3 + $0x108] sm:$0xff]
        %v8309 = vld [vmem:[#allocation3 + $0x110] sm:$0xff]
        %v8310 = vld [vmem:[#allocation3 + $0x118] sm:$0xff]
        %v8311 = vld [vmem:[#allocation3 + $0x120] sm:$0xff]
        %v8312 = vld [vmem:[#allocation3 + $0x128] sm:$0xff]
        %v8313 = vld [vmem:[#allocation3 + $0x130] sm:$0xff]
        %v8314 = vld [vmem:[#allocation3 + $0x138] sm:$0xff]
        %v8315 = vld [vmem:[#allocation3 + $0x140] sm:$0xff]
        %v8316 = vld [vmem:[#allocation3 + $0x148] sm:$0xff]
        %v8317 = vld [vmem:[#allocation3 + $0x150] sm:$0xff]
        %v8318 = vld [vmem:[#allocation3 + $0x158] sm:$0xff]
        %v8319 = vld [vmem:[#allocation3 + $0x160] sm:$0xff]
        %v8320 = vld [vmem:[#allocation3 + $0x168] sm:$0xff]
        %v8321 = vld [vmem:[#allocation3 + $0x170] sm:$0xff]
        %v8322 = vld [vmem:[#allocation3 + $0x178] sm:$0xff]
        %v8323 = vld [vmem:[#allocation3 + $0x180] sm:$0xff]
        %v8324 = vld [vmem:[#allocation3 + $0x188] sm:$0xff]
        %v8325 = vld [vmem:[#allocation3 + $0x190] sm:$0xff]
        %v8326 = vld [vmem:[#allocation3 + $0x198] sm:$0xff]
        %v8327 = vld [vmem:[#allocation3 + $0x1a0] sm:$0xff]
        %v8328 = vld [vmem:[#allocation3 + $0x1a8] sm:$0xff]
        %v8329 = vld [vmem:[#allocation3 + $0x1b0] sm:$0xff]
        %v8330 = vld [vmem:[#allocation3 + $0x1b8] sm:$0xff]
        %v8331 = vld [vmem:[#allocation3 + $0x1c0] sm:$0xff]
        %v8332 = vld [vmem:[#allocation3 + $0x1c8] sm:$0xff]
        %v8333 = vld [vmem:[#allocation3 + $0x1d0] sm:$0xff]
        %v8334 = vld [vmem:[#allocation3 + $0x1d8] sm:$0xff]
        %v8335 = vld [vmem:[#allocation3 + $0x1e0] sm:$0xff]
        %v8336 = vld [vmem:[#allocation3 + $0x1e8] sm:$0xff]
        %v8337 = vld [vmem:[#allocation3 + $0x1f0] sm:$0xff]
        %v8338 = vld [vmem:[#allocation3 + $0x1f8] sm:$0xff]
        %v8339 = vld [vmem:[#allocation3 + $0x200] sm:$0xff]
        %v8340 = vld [vmem:[#allocation3 + $0x208] sm:$0xff]
        %v8341 = vld [vmem:[#allocation3 + $0x210] sm:$0xff]
        %v8342 = vld [vmem:[#allocation3 + $0x218] sm:$0xff]
        %v8343 = vld [vmem:[#allocation3 + $0x220] sm:$0xff]
        %v8344 = vld [vmem:[#allocation3 + $0x228] sm:$0xff]
        %v8345 = vld [vmem:[#allocation3 + $0x230] sm:$0xff]
        %v8346 = vld [vmem:[#allocation3 + $0x238] sm:$0xff]
        %v8347 = vld [vmem:[#allocation3 + $0x240] sm:$0xff]
        %v8348 = vld [vmem:[#allocation3 + $0x248] sm:$0xff]
        %v8349 = vld [vmem:[#allocation3 + $0x250] sm:$0xff]
        %v8350 = vld [vmem:[#allocation3 + $0x258] sm:$0xff]
        %v8351 = vld [vmem:[#allocation3 + $0x260] sm:$0xff]
        %v8352 = vld [vmem:[#allocation3 + $0x268] sm:$0xff]
        %v8353 = vld [vmem:[#allocation3 + $0x270] sm:$0xff]
        %v8354 = vld [vmem:[#allocation3 + $0x278] sm:$0xff]
        %v8355 = vld [vmem:[#allocation3 + $0x280] sm:$0xff]
        %v8356 = vld [vmem:[#allocation3 + $0x288] sm:$0xff]
        %v8357 = vld [vmem:[#allocation3 + $0x290] sm:$0xff]
        %v8358 = vld [vmem:[#allocation3 + $0x298] sm:$0xff]
        %v8359 = vld [vmem:[#allocation3 + $0x2a0] sm:$0xff]
        %v8360 = vld [vmem:[#allocation3 + $0x2a8] sm:$0xff]
        %v8361 = vld [vmem:[#allocation3 + $0x2b0] sm:$0xff]
        %v8362 = vld [vmem:[#allocation3 + $0x2b8] sm:$0xff]
        %v8363 = vld [vmem:[#allocation3 + $0x2c0] sm:$0xff]
        %v8364 = vld [vmem:[#allocation3 + $0x2c8] sm:$0xff]
        %v8365 = vld [vmem:[#allocation3 + $0x2d0] sm:$0xff]
        %v8366 = vld [vmem:[#allocation3 + $0x2d8] sm:$0xff]
        %v8367 = vld [vmem:[#allocation3 + $0x2e0] sm:$0xff]
        %v8368 = vld [vmem:[#allocation3 + $0x2e8] sm:$0xff]
        %v8369 = vld [vmem:[#allocation3 + $0x2f0] sm:$0xff]
        %v8370 = vld [vmem:[#allocation3 + $0x2f8] sm:$0xff]
        %v8371 = vld [vmem:[#allocation3 + $0x300] sm:$0xff]
        %v8372 = vld [vmem:[#allocation3 + $0x308] sm:$0xff]
        %v8373 = vld [vmem:[#allocation3 + $0x310] sm:$0xff]
        %v8374 = vld [vmem:[#allocation3 + $0x318] sm:$0xff]
        %v8375 = vld [vmem:[#allocation3 + $0x320] sm:$0xff]
        %v8376 = vld [vmem:[#allocation3 + $0x328] sm:$0xff]
        %v8377 = vld [vmem:[#allocation3 + $0x330] sm:$0xff]
        %v8378 = vld [vmem:[#allocation3 + $0x338] sm:$0xff]
        %v8379 = vld [vmem:[#allocation3 + $0x340] sm:$0xff]
        %v8380 = vld [vmem:[#allocation3 + $0x348] sm:$0xff]
        %v8381 = vld [vmem:[#allocation3 + $0x350] sm:$0xff]
        %v8382 = vld [vmem:[#allocation3 + $0x358] sm:$0xff]
        %v8383 = vld [vmem:[#allocation3 + $0x360] sm:$0xff]
        %v8384 = vld [vmem:[#allocation3 + $0x368] sm:$0xff]
        %v8385 = vld [vmem:[#allocation3 + $0x370] sm:$0xff]
        %v8386 = vld [vmem:[#allocation3 + $0x378] sm:$0xff]
        %v8387 = vld [vmem:[#allocation3 + $0x380] sm:$0xff]
        %v8388 = vld [vmem:[#allocation3 + $0x388] sm:$0xff]
        %v8389 = vld [vmem:[#allocation3 + $0x390] sm:$0xff]
        %v8390 = vld [vmem:[#allocation3 + $0x398] sm:$0xff]
        %v8391 = vld [vmem:[#allocation3 + $0x3a0] sm:$0xff]
        %v8392 = vld [vmem:[#allocation3 + $0x3a8] sm:$0xff]
        %v8393 = vld [vmem:[#allocation3 + $0x3b0] sm:$0xff]
        %v8394 = vld [vmem:[#allocation3 + $0x3b8] sm:$0xff]
        %v8395 = vld [vmem:[#allocation3 + $0x3c0] sm:$0xff]
        %v8396 = vld [vmem:[#allocation3 + $0x3c8] sm:$0xff]
        %v8397 = vld [vmem:[#allocation3 + $0x3d0] sm:$0xff]
        %v8398 = vld [vmem:[#allocation3 + $0x3d8] sm:$0xff]
        %v8399 = vld [vmem:[#allocation3 + $0x3e0] sm:$0xff]
        %v8400 = vld [vmem:[#allocation3 + $0x3e8] sm:$0xff]
        %v8401 = vld [vmem:[#allocation3 + $0x3f0] sm:$0xff]
        %v8402 = vld [vmem:[#allocation3 + $0x3f8] sm:$0xff]
        %v8403 = vld [vmem:[#allocation3 + $0x400] sm:$0xff]
        %v8404 = vld [vmem:[#allocation3 + $0x408] sm:$0xff]
        %v8405 = vld [vmem:[#allocation3 + $0x410] sm:$0xff]
        %v8406 = vld [vmem:[#allocation3 + $0x418] sm:$0xff]
        %v8407 = vld [vmem:[#allocation3 + $0x420] sm:$0xff]
        %v8408 = vld [vmem:[#allocation3 + $0x428] sm:$0xff]
        %v8409 = vld [vmem:[#allocation3 + $0x430] sm:$0xff]
        %v8410 = vld [vmem:[#allocation3 + $0x438] sm:$0xff]
        %v8411 = vld [vmem:[#allocation3 + $0x440] sm:$0xff]
        %v8412 = vld [vmem:[#allocation3 + $0x448] sm:$0xff]
        %v8413 = vld [vmem:[#allocation3 + $0x450] sm:$0xff]
        %v8414 = vld [vmem:[#allocation3 + $0x458] sm:$0xff]
        %v8415 = vld [vmem:[#allocation3 + $0x460] sm:$0xff]
        %v8416 = vld [vmem:[#allocation3 + $0x468] sm:$0xff]
        %v8417 = vld [vmem:[#allocation3 + $0x470] sm:$0xff]
        %v8418 = vld [vmem:[#allocation3 + $0x478] sm:$0xff]
        %v8419 = vld [vmem:[#allocation3 + $0x480] sm:$0xff]
        %v8420 = vld [vmem:[#allocation3 + $0x488] sm:$0xff]
        %v8421 = vld [vmem:[#allocation3 + $0x490] sm:$0xff]
        %v8422 = vld [vmem:[#allocation3 + $0x498] sm:$0xff]
        %v8423 = vld [vmem:[#allocation3 + $0x4a0] sm:$0xff]
        %v8424 = vld [vmem:[#allocation3 + $0x4a8] sm:$0xff]
        %v8425 = vld [vmem:[#allocation3 + $0x4b0] sm:$0xff]
        %v8426 = vld [vmem:[#allocation3 + $0x4b8] sm:$0xff]
        %v8427 = vld [vmem:[#allocation3 + $0x4c0] sm:$0xff]
        %v8428 = vld [vmem:[#allocation3 + $0x4c8] sm:$0xff]
        %v8429 = vld [vmem:[#allocation3 + $0x4d0] sm:$0xff]
        %v8430 = vld [vmem:[#allocation3 + $0x4d8] sm:$0xff]
        %v8431 = vld [vmem:[#allocation3 + $0x4e0] sm:$0xff]
        %v8432 = vld [vmem:[#allocation3 + $0x4e8] sm:$0xff]
        %v8433 = vld [vmem:[#allocation3 + $0x4f0] sm:$0xff]
        %v8434 = vld [vmem:[#allocation3 + $0x4f8] sm:$0xff]
        %v8435 = vpack.c.bf16 %v8280, %v8275
        %v8436 = vpack.c.bf16 %v8281, %v8276
        %v8437 = vpack.c.bf16 %v8282, %v8277
        %v8438 = vpack.c.bf16 %v8283, %v8278
        %v8439 = vpack.c.bf16 %v8284, %v8279
        %v8440 = vpack.c.bf16 %v8290, %v8285
        %v8441 = vpack.c.bf16 %v8291, %v8286
        %v8442 = vpack.c.bf16 %v8292, %v8287
        %v8443 = vpack.c.bf16 %v8293, %v8288
        %v8444 = vpack.c.bf16 %v8294, %v8289
        %v8445 = vpack.c.bf16 %v8300, %v8295
        %v8446 = vpack.c.bf16 %v8301, %v8296
        %v8447 = vpack.c.bf16 %v8302, %v8297
        %v8448 = vpack.c.bf16 %v8303, %v8298
        %v8449 = vpack.c.bf16 %v8304, %v8299
        %v8450 = vpack.c.bf16 %v8310, %v8305
        %v8451 = vpack.c.bf16 %v8311, %v8306
        %v8452 = vpack.c.bf16 %v8312, %v8307
        %v8453 = vpack.c.bf16 %v8313, %v8308
        %v8454 = vpack.c.bf16 %v8314, %v8309
        %v8455 = vpack.c.bf16 %v8320, %v8315
        %v8456 = vpack.c.bf16 %v8321, %v8316
        %v8457 = vpack.c.bf16 %v8322, %v8317
        %v8458 = vpack.c.bf16 %v8323, %v8318
        %v8459 = vpack.c.bf16 %v8324, %v8319
        %v8460 = vpack.c.bf16 %v8330, %v8325
        %v8461 = vpack.c.bf16 %v8331, %v8326
        %v8462 = vpack.c.bf16 %v8332, %v8327
        %v8463 = vpack.c.bf16 %v8333, %v8328
        %v8464 = vpack.c.bf16 %v8334, %v8329
        %v8465 = vpack.c.bf16 %v8340, %v8335
        %v8466 = vpack.c.bf16 %v8341, %v8336
        %v8467 = vpack.c.bf16 %v8342, %v8337
        %v8468 = vpack.c.bf16 %v8343, %v8338
        %v8469 = vpack.c.bf16 %v8344, %v8339
        %v8470 = vpack.c.bf16 %v8350, %v8345
        %v8471 = vpack.c.bf16 %v8351, %v8346
        %v8472 = vpack.c.bf16 %v8352, %v8347
        %v8473 = vpack.c.bf16 %v8353, %v8348
        %v8474 = vpack.c.bf16 %v8354, %v8349
        %v8475 = vpack.c.bf16 %v8360, %v8355
        %v8476 = vpack.c.bf16 %v8361, %v8356
        %v8477 = vpack.c.bf16 %v8362, %v8357
        %v8478 = vpack.c.bf16 %v8363, %v8358
        %v8479 = vpack.c.bf16 %v8364, %v8359
        %v8480 = vpack.c.bf16 %v8370, %v8365
        %v8481 = vpack.c.bf16 %v8371, %v8366
        %v8482 = vpack.c.bf16 %v8372, %v8367
        %v8483 = vpack.c.bf16 %v8373, %v8368
        %v8484 = vpack.c.bf16 %v8374, %v8369
        %v8485 = vpack.c.bf16 %v8380, %v8375
        %v8486 = vpack.c.bf16 %v8381, %v8376
        %v8487 = vpack.c.bf16 %v8382, %v8377
        %v8488 = vpack.c.bf16 %v8383, %v8378
        %v8489 = vpack.c.bf16 %v8384, %v8379
        %v8490 = vpack.c.bf16 %v8390, %v8385
        %v8491 = vpack.c.bf16 %v8391, %v8386
        %v8492 = vpack.c.bf16 %v8392, %v8387
        %v8493 = vpack.c.bf16 %v8393, %v8388
        %v8494 = vpack.c.bf16 %v8394, %v8389
        %v8495 = vpack.c.bf16 %v8400, %v8395
        %v8496 = vpack.c.bf16 %v8401, %v8396
        %v8497 = vpack.c.bf16 %v8402, %v8397
        %v8498 = vpack.c.bf16 %v8403, %v8398
        %v8499 = vpack.c.bf16 %v8404, %v8399
        %v8500 = vpack.c.bf16 %v8410, %v8405
        %v8501 = vpack.c.bf16 %v8411, %v8406
        %v8502 = vpack.c.bf16 %v8412, %v8407
        %v8503 = vpack.c.bf16 %v8413, %v8408
        %v8504 = vpack.c.bf16 %v8414, %v8409
        %v8505 = vpack.c.bf16 %v8420, %v8415
        %v8506 = vpack.c.bf16 %v8421, %v8416
        %v8507 = vpack.c.bf16 %v8422, %v8417
        %v8508 = vpack.c.bf16 %v8423, %v8418
        %v8509 = vpack.c.bf16 %v8424, %v8419
        %v8510 = vpack.c.bf16 %v8430, %v8425
        %v8511 = vpack.c.bf16 %v8431, %v8426
        %v8512 = vpack.c.bf16 %v8432, %v8427
        %v8513 = vpack.c.bf16 %v8433, %v8428
        %v8514 = vpack.c.bf16 %v8434, %v8429
        %v8515 = vld [vmem:[%s10] sm:$0xf]
        %v8516 = vld [vmem:[%s10 + $0x4] sm:$0xf]
        %v8517 = vld [vmem:[%s10 + $0x8] sm:$0xf]
        %v8518 = vld [vmem:[%s10 + $0xc] sm:$0xf]
        %v8519 = vld [vmem:[%s10 + $0x10] sm:$0xf]
        %v8520 = vld [vmem:[%s10 + $0x14] sm:$0xf]
        %v8521 = vld [vmem:[%s10 + $0x18] sm:$0xf]
        %v8522 = vld [vmem:[%s10 + $0x1c] sm:$0xf]
        %v8523 = vld [vmem:[%s10 + $0x20] sm:$0xf]
        %v8524 = vld [vmem:[%s10 + $0x24] sm:$0xf]
        %v8525 = vld [vmem:[%s10 + $0x28] sm:$0xf]
        %v8526 = vld [vmem:[%s10 + $0x2c] sm:$0xf]
        %v8527 = vld [vmem:[%s10 + $0x30] sm:$0xf]
        %v8528 = vld [vmem:[%s10 + $0x34] sm:$0xf]
        %v8529 = vld [vmem:[%s10 + $0x38] sm:$0xf]
        %v8530 = vld [vmem:[%s10 + $0x3c] sm:$0xf]
        %v8531 = vld [vmem:[%s10 + $0x40] sm:$0xf]
        %v8532 = vld [vmem:[%s10 + $0x44] sm:$0xf]
        %v8533 = vld [vmem:[%s10 + $0x48] sm:$0xf]
        %v8534 = vld [vmem:[%s10 + $0x4c] sm:$0xf]
        %v8535 = vld [vmem:[%s10 + $0x50] sm:$0xf]
        %v8536 = vld [vmem:[%s10 + $0x54] sm:$0xf]
        %v8537 = vld [vmem:[%s10 + $0x58] sm:$0xf]
        %v8538 = vld [vmem:[%s10 + $0x5c] sm:$0xf]
        %v8539 = vld [vmem:[%s10 + $0x60] sm:$0xf]
        %v8540 = vld [vmem:[%s10 + $0x64] sm:$0xf]
        %v8541 = vld [vmem:[%s10 + $0x68] sm:$0xf]
        %v8542 = vld [vmem:[%s10 + $0x6c] sm:$0xf]
        %v8543 = vld [vmem:[%s10 + $0x70] sm:$0xf]
        %v8544 = vld [vmem:[%s10 + $0x74] sm:$0xf]
        %v8545 = vld [vmem:[%s10 + $0x78] sm:$0xf]
        %v8546 = vld [vmem:[%s10 + $0x7c] sm:$0xf]
        %v8547 = vld [vmem:[%s10 + $0x80] sm:$0xf]
        %v8548 = vld [vmem:[%s10 + $0x84] sm:$0xf]
        %v8549 = vld [vmem:[%s10 + $0x88] sm:$0xf]
        %v8550 = vld [vmem:[%s10 + $0x8c] sm:$0xf]
        %v8551 = vld [vmem:[%s10 + $0x90] sm:$0xf]
        %v8552 = vld [vmem:[%s10 + $0x94] sm:$0xf]
        %v8553 = vld [vmem:[%s10 + $0x98] sm:$0xf]
        %v8554 = vld [vmem:[%s10 + $0x9c] sm:$0xf]
        %v8555 = vld [vmem:[%s10 + $0xa0] sm:$0xf]
        %v8556 = vld [vmem:[%s10 + $0xa4] sm:$0xf]
        %v8557 = vld [vmem:[%s10 + $0xa8] sm:$0xf]
        %v8558 = vld [vmem:[%s10 + $0xac] sm:$0xf]
        %v8559 = vld [vmem:[%s10 + $0xb0] sm:$0xf]
        %v8560 = vld [vmem:[%s10 + $0xb4] sm:$0xf]
        %v8561 = vld [vmem:[%s10 + $0xb8] sm:$0xf]
        %v8562 = vld [vmem:[%s10 + $0xbc] sm:$0xf]
        %v8563 = vld [vmem:[%s10 + $0xc0] sm:$0xf]
        %v8564 = vld [vmem:[%s10 + $0xc4] sm:$0xf]
        %v8565 = vld [vmem:[%s10 + $0xc8] sm:$0xf]
        %v8566 = vld [vmem:[%s10 + $0xcc] sm:$0xf]
        %v8567 = vld [vmem:[%s10 + $0xd0] sm:$0xf]
        %v8568 = vld [vmem:[%s10 + $0xd4] sm:$0xf]
        %v8569 = vld [vmem:[%s10 + $0xd8] sm:$0xf]
        %v8570 = vld [vmem:[%s10 + $0xdc] sm:$0xf]
        %v8571 = vld [vmem:[%s10 + $0xe0] sm:$0xf]
        %v8572 = vld [vmem:[%s10 + $0xe4] sm:$0xf]
        %v8573 = vld [vmem:[%s10 + $0xe8] sm:$0xf]
        %v8574 = vld [vmem:[%s10 + $0xec] sm:$0xf]
        %v8575 = vld [vmem:[%s10 + $0xf0] sm:$0xf]
        %v8576 = vld [vmem:[%s10 + $0xf4] sm:$0xf]
        %v8577 = vld [vmem:[%s10 + $0xf8] sm:$0xf]
        %v8578 = vld [vmem:[%s10 + $0xfc] sm:$0xf]
        %v8579 = vld [vmem:[%s10 + $0x100] sm:$0xf]
        %v8580 = vld [vmem:[%s10 + $0x104] sm:$0xf]
        %v8581 = vld [vmem:[%s10 + $0x108] sm:$0xf]
        %v8582 = vld [vmem:[%s10 + $0x10c] sm:$0xf]
        %v8583 = vld [vmem:[%s10 + $0x110] sm:$0xf]
        %v8584 = vld [vmem:[%s10 + $0x114] sm:$0xf]
        %v8585 = vld [vmem:[%s10 + $0x118] sm:$0xf]
        %v8586 = vld [vmem:[%s10 + $0x11c] sm:$0xf]
        %v8588 = vlaneseq
        %v8589 = vshrl.u32 %v8588, 7
        %v8590 = vsub.s32 0, %v8589
        %v8591 = vrot.slane %v5553, %v8590
        %v8665 = vunpack.c.l.b16 %v8515
        %v8666 = vunpack.c.l.b16 %v8516
        %v8667 = vunpack.c.l.b16 %v8517
        %v8668 = vunpack.c.l.b16 %v8518
        %v8669 = vunpack.c.l.b16 %v8519
        %v8670 = vunpack.c.l.b16 %v8520
        %v8671 = vunpack.c.l.b16 %v8521
        %v8672 = vunpack.c.l.b16 %v8522
        %v8673 = vunpack.c.l.b16 %v8523
        %v8674 = vunpack.c.l.b16 %v8524
        %v8675 = vunpack.c.l.b16 %v8525
        %v8676 = vunpack.c.l.b16 %v8526
        %v8677 = vunpack.c.l.b16 %v8527
        %v8678 = vunpack.c.l.b16 %v8528
        %v8679 = vunpack.c.l.b16 %v8529
        %v8680 = vunpack.c.l.b16 %v8530
        %v8681 = vunpack.c.l.b16 %v8531
        %v8682 = vunpack.c.l.b16 %v8532
        %v8683 = vunpack.c.l.b16 %v8533
        %v8684 = vunpack.c.l.b16 %v8534
        %v8685 = vunpack.c.l.b16 %v8535
        %v8686 = vunpack.c.l.b16 %v8536
        %v8687 = vunpack.c.l.b16 %v8537
        %v8688 = vunpack.c.l.b16 %v8538
        %v8689 = vunpack.c.l.b16 %v8539
        %v8690 = vunpack.c.l.b16 %v8540
        %v8691 = vunpack.c.l.b16 %v8541
        %v8692 = vunpack.c.l.b16 %v8542
        %v8693 = vunpack.c.l.b16 %v8543
        %v8694 = vunpack.c.l.b16 %v8544
        %v8695 = vunpack.c.l.b16 %v8545
        %v8696 = vunpack.c.l.b16 %v8546
        %v8697 = vunpack.c.l.b16 %v8547
        %v8698 = vunpack.c.l.b16 %v8548
        %v8699 = vunpack.c.l.b16 %v8549
        %v8700 = vunpack.c.l.b16 %v8550
        %v8701 = vunpack.c.l.b16 %v8551
        %v8702 = vunpack.c.l.b16 %v8552
        %v8703 = vunpack.c.l.b16 %v8553
        %v8704 = vunpack.c.l.b16 %v8554
        %v8705 = vunpack.c.l.b16 %v8555
        %v8706 = vunpack.c.l.b16 %v8556
        %v8707 = vunpack.c.l.b16 %v8557
        %v8708 = vunpack.c.l.b16 %v8558
        %v8709 = vunpack.c.l.b16 %v8559
        %v8710 = vunpack.c.l.b16 %v8560
        %v8711 = vunpack.c.l.b16 %v8561
        %v8712 = vunpack.c.l.b16 %v8562
        %v8713 = vunpack.c.l.b16 %v8563
        %v8714 = vunpack.c.l.b16 %v8564
        %v8715 = vunpack.c.l.b16 %v8565
        %v8716 = vunpack.c.l.b16 %v8566
        %v8717 = vunpack.c.l.b16 %v8567
        %v8718 = vunpack.c.l.b16 %v8568
        %v8719 = vunpack.c.l.b16 %v8569
        %v8720 = vunpack.c.l.b16 %v8570
        %v8721 = vunpack.c.l.b16 %v8571
        %v8722 = vunpack.c.l.b16 %v8572
        %v8723 = vunpack.c.l.b16 %v8573
        %v8724 = vunpack.c.l.b16 %v8574
        %v8725 = vunpack.c.l.b16 %v8575
        %v8726 = vunpack.c.l.b16 %v8576
        %v8727 = vunpack.c.l.b16 %v8577
        %v8728 = vunpack.c.l.b16 %v8578
        %v8729 = vunpack.c.l.b16 %v8579
        %v8730 = vunpack.c.l.b16 %v8580
        %v8731 = vunpack.c.l.b16 %v8581
        %v8732 = vunpack.c.l.b16 %v8582
        %v8733 = vunpack.c.l.b16 %v8583
        %v8734 = vunpack.c.l.b16 %v8584
        %v8735 = vunpack.c.l.b16 %v8585
        %v8736 = vunpack.c.l.b16 %v8586
        %v8737 = vpack.c.b16 %v8666, %v8665
        %v8738 = vpack.c.b16 %v8668, %v8667
        %v8739 = vpack.c.b16 %v8670, %v8669
        %v8740 = vpack.c.b16 %v8672, %v8671
        %v8741 = vpack.c.b16 %v8674, %v8673
        %v8742 = vpack.c.b16 %v8676, %v8675
        %v8743 = vpack.c.b16 %v8678, %v8677
        %v8744 = vpack.c.b16 %v8680, %v8679
        %v8745 = vpack.c.b16 %v8682, %v8681
        %v8746 = vpack.c.b16 %v8684, %v8683
        %v8747 = vpack.c.b16 %v8686, %v8685
        %v8748 = vpack.c.b16 %v8688, %v8687
        %v8749 = vpack.c.b16 %v8690, %v8689
        %v8750 = vpack.c.b16 %v8692, %v8691
        %v8751 = vpack.c.b16 %v8694, %v8693
        %v8752 = vpack.c.b16 %v8696, %v8695
        %v8753 = vpack.c.b16 %v8698, %v8697
        %v8754 = vpack.c.b16 %v8700, %v8699
        %v8755 = vpack.c.b16 %v8702, %v8701
        %v8756 = vpack.c.b16 %v8704, %v8703
        %v8757 = vpack.c.b16 %v8706, %v8705
        %v8758 = vpack.c.b16 %v8708, %v8707
        %v8759 = vpack.c.b16 %v8710, %v8709
        %v8760 = vpack.c.b16 %v8712, %v8711
        %v8761 = vpack.c.b16 %v8714, %v8713
        %v8762 = vpack.c.b16 %v8716, %v8715
        %v8763 = vpack.c.b16 %v8718, %v8717
        %v8764 = vpack.c.b16 %v8720, %v8719
        %v8765 = vpack.c.b16 %v8722, %v8721
        %v8766 = vpack.c.b16 %v8724, %v8723
        %v8767 = vpack.c.b16 %v8726, %v8725
        %v8768 = vpack.c.b16 %v8728, %v8727
        %v8769 = vpack.c.b16 %v8730, %v8729
        %v8770 = vpack.c.b16 %v8732, %v8731
        %v8771 = vpack.c.b16 %v8734, %v8733
        %v8772 = vpack.c.b16 %v8736, %v8735
        %v8810 = vsel %vm4858, %v8439, 0
        %v8813 = vsel %vm4858, %v8444, 0
        %v8816 = vsel %vm4858, %v8449, 0
        %v8819 = vsel %vm4858, %v8454, 0
        %v8822 = vsel %vm4858, %v8459, 0
        %v8825 = vsel %vm4858, %v8464, 0
        %v8828 = vsel %vm4858, %v8469, 0
        %v8831 = vsel %vm4858, %v8474, 0
        %v8834 = vsel %vm4858, %v8479, 0
        %v8837 = vsel %vm4858, %v8484, 0
        %v8840 = vsel %vm4858, %v8489, 0
        %v8843 = vsel %vm4858, %v8494, 0
        %v8846 = vsel %vm4858, %v8499, 0
        %v8849 = vsel %vm4858, %v8504, 0
        %v8852 = vsel %vm4858, %v8509, 0
        %v8855 = vsel %vm4858, %v8514, 0
        %8857 = vmatprep.subr.bf16.mxu0 0
        %8858 = vmatpush1.bf16.msra.mxu0 %v8737
        %8859 = vmatprep.subr.bf16.mxu0 0
        %8860 = vmatpush1.bf16.msra.mxu0 %v8738
        %8861 = vmatprep.subr.bf16.mxu0 0
        %8862 = vmatpush1.bf16.msra.mxu0 %v8739
        %8863 = vmatprep.subr.bf16.mxu0 0
        %8864 = vmatpush1.bf16.msra.mxu0 %v8740
        %8865 = vmatprep.subr.bf16.mxu0 0
        %8866 = vmatpush1.bf16.msra.mxu0 %v8741
        %8867 = vmatprep.subr.bf16.mxu0 0
        %8868 = vmatpush1.bf16.msra.mxu0 %v8742
        %8869 = vmatprep.subr.bf16.mxu0 0
        %8870 = vmatpush1.bf16.msra.mxu0 %v8743
        %8871 = vmatprep.subr.bf16.mxu0 0
        %8872 = vmatpush1.bf16.msra.mxu0 %v8744
        %8873 = vmatprep.subr.bf16.mxu0 0
        %8874 = vmatpush1.bf16.msra.mxu0 %v8745
        %8875 = vmatprep.subr.bf16.mxu0 0
        %8876 = vmatpush1.bf16.msra.mxu0 %v8746
        %8877 = vmatprep.subr.bf16.mxu0 0
        %8878 = vmatpush1.bf16.msra.mxu0 %v8747
        %8879 = vmatprep.subr.bf16.mxu0 0
        %8880 = vmatpush1.bf16.msra.mxu0 %v8748
        %8881 = vmatprep.subr.bf16.mxu0 0
        %8882 = vmatpush1.bf16.msra.mxu0 %v8749
        %8883 = vmatprep.subr.bf16.mxu0 0
        %8884 = vmatpush1.bf16.msra.mxu0 %v8750
        %8885 = vmatprep.subr.bf16.mxu0 0
        %8886 = vmatpush1.bf16.msra.mxu0 %v8751
        %8887 = vmatprep.subr.bf16.mxu0 0
        %8888 = vmatpush1.bf16.msra.mxu0 %v8752
        %8889 = vmatprep.mubr.bf16.mxu0 %v8436
        %8890 = vmatmul.mubr.bf16.gmra.mrb[0].mxu0 %v8435
        %v8891 = vpop.f32.mrb[0].mxu0
        %v8892 = vadd.f32 %v8591, %v8891
        %v8893 = vpop.f32.mrb[0].mxu0
        %v8894 = vpop.f32.mrb[0].mxu0
        %v8895 = vadd.f32 %v8591, %v8894
        %v8896 = vpop.f32.mrb[0].mxu0
        %8897 = vmatprep.mubr.bf16.mxu0 %v8441
        %8898 = vmatmul.mubr.bf16.gmra.mrb[0].mxu0 %v8440
        %v8899 = vpop.f32.mrb[0].mxu0
        %v8900 = vadd.f32 %v8591, %v8899
        %v8901 = vpop.f32.mrb[0].mxu0
        %v8902 = vpop.f32.mrb[0].mxu0
        %v8903 = vadd.f32 %v8591, %v8902
        %v8904 = vpop.f32.mrb[0].mxu0
        %8905 = vmatprep.mubr.bf16.mxu0 %v8446
        %8906 = vmatmul.mubr.bf16.gmra.mrb[0].mxu0 %v8445
        %v8907 = vpop.f32.mrb[0].mxu0
        %v8908 = vadd.f32 %v8591, %v8907
        %v8909 = vpop.f32.mrb[0].mxu0
        %v8910 = vpop.f32.mrb[0].mxu0
        %v8911 = vadd.f32 %v8591, %v8910
        %v8912 = vpop.f32.mrb[0].mxu0
        %8913 = vmatprep.mubr.bf16.mxu0 %v8451
        %8914 = vmatmul.mubr.bf16.gmra.mrb[0].mxu0 %v8450
        %v8915 = vpop.f32.mrb[0].mxu0
        %v8916 = vadd.f32 %v8591, %v8915
        %v8917 = vpop.f32.mrb[0].mxu0
        %v8918 = vpop.f32.mrb[0].mxu0
        %v8919 = vadd.f32 %v8591, %v8918
        %v8920 = vpop.f32.mrb[0].mxu0
        %8921 = vmatprep.mubr.bf16.mxu0 %v8456
        %8922 = vmatmul.mubr.bf16.gmra.mrb[0].mxu0 %v8455
        %v8923 = vpop.f32.mrb[0].mxu0
        %v8924 = vadd.f32 %v8591, %v8923
        %v8925 = vpop.f32.mrb[0].mxu0
        %v8926 = vpop.f32.mrb[0].mxu0
        %v8927 = vadd.f32 %v8591, %v8926
        %v8928 = vpop.f32.mrb[0].mxu0
        %8929 = vmatprep.mubr.bf16.mxu0 %v8461
        %8930 = vmatmul.mubr.bf16.gmra.mrb[0].mxu0 %v8460
        %v8931 = vpop.f32.mrb[0].mxu0
        %v8932 = vadd.f32 %v8591, %v8931
        %v8933 = vpop.f32.mrb[0].mxu0
        %v8934 = vpop.f32.mrb[0].mxu0
        %v8935 = vadd.f32 %v8591, %v8934
        %v8936 = vpop.f32.mrb[0].mxu0
        %8937 = vmatprep.mubr.bf16.mxu0 %v8466
        %8938 = vmatmul.mubr.bf16.gmra.mrb[0].mxu0 %v8465
        %v8939 = vpop.f32.mrb[0].mxu0
        %v8940 = vadd.f32 %v8591, %v8939
        %v8941 = vpop.f32.mrb[0].mxu0
        %v8942 = vpop.f32.mrb[0].mxu0
        %v8943 = vadd.f32 %v8591, %v8942
        %v8944 = vpop.f32.mrb[0].mxu0
        %8945 = vmatprep.mubr.bf16.mxu0 %v8471
        %8946 = vmatmul.mubr.bf16.gmra.mrb[0].mxu0 %v8470
        %v8947 = vpop.f32.mrb[0].mxu0
        %v8948 = vadd.f32 %v8591, %v8947
        %v8949 = vpop.f32.mrb[0].mxu0
        %v8950 = vpop.f32.mrb[0].mxu0
        %v8951 = vadd.f32 %v8591, %v8950
        %v8952 = vpop.f32.mrb[0].mxu0
        %8953 = vmatprep.mubr.bf16.mxu0 %v8476
        %8954 = vmatmul.mubr.bf16.gmra.mrb[0].mxu0 %v8475
        %v8955 = vpop.f32.mrb[0].mxu0
        %v8956 = vadd.f32 %v8591, %v8955
        %v8957 = vpop.f32.mrb[0].mxu0
        %v8958 = vpop.f32.mrb[0].mxu0
        %v8959 = vadd.f32 %v8591, %v8958
        %v8960 = vpop.f32.mrb[0].mxu0
        %8961 = vmatprep.mubr.bf16.mxu0 %v8481
        %8962 = vmatmul.mubr.bf16.gmra.mrb[0].mxu0 %v8480
        %v8963 = vpop.f32.mrb[0].mxu0
        %v8964 = vadd.f32 %v8591, %v8963
        %v8965 = vpop.f32.mrb[0].mxu0
        %v8966 = vpop.f32.mrb[0].mxu0
        %v8967 = vadd.f32 %v8591, %v8966
        %v8968 = vpop.f32.mrb[0].mxu0
        %8969 = vmatprep.mubr.bf16.mxu0 %v8486
        %8970 = vmatmul.mubr.bf16.gmra.mrb[0].mxu0 %v8485
        %v8971 = vpop.f32.mrb[0].mxu0
        %v8972 = vadd.f32 %v8591, %v8971
        %v8973 = vpop.f32.mrb[0].mxu0
        %v8974 = vpop.f32.mrb[0].mxu0
        %v8975 = vadd.f32 %v8591, %v8974
        %v8976 = vpop.f32.mrb[0].mxu0
        %8977 = vmatprep.mubr.bf16.mxu0 %v8491
        %8978 = vmatmul.mubr.bf16.gmra.mrb[0].mxu0 %v8490
        %v8979 = vpop.f32.mrb[0].mxu0
        %v8980 = vadd.f32 %v8591, %v8979
        %v8981 = vpop.f32.mrb[0].mxu0
        %v8982 = vpop.f32.mrb[0].mxu0
        %v8983 = vadd.f32 %v8591, %v8982
        %v8984 = vpop.f32.mrb[0].mxu0
        %8985 = vmatprep.mubr.bf16.mxu0 %v8496
        %8986 = vmatmul.mubr.bf16.gmra.mrb[0].mxu0 %v8495
        %v8987 = vpop.f32.mrb[0].mxu0
        %v8988 = vadd.f32 %v8591, %v8987
        %v8989 = vpop.f32.mrb[0].mxu0
        %v8990 = vpop.f32.mrb[0].mxu0
        %v8991 = vadd.f32 %v8591, %v8990
        %v8992 = vpop.f32.mrb[0].mxu0
        %8993 = vmatprep.mubr.bf16.mxu0 %v8501
        %8994 = vmatmul.mubr.bf16.gmra.mrb[0].mxu0 %v8500
        %v8995 = vpop.f32.mrb[0].mxu0
        %v8996 = vadd.f32 %v8591, %v8995
        %v8997 = vpop.f32.mrb[0].mxu0
        %v8998 = vpop.f32.mrb[0].mxu0
        %v8999 = vadd.f32 %v8591, %v8998
        %v9000 = vpop.f32.mrb[0].mxu0
        %9001 = vmatprep.mubr.bf16.mxu0 %v8506
        %9002 = vmatmul.mubr.bf16.gmra.mrb[0].mxu0 %v8505
        %v9003 = vpop.f32.mrb[0].mxu0
        %v9004 = vadd.f32 %v8591, %v9003
        %v9005 = vpop.f32.mrb[0].mxu0
        %v9006 = vpop.f32.mrb[0].mxu0
        %v9007 = vadd.f32 %v8591, %v9006
        %v9008 = vpop.f32.mrb[0].mxu0
        %9009 = vmatprep.mubr.bf16.mxu0 %v8511
        %9010 = vmatmul.mubr.bf16.gmra.mrb[0].mxu0 %v8510
        %v9011 = vpop.f32.mrb[0].mxu0
        %v9012 = vadd.f32 %v8591, %v9011
        %v9013 = vpop.f32.mrb[0].mxu0
        %v9014 = vpop.f32.mrb[0].mxu0
        %v9015 = vadd.f32 %v8591, %v9014
        %v9016 = vpop.f32.mrb[0].mxu0
        %9017 = vdwg.mxu0
        %9018 = vmatprep.subr.bf16.mxu0 0
        %9019 = vmatpush1.bf16.msra.mxu0 %v8753
        %9020 = vmatprep.subr.bf16.mxu0 0
        %9021 = vmatpush1.bf16.msra.mxu0 %v8754
        %9022 = vmatprep.subr.bf16.mxu0 0
        %9023 = vmatpush1.bf16.msra.mxu0 %v8755
        %9024 = vmatprep.subr.bf16.mxu0 0
        %9025 = vmatpush1.bf16.msra.mxu0 %v8756
        %9026 = vmatprep.subr.bf16.mxu0 0
        %9027 = vmatpush1.bf16.msra.mxu0 %v8757
        %9028 = vmatprep.subr.bf16.mxu0 0
        %9029 = vmatpush1.bf16.msra.mxu0 %v8758
        %9030 = vmatprep.subr.bf16.mxu0 0
        %9031 = vmatpush1.bf16.msra.mxu0 %v8759
        %9032 = vmatprep.subr.bf16.mxu0 0
        %9033 = vmatpush1.bf16.msra.mxu0 %v8760
        %9034 = vmatprep.subr.bf16.mxu0 0
        %9035 = vmatpush1.bf16.msra.mxu0 %v8761
        %9036 = vmatprep.subr.bf16.mxu0 0
        %9037 = vmatpush1.bf16.msra.mxu0 %v8762
        %9038 = vmatprep.subr.bf16.mxu0 0
        %9039 = vmatpush1.bf16.msra.mxu0 %v8763
        %9040 = vmatprep.subr.bf16.mxu0 0
        %9041 = vmatpush1.bf16.msra.mxu0 %v8764
        %9042 = vmatprep.subr.bf16.mxu0 0
        %9043 = vmatpush1.bf16.msra.mxu0 %v8765
        %9044 = vmatprep.subr.bf16.mxu0 0
        %9045 = vmatpush1.bf16.msra.mxu0 %v8766
        %9046 = vmatprep.subr.bf16.mxu0 0
        %9047 = vmatpush1.bf16.msra.mxu0 %v8767
        %9048 = vmatprep.subr.bf16.mxu0 0
        %9049 = vmatpush1.bf16.msra.mxu0 %v8768
        %9050 = vmatprep.mubr.bf16.mxu0 %v8438
        %9051 = vmatmul.mubr.bf16.gmra.mrb[0].mxu0 %v8437
        %v9052 = vpop.f32.mrb[0].mxu0
        %v9053 = vadd.f32 %v8892, %v9052
        %v9054 = vpop.f32.mrb[0].mxu0
        %v9055 = vpop.f32.mrb[0].mxu0
        %v9056 = vadd.f32 %v8895, %v9055
        %v9057 = vpop.f32.mrb[0].mxu0
        %9058 = vmatprep.mubr.bf16.mxu0 %v8443
        %9059 = vmatmul.mubr.bf16.gmra.mrb[0].mxu0 %v8442
        %v9060 = vpop.f32.mrb[0].mxu0
        %v9061 = vadd.f32 %v8900, %v9060
        %v9062 = vpop.f32.mrb[0].mxu0
        %v9063 = vpop.f32.mrb[0].mxu0
        %v9064 = vadd.f32 %v8903, %v9063
        %v9065 = vpop.f32.mrb[0].mxu0
        %9066 = vmatprep.mubr.bf16.mxu0 %v8448
        %9067 = vmatmul.mubr.bf16.gmra.mrb[0].mxu0 %v8447
        %v9068 = vpop.f32.mrb[0].mxu0
        %v9069 = vadd.f32 %v8908, %v9068
        %v9070 = vpop.f32.mrb[0].mxu0
        %v9071 = vpop.f32.mrb[0].mxu0
        %v9072 = vadd.f32 %v8911, %v9071
        %v9073 = vpop.f32.mrb[0].mxu0
        %9074 = vmatprep.mubr.bf16.mxu0 %v8453
        %9075 = vmatmul.mubr.bf16.gmra.mrb[0].mxu0 %v8452
        %v9076 = vpop.f32.mrb[0].mxu0
        %v9077 = vadd.f32 %v8916, %v9076
        %v9078 = vpop.f32.mrb[0].mxu0
        %v9079 = vpop.f32.mrb[0].mxu0
        %v9080 = vadd.f32 %v8919, %v9079
        %v9081 = vpop.f32.mrb[0].mxu0
        %9082 = vmatprep.mubr.bf16.mxu0 %v8458
        %9083 = vmatmul.mubr.bf16.gmra.mrb[0].mxu0 %v8457
        %v9084 = vpop.f32.mrb[0].mxu0
        %v9085 = vadd.f32 %v8924, %v9084
        %v9086 = vpop.f32.mrb[0].mxu0
        %v9087 = vpop.f32.mrb[0].mxu0
        %v9088 = vadd.f32 %v8927, %v9087
        %v9089 = vpop.f32.mrb[0].mxu0
        %9090 = vmatprep.mubr.bf16.mxu0 %v8463
        %9091 = vmatmul.mubr.bf16.gmra.mrb[0].mxu0 %v8462
        %v9092 = vpop.f32.mrb[0].mxu0
        %v9093 = vadd.f32 %v8932, %v9092
        %v9094 = vpop.f32.mrb[0].mxu0
        %v9095 = vpop.f32.mrb[0].mxu0
        %v9096 = vadd.f32 %v8935, %v9095
        %v9097 = vpop.f32.mrb[0].mxu0
        %9098 = vmatprep.mubr.bf16.mxu0 %v8468
        %9099 = vmatmul.mubr.bf16.gmra.mrb[0].mxu0 %v8467
        %v9100 = vpop.f32.mrb[0].mxu0
        %v9101 = vadd.f32 %v8940, %v9100
        %v9102 = vpop.f32.mrb[0].mxu0
        %v9103 = vpop.f32.mrb[0].mxu0
        %v9104 = vadd.f32 %v8943, %v9103
        %v9105 = vpop.f32.mrb[0].mxu0
        %9106 = vmatprep.mubr.bf16.mxu0 %v8473
        %9107 = vmatmul.mubr.bf16.gmra.mrb[0].mxu0 %v8472
        %v9108 = vpop.f32.mrb[0].mxu0
        %v9109 = vadd.f32 %v8948, %v9108
        %v9110 = vpop.f32.mrb[0].mxu0
        %v9111 = vpop.f32.mrb[0].mxu0
        %v9112 = vadd.f32 %v8951, %v9111
        %v9113 = vpop.f32.mrb[0].mxu0
        %9114 = vmatprep.mubr.bf16.mxu0 %v8478
        %9115 = vmatmul.mubr.bf16.gmra.mrb[0].mxu0 %v8477
        %v9116 = vpop.f32.mrb[0].mxu0
        %v9117 = vadd.f32 %v8956, %v9116
        %v9118 = vpop.f32.mrb[0].mxu0
        %v9119 = vpop.f32.mrb[0].mxu0
        %v9120 = vadd.f32 %v8959, %v9119
        %v9121 = vpop.f32.mrb[0].mxu0
        %9122 = vmatprep.mubr.bf16.mxu0 %v8483
        %9123 = vmatmul.mubr.bf16.gmra.mrb[0].mxu0 %v8482
        %v9124 = vpop.f32.mrb[0].mxu0
        %v9125 = vadd.f32 %v8964, %v9124
        %v9126 = vpop.f32.mrb[0].mxu0
        %v9127 = vpop.f32.mrb[0].mxu0
        %v9128 = vadd.f32 %v8967, %v9127
        %v9129 = vpop.f32.mrb[0].mxu0
        %9130 = vmatprep.mubr.bf16.mxu0 %v8488
        %9131 = vmatmul.mubr.bf16.gmra.mrb[0].mxu0 %v8487
        %v9132 = vpop.f32.mrb[0].mxu0
        %v9133 = vadd.f32 %v8972, %v9132
        %v9134 = vpop.f32.mrb[0].mxu0
        %v9135 = vpop.f32.mrb[0].mxu0
        %v9136 = vadd.f32 %v8975, %v9135
        %v9137 = vpop.f32.mrb[0].mxu0
        %9138 = vmatprep.mubr.bf16.mxu0 %v8493
        %9139 = vmatmul.mubr.bf16.gmra.mrb[0].mxu0 %v8492
        %v9140 = vpop.f32.mrb[0].mxu0
        %v9141 = vadd.f32 %v8980, %v9140
        %v9142 = vpop.f32.mrb[0].mxu0
        %v9143 = vpop.f32.mrb[0].mxu0
        %v9144 = vadd.f32 %v8983, %v9143
        %v9145 = vpop.f32.mrb[0].mxu0
        %9146 = vmatprep.mubr.bf16.mxu0 %v8498
        %9147 = vmatmul.mubr.bf16.gmra.mrb[0].mxu0 %v8497
        %v9148 = vpop.f32.mrb[0].mxu0
        %v9149 = vadd.f32 %v8988, %v9148
        %v9150 = vpop.f32.mrb[0].mxu0
        %v9151 = vpop.f32.mrb[0].mxu0
        %v9152 = vadd.f32 %v8991, %v9151
        %v9153 = vpop.f32.mrb[0].mxu0
        %9154 = vmatprep.mubr.bf16.mxu0 %v8503
        %9155 = vmatmul.mubr.bf16.gmra.mrb[0].mxu0 %v8502
        %v9156 = vpop.f32.mrb[0].mxu0
        %v9157 = vadd.f32 %v8996, %v9156
        %v9158 = vpop.f32.mrb[0].mxu0
        %v9159 = vpop.f32.mrb[0].mxu0
        %v9160 = vadd.f32 %v8999, %v9159
        %v9161 = vpop.f32.mrb[0].mxu0
        %9162 = vmatprep.mubr.bf16.mxu0 %v8508
        %9163 = vmatmul.mubr.bf16.gmra.mrb[0].mxu0 %v8507
        %v9164 = vpop.f32.mrb[0].mxu0
        %v9165 = vadd.f32 %v9004, %v9164
        %v9166 = vpop.f32.mrb[0].mxu0
        %v9167 = vpop.f32.mrb[0].mxu0
        %v9168 = vadd.f32 %v9007, %v9167
        %v9169 = vpop.f32.mrb[0].mxu0
        %9170 = vmatprep.mubr.bf16.mxu0 %v8513
        %9171 = vmatmul.mubr.bf16.gmra.mrb[0].mxu0 %v8512
        %v9172 = vpop.f32.mrb[0].mxu0
        %v9173 = vadd.f32 %v9012, %v9172
        %v9174 = vpop.f32.mrb[0].mxu0
        %v9175 = vpop.f32.mrb[0].mxu0
        %v9176 = vadd.f32 %v9015, %v9175
        %v9177 = vpop.f32.mrb[0].mxu0
        %9178 = vdwg.mxu0
        %9179 = vmatprep.subr.bf16.mxu0 0
        %9180 = vmatpush1.bf16.msra.mxu0 %v8769
        %9181 = vmatprep.subr.bf16.mxu0 0
        %9182 = vmatpush1.bf16.msra.mxu0 %v8770
        %9183 = vmatprep.subr.bf16.mxu0 0
        %9184 = vmatpush1.bf16.msra.mxu0 %v8771
        %9185 = vmatprep.subr.bf16.mxu0 0
        %9186 = vmatpush1.bf16.msra.mxu0 %v8772
        %9187 = vmatprep.subr.bf16.mxu0 0
        %9188 = vmatpush1.bf16.msra.mxu0 0
        %9189 = vmatprep.subr.bf16.mxu0 0
        %9190 = vmatpush1.bf16.msra.mxu0 0
        %9191 = vmatprep.subr.bf16.mxu0 0
        %9192 = vmatpush1.bf16.msra.mxu0 0
        %9193 = vmatprep.subr.bf16.mxu0 0
        %9194 = vmatpush1.bf16.msra.mxu0 0
        %9195 = vmatprep.subr.bf16.mxu0 0
        %9196 = vmatpush1.bf16.msra.mxu0 0
        %9197 = vmatprep.subr.bf16.mxu0 0
        %9198 = vmatpush1.bf16.msra.mxu0 0
        %9199 = vmatprep.subr.bf16.mxu0 0
        %9200 = vmatpush1.bf16.msra.mxu0 0
        %9201 = vmatprep.subr.bf16.mxu0 0
        %9202 = vmatpush1.bf16.msra.mxu0 0
        %9203 = vmatprep.subr.bf16.mxu0 0
        %9204 = vmatpush1.bf16.msra.mxu0 0
        %9205 = vmatprep.subr.bf16.mxu0 0
        %9206 = vmatpush1.bf16.msra.mxu0 0
        %9207 = vmatprep.subr.bf16.mxu0 0
        %9208 = vmatpush1.bf16.msra.mxu0 0
        %9209 = vmatprep.subr.bf16.mxu0 0
        %9210 = vmatpush1.bf16.msra.mxu0 0
        %9211 = vmatprep.mubr.bf16.mxu0 0
        %9212 = vmatmul.mubr.bf16.gmra.mrb[0].mxu0 %v8810
        %v9213 = vpop.f32.mrb[0].mxu0
        %v9214 = vadd.f32 %v9053, %v9213
        %v9215 = vpop.f32.mrb[0].mxu0
        %v9216 = vpop.f32.mrb[0].mxu0
        %v9217 = vadd.f32 %v9056, %v9216
        %v9218 = vpop.f32.mrb[0].mxu0
        %9219 = vmatprep.mubr.bf16.mxu0 0
        %9220 = vmatmul.mubr.bf16.gmra.mrb[0].mxu0 %v8813
        %v9221 = vpop.f32.mrb[0].mxu0
        %v9222 = vadd.f32 %v9061, %v9221
        %v9223 = vpop.f32.mrb[0].mxu0
        %v9224 = vpop.f32.mrb[0].mxu0
        %v9225 = vadd.f32 %v9064, %v9224
        %v9226 = vpop.f32.mrb[0].mxu0
        %9227 = vmatprep.mubr.bf16.mxu0 0
        %9228 = vmatmul.mubr.bf16.gmra.mrb[0].mxu0 %v8816
        %v9229 = vpop.f32.mrb[0].mxu0
        %v9230 = vadd.f32 %v9069, %v9229
        %v9231 = vpop.f32.mrb[0].mxu0
        %v9232 = vpop.f32.mrb[0].mxu0
        %v9233 = vadd.f32 %v9072, %v9232
        %v9234 = vpop.f32.mrb[0].mxu0
        %9235 = vmatprep.mubr.bf16.mxu0 0
        %9236 = vmatmul.mubr.bf16.gmra.mrb[0].mxu0 %v8819
        %v9237 = vpop.f32.mrb[0].mxu0
        %v9238 = vadd.f32 %v9077, %v9237
        %v9239 = vpop.f32.mrb[0].mxu0
        %v9240 = vpop.f32.mrb[0].mxu0
        %v9241 = vadd.f32 %v9080, %v9240
        %v9242 = vpop.f32.mrb[0].mxu0
        %9243 = vmatprep.mubr.bf16.mxu0 0
        %9244 = vmatmul.mubr.bf16.gmra.mrb[0].mxu0 %v8822
        %v9245 = vpop.f32.mrb[0].mxu0
        %v9246 = vadd.f32 %v9085, %v9245
        %v9247 = vpop.f32.mrb[0].mxu0
        %v9248 = vpop.f32.mrb[0].mxu0
        %v9249 = vadd.f32 %v9088, %v9248
        %v9250 = vpop.f32.mrb[0].mxu0
        %9251 = vmatprep.mubr.bf16.mxu0 0
        %9252 = vmatmul.mubr.bf16.gmra.mrb[0].mxu0 %v8825
        %v9253 = vpop.f32.mrb[0].mxu0
        %v9254 = vadd.f32 %v9093, %v9253
        %v9255 = vpop.f32.mrb[0].mxu0
        %v9256 = vpop.f32.mrb[0].mxu0
        %v9257 = vadd.f32 %v9096, %v9256
        %v9258 = vpop.f32.mrb[0].mxu0
        %9259 = vmatprep.mubr.bf16.mxu0 0
        %9260 = vmatmul.mubr.bf16.gmra.mrb[0].mxu0 %v8828
        %v9261 = vpop.f32.mrb[0].mxu0
        %v9262 = vadd.f32 %v9101, %v9261
        %v9263 = vpop.f32.mrb[0].mxu0
        %v9264 = vpop.f32.mrb[0].mxu0
        %v9265 = vadd.f32 %v9104, %v9264
        %v9266 = vpop.f32.mrb[0].mxu0
        %9267 = vmatprep.mubr.bf16.mxu0 0
        %9268 = vmatmul.mubr.bf16.gmra.mrb[0].mxu0 %v8831
        %v9269 = vpop.f32.mrb[0].mxu0
        %v9270 = vadd.f32 %v9109, %v9269
        %v9271 = vpop.f32.mrb[0].mxu0
        %v9272 = vpop.f32.mrb[0].mxu0
        %v9273 = vadd.f32 %v9112, %v9272
        %v9274 = vpop.f32.mrb[0].mxu0
        %9275 = vmatprep.mubr.bf16.mxu0 0
        %9276 = vmatmul.mubr.bf16.gmra.mrb[0].mxu0 %v8834
        %v9277 = vpop.f32.mrb[0].mxu0
        %v9278 = vadd.f32 %v9117, %v9277
        %v9279 = vpop.f32.mrb[0].mxu0
        %v9280 = vpop.f32.mrb[0].mxu0
        %v9281 = vadd.f32 %v9120, %v9280
        %v9282 = vpop.f32.mrb[0].mxu0
        %9283 = vmatprep.mubr.bf16.mxu0 0
        %9284 = vmatmul.mubr.bf16.gmra.mrb[0].mxu0 %v8837
        %v9285 = vpop.f32.mrb[0].mxu0
        %v9286 = vadd.f32 %v9125, %v9285
        %v9287 = vpop.f32.mrb[0].mxu0
        %v9288 = vpop.f32.mrb[0].mxu0
        %v9289 = vadd.f32 %v9128, %v9288
        %v9290 = vpop.f32.mrb[0].mxu0
        %9291 = vmatprep.mubr.bf16.mxu0 0
        %9292 = vmatmul.mubr.bf16.gmra.mrb[0].mxu0 %v8840
        %v9293 = vpop.f32.mrb[0].mxu0
        %v9294 = vadd.f32 %v9133, %v9293
        %v9295 = vpop.f32.mrb[0].mxu0
        %v9296 = vpop.f32.mrb[0].mxu0
        %v9297 = vadd.f32 %v9136, %v9296
        %v9298 = vpop.f32.mrb[0].mxu0
        %9299 = vmatprep.mubr.bf16.mxu0 0
        %9300 = vmatmul.mubr.bf16.gmra.mrb[0].mxu0 %v8843
        %v9301 = vpop.f32.mrb[0].mxu0
        %v9302 = vadd.f32 %v9141, %v9301
        %v9303 = vpop.f32.mrb[0].mxu0
        %v9304 = vpop.f32.mrb[0].mxu0
        %v9305 = vadd.f32 %v9144, %v9304
        %v9306 = vpop.f32.mrb[0].mxu0
        %9307 = vmatprep.mubr.bf16.mxu0 0
        %9308 = vmatmul.mubr.bf16.gmra.mrb[0].mxu0 %v8846
        %v9309 = vpop.f32.mrb[0].mxu0
        %v9310 = vadd.f32 %v9149, %v9309
        %v9311 = vpop.f32.mrb[0].mxu0
        %v9312 = vpop.f32.mrb[0].mxu0
        %v9313 = vadd.f32 %v9152, %v9312
        %v9314 = vpop.f32.mrb[0].mxu0
        %9315 = vmatprep.mubr.bf16.mxu0 0
        %9316 = vmatmul.mubr.bf16.gmra.mrb[0].mxu0 %v8849
        %v9317 = vpop.f32.mrb[0].mxu0
        %v9318 = vadd.f32 %v9157, %v9317
        %v9319 = vpop.f32.mrb[0].mxu0
        %v9320 = vpop.f32.mrb[0].mxu0
        %v9321 = vadd.f32 %v9160, %v9320
        %v9322 = vpop.f32.mrb[0].mxu0
        %9323 = vmatprep.mubr.bf16.mxu0 0
        %9324 = vmatmul.mubr.bf16.gmra.mrb[0].mxu0 %v8852
        %v9325 = vpop.f32.mrb[0].mxu0
        %v9326 = vadd.f32 %v9165, %v9325
        %v9327 = vpop.f32.mrb[0].mxu0
        %v9328 = vpop.f32.mrb[0].mxu0
        %v9329 = vadd.f32 %v9168, %v9328
        %v9330 = vpop.f32.mrb[0].mxu0
        %9331 = vmatprep.mubr.bf16.mxu0 0
        %9332 = vmatmul.mubr.bf16.gmra.mrb[0].mxu0 %v8855
        %v9333 = vpop.f32.mrb[0].mxu0
        %v9334 = vadd.f32 %v9173, %v9333
        %v9335 = vpop.f32.mrb[0].mxu0
        %v9336 = vpop.f32.mrb[0].mxu0
        %v9337 = vadd.f32 %v9176, %v9336
        %v9338 = vpop.f32.mrb[0].mxu0
        %9339 = vdwg.mxu0
        %v9340 = vpack.c.bf16 %v468, %v467
        %v9341 = vpack.c.bf16 %v470, %v469
        %v9342 = vpack.c.bf16 %v472, %v471
        %v9343 = vpack.c.bf16 %v474, %v473
        %v9344 = vpack.c.bf16 %v476, %v475
        %v9345 = vpack.c.bf16 %v478, %v477
        %v9346 = vpack.c.bf16 %v480, %v479
        %v9347 = vpack.c.bf16 %v482, %v481
        %v9348 = vpack.c.bf16 %v484, %v483
        %v9349 = vpack.c.bf16 %v486, %v485
        %v9350 = vpack.c.bf16 %v488, %v487
        %v9351 = vpack.c.bf16 %v490, %v489
        %v9352 = vpack.c.bf16 %v492, %v491
        %v9353 = vpack.c.bf16 %v494, %v493
        %v9354 = vpack.c.bf16 %v496, %v495
        %v9355 = vpack.c.bf16 %v498, %v497
        %v9356 = vld [vmem:[%s12] sm:$0xf]
        %v9357 = vld [vmem:[%s12 + $0x4] sm:$0xf]
        %v9358 = vld [vmem:[%s12 + $0x8] sm:$0xf]
        %v9359 = vld [vmem:[%s12 + $0xc] sm:$0xf]
        %v9360 = vld [vmem:[%s13] sm:$0x1]
        %v9362 = vlaneseq
        %v9363 = vshrl.u32 %v9362, 7
        %v9364 = vsub.s32 0, %v9363
        %v9365 = vrot.slane %v9360, %v9364
        %v9371 = vunpack.c.l.b16 %v9356
        %v9372 = vunpack.c.l.b16 %v9357
        %v9373 = vunpack.c.l.b16 %v9358
        %v9374 = vunpack.c.l.b16 %v9359
        %v9375 = vpack.c.b16 %v9372, %v9371
        %v9376 = vpack.c.b16 %v9374, %v9373
        %v9380 = vsel %vm505, %v9340, 0
        %v9383 = vsel %vm505, %v9341, 0
        %v9386 = vsel %vm505, %v9342, 0
        %v9389 = vsel %vm505, %v9343, 0
        %v9392 = vsel %vm505, %v9344, 0
        %v9395 = vsel %vm505, %v9345, 0
        %v9398 = vsel %vm505, %v9346, 0
        %v9401 = vsel %vm505, %v9347, 0
        %v9404 = vsel %vm505, %v9348, 0
        %v9407 = vsel %vm505, %v9349, 0
        %v9410 = vsel %vm505, %v9350, 0
        %v9413 = vsel %vm505, %v9351, 0
        %v9416 = vsel %vm505, %v9352, 0
        %v9419 = vsel %vm505, %v9353, 0
        %v9422 = vsel %vm505, %v9354, 0
        %v9425 = vsel %vm505, %v9355, 0
        %9427 = vmatprep.subr.bf16.mxu0 0
        %9428 = vmatpush1.bf16.msra.mxu0 %v9375
        %9429 = vmatprep.subr.bf16.mxu0 0
        %9430 = vmatpush1.bf16.msra.mxu0 %v9376
        %9431 = vmatprep.subr.bf16.mxu0 0
        %9432 = vmatpush1.bf16.msra.mxu0 0
        %9433 = vmatprep.subr.bf16.mxu0 0
        %9434 = vmatpush1.bf16.msra.mxu0 0
        %9435 = vmatprep.subr.bf16.mxu0 0
        %9436 = vmatpush1.bf16.msra.mxu0 0
        %9437 = vmatprep.subr.bf16.mxu0 0
        %9438 = vmatpush1.bf16.msra.mxu0 0
        %9439 = vmatprep.subr.bf16.mxu0 0
        %9440 = vmatpush1.bf16.msra.mxu0 0
        %9441 = vmatprep.subr.bf16.mxu0 0
        %9442 = vmatpush1.bf16.msra.mxu0 0
        %9443 = vmatprep.subr.bf16.mxu0 0
        %9444 = vmatpush1.bf16.msra.mxu0 0
        %9445 = vmatprep.subr.bf16.mxu0 0
        %9446 = vmatpush1.bf16.msra.mxu0 0
        %9447 = vmatprep.subr.bf16.mxu0 0
        %9448 = vmatpush1.bf16.msra.mxu0 0
        %9449 = vmatprep.subr.bf16.mxu0 0
        %9450 = vmatpush1.bf16.msra.mxu0 0
        %9451 = vmatprep.subr.bf16.mxu0 0
        %9452 = vmatpush1.bf16.msra.mxu0 0
        %9453 = vmatprep.subr.bf16.mxu0 0
        %9454 = vmatpush1.bf16.msra.mxu0 0
        %9455 = vmatprep.subr.bf16.mxu0 0
        %9456 = vmatpush1.bf16.msra.mxu0 0
        %9457 = vmatprep.subr.bf16.mxu0 0
        %9458 = vmatpush1.bf16.msra.mxu0 0
        %9459 = vmatprep.mubr.bf16.mxu0 0
        %9460 = vmatmul.mubr.bf16.gmra.mrb[0].mxu0 %v9380
        %v9461 = vpop.f32.mrb[0].mxu0
        %v9462 = vadd.f32 %v9365, %v9461
        %v9463 = vpop.f32.mrb[0].mxu0
        %v9464 = vpop.f32.mrb[0].mxu0
        %v9465 = vadd.f32 %v9365, %v9464
        %v9466 = vpop.f32.mrb[0].mxu0
        %9467 = vmatprep.mubr.bf16.mxu0 0
        %9468 = vmatmul.mubr.bf16.gmra.mrb[0].mxu0 %v9383
        %v9469 = vpop.f32.mrb[0].mxu0
        %v9470 = vadd.f32 %v9365, %v9469
        %v9471 = vpop.f32.mrb[0].mxu0
        %v9472 = vpop.f32.mrb[0].mxu0
        %v9473 = vadd.f32 %v9365, %v9472
        %v9474 = vpop.f32.mrb[0].mxu0
        %9475 = vmatprep.mubr.bf16.mxu0 0
        %9476 = vmatmul.mubr.bf16.gmra.mrb[0].mxu0 %v9386
        %v9477 = vpop.f32.mrb[0].mxu0
        %v9478 = vadd.f32 %v9365, %v9477
        %v9479 = vpop.f32.mrb[0].mxu0
        %v9480 = vpop.f32.mrb[0].mxu0
        %v9481 = vadd.f32 %v9365, %v9480
        %v9482 = vpop.f32.mrb[0].mxu0
        %9483 = vmatprep.mubr.bf16.mxu0 0
        %9484 = vmatmul.mubr.bf16.gmra.mrb[0].mxu0 %v9389
        %v9485 = vpop.f32.mrb[0].mxu0
        %v9486 = vadd.f32 %v9365, %v9485
        %v9487 = vpop.f32.mrb[0].mxu0
        %v9488 = vpop.f32.mrb[0].mxu0
        %v9489 = vadd.f32 %v9365, %v9488
        %v9490 = vpop.f32.mrb[0].mxu0
        %9491 = vmatprep.mubr.bf16.mxu0 0
        %9492 = vmatmul.mubr.bf16.gmra.mrb[0].mxu0 %v9392
        %v9493 = vpop.f32.mrb[0].mxu0
        %v9494 = vadd.f32 %v9365, %v9493
        %v9495 = vpop.f32.mrb[0].mxu0
        %v9496 = vpop.f32.mrb[0].mxu0
        %v9497 = vadd.f32 %v9365, %v9496
        %v9498 = vpop.f32.mrb[0].mxu0
        %9499 = vmatprep.mubr.bf16.mxu0 0
        %9500 = vmatmul.mubr.bf16.gmra.mrb[0].mxu0 %v9395
        %v9501 = vpop.f32.mrb[0].mxu0
        %v9502 = vadd.f32 %v9365, %v9501
        %v9503 = vpop.f32.mrb[0].mxu0
        %v9504 = vpop.f32.mrb[0].mxu0
        %v9505 = vadd.f32 %v9365, %v9504
        %v9506 = vpop.f32.mrb[0].mxu0
        %9507 = vmatprep.mubr.bf16.mxu0 0
        %9508 = vmatmul.mubr.bf16.gmra.mrb[0].mxu0 %v9398
        %v9509 = vpop.f32.mrb[0].mxu0
        %v9510 = vadd.f32 %v9365, %v9509
        %v9511 = vpop.f32.mrb[0].mxu0
        %v9512 = vpop.f32.mrb[0].mxu0
        %v9513 = vadd.f32 %v9365, %v9512
        %v9514 = vpop.f32.mrb[0].mxu0
        %9515 = vmatprep.mubr.bf16.mxu0 0
        %9516 = vmatmul.mubr.bf16.gmra.mrb[0].mxu0 %v9401
        %v9517 = vpop.f32.mrb[0].mxu0
        %v9518 = vadd.f32 %v9365, %v9517
        %v9519 = vpop.f32.mrb[0].mxu0
        %v9520 = vpop.f32.mrb[0].mxu0
        %v9521 = vadd.f32 %v9365, %v9520
        %v9522 = vpop.f32.mrb[0].mxu0
        %9523 = vmatprep.mubr.bf16.mxu0 0
        %9524 = vmatmul.mubr.bf16.gmra.mrb[0].mxu0 %v9404
        %v9525 = vpop.f32.mrb[0].mxu0
        %v9526 = vadd.f32 %v9365, %v9525
        %v9527 = vpop.f32.mrb[0].mxu0
        %v9528 = vpop.f32.mrb[0].mxu0
        %v9529 = vadd.f32 %v9365, %v9528
        %v9530 = vpop.f32.mrb[0].mxu0
        %9531 = vmatprep.mubr.bf16.mxu0 0
        %9532 = vmatmul.mubr.bf16.gmra.mrb[0].mxu0 %v9407
        %v9533 = vpop.f32.mrb[0].mxu0
        %v9534 = vadd.f32 %v9365, %v9533
        %v9535 = vpop.f32.mrb[0].mxu0
        %v9536 = vpop.f32.mrb[0].mxu0
        %v9537 = vadd.f32 %v9365, %v9536
        %v9538 = vpop.f32.mrb[0].mxu0
        %9539 = vmatprep.mubr.bf16.mxu0 0
        %9540 = vmatmul.mubr.bf16.gmra.mrb[0].mxu0 %v9410
        %v9541 = vpop.f32.mrb[0].mxu0
        %v9542 = vadd.f32 %v9365, %v9541
        %v9543 = vpop.f32.mrb[0].mxu0
        %v9544 = vpop.f32.mrb[0].mxu0
        %v9545 = vadd.f32 %v9365, %v9544
        %v9546 = vpop.f32.mrb[0].mxu0
        %9547 = vmatprep.mubr.bf16.mxu0 0
        %9548 = vmatmul.mubr.bf16.gmra.mrb[0].mxu0 %v9413
        %v9549 = vpop.f32.mrb[0].mxu0
        %v9550 = vadd.f32 %v9365, %v9549
        %v9551 = vpop.f32.mrb[0].mxu0
        %v9552 = vpop.f32.mrb[0].mxu0
        %v9553 = vadd.f32 %v9365, %v9552
        %v9554 = vpop.f32.mrb[0].mxu0
        %9555 = vmatprep.mubr.bf16.mxu0 0
        %9556 = vmatmul.mubr.bf16.gmra.mrb[0].mxu0 %v9416
        %v9557 = vpop.f32.mrb[0].mxu0
        %v9558 = vadd.f32 %v9365, %v9557
        %v9559 = vpop.f32.mrb[0].mxu0
        %v9560 = vpop.f32.mrb[0].mxu0
        %v9561 = vadd.f32 %v9365, %v9560
        %v9562 = vpop.f32.mrb[0].mxu0
        %9563 = vmatprep.mubr.bf16.mxu0 0
        %9564 = vmatmul.mubr.bf16.gmra.mrb[0].mxu0 %v9419
        %v9565 = vpop.f32.mrb[0].mxu0
        %v9566 = vadd.f32 %v9365, %v9565
        %v9567 = vpop.f32.mrb[0].mxu0
        %v9568 = vpop.f32.mrb[0].mxu0
        %v9569 = vadd.f32 %v9365, %v9568
        %v9570 = vpop.f32.mrb[0].mxu0
        %9571 = vmatprep.mubr.bf16.mxu0 0
        %9572 = vmatmul.mubr.bf16.gmra.mrb[0].mxu0 %v9422
        %v9573 = vpop.f32.mrb[0].mxu0
        %v9574 = vadd.f32 %v9365, %v9573
        %v9575 = vpop.f32.mrb[0].mxu0
        %v9576 = vpop.f32.mrb[0].mxu0
        %v9577 = vadd.f32 %v9365, %v9576
        %v9578 = vpop.f32.mrb[0].mxu0
        %9579 = vmatprep.mubr.bf16.mxu0 0
        %9580 = vmatmul.mubr.bf16.gmra.mrb[0].mxu0 %v9425
        %v9581 = vpop.f32.mrb[0].mxu0
        %v9582 = vadd.f32 %v9365, %v9581
        %v9583 = vpop.f32.mrb[0].mxu0
        %v9584 = vpop.f32.mrb[0].mxu0
        %v9585 = vadd.f32 %v9365, %v9584
        %v9586 = vpop.f32.mrb[0].mxu0
        %9587 = vdwg.mxu0
        %v9588 = vadd.f32 %v9462, %v9214
        %v9589 = vadd.f32 %v9465, %v9217
        %v9590 = vadd.f32 %v9470, %v9222
        %v9591 = vadd.f32 %v9473, %v9225
        %v9592 = vadd.f32 %v9478, %v9230
        %v9593 = vadd.f32 %v9481, %v9233
        %v9594 = vadd.f32 %v9486, %v9238
        %v9595 = vadd.f32 %v9489, %v9241
        %v9596 = vadd.f32 %v9494, %v9246
        %v9597 = vadd.f32 %v9497, %v9249
        %v9598 = vadd.f32 %v9502, %v9254
        %v9599 = vadd.f32 %v9505, %v9257
        %v9600 = vadd.f32 %v9510, %v9262
        %v9601 = vadd.f32 %v9513, %v9265
        %v9602 = vadd.f32 %v9518, %v9270
        %v9603 = vadd.f32 %v9521, %v9273
        %v9604 = vadd.f32 %v9526, %v9278
        %v9605 = vadd.f32 %v9529, %v9281
        %v9606 = vadd.f32 %v9534, %v9286
        %v9607 = vadd.f32 %v9537, %v9289
        %v9608 = vadd.f32 %v9542, %v9294
        %v9609 = vadd.f32 %v9545, %v9297
        %v9610 = vadd.f32 %v9550, %v9302
        %v9611 = vadd.f32 %v9553, %v9305
        %v9612 = vadd.f32 %v9558, %v9310
        %v9613 = vadd.f32 %v9561, %v9313
        %v9614 = vadd.f32 %v9566, %v9318
        %v9615 = vadd.f32 %v9569, %v9321
        %v9616 = vadd.f32 %v9574, %v9326
        %v9617 = vadd.f32 %v9577, %v9329
        %v9618 = vadd.f32 %v9582, %v9334
        %v9619 = vadd.f32 %v9585, %v9337
        %9620 = vst [vmem:[%s460] sm:$0xff] %v9588
        %9621 = vst [vmem:[%s460 + $0x8] sm:$0xff] %v9589
        %9622 = vst [vmem:[%s460 + $0x10] sm:$0xff] %v9590
        %9623 = vst [vmem:[%s460 + $0x18] sm:$0xff] %v9591
        %9624 = vst [vmem:[%s460 + $0x20] sm:$0xff] %v9592
        %9625 = vst [vmem:[%s460 + $0x28] sm:$0xff] %v9593
        %9626 = vst [vmem:[%s460 + $0x30] sm:$0xff] %v9594
        %9627 = vst [vmem:[%s460 + $0x38] sm:$0xff] %v9595
        %9628 = vst [vmem:[%s460 + $0x40] sm:$0xff] %v9596
        %9629 = vst [vmem:[%s460 + $0x48] sm:$0xff] %v9597
        %9630 = vst [vmem:[%s460 + $0x50] sm:$0xff] %v9598
        %9631 = vst [vmem:[%s460 + $0x58] sm:$0xff] %v9599
        %9632 = vst [vmem:[%s460 + $0x60] sm:$0xff] %v9600
        %9633 = vst [vmem:[%s460 + $0x68] sm:$0xff] %v9601
        %9634 = vst [vmem:[%s460 + $0x70] sm:$0xff] %v9602
        %9635 = vst [vmem:[%s460 + $0x78] sm:$0xff] %v9603
        %9636 = vst [vmem:[%s460 + $0x80] sm:$0xff] %v9604
        %9637 = vst [vmem:[%s460 + $0x88] sm:$0xff] %v9605
        %9638 = vst [vmem:[%s460 + $0x90] sm:$0xff] %v9606
        %9639 = vst [vmem:[%s460 + $0x98] sm:$0xff] %v9607
        %9640 = vst [vmem:[%s460 + $0xa0] sm:$0xff] %v9608
        %9641 = vst [vmem:[%s460 + $0xa8] sm:$0xff] %v9609
        %9642 = vst [vmem:[%s460 + $0xb0] sm:$0xff] %v9610
        %9643 = vst [vmem:[%s460 + $0xb8] sm:$0xff] %v9611
        %9644 = vst [vmem:[%s460 + $0xc0] sm:$0xff] %v9612
        %9645 = vst [vmem:[%s460 + $0xc8] sm:$0xff] %v9613
        %9646 = vst [vmem:[%s460 + $0xd0] sm:$0xff] %v9614
        %9647 = vst [vmem:[%s460 + $0xd8] sm:$0xff] %v9615
        %9648 = vst [vmem:[%s460 + $0xe0] sm:$0xff] %v9616
        %9649 = vst [vmem:[%s460 + $0xe8] sm:$0xff] %v9617
        %9650 = vst [vmem:[%s460 + $0xf0] sm:$0xff] %v9618
        %9651 = vst [vmem:[%s460 + $0xf8] sm:$0xff] %v9619
        %s9652 = sand.u32 %s335, 1
        %s9653 = scalar_lea.sflag [#allocation5], %s9652
        %s9654 = sand.u32 %s335, 1
        %s9655 = smul.addr %s9654, 256
        %s9656 = scalar_lea.vmem [#allocation4], %s9655
        // Predicated region
        $region77: #{tpu_custom_call.1} parent=75 // pred_check
          %p9657 = pneg %p345
        $region78: #{tpu_custom_call.1} parent=75 // pred_check_branch
          %9659 = sbr.rel (%p9657) target = $region80
        $region79: #{tpu_custom_call.1} parent=75 // pred_region
          %s9661 = ssub.s32 4096, 4096
          %9662 = vsyncadd %s9653, %s9661
          %s9663 = smul.addr %s28, 32
          %s9664 = smul.addr %s9663, 128
          %s9665 = scalar_lea.hbm %s14, %s9664
          %s9666 = sshll.u32 %s9656, 4
          %s9667 = int_to_ptr.vmem [resolvable:$true] %s9666
          %9672 = dma.vmem_to_hbm [thread:$0]  %s9667, 4096, %s9665, %s9653, 128, 128, 8
        $region80: #{tpu_custom_call.1} parent=75 // pred_fallthru
          _
      $region76: #{tpu_custom_call.1} parent=5 // pred_fallthru
        _
      %p9673 = scmp.le.s32.totalorder 2, %s23
      // Predicated region
      $region81: #{tpu_custom_call.1} parent=5 // pred_check
        %p9674 = pneg %p9673
      $region82: #{tpu_custom_call.1} parent=5 // pred_check_branch
        %9676 = sbr.rel (%p9674) target = $region84
      $region83: #{tpu_custom_call.1} parent=5 // pred_region
        %s9677 = ssub.s32 %s23, 2
        // Predicated region
        $region85: #{tpu_custom_call.1} parent=83 // pred_check
          %p9678 = pneg %p351
        $region86: #{tpu_custom_call.1} parent=83 // pred_check_branch
          %9680 = sbr.rel (%p9678) target = $region88
        $region87: #{tpu_custom_call.1} parent=83 // pred_region
          %s9681 = sand.u32 %s336, 1
          %s9682 = scalar_lea.sflag [#allocation5], %s9681
          %s9683 = sand.u32 %s336, 1
          %s9684 = smul.addr %s9683, 256
          %s9685 = scalar_lea.vmem [#allocation4], %s9684
          %9686 = dma.done %s9682, 4096
        $region88: #{tpu_custom_call.1} parent=83 // pred_fallthru
          _
      $region84: #{tpu_custom_call.1} parent=5 // pred_fallthru
        _
    $region6: #{tpu_custom_call.1} parent=1 // loop_footer
      %s27 = sadd.s32 1, %s23
    $region7: #{tpu_custom_call.1} parent=1 // loop_footer_branch
      %22 = sbr.rel target = $region3
    $region8: #{tpu_custom_call.1} parent=1 // loop_exit
      _
    %9687 = vsyncpa [#allocation5], 1
    %s9688 = scalar_lea.sflag [#allocation5], 1
    %9689 = vsyncpa %s9688, 1

</llo_original>
